<compile_context>
chip_gen: v6e
topology: v6e:2x2x1
jax: 0.10.0
libtpu: 0.0.40
codegen_flags: <defaults>
</compile_context>

<pallas_src>
import functools

import jax
import jax.numpy as jnp
from jax.experimental import pallas as pl
from jax.experimental.pallas import tpu as pltpu

BN_EPS = 1e-5
_LANES = 128


def _round_up(v, m):
    return ((v + m - 1) // m) * m


# --------------------------------------------------------------------------- #
# Kernel 1: conv1 (3x3) + bias pre-activations (stored bf16) and per-block
# partial sums / sums-of-squares for BN1 and the downsample BN.
# Grid: (N, H//R); one R-row body block + two clamped 1-row halo blocks.
# --------------------------------------------------------------------------- #
def _conv1_stats_kernel(xt_ref, xm_ref, xb_ref, w1_ref, wd_ref, b1_ref,
                        z1_ref, st_ref):
    R = xm_ref.shape[1]
    W = z1_ref.shape[2]
    COP = z1_ref.shape[3]
    h = pl.program_id(1)
    HB = pl.num_programs(1)

    # Clamped halo rows are valid data; zero them at the image boundary.
    top_live = (h > 0).astype(jnp.float32)
    bot_live = (h < HB - 1).astype(jnp.float32)
    xt = xt_ref[0, 0].astype(jnp.float32) * top_live          # (Wp, CIP)
    xb = xb_ref[0, 0].astype(jnp.float32) * bot_live
    xm = xm_ref[0].astype(jnp.float32)                        # (R, Wp, CIP)
    xblk = jnp.concatenate([xt[None], xm, xb[None]], axis=0)  # (R+2, Wp, CIP)

    acc = jnp.zeros((R * W, COP), jnp.float32)
    for ky in range(3):
        for kx in range(3):
            tap = xblk[ky:ky + R, kx:kx + W, :].reshape(R * W, -1)
            acc = acc + jnp.dot(tap.astype(jnp.bfloat16), w1_ref[ky * 3 + kx],
                                preferred_element_type=jnp.float32)
    z1 = acc + b1_ref[...]                                    # conv1 + bias, f32
    z1_ref[...] = z1.astype(jnp.bfloat16).reshape(z1_ref.shape)

    # Downsample pre-activation: only needed here for its BN statistics
    # (kernel 2 recomputes it bit-identically from the same bf16 inputs).
    xin = xm[:, 1:1 + W, :].reshape(R * W, -1).astype(jnp.bfloat16)
    zd = jnp.dot(xin, wd_ref[...], preferred_element_type=jnp.float32)

    st = jnp.concatenate(
        [jnp.sum(z1, axis=0, keepdims=True),
         jnp.sum(z1 * z1, axis=0, keepdims=True),
         jnp.sum(zd, axis=0, keepdims=True),
         jnp.sum(zd * zd, axis=0, keepdims=True)], axis=0)    # (4, COP)
    st_ref[...] = st.reshape(st_ref.shape)


# --------------------------------------------------------------------------- #
# Kernel 2: BN1+ReLU, conv2 (3x3)+bias+ReLU, recomputed downsample + BN,
# residual add, ReLU, and a fully in-block 2x2 MaxPool.  Grid: (N, H//R).
# --------------------------------------------------------------------------- #
def _conv2_residual_pool_kernel(zt_ref, zm_ref, zb_ref, xm_ref, w2_ref, wd_ref,
                                s1_ref, t1_ref, b2_ref, sd_ref, td_ref,
                                out_ref, pool_ref):
    R = out_ref.shape[1]
    W = out_ref.shape[2]
    COP = out_ref.shape[3]
    R2 = pool_ref.shape[1]
    W2 = pool_ref.shape[2]
    h = pl.program_id(1)
    HB = pl.num_programs(1)

    s1 = s1_ref[...]
    t1 = t1_ref[...]

    def bn_relu(z):                                           # folded BN affine
        return jnp.maximum(z * s1 + t1, 0.0)

    # h1 halo rows: real rows via clamped specs, zeroed at the image boundary
    # AFTER bn_relu (the conv2 zero-padding applies to h1, not to z1).
    top_live = (h > 0).astype(jnp.float32)
    bot_live = (h < HB - 1).astype(jnp.float32)
    h1t = bn_relu(zt_ref[0, 0].astype(jnp.float32)) * top_live      # (W, COP)
    h1b = bn_relu(zb_ref[0, 0].astype(jnp.float32)) * bot_live
    h1m = bn_relu(zm_ref[0].astype(jnp.float32))                    # (R, W, COP)
    h1 = jnp.concatenate([h1t[None], h1m, h1b[None]], axis=0)       # (R+2, W, COP)

    zcol = jnp.zeros((R + 2, 1, COP), jnp.float32)
    hp = jnp.concatenate([zcol, h1, zcol], axis=1)                  # (R+2, W+2, COP)

    acc = jnp.zeros((R * W, COP), jnp.float32)
    for ky in range(3):
        for kx in range(3):
            tap = hp[ky:ky + R, kx:kx + W, :].reshape(R * W, COP)
            acc = acc + jnp.dot(tap.astype(jnp.bfloat16), w2_ref[ky * 3 + kx],
                                preferred_element_type=jnp.float32)
    d = jnp.maximum(acc + b2_ref[...], 0.0)                   # relu2(conv2 + b2)

    # Recompute the 1x1 downsample here (cheaper than an HBM round trip of zd).
    xin = xm_ref[0, :, 1:1 + W, :].reshape(R * W, -1)         # (R*W, CIP) bf16
    zd = jnp.dot(xin, wd_ref[...], preferred_element_type=jnp.float32)
    ident = zd * sd_ref[...] + td_ref[...]                    # downsample BN

    out2 = jnp.maximum(d + ident, 0.0)                        # (R*W, COP)
    out_ref[...] = out2.reshape(out_ref.shape)

    # Fused MaxPool2d(2): both spatial reductions stay inside the block
    # (no selection matmuls, no revisited output blocks).
    o = out2.reshape(R, W, COP)
    wpool = jnp.max(o.reshape(R, W2, 2, COP), axis=2)         # (R, W2, COP)
    pool = jnp.max(wpool.reshape(R2, 2, W2, COP), axis=1)     # (R2, W2, COP)
    pool_ref[...] = pool.reshape(pool_ref.shape)


# ------------------------------- parameters -------------------------------- #
def init_resblock_params(key, in_channels, out_channels):
    """Deterministic synthetic parameters with the module's __init__ shapes."""
    ks = jax.random.split(key, 7)
    p = {}
    p["w1"] = 0.2 * jax.random.normal(ks[0], (out_channels, in_channels, 3, 3), jnp.float32)
    p["b1"] = 0.1 * jax.random.normal(ks[1], (out_channels,), jnp.float32)
    p["bn1_gamma"] = 1.0 + 0.1 * jax.random.normal(ks[2], (out_channels,), jnp.float32)
    p["bn1_beta"] = 0.1 * jax.random.normal(ks[3], (out_channels,), jnp.float32)
    p["w2"] = 0.2 * jax.random.normal(ks[4], (out_channels, out_channels, 3, 3), jnp.float32)
    p["b2"] = 0.1 * jax.random.normal(ks[5], (out_channels,), jnp.float32)
    kd = jax.random.split(ks[6], 3)
    p["wd"] = 0.2 * jax.random.normal(kd[0], (out_channels, in_channels, 1, 1), jnp.float32)
    p["bnd_gamma"] = 1.0 + 0.1 * jax.random.normal(kd[1], (out_channels,), jnp.float32)
    p["bnd_beta"] = 0.1 * jax.random.normal(kd[2], (out_channels,), jnp.float32)
    return p


# -------------------------------- forward ---------------------------------- #
@jax.jit
def resblock_forward(x_nchw, params):
    x = jnp.transpose(x_nchw, (0, 2, 3, 1)).astype(jnp.float32)   # NCHW -> NHWC
    N, H, W, Cin = x.shape
    Cout = params["w1"].shape[0]
    assert H % 2 == 0 and W % 2 == 0, "MaxPool2d(2) needs even H, W"

    CIP = _round_up(Cin, _LANES)          # lane-dense input channels
    COP = _round_up(Cout, _LANES)         # lane-dense output channels
    Wp = _round_up(W + 2, 16)             # padded width (bf16 sublane packing)

    # Row-block size: even (in-block 2x2 pooling) and divides H.
    # Tune per generation: larger on v5e/v6e (128 MiB VMEM), ~8 on v7x (64 MiB).
    R = 2
    for cand in (8, 4, 2):
        if H % cand == 0:
            R = cand
            break
    HB = H // R

    # weights: OIHW -> (tap, Cin_pad, Cout_pad), bf16 MXU operands
    w1m = jnp.pad(jnp.transpose(params["w1"], (2, 3, 1, 0)),
                  ((0, 0), (0, 0), (0, CIP - Cin), (0, COP - Cout)))
    w1m = w1m.reshape(9, CIP, COP).astype(jnp.bfloat16)
    w2m = jnp.pad(jnp.transpose(params["w2"], (2, 3, 1, 0)),
                  ((0, 0), (0, 0), (0, COP - Cout), (0, COP - Cout)))
    w2m = w2m.reshape(9, COP, COP).astype(jnp.bfloat16)
    wdm = jnp.pad(params["wd"][:, :, 0, 0].T,
                  ((0, CIP - Cin), (0, COP - Cout))).astype(jnp.bfloat16)

    padc = lambda v: jnp.pad(v, (0, COP - v.shape[0]))
    b1r = padc(params["b1"]).reshape(1, COP)
    b2r = padc(params["b2"]).reshape(1, COP)
    g1, be1 = padc(params["bn1_gamma"]), padc(params["bn1_beta"])
    gd, bed = padc(params["bnd_gamma"]), padc(params["bnd_beta"])

    # W-halo + channel padded input in bf16 (halves DMA bytes).  No H padding:
    # vertical halo rows come from clamped 1-row BlockSpecs + in-kernel masks.
    xpad = jnp.pad(x, ((0, 0), (0, 0), (1, Wp - W - 1), (0, CIP - Cin))).astype(jnp.bfloat16)

    cp = pltpu.CompilerParams(
        dimension_semantics=("parallel", "parallel"),
        vmem_limit_bytes=32 * 1024 * 1024)

    body_x = pl.BlockSpec((1, R, Wp, CIP), lambda n, h: (n, h, 0, 0))
    halo_x_top = pl.BlockSpec((1, 1, Wp, CIP),
                              lambda n, h: (n, jnp.maximum(h * R - 1, 0), 0, 0))
    halo_x_bot = pl.BlockSpec((1, 1, Wp, CIP),
                              lambda n, h: (n, jnp.minimum(h * R + R, H - 1), 0, 0))
    const = lambda shp: pl.BlockSpec(shp, lambda n, h: (0,) * len(shp))

    # ---- pass 1: conv1 pre-activations (bf16) + per-block BN partial sums ----
    z1, stats = pl.pallas_call(
        _conv1_stats_kernel,
        out_shape=(jax.ShapeDtypeStruct((N, H, W, COP), jnp.bfloat16),
                   jax.ShapeDtypeStruct((N, HB, 4, COP), jnp.float32)),
        grid=(N, HB),
        in_specs=[halo_x_top, body_x, halo_x_bot,
                  const((9, CIP, COP)), const((CIP, COP)), const((1, COP))],
        out_specs=(pl.BlockSpec((1, R, W, COP), lambda n, h: (n, h, 0, 0)),
                   pl.BlockSpec((1, 1, 4, COP), lambda n, h: (n, h, 0, 0))),
        compiler_params=cp,
    )(xpad, xpad, xpad, w1m, wdm, b1r)

    # ---- fold batch stats into per-channel scale/shift (tiny O(C) glue) ----
    # NOTE: E[x^2]-E[x]^2 in f32; clamped at 0 (adequate for these sizes).
    cnt = float(N * H * W)
    ssum = jnp.sum(stats, axis=(0, 1))                  # (4, COP)
    mean1 = ssum[0] / cnt
    var1 = jnp.maximum(ssum[1] / cnt - mean1 * mean1, 0.0)
    scale1 = g1 * jax.lax.rsqrt(var1 + BN_EPS)
    shift1 = be1 - mean1 * scale1
    meand = ssum[2] / cnt
    vard = jnp.maximum(ssum[3] / cnt - meand * meand, 0.0)
    scaled = gd * jax.lax.rsqrt(vard + BN_EPS)
    shiftd = bed - meand * scaled
    vec = lambda v: v.reshape(1, COP)

    body_z = pl.BlockSpec((1, R, W, COP), lambda n, h: (n, h, 0, 0))
    halo_z_top = pl.BlockSpec((1, 1, W, COP),
                              lambda n, h: (n, jnp.maximum(h * R - 1, 0), 0, 0))
    halo_z_bot = pl.BlockSpec((1, 1, W, COP),
                              lambda n, h: (n, jnp.minimum(h * R + R, H - 1), 0, 0))

    # ---- pass 2: BN1+ReLU, conv2+ReLU, downsample BN, residual, ReLU, MaxPool ----
    out_full, pooled = pl.pallas_call(
        _conv2_residual_pool_kernel,
        out_shape=(jax.ShapeDtypeStruct((N, H, W, COP), jnp.float32),
                   jax.ShapeDtypeStruct((N, H // 2, W // 2, COP), jnp.float32)),
        grid=(N, HB),
        in_specs=[halo_z_top, body_z, halo_z_bot, body_x,
                  const((9, COP, COP)), const((CIP, COP)),
                  const((1, COP)), const((1, COP)), const((1, COP)),
                  const((1, COP)), const((1, COP))],
        out_specs=(pl.BlockSpec((1, R, W, COP), lambda n, h: (n, h, 0, 0)),
                   pl.BlockSpec((1, R // 2, W // 2, COP), lambda n, h: (n, h, 0, 0))),
        compiler_params=cp,
    )(z1, z1, z1, xpad, w2m, wdm,
      vec(scale1), vec(shift1), b2r, vec(scaled), vec(shiftd))

    out = jnp.transpose(out_full[..., :Cout], (0, 3, 1, 2))       # back to NCHW
    pooled = jnp.transpose(pooled[..., :Cout], (0, 3, 1, 2))
    return pooled, out


# ------------------------- pure-JAX reference (check) ----------------------- #
def _reference_forward(x_nchw, params):
    x = x_nchw.astype(jnp.float32)
    dn = ("NCHW", "OIHW", "NCHW")
    conv = functools.partial(jax.lax.conv_general_dilated, window_strides=(1, 1),
                             dimension_numbers=dn, precision=jax.lax.Precision.HIGHEST)

    def bn(z, gamma, beta):
        mean = jnp.mean(z, axis=(0, 2, 3), keepdims=True)
        var = jnp.mean((z - mean) ** 2, axis=(0, 2, 3), keepdims=True)
        return ((z - mean) * jax.lax.rsqrt(var + BN_EPS)
                * gamma[None, :, None, None] + beta[None, :, None, None])

    z1 = conv(x, params["w1"], padding=((1, 1), (1, 1))) + params["b1"][None, :, None, None]
    h1 = jax.nn.relu(bn(z1, params["bn1_gamma"], params["bn1_beta"]))
    d = jax.nn.relu(conv(h1, params["w2"], padding=((1, 1), (1, 1)))
                    + params["b2"][None, :, None, None])
    zd = conv(x, params["wd"], padding=((0, 0), (0, 0)))
    ident = bn(zd, params["bnd_gamma"], params["bnd_beta"])
    out = jax.nn.relu(d + ident)
    N, C, H, W = out.shape
    pooled = out.reshape(N, C, H // 2, 2, W // 2, 2).max(axis=(3, 5))
    return pooled, out


if __name__ == "__main__":
    N, Cin, Cout, H, W = 2, 4, 8, 16, 16
    key = jax.random.PRNGKey(0)
    kx, kp = jax.random.split(key)
    x = jax.random.normal(kx, (N, Cin, H, W), jnp.float32)
    params = init_resblock_params(kp, Cin, Cout)

    pooled, full = resblock_forward(x, params)
    jax.block_until_ready((pooled, full))

    assert pooled.shape == (N, Cout, H // 2, W // 2), pooled.shape
    assert full.shape == (N, Cout, H, W), full.shape
    assert bool(jnp.all(jnp.isfinite(pooled))) and bool(jnp.all(jnp.isfinite(full)))

    # Loose tolerance: bf16 MXU operands and a bf16-stored z1 intermediate.
    ref_pooled, ref_full = _reference_forward(x, params)
    assert bool(jnp.all(jnp.abs(full - ref_full) <= 0.1 + 0.1 * jnp.abs(ref_full))), \
        float(jnp.max(jnp.abs(full - ref_full)))
    assert bool(jnp.all(jnp.abs(pooled - ref_pooled) <= 0.1 + 0.1 * jnp.abs(ref_pooled))), \
        float(jnp.max(jnp.abs(pooled - ref_pooled)))

    print("KERNEL_OK")
</pallas_src>

<mosaic_0001>
module attributes {stable_mosaic.version = 11 : i64} {
  func.func @_conv1_stats_kernel(%arg0: i32, %arg1: i32, %arg2: memref<1x1x32x128xbf16, #tpu.memory_space<vmem>>, %arg3: memref<1x8x32x128xbf16, #tpu.memory_space<vmem>>, %arg4: memref<1x1x32x128xbf16, #tpu.memory_space<vmem>>, %arg5: memref<9x128x128xbf16, #tpu.memory_space<vmem>>, %arg6: memref<128x128xbf16, #tpu.memory_space<vmem>>, %arg7: memref<1x128xf32, #tpu.memory_space<vmem>>, %arg8: memref<1x8x16x128xbf16, #tpu.memory_space<vmem>>, %arg9: memref<1x1x4x128xf32, #tpu.memory_space<vmem>>) attributes {dimension_semantics = [#tpu.dimension_semantics<parallel>, #tpu.dimension_semantics<parallel>], iteration_bounds = array<i64: 2, 2>, scalar_prefetch = 0 : i64, scratch_operands = 0 : i64, tpu.core_type = #tpu.core_type<tc>, window_params = [{transform_indices = @transform_0, window_bounds = array<i64: 1, 1, 32, 128>}, {transform_indices = @transform_1, window_bounds = array<i64: 1, 8, 32, 128>}, {transform_indices = @transform_2, window_bounds = array<i64: 1, 1, 32, 128>}, {pipeline_mode = #tpu.pipeline_mode<synchronous>, transform_indices = @transform_3, window_bounds = array<i64: 9, 128, 128>}, {pipeline_mode = #tpu.pipeline_mode<synchronous>, transform_indices = @transform_4, window_bounds = array<i64: 128, 128>}, {pipeline_mode = #tpu.pipeline_mode<synchronous>, transform_indices = @transform_5, window_bounds = array<i64: 1, 128>}, {transform_indices = @transform_6, window_bounds = array<i64: 1, 8, 16, 128>}, {transform_indices = @transform_7, window_bounds = array<i64: 1, 1, 4, 128>}]} {
    %c0_i32 = arith.constant 0 : i32
    %0 = arith.cmpi sgt, %arg1, %c0_i32 : i32
    %1 = arith.extui %0 : i1 to i32
    %2 = arith.sitofp %1 : i32 to f32
    %c1_i32 = arith.constant 1 : i32
    %3 = arith.cmpi slt, %arg1, %c1_i32 : i32
    %4 = arith.extui %3 : i1 to i32
    %5 = arith.sitofp %4 : i32 to f32
    %c0 = arith.constant 0 : index
    %c0_0 = arith.constant 0 : index
    %c0_1 = arith.constant 0 : index
    %c0_2 = arith.constant 0 : index
    %6 = vector.load %arg2[%c0, %c0_0, %c0_1, %c0_2] : memref<1x1x32x128xbf16, #tpu.memory_space<vmem>>, vector<1x1x32x128xbf16>
    %7 = vector.shape_cast %6 : vector<1x1x32x128xbf16> to vector<32x128xbf16>
    %8 = arith.extf %7 : vector<32x128xbf16> to vector<32x128xf32>
    %9 = vector.broadcast %2 : f32 to vector<32x128xf32>
    %10 = arith.mulf %8, %9 : vector<32x128xf32>
    %c0_3 = arith.constant 0 : index
    %c0_4 = arith.constant 0 : index
    %c0_5 = arith.constant 0 : index
    %c0_6 = arith.constant 0 : index
    %11 = vector.load %arg4[%c0_3, %c0_4, %c0_5, %c0_6] : memref<1x1x32x128xbf16, #tpu.memory_space<vmem>>, vector<1x1x32x128xbf16>
    %12 = vector.shape_cast %11 : vector<1x1x32x128xbf16> to vector<32x128xbf16>
    %13 = arith.extf %12 : vector<32x128xbf16> to vector<32x128xf32>
    %14 = vector.broadcast %5 : f32 to vector<32x128xf32>
    %15 = arith.mulf %13, %14 : vector<32x128xf32>
    %c0_7 = arith.constant 0 : index
    %c0_8 = arith.constant 0 : index
    %c0_9 = arith.constant 0 : index
    %c0_10 = arith.constant 0 : index
    %16 = vector.load %arg3[%c0_7, %c0_8, %c0_9, %c0_10] : memref<1x8x32x128xbf16, #tpu.memory_space<vmem>>, vector<1x8x32x128xbf16>
    %17 = vector.shape_cast %16 : vector<1x8x32x128xbf16> to vector<8x32x128xbf16>
    %18 = arith.extf %17 : vector<8x32x128xbf16> to vector<8x32x128xf32>
    %19 = vector.shape_cast %10 : vector<32x128xf32> to vector<1x32x128xf32>
    %20 = vector.shape_cast %15 : vector<32x128xf32> to vector<1x32x128xf32>
    %21 = tpu.concatenate %19, %18, %20 in 0 : vector<1x32x128xf32>, vector<8x32x128xf32>, vector<1x32x128xf32> -> vector<10x32x128xf32>
    %cst = arith.constant 0.000000e+00 : f32
    %22 = vector.broadcast %cst : f32 to vector<128x128xf32>
    %23 = vector.extract_strided_slice %21 {offsets = [0, 0, 0], sizes = [8, 16, 128], strides = [1, 1, 1]} : vector<10x32x128xf32> to vector<8x16x128xf32>
    %24 = vector.shape_cast %23 : vector<8x16x128xf32> to vector<128x128xf32>
    %25 = arith.truncf %24 : vector<128x128xf32> to vector<128x128xbf16>
    %c0_11 = arith.constant 0 : index
    %c0_12 = arith.constant 0 : index
    %c0_13 = arith.constant 0 : index
    %26 = vector.load %arg5[%c0_11, %c0_12, %c0_13] : memref<9x128x128xbf16, #tpu.memory_space<vmem>>, vector<1x128x128xbf16>
    %27 = vector.shape_cast %26 : vector<1x128x128xbf16> to vector<128x128xbf16>
    %cst_14 = arith.constant dense<0.000000e+00> : vector<128x128xf32>
    %28 = tpu.matmul %25, %27, %cst_14 {dimension_numbers = #tpu.dot_dimension_numbers<[1], [0], [0], [1], [0, 0, 1, 1], [], []>} : vector<128x128xbf16>, vector<128x128xbf16>, vector<128x128xf32> -> vector<128x128xf32>
    %29 = arith.addf %22, %28 : vector<128x128xf32>
    %30 = vector.extract_strided_slice %21 {offsets = [0, 1, 0], sizes = [8, 16, 128], strides = [1, 1, 1]} : vector<10x32x128xf32> to vector<8x16x128xf32>
    %31 = vector.shape_cast %30 : vector<8x16x128xf32> to vector<128x128xf32>
    %32 = arith.truncf %31 : vector<128x128xf32> to vector<128x128xbf16>
    %c1 = arith.constant 1 : index
    %c0_15 = arith.constant 0 : index
    %c0_16 = arith.constant 0 : index
    %33 = vector.load %arg5[%c1, %c0_15, %c0_16] : memref<9x128x128xbf16, #tpu.memory_space<vmem>>, vector<1x128x128xbf16>
    %34 = vector.shape_cast %33 : vector<1x128x128xbf16> to vector<128x128xbf16>
    %cst_17 = arith.constant dense<0.000000e+00> : vector<128x128xf32>
    %35 = tpu.matmul %32, %34, %cst_17 {dimension_numbers = #tpu.dot_dimension_numbers<[1], [0], [0], [1], [0, 0, 1, 1], [], []>} : vector<128x128xbf16>, vector<128x128xbf16>, vector<128x128xf32> -> vector<128x128xf32>
    %36 = arith.addf %29, %35 : vector<128x128xf32>
    %37 = vector.extract_strided_slice %21 {offsets = [0, 2, 0], sizes = [8, 16, 128], strides = [1, 1, 1]} : vector<10x32x128xf32> to vector<8x16x128xf32>
    %38 = vector.shape_cast %37 : vector<8x16x128xf32> to vector<128x128xf32>
    %39 = arith.truncf %38 : vector<128x128xf32> to vector<128x128xbf16>
    %c2 = arith.constant 2 : index
    %c0_18 = arith.constant 0 : index
    %c0_19 = arith.constant 0 : index
    %40 = vector.load %arg5[%c2, %c0_18, %c0_19] : memref<9x128x128xbf16, #tpu.memory_space<vmem>>, vector<1x128x128xbf16>
    %41 = vector.shape_cast %40 : vector<1x128x128xbf16> to vector<128x128xbf16>
    %cst_20 = arith.constant dense<0.000000e+00> : vector<128x128xf32>
    %42 = tpu.matmul %39, %41, %cst_20 {dimension_numbers = #tpu.dot_dimension_numbers<[1], [0], [0], [1], [0, 0, 1, 1], [], []>} : vector<128x128xbf16>, vector<128x128xbf16>, vector<128x128xf32> -> vector<128x128xf32>
    %43 = arith.addf %36, %42 : vector<128x128xf32>
    %44 = vector.extract_strided_slice %21 {offsets = [1, 0, 0], sizes = [8, 16, 128], strides = [1, 1, 1]} : vector<10x32x128xf32> to vector<8x16x128xf32>
    %45 = vector.shape_cast %44 : vector<8x16x128xf32> to vector<128x128xf32>
    %46 = arith.truncf %45 : vector<128x128xf32> to vector<128x128xbf16>
    %c3 = arith.constant 3 : index
    %c0_21 = arith.constant 0 : index
    %c0_22 = arith.constant 0 : index
    %47 = vector.load %arg5[%c3, %c0_21, %c0_22] : memref<9x128x128xbf16, #tpu.memory_space<vmem>>, vector<1x128x128xbf16>
    %48 = vector.shape_cast %47 : vector<1x128x128xbf16> to vector<128x128xbf16>
    %cst_23 = arith.constant dense<0.000000e+00> : vector<128x128xf32>
    %49 = tpu.matmul %46, %48, %cst_23 {dimension_numbers = #tpu.dot_dimension_numbers<[1], [0], [0], [1], [0, 0, 1, 1], [], []>} : vector<128x128xbf16>, vector<128x128xbf16>, vector<128x128xf32> -> vector<128x128xf32>
    %50 = arith.addf %43, %49 : vector<128x128xf32>
    %51 = vector.extract_strided_slice %21 {offsets = [1, 1, 0], sizes = [8, 16, 128], strides = [1, 1, 1]} : vector<10x32x128xf32> to vector<8x16x128xf32>
    %52 = vector.shape_cast %51 : vector<8x16x128xf32> to vector<128x128xf32>
    %53 = arith.truncf %52 : vector<128x128xf32> to vector<128x128xbf16>
    %c4 = arith.constant 4 : index
    %c0_24 = arith.constant 0 : index
    %c0_25 = arith.constant 0 : index
    %54 = vector.load %arg5[%c4, %c0_24, %c0_25] : memref<9x128x128xbf16, #tpu.memory_space<vmem>>, vector<1x128x128xbf16>
    %55 = vector.shape_cast %54 : vector<1x128x128xbf16> to vector<128x128xbf16>
    %cst_26 = arith.constant dense<0.000000e+00> : vector<128x128xf32>
    %56 = tpu.matmul %53, %55, %cst_26 {dimension_numbers = #tpu.dot_dimension_numbers<[1], [0], [0], [1], [0, 0, 1, 1], [], []>} : vector<128x128xbf16>, vector<128x128xbf16>, vector<128x128xf32> -> vector<128x128xf32>
    %57 = arith.addf %50, %56 : vector<128x128xf32>
    %58 = vector.extract_strided_slice %21 {offsets = [1, 2, 0], sizes = [8, 16, 128], strides = [1, 1, 1]} : vector<10x32x128xf32> to vector<8x16x128xf32>
    %59 = vector.shape_cast %58 : vector<8x16x128xf32> to vector<128x128xf32>
    %60 = arith.truncf %59 : vector<128x128xf32> to vector<128x128xbf16>
    %c5 = arith.constant 5 : index
    %c0_27 = arith.constant 0 : index
    %c0_28 = arith.constant 0 : index
    %61 = vector.load %arg5[%c5, %c0_27, %c0_28] : memref<9x128x128xbf16, #tpu.memory_space<vmem>>, vector<1x128x128xbf16>
    %62 = vector.shape_cast %61 : vector<1x128x128xbf16> to vector<128x128xbf16>
    %cst_29 = arith.constant dense<0.000000e+00> : vector<128x128xf32>
    %63 = tpu.matmul %60, %62, %cst_29 {dimension_numbers = #tpu.dot_dimension_numbers<[1], [0], [0], [1], [0, 0, 1, 1], [], []>} : vector<128x128xbf16>, vector<128x128xbf16>, vector<128x128xf32> -> vector<128x128xf32>
    %64 = arith.addf %57, %63 : vector<128x128xf32>
    %65 = vector.extract_strided_slice %21 {offsets = [2, 0, 0], sizes = [8, 16, 128], strides = [1, 1, 1]} : vector<10x32x128xf32> to vector<8x16x128xf32>
    %66 = vector.shape_cast %65 : vector<8x16x128xf32> to vector<128x128xf32>
    %67 = arith.truncf %66 : vector<128x128xf32> to vector<128x128xbf16>
    %c6 = arith.constant 6 : index
    %c0_30 = arith.constant 0 : index
    %c0_31 = arith.constant 0 : index
    %68 = vector.load %arg5[%c6, %c0_30, %c0_31] : memref<9x128x128xbf16, #tpu.memory_space<vmem>>, vector<1x128x128xbf16>
    %69 = vector.shape_cast %68 : vector<1x128x128xbf16> to vector<128x128xbf16>
    %cst_32 = arith.constant dense<0.000000e+00> : vector<128x128xf32>
    %70 = tpu.matmul %67, %69, %cst_32 {dimension_numbers = #tpu.dot_dimension_numbers<[1], [0], [0], [1], [0, 0, 1, 1], [], []>} : vector<128x128xbf16>, vector<128x128xbf16>, vector<128x128xf32> -> vector<128x128xf32>
    %71 = arith.addf %64, %70 : vector<128x128xf32>
    %72 = vector.extract_strided_slice %21 {offsets = [2, 1, 0], sizes = [8, 16, 128], strides = [1, 1, 1]} : vector<10x32x128xf32> to vector<8x16x128xf32>
    %73 = vector.shape_cast %72 : vector<8x16x128xf32> to vector<128x128xf32>
    %74 = arith.truncf %73 : vector<128x128xf32> to vector<128x128xbf16>
    %c7 = arith.constant 7 : index
    %c0_33 = arith.constant 0 : index
    %c0_34 = arith.constant 0 : index
    %75 = vector.load %arg5[%c7, %c0_33, %c0_34] : memref<9x128x128xbf16, #tpu.memory_space<vmem>>, vector<1x128x128xbf16>
    %76 = vector.shape_cast %75 : vector<1x128x128xbf16> to vector<128x128xbf16>
    %cst_35 = arith.constant dense<0.000000e+00> : vector<128x128xf32>
    %77 = tpu.matmul %74, %76, %cst_35 {dimension_numbers = #tpu.dot_dimension_numbers<[1], [0], [0], [1], [0, 0, 1, 1], [], []>} : vector<128x128xbf16>, vector<128x128xbf16>, vector<128x128xf32> -> vector<128x128xf32>
    %78 = arith.addf %71, %77 : vector<128x128xf32>
    %79 = vector.extract_strided_slice %21 {offsets = [2, 2, 0], sizes = [8, 16, 128], strides = [1, 1, 1]} : vector<10x32x128xf32> to vector<8x16x128xf32>
    %80 = vector.shape_cast %79 : vector<8x16x128xf32> to vector<128x128xf32>
    %81 = arith.truncf %80 : vector<128x128xf32> to vector<128x128xbf16>
    %c8 = arith.constant 8 : index
    %c0_36 = arith.constant 0 : index
    %c0_37 = arith.constant 0 : index
    %82 = vector.load %arg5[%c8, %c0_36, %c0_37] : memref<9x128x128xbf16, #tpu.memory_space<vmem>>, vector<1x128x128xbf16>
    %83 = vector.shape_cast %82 : vector<1x128x128xbf16> to vector<128x128xbf16>
    %cst_38 = arith.constant dense<0.000000e+00> : vector<128x128xf32>
    %84 = tpu.matmul %81, %83, %cst_38 {dimension_numbers = #tpu.dot_dimension_numbers<[1], [0], [0], [1], [0, 0, 1, 1], [], []>} : vector<128x128xbf16>, vector<128x128xbf16>, vector<128x128xf32> -> vector<128x128xf32>
    %85 = arith.addf %78, %84 : vector<128x128xf32>
    %c0_39 = arith.constant 0 : index
    %c0_40 = arith.constant 0 : index
    %86 = vector.load %arg7[%c0_39, %c0_40] : memref<1x128xf32, #tpu.memory_space<vmem>>, vector<1x128xf32>
    %87 = vector.broadcast %86 : vector<1x128xf32> to vector<128x128xf32>
    %88 = arith.addf %85, %87 : vector<128x128xf32>
    %89 = arith.truncf %88 : vector<128x128xf32> to vector<128x128xbf16>
    %90 = vector.shape_cast %89 : vector<128x128xbf16> to vector<1x8x16x128xbf16>
    %c0_41 = arith.constant 0 : index
    %c0_42 = arith.constant 0 : index
    %c0_43 = arith.constant 0 : index
    %c0_44 = arith.constant 0 : index
    %91 = vector.load %arg8[%c0_41, %c0_42, %c0_43, %c0_44] : memref<1x8x16x128xbf16, #tpu.memory_space<vmem>>, vector<1x8x16x128xbf16>
    tpu.vector_store %arg8[%c0_41, %c0_42, %c0_43, %c0_44], %90 {strides = array<i32>} : memref<1x8x16x128xbf16, #tpu.memory_space<vmem>>, vector<1x8x16x128xbf16>,
    %92 = vector.extract_strided_slice %18 {offsets = [0, 1, 0], sizes = [8, 16, 128], strides = [1, 1, 1]} : vector<8x32x128xf32> to vector<8x16x128xf32>
    %93 = vector.shape_cast %92 : vector<8x16x128xf32> to vector<128x128xf32>
    %94 = arith.truncf %93 : vector<128x128xf32> to vector<128x128xbf16>
    %c0_45 = arith.constant 0 : index
    %c0_46 = arith.constant 0 : index
    %95 = vector.load %arg6[%c0_45, %c0_46] : memref<128x128xbf16, #tpu.memory_space<vmem>>, vector<128x128xbf16>
    %cst_47 = arith.constant dense<0.000000e+00> : vector<128x128xf32>
    %96 = tpu.matmul %94, %95, %cst_47 {dimension_numbers = #tpu.dot_dimension_numbers<[1], [0], [0], [1], [0, 0, 1, 1], [], []>} : vector<128x128xbf16>, vector<128x128xbf16>, vector<128x128xf32> -> vector<128x128xf32>
    %cst_48 = arith.constant dense<0.000000e+00> : vector<128xf32>
    %97 = vector.multi_reduction <add>, %88, %cst_48 [0] : vector<128x128xf32> to vector<128xf32>
    %98 = vector.shape_cast %97 : vector<128xf32> to vector<1x128xf32>
    %99 = arith.mulf %88, %88 : vector<128x128xf32>
    %cst_49 = arith.constant dense<0.000000e+00> : vector<128xf32>
    %100 = vector.multi_reduction <add>, %99, %cst_49 [0] : vector<128x128xf32> to vector<128xf32>
    %101 = vector.shape_cast %100 : vector<128xf32> to vector<1x128xf32>
    %cst_50 = arith.constant dense<0.000000e+00> : vector<128xf32>
    %102 = vector.multi_reduction <add>, %96, %cst_50 [0] : vector<128x128xf32> to vector<128xf32>
    %103 = vector.shape_cast %102 : vector<128xf32> to vector<1x128xf32>
    %104 = arith.mulf %96, %96 : vector<128x128xf32>
    %cst_51 = arith.constant dense<0.000000e+00> : vector<128xf32>
    %105 = vector.multi_reduction <add>, %104, %cst_51 [0] : vector<128x128xf32> to vector<128xf32>
    %106 = vector.shape_cast %105 : vector<128xf32> to vector<1x128xf32>
    %107 = tpu.concatenate %98, %101, %103, %106 in 0 : vector<1x128xf32>, vector<1x128xf32>, vector<1x128xf32>, vector<1x128xf32> -> vector<4x128xf32>
    %108 = vector.shape_cast %107 : vector<4x128xf32> to vector<1x1x4x128xf32>
    %c0_52 = arith.constant 0 : index
    %c0_53 = arith.constant 0 : index
    %c0_54 = arith.constant 0 : index
    %c0_55 = arith.constant 0 : index
    %109 = vector.load %arg9[%c0_52, %c0_53, %c0_54, %c0_55] : memref<1x1x4x128xf32, #tpu.memory_space<vmem>>, vector<1x1x4x128xf32>
    tpu.vector_store %arg9[%c0_52, %c0_53, %c0_54, %c0_55], %108 {strides = array<i32>} : memref<1x1x4x128xf32, #tpu.memory_space<vmem>>, vector<1x1x4x128xf32>,
    return
  }
  func.func @transform_0(%arg0: i32, %arg1: i32) -> (i32, i32, i32, i32) {
    %c8_i32 = arith.constant 8 : i32
    %0 = arith.muli %arg1, %c8_i32 : i32
    %c1_i32 = arith.constant 1 : i32
    %1 = arith.subi %0, %c1_i32 : i32
    %c0_i32 = arith.constant 0 : i32
    %2 = arith.maxsi %1, %c0_i32 : i32
    %c0_i32_0 = arith.constant 0 : i32
    %c0_i32_1 = arith.constant 0 : i32
    %c0_i32_2 = arith.constant 0 : i32
    return %arg0, %2, %c0_i32_0, %c0_i32_1 : i32, i32, i32, i32
  }
  func.func @transform_1(%arg0: i32, %arg1: i32) -> (i32, i32, i32, i32) {
    %c0_i32 = arith.constant 0 : i32
    %c0_i32_0 = arith.constant 0 : i32
    %c0_i32_1 = arith.constant 0 : i32
    return %arg0, %arg1, %c0_i32, %c0_i32_0 : i32, i32, i32, i32
  }
  func.func @transform_2(%arg0: i32, %arg1: i32) -> (i32, i32, i32, i32) {
    %c8_i32 = arith.constant 8 : i32
    %0 = arith.muli %arg1, %c8_i32 : i32
    %c8_i32_0 = arith.constant 8 : i32
    %1 = arith.addi %0, %c8_i32_0 : i32
    %c15_i32 = arith.constant 15 : i32
    %2 = arith.minsi %1, %c15_i32 : i32
    %c0_i32 = arith.constant 0 : i32
    %c0_i32_1 = arith.constant 0 : i32
    %c0_i32_2 = arith.constant 0 : i32
    return %arg0, %2, %c0_i32, %c0_i32_1 : i32, i32, i32, i32
  }
  func.func @transform_3(%arg0: i32, %arg1: i32) -> (i32, i32, i32) {
    %c0_i32 = arith.constant 0 : i32
    %c0_i32_0 = arith.constant 0 : i32
    %c0_i32_1 = arith.constant 0 : i32
    %c0_i32_2 = arith.constant 0 : i32
    return %c0_i32, %c0_i32_0, %c0_i32_1 : i32, i32, i32
  }
  func.func @transform_4(%arg0: i32, %arg1: i32) -> (i32, i32) {
    %c0_i32 = arith.constant 0 : i32
    %c0_i32_0 = arith.constant 0 : i32
    %c0_i32_1 = arith.constant 0 : i32
    return %c0_i32, %c0_i32_0 : i32, i32
  }
  func.func @transform_5(%arg0: i32, %arg1: i32) -> (i32, i32) {
    %c0_i32 = arith.constant 0 : i32
    %c0_i32_0 = arith.constant 0 : i32
    %c0_i32_1 = arith.constant 0 : i32
    return %c0_i32, %c0_i32_0 : i32, i32
  }
  func.func @transform_6(%arg0: i32, %arg1: i32) -> (i32, i32, i32, i32) {
    %c0_i32 = arith.constant 0 : i32
    %c0_i32_0 = arith.constant 0 : i32
    %c0_i32_1 = arith.constant 0 : i32
    return %arg0, %arg1, %c0_i32, %c0_i32_0 : i32, i32, i32, i32
  }
  func.func @transform_7(%arg0: i32, %arg1: i32) -> (i32, i32, i32, i32) {
    %c0_i32 = arith.constant 0 : i32
    %c0_i32_0 = arith.constant 0 : i32
    %c0_i32_1 = arith.constant 0 : i32
    return %arg0, %arg1, %c0_i32, %c0_i32_0 : i32, i32, i32, i32
  }
}

module attributes {stable_mosaic.version = 11 : i64} {
  func.func @_conv2_residual_pool_kernel(%arg0: i32, %arg1: i32, %arg2: memref<1x1x16x128xbf16, #tpu.memory_space<vmem>>, %arg3: memref<1x8x16x128xbf16, #tpu.memory_space<vmem>>, %arg4: memref<1x1x16x128xbf16, #tpu.memory_space<vmem>>, %arg5: memref<1x8x32x128xbf16, #tpu.memory_space<vmem>>, %arg6: memref<9x128x128xbf16, #tpu.memory_space<vmem>>, %arg7: memref<128x128xbf16, #tpu.memory_space<vmem>>, %arg8: memref<1x128xf32, #tpu.memory_space<vmem>>, %arg9: memref<1x128xf32, #tpu.memory_space<vmem>>, %arg10: memref<1x128xf32, #tpu.memory_space<vmem>>, %arg11: memref<1x128xf32, #tpu.memory_space<vmem>>, %arg12: memref<1x128xf32, #tpu.memory_space<vmem>>, %arg13: memref<1x8x16x128xf32, #tpu.memory_space<vmem>>, %arg14: memref<1x4x8x128xf32, #tpu.memory_space<vmem>>) attributes {dimension_semantics = [#tpu.dimension_semantics<parallel>, #tpu.dimension_semantics<parallel>], iteration_bounds = array<i64: 2, 2>, scalar_prefetch = 0 : i64, scratch_operands = 0 : i64, tpu.core_type = #tpu.core_type<tc>, window_params = [{transform_indices = @transform_0, window_bounds = array<i64: 1, 1, 16, 128>}, {transform_indices = @transform_1, window_bounds = array<i64: 1, 8, 16, 128>}, {transform_indices = @transform_2, window_bounds = array<i64: 1, 1, 16, 128>}, {transform_indices = @transform_3, window_bounds = array<i64: 1, 8, 32, 128>}, {pipeline_mode = #tpu.pipeline_mode<synchronous>, transform_indices = @transform_4, window_bounds = array<i64: 9, 128, 128>}, {pipeline_mode = #tpu.pipeline_mode<synchronous>, transform_indices = @transform_5, window_bounds = array<i64: 128, 128>}, {pipeline_mode = #tpu.pipeline_mode<synchronous>, transform_indices = @transform_6, window_bounds = array<i64: 1, 128>}, {pipeline_mode = #tpu.pipeline_mode<synchronous>, transform_indices = @transform_7, window_bounds = array<i64: 1, 128>}, {pipeline_mode = #tpu.pipeline_mode<synchronous>, transform_indices = @transform_8, window_bounds = array<i64: 1, 128>}, {pipeline_mode = #tpu.pipeline_mode<synchronous>, transform_indices = @transform_9, window_bounds = array<i64: 1, 128>}, {pipeline_mode = #tpu.pipeline_mode<synchronous>, transform_indices = @transform_10, window_bounds = array<i64: 1, 128>}, {transform_indices = @transform_11, window_bounds = array<i64: 1, 8, 16, 128>}, {transform_indices = @transform_12, window_bounds = array<i64: 1, 4, 8, 128>}]} {
    %c0 = arith.constant 0 : index
    %c0_0 = arith.constant 0 : index
    %0 = vector.load %arg8[%c0, %c0_0] : memref<1x128xf32, #tpu.memory_space<vmem>>, vector<1x128xf32>
    %c0_1 = arith.constant 0 : index
    %c0_2 = arith.constant 0 : index
    %1 = vector.load %arg9[%c0_1, %c0_2] : memref<1x128xf32, #tpu.memory_space<vmem>>, vector<1x128xf32>
    %c0_i32 = arith.constant 0 : i32
    %2 = arith.cmpi sgt, %arg1, %c0_i32 : i32
    %3 = arith.extui %2 : i1 to i32
    %4 = arith.sitofp %3 : i32 to f32
    %c1_i32 = arith.constant 1 : i32
    %5 = arith.cmpi slt, %arg1, %c1_i32 : i32
    %6 = arith.extui %5 : i1 to i32
    %7 = arith.sitofp %6 : i32 to f32
    %c0_3 = arith.constant 0 : index
    %c0_4 = arith.constant 0 : index
    %c0_5 = arith.constant 0 : index
    %c0_6 = arith.constant 0 : index
    %8 = vector.load %arg2[%c0_3, %c0_4, %c0_5, %c0_6] : memref<1x1x16x128xbf16, #tpu.memory_space<vmem>>, vector<1x1x16x128xbf16>
    %9 = vector.shape_cast %8 : vector<1x1x16x128xbf16> to vector<16x128xbf16>
    %10 = arith.extf %9 : vector<16x128xbf16> to vector<16x128xf32>
    %11 = vector.broadcast %0 : vector<1x128xf32> to vector<16x128xf32>
    %12 = arith.mulf %10, %11 : vector<16x128xf32>
    %13 = vector.broadcast %1 : vector<1x128xf32> to vector<16x128xf32>
    %14 = arith.addf %12, %13 : vector<16x128xf32>
    %cst = arith.constant 0.000000e+00 : f32
    %15 = vector.broadcast %cst : f32 to vector<16x128xf32>
    %16 = arith.maximumf %14, %15 : vector<16x128xf32>
    %17 = vector.broadcast %4 : f32 to vector<16x128xf32>
    %18 = arith.mulf %16, %17 : vector<16x128xf32>
    %c0_7 = arith.constant 0 : index
    %c0_8 = arith.constant 0 : index
    %c0_9 = arith.constant 0 : index
    %c0_10 = arith.constant 0 : index
    %19 = vector.load %arg4[%c0_7, %c0_8, %c0_9, %c0_10] : memref<1x1x16x128xbf16, #tpu.memory_space<vmem>>, vector<1x1x16x128xbf16>
    %20 = vector.shape_cast %19 : vector<1x1x16x128xbf16> to vector<16x128xbf16>
    %21 = arith.extf %20 : vector<16x128xbf16> to vector<16x128xf32>
    %22 = vector.broadcast %0 : vector<1x128xf32> to vector<16x128xf32>
    %23 = arith.mulf %21, %22 : vector<16x128xf32>
    %24 = vector.broadcast %1 : vector<1x128xf32> to vector<16x128xf32>
    %25 = arith.addf %23, %24 : vector<16x128xf32>
    %cst_11 = arith.constant 0.000000e+00 : f32
    %26 = vector.broadcast %cst_11 : f32 to vector<16x128xf32>
    %27 = arith.maximumf %25, %26 : vector<16x128xf32>
    %28 = vector.broadcast %7 : f32 to vector<16x128xf32>
    %29 = arith.mulf %27, %28 : vector<16x128xf32>
    %c0_12 = arith.constant 0 : index
    %c0_13 = arith.constant 0 : index
    %c0_14 = arith.constant 0 : index
    %c0_15 = arith.constant 0 : index
    %30 = vector.load %arg3[%c0_12, %c0_13, %c0_14, %c0_15] : memref<1x8x16x128xbf16, #tpu.memory_space<vmem>>, vector<1x8x16x128xbf16>
    %31 = vector.shape_cast %30 : vector<1x8x16x128xbf16> to vector<8x16x128xbf16>
    %32 = arith.extf %31 : vector<8x16x128xbf16> to vector<8x16x128xf32>
    %33 = vector.shape_cast %0 : vector<1x128xf32> to vector<1x1x128xf32>
    %34 = vector.broadcast %33 : vector<1x1x128xf32> to vector<8x16x128xf32>
    %35 = arith.mulf %32, %34 : vector<8x16x128xf32>
    %36 = vector.shape_cast %1 : vector<1x128xf32> to vector<1x1x128xf32>
    %37 = vector.broadcast %36 : vector<1x1x128xf32> to vector<8x16x128xf32>
    %38 = arith.addf %35, %37 : vector<8x16x128xf32>
    %cst_16 = arith.constant 0.000000e+00 : f32
    %39 = vector.broadcast %cst_16 : f32 to vector<8x16x128xf32>
    %40 = arith.maximumf %38, %39 : vector<8x16x128xf32>
    %41 = vector.shape_cast %18 : vector<16x128xf32> to vector<1x16x128xf32>
    %42 = vector.shape_cast %29 : vector<16x128xf32> to vector<1x16x128xf32>
    %43 = tpu.concatenate %41, %40, %42 in 0 : vector<1x16x128xf32>, vector<8x16x128xf32>, vector<1x16x128xf32> -> vector<10x16x128xf32>
    %cst_17 = arith.constant 0.000000e+00 : f32
    %44 = vector.broadcast %cst_17 : f32 to vector<10x1x128xf32>
    %45 = tpu.concatenate %44, %43, %44 in 1 : vector<10x1x128xf32>, vector<10x16x128xf32>, vector<10x1x128xf32> -> vector<10x18x128xf32>
    %cst_18 = arith.constant 0.000000e+00 : f32
    %46 = vector.broadcast %cst_18 : f32 to vector<128x128xf32>
    %47 = vector.extract_strided_slice %45 {offsets = [0, 0, 0], sizes = [8, 16, 128], strides = [1, 1, 1]} : vector<10x18x128xf32> to vector<8x16x128xf32>
    %48 = vector.shape_cast %47 : vector<8x16x128xf32> to vector<128x128xf32>
    %49 = arith.truncf %48 : vector<128x128xf32> to vector<128x128xbf16>
    %c0_19 = arith.constant 0 : index
    %c0_20 = arith.constant 0 : index
    %c0_21 = arith.constant 0 : index
    %50 = vector.load %arg6[%c0_19, %c0_20, %c0_21] : memref<9x128x128xbf16, #tpu.memory_space<vmem>>, vector<1x128x128xbf16>
    %51 = vector.shape_cast %50 : vector<1x128x128xbf16> to vector<128x128xbf16>
    %cst_22 = arith.constant dense<0.000000e+00> : vector<128x128xf32>
    %52 = tpu.matmul %49, %51, %cst_22 {dimension_numbers = #tpu.dot_dimension_numbers<[1], [0], [0], [1], [0, 0, 1, 1], [], []>} : vector<128x128xbf16>, vector<128x128xbf16>, vector<128x128xf32> -> vector<128x128xf32>
    %53 = arith.addf %46, %52 : vector<128x128xf32>
    %54 = vector.extract_strided_slice %45 {offsets = [0, 1, 0], sizes = [8, 16, 128], strides = [1, 1, 1]} : vector<10x18x128xf32> to vector<8x16x128xf32>
    %55 = vector.shape_cast %54 : vector<8x16x128xf32> to vector<128x128xf32>
    %56 = arith.truncf %55 : vector<128x128xf32> to vector<128x128xbf16>
    %c1 = arith.constant 1 : index
    %c0_23 = arith.constant 0 : index
    %c0_24 = arith.constant 0 : index
    %57 = vector.load %arg6[%c1, %c0_23, %c0_24] : memref<9x128x128xbf16, #tpu.memory_space<vmem>>, vector<1x128x128xbf16>
    %58 = vector.shape_cast %57 : vector<1x128x128xbf16> to vector<128x128xbf16>
    %cst_25 = arith.constant dense<0.000000e+00> : vector<128x128xf32>
    %59 = tpu.matmul %56, %58, %cst_25 {dimension_numbers = #tpu.dot_dimension_numbers<[1], [0], [0], [1], [0, 0, 1, 1], [], []>} : vector<128x128xbf16>, vector<128x128xbf16>, vector<128x128xf32> -> vector<128x128xf32>
    %60 = arith.addf %53, %59 : vector<128x128xf32>
    %61 = vector.extract_strided_slice %45 {offsets = [0, 2, 0], sizes = [8, 16, 128], strides = [1, 1, 1]} : vector<10x18x128xf32> to vector<8x16x128xf32>
    %62 = vector.shape_cast %61 : vector<8x16x128xf32> to vector<128x128xf32>
    %63 = arith.truncf %62 : vector<128x128xf32> to vector<128x128xbf16>
    %c2 = arith.constant 2 : index
    %c0_26 = arith.constant 0 : index
    %c0_27 = arith.constant 0 : index
    %64 = vector.load %arg6[%c2, %c0_26, %c0_27] : memref<9x128x128xbf16, #tpu.memory_space<vmem>>, vector<1x128x128xbf16>
    %65 = vector.shape_cast %64 : vector<1x128x128xbf16> to vector<128x128xbf16>
    %cst_28 = arith.constant dense<0.000000e+00> : vector<128x128xf32>
    %66 = tpu.matmul %63, %65, %cst_28 {dimension_numbers = #tpu.dot_dimension_numbers<[1], [0], [0], [1], [0, 0, 1, 1], [], []>} : vector<128x128xbf16>, vector<128x128xbf16>, vector<128x128xf32> -> vector<128x128xf32>
    %67 = arith.addf %60, %66 : vector<128x128xf32>
    %68 = vector.extract_strided_slice %45 {offsets = [1, 0, 0], sizes = [8, 16, 128], strides = [1, 1, 1]} : vector<10x18x128xf32> to vector<8x16x128xf32>
    %69 = vector.shape_cast %68 : vector<8x16x128xf32> to vector<128x128xf32>
    %70 = arith.truncf %69 : vector<128x128xf32> to vector<128x128xbf16>
    %c3 = arith.constant 3 : index
    %c0_29 = arith.constant 0 : index
    %c0_30 = arith.constant 0 : index
    %71 = vector.load %arg6[%c3, %c0_29, %c0_30] : memref<9x128x128xbf16, #tpu.memory_space<vmem>>, vector<1x128x128xbf16>
    %72 = vector.shape_cast %71 : vector<1x128x128xbf16> to vector<128x128xbf16>
    %cst_31 = arith.constant dense<0.000000e+00> : vector<128x128xf32>
    %73 = tpu.matmul %70, %72, %cst_31 {dimension_numbers = #tpu.dot_dimension_numbers<[1], [0], [0], [1], [0, 0, 1, 1], [], []>} : vector<128x128xbf16>, vector<128x128xbf16>, vector<128x128xf32> -> vector<128x128xf32>
    %74 = arith.addf %67, %73 : vector<128x128xf32>
    %75 = vector.extract_strided_slice %45 {offsets = [1, 1, 0], sizes = [8, 16, 128], strides = [1, 1, 1]} : vector<10x18x128xf32> to vector<8x16x128xf32>
    %76 = vector.shape_cast %75 : vector<8x16x128xf32> to vector<128x128xf32>
    %77 = arith.truncf %76 : vector<128x128xf32> to vector<128x128xbf16>
    %c4 = arith.constant 4 : index
    %c0_32 = arith.constant 0 : index
    %c0_33 = arith.constant 0 : index
    %78 = vector.load %arg6[%c4, %c0_32, %c0_33] : memref<9x128x128xbf16, #tpu.memory_space<vmem>>, vector<1x128x128xbf16>
    %79 = vector.shape_cast %78 : vector<1x128x128xbf16> to vector<128x128xbf16>
    %cst_34 = arith.constant dense<0.000000e+00> : vector<128x128xf32>
    %80 = tpu.matmul %77, %79, %cst_34 {dimension_numbers = #tpu.dot_dimension_numbers<[1], [0], [0], [1], [0, 0, 1, 1], [], []>} : vector<128x128xbf16>, vector<128x128xbf16>, vector<128x128xf32> -> vector<128x128xf32>
    %81 = arith.addf %74, %80 : vector<128x128xf32>
    %82 = vector.extract_strided_slice %45 {offsets = [1, 2, 0], sizes = [8, 16, 128], strides = [1, 1, 1]} : vector<10x18x128xf32> to vector<8x16x128xf32>
    %83 = vector.shape_cast %82 : vector<8x16x128xf32> to vector<128x128xf32>
    %84 = arith.truncf %83 : vector<128x128xf32> to vector<128x128xbf16>
    %c5 = arith.constant 5 : index
    %c0_35 = arith.constant 0 : index
    %c0_36 = arith.constant 0 : index
    %85 = vector.load %arg6[%c5, %c0_35, %c0_36] : memref<9x128x128xbf16, #tpu.memory_space<vmem>>, vector<1x128x128xbf16>
    %86 = vector.shape_cast %85 : vector<1x128x128xbf16> to vector<128x128xbf16>
    %cst_37 = arith.constant dense<0.000000e+00> : vector<128x128xf32>
    %87 = tpu.matmul %84, %86, %cst_37 {dimension_numbers = #tpu.dot_dimension_numbers<[1], [0], [0], [1], [0, 0, 1, 1], [], []>} : vector<128x128xbf16>, vector<128x128xbf16>, vector<128x128xf32> -> vector<128x128xf32>
    %88 = arith.addf %81, %87 : vector<128x128xf32>
    %89 = vector.extract_strided_slice %45 {offsets = [2, 0, 0], sizes = [8, 16, 128], strides = [1, 1, 1]} : vector<10x18x128xf32> to vector<8x16x128xf32>
    %90 = vector.shape_cast %89 : vector<8x16x128xf32> to vector<128x128xf32>
    %91 = arith.truncf %90 : vector<128x128xf32> to vector<128x128xbf16>
    %c6 = arith.constant 6 : index
    %c0_38 = arith.constant 0 : index
    %c0_39 = arith.constant 0 : index
    %92 = vector.load %arg6[%c6, %c0_38, %c0_39] : memref<9x128x128xbf16, #tpu.memory_space<vmem>>, vector<1x128x128xbf16>
    %93 = vector.shape_cast %92 : vector<1x128x128xbf16> to vector<128x128xbf16>
    %cst_40 = arith.constant dense<0.000000e+00> : vector<128x128xf32>
    %94 = tpu.matmul %91, %93, %cst_40 {dimension_numbers = #tpu.dot_dimension_numbers<[1], [0], [0], [1], [0, 0, 1, 1], [], []>} : vector<128x128xbf16>, vector<128x128xbf16>, vector<128x128xf32> -> vector<128x128xf32>
    %95 = arith.addf %88, %94 : vector<128x128xf32>
    %96 = vector.extract_strided_slice %45 {offsets = [2, 1, 0], sizes = [8, 16, 128], strides = [1, 1, 1]} : vector<10x18x128xf32> to vector<8x16x128xf32>
    %97 = vector.shape_cast %96 : vector<8x16x128xf32> to vector<128x128xf32>
    %98 = arith.truncf %97 : vector<128x128xf32> to vector<128x128xbf16>
    %c7 = arith.constant 7 : index
    %c0_41 = arith.constant 0 : index
    %c0_42 = arith.constant 0 : index
    %99 = vector.load %arg6[%c7, %c0_41, %c0_42] : memref<9x128x128xbf16, #tpu.memory_space<vmem>>, vector<1x128x128xbf16>
    %100 = vector.shape_cast %99 : vector<1x128x128xbf16> to vector<128x128xbf16>
    %cst_43 = arith.constant dense<0.000000e+00> : vector<128x128xf32>
    %101 = tpu.matmul %98, %100, %cst_43 {dimension_numbers = #tpu.dot_dimension_numbers<[1], [0], [0], [1], [0, 0, 1, 1], [], []>} : vector<128x128xbf16>, vector<128x128xbf16>, vector<128x128xf32> -> vector<128x128xf32>
    %102 = arith.addf %95, %101 : vector<128x128xf32>
    %103 = vector.extract_strided_slice %45 {offsets = [2, 2, 0], sizes = [8, 16, 128], strides = [1, 1, 1]} : vector<10x18x128xf32> to vector<8x16x128xf32>
    %104 = vector.shape_cast %103 : vector<8x16x128xf32> to vector<128x128xf32>
    %105 = arith.truncf %104 : vector<128x128xf32> to vector<128x128xbf16>
    %c8 = arith.constant 8 : index
    %c0_44 = arith.constant 0 : index
    %c0_45 = arith.constant 0 : index
    %106 = vector.load %arg6[%c8, %c0_44, %c0_45] : memref<9x128x128xbf16, #tpu.memory_space<vmem>>, vector<1x128x128xbf16>
    %107 = vector.shape_cast %106 : vector<1x128x128xbf16> to vector<128x128xbf16>
    %cst_46 = arith.constant dense<0.000000e+00> : vector<128x128xf32>
    %108 = tpu.matmul %105, %107, %cst_46 {dimension_numbers = #tpu.dot_dimension_numbers<[1], [0], [0], [1], [0, 0, 1, 1], [], []>} : vector<128x128xbf16>, vector<128x128xbf16>, vector<128x128xf32> -> vector<128x128xf32>
    %109 = arith.addf %102, %108 : vector<128x128xf32>
    %c0_47 = arith.constant 0 : index
    %c0_48 = arith.constant 0 : index
    %110 = vector.load %arg10[%c0_47, %c0_48] : memref<1x128xf32, #tpu.memory_space<vmem>>, vector<1x128xf32>
    %111 = vector.broadcast %110 : vector<1x128xf32> to vector<128x128xf32>
    %112 = arith.addf %109, %111 : vector<128x128xf32>
    %cst_49 = arith.constant 0.000000e+00 : f32
    %113 = vector.broadcast %cst_49 : f32 to vector<128x128xf32>
    %114 = arith.maximumf %112, %113 : vector<128x128xf32>
    %c0_50 = arith.constant 0 : index
    %c0_51 = arith.constant 0 : index
    %c1_52 = arith.constant 1 : index
    %c0_53 = arith.constant 0 : index
    %115 = vector.load %arg5[%c0_50, %c0_51, %c1_52, %c0_53] : memref<1x8x32x128xbf16, #tpu.memory_space<vmem>>, vector<1x8x16x128xbf16>
    %116 = vector.shape_cast %115 : vector<1x8x16x128xbf16> to vector<8x16x128xbf16>
    %117 = vector.shape_cast %116 : vector<8x16x128xbf16> to vector<128x128xbf16>
    %c0_54 = arith.constant 0 : index
    %c0_55 = arith.constant 0 : index
    %118 = vector.load %arg7[%c0_54, %c0_55] : memref<128x128xbf16, #tpu.memory_space<vmem>>, vector<128x128xbf16>
    %cst_56 = arith.constant dense<0.000000e+00> : vector<128x128xf32>
    %119 = tpu.matmul %117, %118, %cst_56 {dimension_numbers = #tpu.dot_dimension_numbers<[1], [0], [0], [1], [0, 0, 1, 1], [], []>} : vector<128x128xbf16>, vector<128x128xbf16>, vector<128x128xf32> -> vector<128x128xf32>
    %c0_57 = arith.constant 0 : index
    %c0_58 = arith.constant 0 : index
    %120 = vector.load %arg11[%c0_57, %c0_58] : memref<1x128xf32, #tpu.memory_space<vmem>>, vector<1x128xf32>
    %121 = vector.broadcast %120 : vector<1x128xf32> to vector<128x128xf32>
    %122 = arith.mulf %119, %121 : vector<128x128xf32>
    %c0_59 = arith.constant 0 : index
    %c0_60 = arith.constant 0 : index
    %123 = vector.load %arg12[%c0_59, %c0_60] : memref<1x128xf32, #tpu.memory_space<vmem>>, vector<1x128xf32>
    %124 = vector.broadcast %123 : vector<1x128xf32> to vector<128x128xf32>
    %125 = arith.addf %122, %124 : vector<128x128xf32>
    %126 = arith.addf %114, %125 : vector<128x128xf32>
    %cst_61 = arith.constant 0.000000e+00 : f32
    %127 = vector.broadcast %cst_61 : f32 to vector<128x128xf32>
    %128 = arith.maximumf %126, %127 : vector<128x128xf32>
    %129 = vector.shape_cast %128 : vector<128x128xf32> to vector<1x8x16x128xf32>
    %c0_62 = arith.constant 0 : index
    %c0_63 = arith.constant 0 : index
    %c0_64 = arith.constant 0 : index
    %c0_65 = arith.constant 0 : index
    %130 = vector.load %arg13[%c0_62, %c0_63, %c0_64, %c0_65] : memref<1x8x16x128xf32, #tpu.memory_space<vmem>>, vector<1x8x16x128xf32>
    tpu.vector_store %arg13[%c0_62, %c0_63, %c0_64, %c0_65], %129 {strides = array<i32>} : memref<1x8x16x128xf32, #tpu.memory_space<vmem>>, vector<1x8x16x128xf32>,
    %131 = vector.shape_cast %128 : vector<128x128xf32> to vector<8x16x128xf32>
    %132 = vector.shape_cast %131 : vector<8x16x128xf32> to vector<8x8x2x128xf32>
    %cst_66 = arith.constant dense<0xFF800000> : vector<8x8x128xf32>
    %133 = vector.multi_reduction <maximumf>, %132, %cst_66 [2] : vector<8x8x2x128xf32> to vector<8x8x128xf32>
    %134 = vector.shape_cast %133 : vector<8x8x128xf32> to vector<4x2x8x128xf32>
    %cst_67 = arith.constant dense<0xFF800000> : vector<4x8x128xf32>
    %135 = vector.multi_reduction <maximumf>, %134, %cst_67 [1] : vector<4x2x8x128xf32> to vector<4x8x128xf32>
    %136 = vector.shape_cast %135 : vector<4x8x128xf32> to vector<1x4x8x128xf32>
    %c0_68 = arith.constant 0 : index
    %c0_69 = arith.constant 0 : index
    %c0_70 = arith.constant 0 : index
    %c0_71 = arith.constant 0 : index
    %137 = vector.load %arg14[%c0_68, %c0_69, %c0_70, %c0_71] : memref<1x4x8x128xf32, #tpu.memory_space<vmem>>, vector<1x4x8x128xf32>
    tpu.vector_store %arg14[%c0_68, %c0_69, %c0_70, %c0_71], %136 {strides = array<i32>} : memref<1x4x8x128xf32, #tpu.memory_space<vmem>>, vector<1x4x8x128xf32>,
    return
  }
  func.func @transform_0(%arg0: i32, %arg1: i32) -> (i32, i32, i32, i32) {
    %c8_i32 = arith.constant 8 : i32
    %0 = arith.muli %arg1, %c8_i32 : i32
    %c1_i32 = arith.constant 1 : i32
    %1 = arith.subi %0, %c1_i32 : i32
    %c0_i32 = arith.constant 0 : i32
    %2 = arith.maxsi %1, %c0_i32 : i32
    %c0_i32_0 = arith.constant 0 : i32
    %c0_i32_1 = arith.constant 0 : i32
    %c0_i32_2 = arith.constant 0 : i32
    return %arg0, %2, %c0_i32_0, %c0_i32_1 : i32, i32, i32, i32
  }
  func.func @transform_1(%arg0: i32, %arg1: i32) -> (i32, i32, i32, i32) {
    %c0_i32 = arith.constant 0 : i32
    %c0_i32_0 = arith.constant 0 : i32
    %c0_i32_1 = arith.constant 0 : i32
    return %arg0, %arg1, %c0_i32, %c0_i32_0 : i32, i32, i32, i32
  }
  func.func @transform_2(%arg0: i32, %arg1: i32) -> (i32, i32, i32, i32) {
    %c8_i32 = arith.constant 8 : i32
    %0 = arith.muli %arg1, %c8_i32 : i32
    %c8_i32_0 = arith.constant 8 : i32
    %1 = arith.addi %0, %c8_i32_0 : i32
    %c15_i32 = arith.constant 15 : i32
    %2 = arith.minsi %1, %c15_i32 : i32
    %c0_i32 = arith.constant 0 : i32
    %c0_i32_1 = arith.constant 0 : i32
    %c0_i32_2 = arith.constant 0 : i32
    return %arg0, %2, %c0_i32, %c0_i32_1 : i32, i32, i32, i32
  }
  func.func @transform_3(%arg0: i32, %arg1: i32) -> (i32, i32, i32, i32) {
    %c0_i32 = arith.constant 0 : i32
    %c0_i32_0 = arith.constant 0 : i32
    %c0_i32_1 = arith.constant 0 : i32
    return %arg0, %arg1, %c0_i32, %c0_i32_0 : i32, i32, i32, i32
  }
  func.func @transform_4(%arg0: i32, %arg1: i32) -> (i32, i32, i32) {
    %c0_i32 = arith.constant 0 : i32
    %c0_i32_0 = arith.constant 0 : i32
    %c0_i32_1 = arith.constant 0 : i32
    %c0_i32_2 = arith.constant 0 : i32
    return %c0_i32, %c0_i32_0, %c0_i32_1 : i32, i32, i32
  }
  func.func @transform_5(%arg0: i32, %arg1: i32) -> (i32, i32) {
    %c0_i32 = arith.constant 0 : i32
    %c0_i32_0 = arith.constant 0 : i32
    %c0_i32_1 = arith.constant 0 : i32
    return %c0_i32, %c0_i32_0 : i32, i32
  }
  func.func @transform_6(%arg0: i32, %arg1: i32) -> (i32, i32) {
    %c0_i32 = arith.constant 0 : i32
    %c0_i32_0 = arith.constant 0 : i32
    %c0_i32_1 = arith.constant 0 : i32
    return %c0_i32, %c0_i32_0 : i32, i32
  }
  func.func @transform_7(%arg0: i32, %arg1: i32) -> (i32, i32) {
    %c0_i32 = arith.constant 0 : i32
    %c0_i32_0 = arith.constant 0 : i32
    %c0_i32_1 = arith.constant 0 : i32
    return %c0_i32, %c0_i32_0 : i32, i32
  }
  func.func @transform_8(%arg0: i32, %arg1: i32) -> (i32, i32) {
    %c0_i32 = arith.constant 0 : i32
    %c0_i32_0 = arith.constant 0 : i32
    %c0_i32_1 = arith.constant 0 : i32
    return %c0_i32, %c0_i32_0 : i32, i32
  }
  func.func @transform_9(%arg0: i32, %arg1: i32) -> (i32, i32) {
    %c0_i32 = arith.constant 0 : i32
    %c0_i32_0 = arith.constant 0 : i32
    %c0_i32_1 = arith.constant 0 : i32
    return %c0_i32, %c0_i32_0 : i32, i32
  }
  func.func @transform_10(%arg0: i32, %arg1: i32) -> (i32, i32) {
    %c0_i32 = arith.constant 0 : i32
    %c0_i32_0 = arith.constant 0 : i32
    %c0_i32_1 = arith.constant 0 : i32
    return %c0_i32, %c0_i32_0 : i32, i32
  }
  func.func @transform_11(%arg0: i32, %arg1: i32) -> (i32, i32, i32, i32) {
    %c0_i32 = arith.constant 0 : i32
    %c0_i32_0 = arith.constant 0 : i32
    %c0_i32_1 = arith.constant 0 : i32
    return %arg0, %arg1, %c0_i32, %c0_i32_0 : i32, i32, i32, i32
  }
  func.func @transform_12(%arg0: i32, %arg1: i32) -> (i32, i32, i32, i32) {
    %c0_i32 = arith.constant 0 : i32
    %c0_i32_0 = arith.constant 0 : i32
    %c0_i32_1 = arith.constant 0 : i32
    return %arg0, %arg1, %c0_i32, %c0_i32_0 : i32, i32, i32, i32
  }
}

</mosaic_0001>

<llo_original>
// kernel: resblock_forward.2
$region0: #{resblock_forward.2}
  #allocation0 [shape = 'u32[]', space=smem, size = 0x4, offset = 0x4, fixed_abs, tag = 'smem constant byte address 0x4 - core index']
  #allocation1 [shape = 'u32[144,128]{1,0:T(1,128)}', space=vmem, size = 0x12000, scoped, tag = 'internal scratch']
  %s0 = inlined_call_operand.vmem [shape: bf16[2,16,32,128], index: 0, kind: input, shape index: {}, may-alias: {0,1,2}]
  %s1 = inlined_call_operand.vmem [shape: bf16[2,16,32,128], index: 1, kind: input, shape index: {}, may-alias: {0,1,2}]
  %s2 = inlined_call_operand.vmem [shape: bf16[2,16,32,128], index: 2, kind: input, shape index: {}, may-alias: {0,1,2}]
  %s3 = inlined_call_operand.vmem [shape: bf16[9,128,128], index: 3, kind: input, shape index: {}]
  %s4 = inlined_call_operand.vmem [shape: bf16[128,128], index: 4, kind: input, shape index: {}]
  %s5 = inlined_call_operand.vmem [shape: f32[1,128], index: 5, kind: input, shape index: {}]
  %s6 = inlined_call_operand.vmem [shape: bf16[2,16,16,128], index: 6, kind: output, shape index: {0}]
  %s7 = inlined_call_operand.vmem [shape: f32[2,2,4,128], index: 7, kind: output, shape index: {1}]
  %8 = xla_tuple %s6, %s7
  %s9 = sld [smem:[#allocation0]]
  $region65: #{resblock_forward.2} parent=0
    _
  %s11 = ssub.s32 1, %s9
  %s12 = scalar_select 0, %s11, %s9
  loop: start=0, step=1, limit=6
  $region2: #{resblock_forward.2} parent=0 // loop_pre_header
    _
  $region3: #{resblock_forward.2} parent=0 // loop_header
    %s14 = sphi 0, %s18
    %p15 = scmp.ge.s32.totalorder %s14, 6
    %s21 = sphi 0, %s33
    %s22 = sphi 0, %s29
    %s23 = sphi 0, %s21
    %s24 = sphi 0, %s22
    %s25 = sphi 0, %s23
    %s26 = sphi 0, %s24
    %s46 = sphi 0, %s48
    %s49 = sphi 0, %s46
    %s50 = sphi 0, %s49
    %s66 = sphi 0, %s50
    %s74 = sphi 0, %s76
    %s77 = sphi 0, %s74
    %s78 = sphi 0, %s77
    %s94 = sphi 0, %s78
    %s110 = sphi 0, %s112
    %s113 = sphi 0, %s110
    %s114 = sphi 0, %s113
    %s130 = sphi 0, %s114
    %s134 = sphi 0, %s134
    %s136 = sphi 0, %s134
    %s137 = sphi 0, %s136
    %s151 = sphi 0, %s137
    %s155 = sphi 0, %s155
    %s157 = sphi 0, %s155
    %s158 = sphi 0, %s157
    %s172 = sphi 0, %s158
    %s176 = sphi 0, %s176
    %s178 = sphi 0, %s176
    %s179 = sphi 0, %s178
    %s193 = sphi 0, %s179
    %s201 = sphi 0, %s203
    %s204 = sphi 0, %s201
    %s205 = sphi 0, %s204
    %s221 = sphi 0, %s205
    %s229 = sphi 0, %s231
    %s232 = sphi 0, %s229
    %s233 = sphi 0, %s232
    %s249 = sphi 0, %s233
  $region4: #{resblock_forward.2} parent=0 // loop_header_branch
    %17 = sbr.rel (%p15) target = $region8
  $region5: #{resblock_forward.2} parent=0 // loop_body
    %s19 = ssub.s32 %s14, 1
    %s20 = ssub.s32 %s14, 2
    %s27 = sadd.s32 1, %s22
    %p28 = scmp.ge.s32.totalorder %s27, 2
    %s29 = scalar_select %p28, 0, %s27
    %s30 = sadd.s32 1, %s21
    %s31 = scalar_select %p28, %s30, %s21
    %p32 = scmp.ge.s32.totalorder %s31, 2
    %s33 = scalar_select %p32, 0, %s31
    %s34 = smul.u32 %s22, 8
    %s35 = ssub.s32 %s34, 1
    %p36 = scmp.gt.s32.totalorder %s35, 0
    %s37 = scalar_select %p36, %s35, 0
    %s38 = smul.u32 %s29, 8
    %s39 = ssub.s32 %s38, 1
    %p40 = scmp.gt.s32.totalorder %s39, 0
    %s41 = scalar_select %p40, %s39, 0
    %s42 = ssub.s32 %s21, %s33
    %s43 = ssub.s32 %s37, %s41
    %s44 = sor.u32 %s42, %s43
    %p45 = scmp.eq.s32.totalorder %s44, 0
    %s47 = sadd.s32 %s46, 1
    %s48 = scalar_select %p45, %s46, %s47
    %p51 = pneg %p45
    %p52 = scmp.eq.s32.totalorder %s14, 3
    %p53 = por %p51, %p52
    %p54 = scmp.ne.s32.totalorder %s46, %s49
    %p55 = scmp.eq.s32.totalorder %s14, 0
    %p56 = por %p54, %p55
    %p57 = scmp.ne.s32.totalorder %s46, %s49
    %p58 = scmp.eq.s32.totalorder %s19, 3
    %p59 = por %p57, %p58
    %p60 = scmp.ne.s32.totalorder %s49, %s50
    %p61 = scmp.eq.s32.totalorder %s19, 0
    %p62 = por %p60, %p61
    %p63 = scmp.ne.s32.totalorder %s49, %s50
    %p64 = scmp.eq.s32.totalorder %s20, 3
    %p65 = por %p63, %p64
    %p67 = scmp.ne.s32.totalorder %s50, %s66
    %p68 = scmp.eq.s32.totalorder %s20, 0
    %p69 = por %p67, %p68
    %s70 = ssub.s32 %s21, %s33
    %s71 = ssub.s32 %s22, %s29
    %s72 = sor.u32 %s70, %s71
    %p73 = scmp.eq.s32.totalorder %s72, 0
    %s75 = sadd.s32 %s74, 1
    %s76 = scalar_select %p73, %s74, %s75
    %p79 = pneg %p73
    %p80 = scmp.eq.s32.totalorder %s14, 3
    %p81 = por %p79, %p80
    %p82 = scmp.ne.s32.totalorder %s74, %s77
    %p83 = scmp.eq.s32.totalorder %s14, 0
    %p84 = por %p82, %p83
    %p85 = scmp.ne.s32.totalorder %s74, %s77
    %p86 = scmp.eq.s32.totalorder %s19, 3
    %p87 = por %p85, %p86
    %p88 = scmp.ne.s32.totalorder %s77, %s78
    %p89 = scmp.eq.s32.totalorder %s19, 0
    %p90 = por %p88, %p89
    %p91 = scmp.ne.s32.totalorder %s77, %s78
    %p92 = scmp.eq.s32.totalorder %s20, 3
    %p93 = por %p91, %p92
    %p95 = scmp.ne.s32.totalorder %s78, %s94
    %p96 = scmp.eq.s32.totalorder %s20, 0
    %p97 = por %p95, %p96
    %s98 = smul.u32 %s22, 8
    %s99 = sadd.s32 %s98, 8
    %p100 = scmp.lt.s32.totalorder %s99, 15
    %s101 = scalar_select %p100, %s99, 15
    %s102 = smul.u32 %s29, 8
    %s103 = sadd.s32 %s102, 8
    %p104 = scmp.lt.s32.totalorder %s103, 15
    %s105 = scalar_select %p104, %s103, 15
    %s106 = ssub.s32 %s21, %s33
    %s107 = ssub.s32 %s101, %s105
    %s108 = sor.u32 %s106, %s107
    %p109 = scmp.eq.s32.totalorder %s108, 0
    %s111 = sadd.s32 %s110, 1
    %s112 = scalar_select %p109, %s110, %s111
    %p115 = pneg %p109
    %p116 = scmp.eq.s32.totalorder %s14, 3
    %p117 = por %p115, %p116
    %p118 = scmp.ne.s32.totalorder %s110, %s113
    %p119 = scmp.eq.s32.totalorder %s14, 0
    %p120 = por %p118, %p119
    %p121 = scmp.ne.s32.totalorder %s110, %s113
    %p122 = scmp.eq.s32.totalorder %s19, 3
    %p123 = por %p121, %p122
    %p124 = scmp.ne.s32.totalorder %s113, %s114
    %p125 = scmp.eq.s32.totalorder %s19, 0
    %p126 = por %p124, %p125
    %p127 = scmp.ne.s32.totalorder %s113, %s114
    %p128 = scmp.eq.s32.totalorder %s20, 3
    %p129 = por %p127, %p128
    %p131 = scmp.ne.s32.totalorder %s114, %s130
    %p132 = scmp.eq.s32.totalorder %s20, 0
    %p133 = por %p131, %p132
    %s135 = sadd.s32 %s134, 1
    %p138 = scmp.eq.s32.totalorder %s14, 3
    %p139 = scmp.ne.s32.totalorder %s134, %s136
    %p140 = scmp.eq.s32.totalorder %s14, 0
    %p141 = por %p139, %p140
    %p142 = scmp.ne.s32.totalorder %s134, %s136
    %p143 = scmp.eq.s32.totalorder %s19, 3
    %p144 = por %p142, %p143
    %p145 = scmp.ne.s32.totalorder %s136, %s137
    %p146 = scmp.eq.s32.totalorder %s19, 0
    %p147 = por %p145, %p146
    %p148 = scmp.ne.s32.totalorder %s136, %s137
    %p149 = scmp.eq.s32.totalorder %s20, 3
    %p150 = por %p148, %p149
    %p152 = scmp.ne.s32.totalorder %s137, %s151
    %p153 = scmp.eq.s32.totalorder %s20, 0
    %p154 = por %p152, %p153
    %s156 = sadd.s32 %s155, 1
    %p159 = scmp.eq.s32.totalorder %s14, 3
    %p160 = scmp.ne.s32.totalorder %s155, %s157
    %p161 = scmp.eq.s32.totalorder %s14, 0
    %p162 = por %p160, %p161
    %p163 = scmp.ne.s32.totalorder %s155, %s157
    %p164 = scmp.eq.s32.totalorder %s19, 3
    %p165 = por %p163, %p164
    %p166 = scmp.ne.s32.totalorder %s157, %s158
    %p167 = scmp.eq.s32.totalorder %s19, 0
    %p168 = por %p166, %p167
    %p169 = scmp.ne.s32.totalorder %s157, %s158
    %p170 = scmp.eq.s32.totalorder %s20, 3
    %p171 = por %p169, %p170
    %p173 = scmp.ne.s32.totalorder %s158, %s172
    %p174 = scmp.eq.s32.totalorder %s20, 0
    %p175 = por %p173, %p174
    %s177 = sadd.s32 %s176, 1
    %p180 = scmp.eq.s32.totalorder %s14, 3
    %p181 = scmp.ne.s32.totalorder %s176, %s178
    %p182 = scmp.eq.s32.totalorder %s14, 0
    %p183 = por %p181, %p182
    %p184 = scmp.ne.s32.totalorder %s176, %s178
    %p185 = scmp.eq.s32.totalorder %s19, 3
    %p186 = por %p184, %p185
    %p187 = scmp.ne.s32.totalorder %s178, %s179
    %p188 = scmp.eq.s32.totalorder %s19, 0
    %p189 = por %p187, %p188
    %p190 = scmp.ne.s32.totalorder %s178, %s179
    %p191 = scmp.eq.s32.totalorder %s20, 3
    %p192 = por %p190, %p191
    %p194 = scmp.ne.s32.totalorder %s179, %s193
    %p195 = scmp.eq.s32.totalorder %s20, 0
    %p196 = por %p194, %p195
    %s197 = ssub.s32 %s21, %s33
    %s198 = ssub.s32 %s22, %s29
    %s199 = sor.u32 %s197, %s198
    %p200 = scmp.eq.s32.totalorder %s199, 0
    %s202 = sadd.s32 %s201, 1
    %s203 = scalar_select %p200, %s201, %s202
    %p206 = pneg %p200
    %p207 = scmp.eq.s32.totalorder %s14, 3
    %p208 = por %p206, %p207
    %p209 = scmp.ne.s32.totalorder %s201, %s204
    %p210 = scmp.eq.s32.totalorder %s14, 0
    %p211 = por %p209, %p210
    %p212 = scmp.ne.s32.totalorder %s201, %s204
    %p213 = scmp.eq.s32.totalorder %s19, 3
    %p214 = por %p212, %p213
    %p215 = scmp.ne.s32.totalorder %s204, %s205
    %p216 = scmp.eq.s32.totalorder %s19, 0
    %p217 = por %p215, %p216
    %p218 = scmp.ne.s32.totalorder %s204, %s205
    %p219 = scmp.eq.s32.totalorder %s20, 3
    %p220 = por %p218, %p219
    %p222 = scmp.ne.s32.totalorder %s205, %s221
    %p223 = scmp.eq.s32.totalorder %s20, 0
    %p224 = por %p222, %p223
    %s225 = ssub.s32 %s21, %s33
    %s226 = ssub.s32 %s22, %s29
    %s227 = sor.u32 %s225, %s226
    %p228 = scmp.eq.s32.totalorder %s227, 0
    %s230 = sadd.s32 %s229, 1
    %s231 = scalar_select %p228, %s229, %s230
    %p234 = pneg %p228
    %p235 = scmp.eq.s32.totalorder %s14, 3
    %p236 = por %p234, %p235
    %p237 = scmp.ne.s32.totalorder %s229, %s232
    %p238 = scmp.eq.s32.totalorder %s14, 0
    %p239 = por %p237, %p238
    %p240 = scmp.ne.s32.totalorder %s229, %s232
    %p241 = scmp.eq.s32.totalorder %s19, 3
    %p242 = por %p240, %p241
    %p243 = scmp.ne.s32.totalorder %s232, %s233
    %p244 = scmp.eq.s32.totalorder %s19, 0
    %p245 = por %p243, %p244
    %p246 = scmp.ne.s32.totalorder %s232, %s233
    %p247 = scmp.eq.s32.totalorder %s20, 3
    %p248 = por %p246, %p247
    %p250 = scmp.ne.s32.totalorder %s233, %s249
    %p251 = scmp.eq.s32.totalorder %s20, 0
    %p252 = por %p250, %p251
    %p253 = scmp.le.s32.totalorder 1, %s14
    %p254 = scmp.lt.s32.totalorder %s14, 5
    %p255 = pnand %p253, %p254
    %p256 = pneg %p255
    // Predicated region
    $region9: #{resblock_forward.2} parent=5 // pred_check
      _
    $region10: #{resblock_forward.2} parent=5 // pred_check_branch
      %258 = sbr.rel (%p255) target = $region12
    $region11: #{resblock_forward.2} parent=5 // pred_region
      %s259 = ssub.s32 %s14, 1
      // Predicated region
      $region13: #{resblock_forward.2} parent=11 // pred_check
        %p260 = pneg %p147
      $region14: #{resblock_forward.2} parent=11 // pred_check_branch
        %262 = sbr.rel (%p260) target = $region16
      $region15: #{resblock_forward.2} parent=11 // pred_region
        _
      $region16: #{resblock_forward.2} parent=11 // pred_fallthru
        _
      // Predicated region
      $region17: #{resblock_forward.2} parent=11 // pred_check
        %p263 = pneg %p168
      $region18: #{resblock_forward.2} parent=11 // pred_check_branch
        %265 = sbr.rel (%p263) target = $region20
      $region19: #{resblock_forward.2} parent=11 // pred_region
        _
      $region20: #{resblock_forward.2} parent=11 // pred_fallthru
        _
      // Predicated region
      $region21: #{resblock_forward.2} parent=11 // pred_check
        %p266 = pneg %p189
      $region22: #{resblock_forward.2} parent=11 // pred_check_branch
        %268 = sbr.rel (%p266) target = $region24
      $region23: #{resblock_forward.2} parent=11 // pred_region
        _
      $region24: #{resblock_forward.2} parent=11 // pred_fallthru
        _
    $region12: #{resblock_forward.2} parent=5 // pred_fallthru
      _
    %p269 = scmp.lt.s32.totalorder %s14, 4
    // Predicated region
    $region25: #{resblock_forward.2} parent=5 // pred_check
      %p270 = pneg %p269
    $region26: #{resblock_forward.2} parent=5 // pred_check_branch
      %272 = sbr.rel (%p270) target = $region28
    $region27: #{resblock_forward.2} parent=5 // pred_region
      // Predicated region
      $region29: #{resblock_forward.2} parent=27 // pred_check
        %p273 = pneg %p56
      $region30: #{resblock_forward.2} parent=27 // pred_check_branch
        %275 = sbr.rel (%p273) target = $region32
      $region31: #{resblock_forward.2} parent=27 // pred_region
        %s276 = smul.u32 %s22, 8
        %s277 = ssub.s32 %s276, 1
        %p278 = scmp.gt.s32.totalorder %s277, 0
        %s279 = scalar_select %p278, %s277, 0
        %p280 = scmp.lt.s32.totalorder %s21, 1
        %s281 = scalar_select %p280, %s21, 1
        %p282 = scmp.lt.s32.totalorder %s279, 15
        %s283 = scalar_select %p282, %s279, 15
        %s284 = smul.addr %s283, 4
        %s285 = smul.addr %s281, 64
        %s286 = sadd.s32 %s284, %s285
        %s287 = smul.addr %s286, 4
        %s288 = scalar_lea.vmem %s0, %s287
        %s289 = smul.u32 %s22, 8
        %s290 = ssub.s32 %s289, 1
        %p291 = scmp.gt.s32.totalorder %s290, 0
        %s292 = scalar_select %p291, %s290, 0
      $region32: #{resblock_forward.2} parent=27 // pred_fallthru
        _
      // Predicated region
      $region33: #{resblock_forward.2} parent=27 // pred_check
        %p293 = pneg %p84
      $region34: #{resblock_forward.2} parent=27 // pred_check_branch
        %295 = sbr.rel (%p293) target = $region36
      $region35: #{resblock_forward.2} parent=27 // pred_region
        %s296 = smul.u32 8, %s22
        %p297 = scmp.lt.s32.totalorder %s21, 1
        %s298 = scalar_select %p297, %s21, 1
        %p299 = scmp.lt.s32.totalorder %s296, 15
        %s300 = scalar_select %p299, %s296, 15
        %s301 = smul.addr %s300, 4
        %s302 = smul.addr %s298, 64
        %s303 = sadd.s32 %s301, %s302
        %s304 = smul.addr %s303, 4
        %s305 = scalar_lea.vmem %s1, %s304
        %s306 = smul.u32 8, %s22
      $region36: #{resblock_forward.2} parent=27 // pred_fallthru
        _
      // Predicated region
      $region37: #{resblock_forward.2} parent=27 // pred_check
        %p307 = pneg %p120
      $region38: #{resblock_forward.2} parent=27 // pred_check_branch
        %309 = sbr.rel (%p307) target = $region40
      $region39: #{resblock_forward.2} parent=27 // pred_region
        %s310 = smul.u32 %s22, 8
        %s311 = sadd.s32 %s310, 8
        %p312 = scmp.lt.s32.totalorder %s311, 15
        %s313 = scalar_select %p312, %s311, 15
        %p314 = scmp.lt.s32.totalorder %s21, 1
        %s315 = scalar_select %p314, %s21, 1
        %p316 = scmp.lt.s32.totalorder %s313, 15
        %s317 = scalar_select %p316, %s313, 15
        %s318 = smul.addr %s317, 4
        %s319 = smul.addr %s315, 64
        %s320 = sadd.s32 %s318, %s319
        %s321 = smul.addr %s320, 4
        %s322 = scalar_lea.vmem %s2, %s321
        %s323 = smul.u32 %s22, 8
        %s324 = sadd.s32 %s323, 8
        %p325 = scmp.lt.s32.totalorder %s324, 15
        %s326 = scalar_select %p325, %s324, 15
      $region40: #{resblock_forward.2} parent=27 // pred_fallthru
        _
    $region28: #{resblock_forward.2} parent=5 // pred_fallthru
      _
    %p327 = scmp.le.s32.totalorder 1, %s14
    %p328 = scmp.lt.s32.totalorder %s14, 5
    %p329 = pnand %p327, %p328
    %p330 = pneg %p329
    // Predicated region
    $region41: #{resblock_forward.2} parent=5 // pred_check
      _
    $region42: #{resblock_forward.2} parent=5 // pred_check_branch
      %332 = sbr.rel (%p329) target = $region44
    $region43: #{resblock_forward.2} parent=5 // pred_region
      %s333 = ssub.s32 %s14, 1
      %s334 = smul.u32 %s24, 8
      %s335 = ssub.s32 %s334, 1
      %p336 = scmp.gt.s32.totalorder %s335, 0
      %s337 = scalar_select %p336, %s335, 0
      %p338 = scmp.lt.s32.totalorder %s23, 1
      %s339 = scalar_select %p338, %s23, 1
      %p340 = scmp.lt.s32.totalorder %s337, 15
      %s341 = scalar_select %p340, %s337, 15
      %s342 = smul.addr %s341, 4
      %s343 = smul.addr %s339, 64
      %s344 = sadd.s32 %s342, %s343
      %s345 = smul.addr %s344, 4
      %s346 = scalar_lea.vmem %s0, %s345
      %p347 = pneg %p62
      %p348 = pneg %p59
      %s349 = smul.u32 8, %s24
      %p350 = scmp.lt.s32.totalorder %s23, 1
      %s351 = scalar_select %p350, %s23, 1
      %p352 = scmp.lt.s32.totalorder %s349, 15
      %s353 = scalar_select %p352, %s349, 15
      %s354 = smul.addr %s353, 4
      %s355 = smul.addr %s351, 64
      %s356 = sadd.s32 %s354, %s355
      %s357 = smul.addr %s356, 4
      %s358 = scalar_lea.vmem %s1, %s357
      %p359 = pneg %p90
      %p360 = pneg %p87
      %s361 = smul.u32 %s24, 8
      %s362 = sadd.s32 %s361, 8
      %p363 = scmp.lt.s32.totalorder %s362, 15
      %s364 = scalar_select %p363, %s362, 15
      %p365 = scmp.lt.s32.totalorder %s23, 1
      %s366 = scalar_select %p365, %s23, 1
      %p367 = scmp.lt.s32.totalorder %s364, 15
      %s368 = scalar_select %p367, %s364, 15
      %s369 = smul.addr %s368, 4
      %s370 = smul.addr %s366, 64
      %s371 = sadd.s32 %s369, %s370
      %s372 = smul.addr %s371, 4
      %s373 = scalar_lea.vmem %s2, %s372
      %p374 = pneg %p126
      %p375 = pneg %p123
      %p376 = pneg %p147
      %p377 = pneg %p144
      %p378 = pneg %p168
      %p379 = pneg %p165
      %p380 = pneg %p189
      %p381 = pneg %p186
      %p382 = pneg %p217
      %p383 = pneg %p214
      %s384 = smul.u32 8, %s24
      %p385 = scmp.lt.s32.totalorder %s23, 1
      %s386 = scalar_select %p385, %s23, 1
      %p387 = scmp.lt.s32.totalorder %s384, 15
      %s388 = scalar_select %p387, %s384, 15
      %s389 = smul.addr %s388, 2
      %s390 = smul.addr %s386, 32
      %s391 = sadd.s32 %s389, %s390
      %s392 = smul.addr %s391, 4
      %s393 = scalar_lea.vmem %s6, %s392
      %p394 = pneg %p245
      %p395 = pneg %p242
      %p396 = scmp.lt.s32.totalorder %s23, 1
      %s397 = scalar_select %p396, %s23, 1
      %p398 = scmp.lt.s32.totalorder %s24, 1
      %s399 = scalar_select %p398, %s24, 1
      %s400 = smul.addr %s397, 2
      %s401 = sadd.s32 %s399, %s400
      %s402 = smul.addr %s401, 4
      %s403 = scalar_lea.vmem %s7, %s402
      %s404 = smul.u32 %s24, 8
      %s405 = ssub.s32 %s404, 1
      %p406 = scmp.gt.s32.totalorder %s405, 0
      %s407 = scalar_select %p406, %s405, 0
      %p408 = scmp.lt.s32.totalorder %s23, 1
      %s409 = scalar_select %p408, %s23, 1
      %p410 = scmp.lt.s32.totalorder %s407, 15
      %s411 = scalar_select %p410, %s407, 15
      %s412 = smul.addr %s411, 4
      %s413 = smul.addr %s409, 64
      %s414 = sadd.s32 %s412, %s413
      %s415 = smul.addr %s414, 4
      %s416 = scalar_lea.vmem %s0, %s415
      %s417 = smul.u32 %s24, 8
      %s418 = ssub.s32 %s417, 1
      %p419 = scmp.gt.s32.totalorder %s418, 0
      %s420 = scalar_select %p419, %s418, 0
      %s421 = smul.u32 8, %s24
      %p422 = scmp.lt.s32.totalorder %s23, 1
      %s423 = scalar_select %p422, %s23, 1
      %p424 = scmp.lt.s32.totalorder %s421, 15
      %s425 = scalar_select %p424, %s421, 15
      %s426 = smul.addr %s425, 4
      %s427 = smul.addr %s423, 64
      %s428 = sadd.s32 %s426, %s427
      %s429 = smul.addr %s428, 4
      %s430 = scalar_lea.vmem %s1, %s429
      %s431 = smul.u32 8, %s24
      %s432 = smul.u32 %s24, 8
      %s433 = sadd.s32 %s432, 8
      %p434 = scmp.lt.s32.totalorder %s433, 15
      %s435 = scalar_select %p434, %s433, 15
      %p436 = scmp.lt.s32.totalorder %s23, 1
      %s437 = scalar_select %p436, %s23, 1
      %p438 = scmp.lt.s32.totalorder %s435, 15
      %s439 = scalar_select %p438, %s435, 15
      %s440 = smul.addr %s439, 4
      %s441 = smul.addr %s437, 64
      %s442 = sadd.s32 %s440, %s441
      %s443 = smul.addr %s442, 4
      %s444 = scalar_lea.vmem %s2, %s443
      %s445 = smul.u32 %s24, 8
      %s446 = sadd.s32 %s445, 8
      %p447 = scmp.lt.s32.totalorder %s446, 15
      %s448 = scalar_select %p447, %s446, 15
      %s449 = smul.u32 8, %s24
      %p450 = scmp.lt.s32.totalorder %s23, 1
      %s451 = scalar_select %p450, %s23, 1
      %p452 = scmp.lt.s32.totalorder %s449, 15
      %s453 = scalar_select %p452, %s449, 15
      %s454 = smul.addr %s453, 2
      %s455 = smul.addr %s451, 32
      %s456 = sadd.s32 %s454, %s455
      %s457 = smul.addr %s456, 4
      %s458 = scalar_lea.vmem %s6, %s457
      %s459 = smul.u32 8, %s24
      %p460 = scmp.lt.s32.totalorder %s23, 1
      %s461 = scalar_select %p460, %s23, 1
      %p462 = scmp.lt.s32.totalorder %s24, 1
      %s463 = scalar_select %p462, %s24, 1
      %s464 = smul.addr %s461, 2
      %s465 = sadd.s32 %s463, %s464
      %s466 = smul.addr %s465, 4
      %s467 = scalar_lea.vmem %s7, %s466
      %p469 = scmp.gt.s32.totalorder %s24, 0
      %s470 = scalar_select %p469, 1, 0
      %s471 = scvt.s32.f32 %s470
      %p472 = scmp.lt.s32.totalorder %s24, 1
      %s473 = scalar_select %p472, 1, 0
      %s474 = scvt.s32.f32 %s473
      %v475 = vld [vmem:[%s416] sm:$0xf]
      %v476 = vld [vmem:[%s416 + $0x4] sm:$0xf]
      %v477 = vld [vmem:[%s416 + $0x8] sm:$0xf]
      %v478 = vunpack.c.l.bf16 %v475
      %v479 = vunpack.c.l.bf16 %v476
      %v480 = vunpack.c.l.bf16 %v477
      %v481 = vstv %s471
      %v482 = vmul.f32 %v478, %v481
      %v483 = vmul.f32 %v479, %v481
      %v484 = vmul.f32 %v480, %v481
      %v485 = vld [vmem:[%s444] sm:$0xf]
      %v486 = vld [vmem:[%s444 + $0x4] sm:$0xf]
      %v487 = vld [vmem:[%s444 + $0x8] sm:$0xf]
      %v488 = vunpack.c.l.bf16 %v485
      %v489 = vunpack.c.l.bf16 %v486
      %v490 = vunpack.c.l.bf16 %v487
      %v491 = vstv %s474
      %v492 = vmul.f32 %v488, %v491
      %v493 = vmul.f32 %v489, %v491
      %v494 = vmul.f32 %v490, %v491
      %v495 = vld [vmem:[%s430] sm:$0xf]
      %v496 = vld [vmem:[%s430 + $0x4] sm:$0xf]
      %v497 = vld [vmem:[%s430 + $0x8] sm:$0xf]
      %v498 = vld [vmem:[%s430 + $0x10] sm:$0xf]
      %v499 = vld [vmem:[%s430 + $0x14] sm:$0xf]
      %v500 = vld [vmem:[%s430 + $0x18] sm:$0xf]
      %v501 = vld [vmem:[%s430 + $0x20] sm:$0xf]
      %v502 = vld [vmem:[%s430 + $0x24] sm:$0xf]
      %v503 = vld [vmem:[%s430 + $0x28] sm:$0xf]
      %v504 = vld [vmem:[%s430 + $0x30] sm:$0xf]
      %v505 = vld [vmem:[%s430 + $0x34] sm:$0xf]
      %v506 = vld [vmem:[%s430 + $0x38] sm:$0xf]
      %v507 = vld [vmem:[%s430 + $0x40] sm:$0xf]
      %v508 = vld [vmem:[%s430 + $0x44] sm:$0xf]
      %v509 = vld [vmem:[%s430 + $0x48] sm:$0xf]
      %v510 = vld [vmem:[%s430 + $0x50] sm:$0xf]
      %v511 = vld [vmem:[%s430 + $0x54] sm:$0xf]
      %v512 = vld [vmem:[%s430 + $0x58] sm:$0xf]
      %v513 = vld [vmem:[%s430 + $0x60] sm:$0xf]
      %v514 = vld [vmem:[%s430 + $0x64] sm:$0xf]
      %v515 = vld [vmem:[%s430 + $0x68] sm:$0xf]
      %v516 = vld [vmem:[%s430 + $0x70] sm:$0xf]
      %v517 = vld [vmem:[%s430 + $0x74] sm:$0xf]
      %v518 = vld [vmem:[%s430 + $0x78] sm:$0xf]
      %v519 = vunpack.c.l.bf16 %v495
      %v520 = vunpack.c.l.bf16 %v496
      %v521 = vunpack.c.l.bf16 %v497
      %v522 = vunpack.c.l.bf16 %v498
      %v523 = vunpack.c.l.bf16 %v499
      %v524 = vunpack.c.l.bf16 %v500
      %v525 = vunpack.c.l.bf16 %v501
      %v526 = vunpack.c.l.bf16 %v502
      %v527 = vunpack.c.l.bf16 %v503
      %v528 = vunpack.c.l.bf16 %v504
      %v529 = vunpack.c.l.bf16 %v505
      %v530 = vunpack.c.l.bf16 %v506
      %v531 = vunpack.c.l.bf16 %v507
      %v532 = vunpack.c.l.bf16 %v508
      %v533 = vunpack.c.l.bf16 %v509
      %v534 = vunpack.c.l.bf16 %v510
      %v535 = vunpack.c.l.bf16 %v511
      %v536 = vunpack.c.l.bf16 %v512
      %v537 = vunpack.c.l.bf16 %v513
      %v538 = vunpack.c.l.bf16 %v514
      %v539 = vunpack.c.l.bf16 %v515
      %v540 = vunpack.c.l.bf16 %v516
      %v541 = vunpack.c.l.bf16 %v517
      %v542 = vunpack.c.l.bf16 %v518
      %v543 = vpack.c.bf16 %v483, %v482
      %v544 = vpack.c.bf16 %v520, %v519
      %v545 = vpack.c.bf16 %v523, %v522
      %v546 = vpack.c.bf16 %v526, %v525
      %v547 = vpack.c.bf16 %v529, %v528
      %v548 = vpack.c.bf16 %v532, %v531
      %v549 = vpack.c.bf16 %v535, %v534
      %v550 = vpack.c.bf16 %v538, %v537
      %v551 = vld [vmem:[%s3] sm:$0xf]
      %v552 = vld [vmem:[%s3 + $0x4] sm:$0xf]
      %v553 = vld [vmem:[%s3 + $0x8] sm:$0xf]
      %v554 = vld [vmem:[%s3 + $0xc] sm:$0xf]
      %v555 = vld [vmem:[%s3 + $0x10] sm:$0xf]
      %v556 = vld [vmem:[%s3 + $0x14] sm:$0xf]
      %v557 = vld [vmem:[%s3 + $0x18] sm:$0xf]
      %v558 = vld [vmem:[%s3 + $0x1c] sm:$0xf]
      %v559 = vld [vmem:[%s3 + $0x20] sm:$0xf]
      %v560 = vld [vmem:[%s3 + $0x24] sm:$0xf]
      %v561 = vld [vmem:[%s3 + $0x28] sm:$0xf]
      %v562 = vld [vmem:[%s3 + $0x2c] sm:$0xf]
      %v563 = vld [vmem:[%s3 + $0x30] sm:$0xf]
      %v564 = vld [vmem:[%s3 + $0x34] sm:$0xf]
      %v565 = vld [vmem:[%s3 + $0x38] sm:$0xf]
      %v566 = vld [vmem:[%s3 + $0x3c] sm:$0xf]
      %vm591 = vcmask 1046528
      %v592 = vrot.slane %v482, 1
      %v593 = vrot.slane %v483, 1
      %v594 = vsel %vm591, %v592, %v593
      %v595 = vrot.slane %v484, 1
      %v596 = vsel %vm591, %v593, %v595
      %v597 = vrot.slane %v519, 1
      %v598 = vrot.slane %v520, 1
      %v599 = vsel %vm591, %v597, %v598
      %v600 = vrot.slane %v521, 1
      %v601 = vsel %vm591, %v598, %v600
      %v602 = vrot.slane %v522, 1
      %v603 = vrot.slane %v523, 1
      %v604 = vsel %vm591, %v602, %v603
      %v605 = vrot.slane %v524, 1
      %v606 = vsel %vm591, %v603, %v605
      %v607 = vrot.slane %v525, 1
      %v608 = vrot.slane %v526, 1
      %v609 = vsel %vm591, %v607, %v608
      %v610 = vrot.slane %v527, 1
      %v611 = vsel %vm591, %v608, %v610
      %v612 = vrot.slane %v528, 1
      %v613 = vrot.slane %v529, 1
      %v614 = vsel %vm591, %v612, %v613
      %v615 = vrot.slane %v530, 1
      %v616 = vsel %vm591, %v613, %v615
      %v617 = vrot.slane %v531, 1
      %v618 = vrot.slane %v532, 1
      %v619 = vsel %vm591, %v617, %v618
      %v620 = vrot.slane %v533, 1
      %v621 = vsel %vm591, %v618, %v620
      %v622 = vrot.slane %v534, 1
      %v623 = vrot.slane %v535, 1
      %v624 = vsel %vm591, %v622, %v623
      %v625 = vrot.slane %v536, 1
      %v626 = vsel %vm591, %v623, %v625
      %v627 = vrot.slane %v537, 1
      %v628 = vrot.slane %v538, 1
      %v629 = vsel %vm591, %v627, %v628
      %v630 = vrot.slane %v539, 1
      %v631 = vsel %vm591, %v628, %v630
      %v648 = vpack.c.bf16 %v596, %v594
      %v649 = vpack.c.bf16 %v601, %v599
      %v650 = vpack.c.bf16 %v606, %v604
      %v651 = vpack.c.bf16 %v611, %v609
      %v652 = vpack.c.bf16 %v616, %v614
      %v653 = vpack.c.bf16 %v621, %v619
      %v654 = vpack.c.bf16 %v626, %v624
      %v655 = vpack.c.bf16 %v631, %v629
      %s656 = scalar_lea.vmem %s3, 64
      %v657 = vld [vmem:[%s656] sm:$0xf]
      %v658 = vld [vmem:[%s656 + $0x4] sm:$0xf]
      %v659 = vld [vmem:[%s656 + $0x8] sm:$0xf]
      %v660 = vld [vmem:[%s656 + $0xc] sm:$0xf]
      %v661 = vld [vmem:[%s656 + $0x10] sm:$0xf]
      %v662 = vld [vmem:[%s656 + $0x14] sm:$0xf]
      %v663 = vld [vmem:[%s656 + $0x18] sm:$0xf]
      %v664 = vld [vmem:[%s656 + $0x1c] sm:$0xf]
      %v665 = vld [vmem:[%s656 + $0x20] sm:$0xf]
      %v666 = vld [vmem:[%s656 + $0x24] sm:$0xf]
      %v667 = vld [vmem:[%s656 + $0x28] sm:$0xf]
      %v668 = vld [vmem:[%s656 + $0x2c] sm:$0xf]
      %v669 = vld [vmem:[%s656 + $0x30] sm:$0xf]
      %v670 = vld [vmem:[%s656 + $0x34] sm:$0xf]
      %v671 = vld [vmem:[%s656 + $0x38] sm:$0xf]
      %v672 = vld [vmem:[%s656 + $0x3c] sm:$0xf]
      %v689 = vunpack.c.l.b16 %v657
      %v690 = vunpack.c.l.b16 %v658
      %v691 = vunpack.c.l.b16 %v659
      %v692 = vunpack.c.l.b16 %v660
      %v693 = vunpack.c.l.b16 %v661
      %v694 = vunpack.c.l.b16 %v662
      %v695 = vunpack.c.l.b16 %v663
      %v696 = vunpack.c.l.b16 %v664
      %v697 = vunpack.c.l.b16 %v665
      %v698 = vunpack.c.l.b16 %v666
      %v699 = vunpack.c.l.b16 %v667
      %v700 = vunpack.c.l.b16 %v668
      %v701 = vunpack.c.l.b16 %v669
      %v702 = vunpack.c.l.b16 %v670
      %v703 = vunpack.c.l.b16 %v671
      %v704 = vunpack.c.l.b16 %v672
      %v705 = vpack.c.b16 %v690, %v689
      %v706 = vpack.c.b16 %v692, %v691
      %v707 = vpack.c.b16 %v694, %v693
      %v708 = vpack.c.b16 %v696, %v695
      %v709 = vpack.c.b16 %v698, %v697
      %v710 = vpack.c.b16 %v700, %v699
      %v711 = vpack.c.b16 %v702, %v701
      %v712 = vpack.c.b16 %v704, %v703
      %721 = vmatprep.subr.bf16.mxu0 0
      %722 = vmatpush1.bf16.msra.mxu0 %v712
      %723 = vmatprep.subr.bf16.mxu0 0
      %724 = vmatpush1.bf16.msra.mxu0 %v711
      %725 = vmatprep.subr.bf16.mxu0 0
      %726 = vmatpush1.bf16.msra.mxu0 %v710
      %727 = vmatprep.subr.bf16.mxu0 0
      %728 = vmatpush1.bf16.msra.mxu0 %v709
      %729 = vmatprep.subr.bf16.mxu0 0
      %730 = vmatpush1.bf16.msra.mxu0 %v708
      %731 = vmatprep.subr.bf16.mxu0 0
      %732 = vmatpush1.bf16.msra.mxu0 %v707
      %733 = vmatprep.subr.bf16.mxu0 0
      %734 = vmatpush1.bf16.msra.mxu0 %v706
      %735 = vmatprep.subr.bf16.mxu0 0
      %736 = vmatpush1.bf16.msra.mxu0 %v705
      %737 = vmatprep.subr.bf16.mxu0 0
      %738 = vmatpush2.bf16.msra.mxu0 0
      %739 = vmatprep.subr.bf16.mxu0 0
      %740 = vmatpush2.bf16.msra.mxu0 0
      %741 = vmatprep.subr.bf16.mxu0 0
      %742 = vmatpush2.bf16.msra.mxu0 0
      %743 = vmatprep.subr.bf16.mxu0 0
      %744 = vmatpush2.bf16.msra.mxu0 0
      %745 = vmatprep.subr.bf16.mxu0 0
      %746 = vmatpush2.bf16.msra.mxu0 0
      %747 = vmatprep.subr.bf16.mxu0 0
      %748 = vmatpush2.bf16.msra.mxu0 0
      %749 = vmatprep.subr.bf16.mxu0 0
      %750 = vmatpush2.bf16.msra.mxu0 0
      %751 = vmatprep.subr.bf16.mxu0 0
      %752 = vmatpush2.bf16.msra.mxu0 0
      %753 = vmatprep.mubr.bf16.mxu0 0
      %754 = vmatmul.mubr.bf16.gmra.mxu0 %v648
      %v755 = vpop.f32.mrf.mxu0
      %v756 = vadd.f32 0.0, %v755
      %v757 = vpop.f32.mrf.mxu0
      %v758 = vpop.f32.mrf.mxu0
      %v759 = vadd.f32 0.0, %v758
      %v760 = vpop.f32.mrf.mxu0
      %761 = vmatprep.mubr.bf16.mxu0 0
      %762 = vmatmul.mubr.bf16.gmra.mxu0 %v649
      %v763 = vpop.f32.mrf.mxu0
      %v764 = vadd.f32 0.0, %v763
      %v765 = vpop.f32.mrf.mxu0
      %v766 = vpop.f32.mrf.mxu0
      %v767 = vadd.f32 0.0, %v766
      %v768 = vpop.f32.mrf.mxu0
      %769 = vmatprep.mubr.bf16.mxu0 0
      %770 = vmatmul.mubr.bf16.gmra.mxu0 %v650
      %v771 = vpop.f32.mrf.mxu0
      %v772 = vadd.f32 0.0, %v771
      %v773 = vpop.f32.mrf.mxu0
      %v774 = vpop.f32.mrf.mxu0
      %v775 = vadd.f32 0.0, %v774
      %v776 = vpop.f32.mrf.mxu0
      %777 = vmatprep.mubr.bf16.mxu0 0
      %778 = vmatmul.mubr.bf16.gmra.mxu0 %v651
      %v779 = vpop.f32.mrf.mxu0
      %v780 = vadd.f32 0.0, %v779
      %v781 = vpop.f32.mrf.mxu0
      %v782 = vpop.f32.mrf.mxu0
      %v783 = vadd.f32 0.0, %v782
      %v784 = vpop.f32.mrf.mxu0
      %785 = vmatprep.mubr.bf16.mxu0 0
      %786 = vmatmul.mubr.bf16.gmra.mxu0 %v652
      %v787 = vpop.f32.mrf.mxu0
      %v788 = vadd.f32 0.0, %v787
      %v789 = vpop.f32.mrf.mxu0
      %v790 = vpop.f32.mrf.mxu0
      %v791 = vadd.f32 0.0, %v790
      %v792 = vpop.f32.mrf.mxu0
      %793 = vmatprep.mubr.bf16.mxu0 0
      %794 = vmatmul.mubr.bf16.gmra.mxu0 %v653
      %v795 = vpop.f32.mrf.mxu0
      %v796 = vadd.f32 0.0, %v795
      %v797 = vpop.f32.mrf.mxu0
      %v798 = vpop.f32.mrf.mxu0
      %v799 = vadd.f32 0.0, %v798
      %v800 = vpop.f32.mrf.mxu0
      %801 = vmatprep.mubr.bf16.mxu0 0
      %802 = vmatmul.mubr.bf16.gmra.mxu0 %v654
      %v803 = vpop.f32.mrf.mxu0
      %v804 = vadd.f32 0.0, %v803
      %v805 = vpop.f32.mrf.mxu0
      %v806 = vpop.f32.mrf.mxu0
      %v807 = vadd.f32 0.0, %v806
      %v808 = vpop.f32.mrf.mxu0
      %809 = vmatprep.mubr.bf16.mxu0 0
      %810 = vmatmul.mubr.bf16.gmra.mxu0 %v655
      %v811 = vpop.f32.mrf.mxu0
      %v812 = vadd.f32 0.0, %v811
      %v813 = vpop.f32.mrf.mxu0
      %v814 = vpop.f32.mrf.mxu0
      %v815 = vadd.f32 0.0, %v814
      %v816 = vpop.f32.mrf.mxu0
      %817 = vdwg.mxu0
      %v834 = vunpack.c.l.b16 %v551
      %v835 = vunpack.c.l.b16 %v552
      %v836 = vunpack.c.l.b16 %v553
      %v837 = vunpack.c.l.b16 %v554
      %v838 = vunpack.c.l.b16 %v555
      %v839 = vunpack.c.l.b16 %v556
      %v840 = vunpack.c.l.b16 %v557
      %v841 = vunpack.c.l.b16 %v558
      %v842 = vunpack.c.l.b16 %v559
      %v843 = vunpack.c.l.b16 %v560
      %v844 = vunpack.c.l.b16 %v561
      %v845 = vunpack.c.l.b16 %v562
      %v846 = vunpack.c.l.b16 %v563
      %v847 = vunpack.c.l.b16 %v564
      %v848 = vunpack.c.l.b16 %v565
      %v849 = vunpack.c.l.b16 %v566
      %v850 = vpack.c.b16 %v835, %v834
      %v851 = vpack.c.b16 %v837, %v836
      %v852 = vpack.c.b16 %v839, %v838
      %v853 = vpack.c.b16 %v841, %v840
      %v854 = vpack.c.b16 %v843, %v842
      %v855 = vpack.c.b16 %v845, %v844
      %v856 = vpack.c.b16 %v847, %v846
      %v857 = vpack.c.b16 %v849, %v848
      %866 = vmatprep.subr.bf16.mxu0 0
      %867 = vmatpush1.bf16.msra.mxu0 %v857
      %868 = vmatprep.subr.bf16.mxu0 0
      %869 = vmatpush1.bf16.msra.mxu0 %v856
      %870 = vmatprep.subr.bf16.mxu0 0
      %871 = vmatpush1.bf16.msra.mxu0 %v855
      %872 = vmatprep.subr.bf16.mxu0 0
      %873 = vmatpush1.bf16.msra.mxu0 %v854
      %874 = vmatprep.subr.bf16.mxu0 0
      %875 = vmatpush1.bf16.msra.mxu0 %v853
      %876 = vmatprep.subr.bf16.mxu0 0
      %877 = vmatpush1.bf16.msra.mxu0 %v852
      %878 = vmatprep.subr.bf16.mxu0 0
      %879 = vmatpush1.bf16.msra.mxu0 %v851
      %880 = vmatprep.subr.bf16.mxu0 0
      %881 = vmatpush1.bf16.msra.mxu0 %v850
      %882 = vmatprep.subr.bf16.mxu0 0
      %883 = vmatpush2.bf16.msra.mxu0 0
      %884 = vmatprep.subr.bf16.mxu0 0
      %885 = vmatpush2.bf16.msra.mxu0 0
      %886 = vmatprep.subr.bf16.mxu0 0
      %887 = vmatpush2.bf16.msra.mxu0 0
      %888 = vmatprep.subr.bf16.mxu0 0
      %889 = vmatpush2.bf16.msra.mxu0 0
      %890 = vmatprep.subr.bf16.mxu0 0
      %891 = vmatpush2.bf16.msra.mxu0 0
      %892 = vmatprep.subr.bf16.mxu0 0
      %893 = vmatpush2.bf16.msra.mxu0 0
      %894 = vmatprep.subr.bf16.mxu0 0
      %895 = vmatpush2.bf16.msra.mxu0 0
      %896 = vmatprep.subr.bf16.mxu0 0
      %897 = vmatpush2.bf16.msra.mxu0 0
      %898 = vmatprep.mubr.bf16.mxu0 0
      %899 = vmatmul.mubr.bf16.gmra.mxu0 %v543
      %v900 = vpop.f32.mrf.mxu0
      %v901 = vadd.f32 %v756, %v900
      %v902 = vpop.f32.mrf.mxu0
      %v903 = vpop.f32.mrf.mxu0
      %v904 = vadd.f32 %v759, %v903
      %v905 = vpop.f32.mrf.mxu0
      %906 = vmatprep.mubr.bf16.mxu0 0
      %907 = vmatmul.mubr.bf16.gmra.mxu0 %v544
      %v908 = vpop.f32.mrf.mxu0
      %v909 = vadd.f32 %v764, %v908
      %v910 = vpop.f32.mrf.mxu0
      %v911 = vpop.f32.mrf.mxu0
      %v912 = vadd.f32 %v767, %v911
      %v913 = vpop.f32.mrf.mxu0
      %914 = vmatprep.mubr.bf16.mxu0 0
      %915 = vmatmul.mubr.bf16.gmra.mxu0 %v545
      %v916 = vpop.f32.mrf.mxu0
      %v917 = vadd.f32 %v772, %v916
      %v918 = vpop.f32.mrf.mxu0
      %v919 = vpop.f32.mrf.mxu0
      %v920 = vadd.f32 %v775, %v919
      %v921 = vpop.f32.mrf.mxu0
      %922 = vmatprep.mubr.bf16.mxu0 0
      %923 = vmatmul.mubr.bf16.gmra.mxu0 %v546
      %v924 = vpop.f32.mrf.mxu0
      %v925 = vadd.f32 %v780, %v924
      %v926 = vpop.f32.mrf.mxu0
      %v927 = vpop.f32.mrf.mxu0
      %v928 = vadd.f32 %v783, %v927
      %v929 = vpop.f32.mrf.mxu0
      %930 = vmatprep.mubr.bf16.mxu0 0
      %931 = vmatmul.mubr.bf16.gmra.mxu0 %v547
      %v932 = vpop.f32.mrf.mxu0
      %v933 = vadd.f32 %v788, %v932
      %v934 = vpop.f32.mrf.mxu0
      %v935 = vpop.f32.mrf.mxu0
      %v936 = vadd.f32 %v791, %v935
      %v937 = vpop.f32.mrf.mxu0
      %938 = vmatprep.mubr.bf16.mxu0 0
      %939 = vmatmul.mubr.bf16.gmra.mxu0 %v548
      %v940 = vpop.f32.mrf.mxu0
      %v941 = vadd.f32 %v796, %v940
      %v942 = vpop.f32.mrf.mxu0
      %v943 = vpop.f32.mrf.mxu0
      %v944 = vadd.f32 %v799, %v943
      %v945 = vpop.f32.mrf.mxu0
      %946 = vmatprep.mubr.bf16.mxu0 0
      %947 = vmatmul.mubr.bf16.gmra.mxu0 %v549
      %v948 = vpop.f32.mrf.mxu0
      %v949 = vadd.f32 %v804, %v948
      %v950 = vpop.f32.mrf.mxu0
      %v951 = vpop.f32.mrf.mxu0
      %v952 = vadd.f32 %v807, %v951
      %v953 = vpop.f32.mrf.mxu0
      %954 = vmatprep.mubr.bf16.mxu0 0
      %955 = vmatmul.mubr.bf16.gmra.mxu0 %v550
      %v956 = vpop.f32.mrf.mxu0
      %v957 = vadd.f32 %v812, %v956
      %v958 = vpop.f32.mrf.mxu0
      %v959 = vpop.f32.mrf.mxu0
      %v960 = vadd.f32 %v815, %v959
      %v961 = vpop.f32.mrf.mxu0
      %962 = vdwg.mxu0
      %vm963 = vcmask 1045504
      %v964 = vrot.slane %v482, 2
      %v965 = vrot.slane %v483, 2
      %v966 = vsel %vm963, %v964, %v965
      %v967 = vrot.slane %v484, 2
      %v968 = vsel %vm963, %v965, %v967
      %v969 = vrot.slane %v519, 2
      %v970 = vrot.slane %v520, 2
      %v971 = vsel %vm963, %v969, %v970
      %v972 = vrot.slane %v521, 2
      %v973 = vsel %vm963, %v970, %v972
      %v974 = vrot.slane %v522, 2
      %v975 = vrot.slane %v523, 2
      %v976 = vsel %vm963, %v974, %v975
      %v977 = vrot.slane %v524, 2
      %v978 = vsel %vm963, %v975, %v977
      %v979 = vrot.slane %v525, 2
      %v980 = vrot.slane %v526, 2
      %v981 = vsel %vm963, %v979, %v980
      %v982 = vrot.slane %v527, 2
      %v983 = vsel %vm963, %v980, %v982
      %v984 = vrot.slane %v528, 2
      %v985 = vrot.slane %v529, 2
      %v986 = vsel %vm963, %v984, %v985
      %v987 = vrot.slane %v530, 2
      %v988 = vsel %vm963, %v985, %v987
      %v989 = vrot.slane %v531, 2
      %v990 = vrot.slane %v532, 2
      %v991 = vsel %vm963, %v989, %v990
      %v992 = vrot.slane %v533, 2
      %v993 = vsel %vm963, %v990, %v992
      %v994 = vrot.slane %v534, 2
      %v995 = vrot.slane %v535, 2
      %v996 = vsel %vm963, %v994, %v995
      %v997 = vrot.slane %v536, 2
      %v998 = vsel %vm963, %v995, %v997
      %v999 = vrot.slane %v537, 2
      %v1000 = vrot.slane %v538, 2
      %v1001 = vsel %vm963, %v999, %v1000
      %v1002 = vrot.slane %v539, 2
      %v1003 = vsel %vm963, %v1000, %v1002
      %v1020 = vpack.c.bf16 %v968, %v966
      %v1021 = vpack.c.bf16 %v973, %v971
      %v1022 = vpack.c.bf16 %v978, %v976
      %v1023 = vpack.c.bf16 %v983, %v981
      %v1024 = vpack.c.bf16 %v988, %v986
      %v1025 = vpack.c.bf16 %v993, %v991
      %v1026 = vpack.c.bf16 %v998, %v996
      %v1027 = vpack.c.bf16 %v1003, %v1001
      %s1028 = scalar_lea.vmem %s3, 128
      %v1029 = vld [vmem:[%s1028] sm:$0xf]
      %v1030 = vld [vmem:[%s1028 + $0x4] sm:$0xf]
      %v1031 = vld [vmem:[%s1028 + $0x8] sm:$0xf]
      %v1032 = vld [vmem:[%s1028 + $0xc] sm:$0xf]
      %v1033 = vld [vmem:[%s1028 + $0x10] sm:$0xf]
      %v1034 = vld [vmem:[%s1028 + $0x14] sm:$0xf]
      %v1035 = vld [vmem:[%s1028 + $0x18] sm:$0xf]
      %v1036 = vld [vmem:[%s1028 + $0x1c] sm:$0xf]
      %v1037 = vld [vmem:[%s1028 + $0x20] sm:$0xf]
      %v1038 = vld [vmem:[%s1028 + $0x24] sm:$0xf]
      %v1039 = vld [vmem:[%s1028 + $0x28] sm:$0xf]
      %v1040 = vld [vmem:[%s1028 + $0x2c] sm:$0xf]
      %v1041 = vld [vmem:[%s1028 + $0x30] sm:$0xf]
      %v1042 = vld [vmem:[%s1028 + $0x34] sm:$0xf]
      %v1043 = vld [vmem:[%s1028 + $0x38] sm:$0xf]
      %v1044 = vld [vmem:[%s1028 + $0x3c] sm:$0xf]
      %v1061 = vunpack.c.l.b16 %v1029
      %v1062 = vunpack.c.l.b16 %v1030
      %v1063 = vunpack.c.l.b16 %v1031
      %v1064 = vunpack.c.l.b16 %v1032
      %v1065 = vunpack.c.l.b16 %v1033
      %v1066 = vunpack.c.l.b16 %v1034
      %v1067 = vunpack.c.l.b16 %v1035
      %v1068 = vunpack.c.l.b16 %v1036
      %v1069 = vunpack.c.l.b16 %v1037
      %v1070 = vunpack.c.l.b16 %v1038
      %v1071 = vunpack.c.l.b16 %v1039
      %v1072 = vunpack.c.l.b16 %v1040
      %v1073 = vunpack.c.l.b16 %v1041
      %v1074 = vunpack.c.l.b16 %v1042
      %v1075 = vunpack.c.l.b16 %v1043
      %v1076 = vunpack.c.l.b16 %v1044
      %v1077 = vpack.c.b16 %v1062, %v1061
      %v1078 = vpack.c.b16 %v1064, %v1063
      %v1079 = vpack.c.b16 %v1066, %v1065
      %v1080 = vpack.c.b16 %v1068, %v1067
      %v1081 = vpack.c.b16 %v1070, %v1069
      %v1082 = vpack.c.b16 %v1072, %v1071
      %v1083 = vpack.c.b16 %v1074, %v1073
      %v1084 = vpack.c.b16 %v1076, %v1075
      %1093 = vmatprep.subr.bf16.mxu0 0
      %1094 = vmatpush1.bf16.msra.mxu0 %v1084
      %1095 = vmatprep.subr.bf16.mxu0 0
      %1096 = vmatpush1.bf16.msra.mxu0 %v1083
      %1097 = vmatprep.subr.bf16.mxu0 0
      %1098 = vmatpush1.bf16.msra.mxu0 %v1082
      %1099 = vmatprep.subr.bf16.mxu0 0
      %1100 = vmatpush1.bf16.msra.mxu0 %v1081
      %1101 = vmatprep.subr.bf16.mxu0 0
      %1102 = vmatpush1.bf16.msra.mxu0 %v1080
      %1103 = vmatprep.subr.bf16.mxu0 0
      %1104 = vmatpush1.bf16.msra.mxu0 %v1079
      %1105 = vmatprep.subr.bf16.mxu0 0
      %1106 = vmatpush1.bf16.msra.mxu0 %v1078
      %1107 = vmatprep.subr.bf16.mxu0 0
      %1108 = vmatpush1.bf16.msra.mxu0 %v1077
      %1109 = vmatprep.subr.bf16.mxu0 0
      %1110 = vmatpush2.bf16.msra.mxu0 0
      %1111 = vmatprep.subr.bf16.mxu0 0
      %1112 = vmatpush2.bf16.msra.mxu0 0
      %1113 = vmatprep.subr.bf16.mxu0 0
      %1114 = vmatpush2.bf16.msra.mxu0 0
      %1115 = vmatprep.subr.bf16.mxu0 0
      %1116 = vmatpush2.bf16.msra.mxu0 0
      %1117 = vmatprep.subr.bf16.mxu0 0
      %1118 = vmatpush2.bf16.msra.mxu0 0
      %1119 = vmatprep.subr.bf16.mxu0 0
      %1120 = vmatpush2.bf16.msra.mxu0 0
      %1121 = vmatprep.subr.bf16.mxu0 0
      %1122 = vmatpush2.bf16.msra.mxu0 0
      %1123 = vmatprep.subr.bf16.mxu0 0
      %1124 = vmatpush2.bf16.msra.mxu0 0
      %1125 = vmatprep.mubr.bf16.mxu0 0
      %1126 = vmatmul.mubr.bf16.gmra.mxu0 %v1020
      %v1127 = vpop.f32.mrf.mxu0
      %v1128 = vadd.f32 0.0, %v1127
      %v1129 = vpop.f32.mrf.mxu0
      %v1130 = vpop.f32.mrf.mxu0
      %v1131 = vadd.f32 0.0, %v1130
      %v1132 = vpop.f32.mrf.mxu0
      %1133 = vmatprep.mubr.bf16.mxu0 0
      %1134 = vmatmul.mubr.bf16.gmra.mxu0 %v1021
      %v1135 = vpop.f32.mrf.mxu0
      %v1136 = vadd.f32 0.0, %v1135
      %v1137 = vpop.f32.mrf.mxu0
      %v1138 = vpop.f32.mrf.mxu0
      %v1139 = vadd.f32 0.0, %v1138
      %v1140 = vpop.f32.mrf.mxu0
      %1141 = vmatprep.mubr.bf16.mxu0 0
      %1142 = vmatmul.mubr.bf16.gmra.mxu0 %v1022
      %v1143 = vpop.f32.mrf.mxu0
      %v1144 = vadd.f32 0.0, %v1143
      %v1145 = vpop.f32.mrf.mxu0
      %v1146 = vpop.f32.mrf.mxu0
      %v1147 = vadd.f32 0.0, %v1146
      %v1148 = vpop.f32.mrf.mxu0
      %1149 = vmatprep.mubr.bf16.mxu0 0
      %1150 = vmatmul.mubr.bf16.gmra.mxu0 %v1023
      %v1151 = vpop.f32.mrf.mxu0
      %v1152 = vadd.f32 0.0, %v1151
      %v1153 = vpop.f32.mrf.mxu0
      %v1154 = vpop.f32.mrf.mxu0
      %v1155 = vadd.f32 0.0, %v1154
      %v1156 = vpop.f32.mrf.mxu0
      %1157 = vmatprep.mubr.bf16.mxu0 0
      %1158 = vmatmul.mubr.bf16.gmra.mxu0 %v1024
      %v1159 = vpop.f32.mrf.mxu0
      %v1160 = vadd.f32 0.0, %v1159
      %v1161 = vpop.f32.mrf.mxu0
      %v1162 = vpop.f32.mrf.mxu0
      %v1163 = vadd.f32 0.0, %v1162
      %v1164 = vpop.f32.mrf.mxu0
      %1165 = vmatprep.mubr.bf16.mxu0 0
      %1166 = vmatmul.mubr.bf16.gmra.mxu0 %v1025
      %v1167 = vpop.f32.mrf.mxu0
      %v1168 = vadd.f32 0.0, %v1167
      %v1169 = vpop.f32.mrf.mxu0
      %v1170 = vpop.f32.mrf.mxu0
      %v1171 = vadd.f32 0.0, %v1170
      %v1172 = vpop.f32.mrf.mxu0
      %1173 = vmatprep.mubr.bf16.mxu0 0
      %1174 = vmatmul.mubr.bf16.gmra.mxu0 %v1026
      %v1175 = vpop.f32.mrf.mxu0
      %v1176 = vadd.f32 0.0, %v1175
      %v1177 = vpop.f32.mrf.mxu0
      %v1178 = vpop.f32.mrf.mxu0
      %v1179 = vadd.f32 0.0, %v1178
      %v1180 = vpop.f32.mrf.mxu0
      %1181 = vmatprep.mubr.bf16.mxu0 0
      %1182 = vmatmul.mubr.bf16.gmra.mxu0 %v1027
      %v1183 = vpop.f32.mrf.mxu0
      %v1184 = vadd.f32 0.0, %v1183
      %v1185 = vpop.f32.mrf.mxu0
      %v1186 = vpop.f32.mrf.mxu0
      %v1187 = vadd.f32 0.0, %v1186
      %v1188 = vpop.f32.mrf.mxu0
      %1189 = vdwg.mxu0
      %v1190 = vadd.f32 %v901, %v1128
      %v1191 = vadd.f32 %v904, %v1131
      %v1192 = vadd.f32 %v909, %v1136
      %v1193 = vadd.f32 %v912, %v1139
      %v1194 = vadd.f32 %v917, %v1144
      %v1195 = vadd.f32 %v920, %v1147
      %v1196 = vadd.f32 %v925, %v1152
      %v1197 = vadd.f32 %v928, %v1155
      %v1198 = vadd.f32 %v933, %v1160
      %v1199 = vadd.f32 %v936, %v1163
      %v1200 = vadd.f32 %v941, %v1168
      %v1201 = vadd.f32 %v944, %v1171
      %v1202 = vadd.f32 %v949, %v1176
      %v1203 = vadd.f32 %v952, %v1179
      %v1204 = vadd.f32 %v957, %v1184
      %v1205 = vadd.f32 %v960, %v1187
      %v1206 = vpack.c.bf16 %v541, %v540
      %s1207 = scalar_lea.vmem %s3, 192
      %v1208 = vld [vmem:[%s1207] sm:$0xf]
      %v1209 = vld [vmem:[%s1207 + $0x4] sm:$0xf]
      %v1210 = vld [vmem:[%s1207 + $0x8] sm:$0xf]
      %v1211 = vld [vmem:[%s1207 + $0xc] sm:$0xf]
      %v1212 = vld [vmem:[%s1207 + $0x10] sm:$0xf]
      %v1213 = vld [vmem:[%s1207 + $0x14] sm:$0xf]
      %v1214 = vld [vmem:[%s1207 + $0x18] sm:$0xf]
      %v1215 = vld [vmem:[%s1207 + $0x1c] sm:$0xf]
      %v1216 = vld [vmem:[%s1207 + $0x20] sm:$0xf]
      %v1217 = vld [vmem:[%s1207 + $0x24] sm:$0xf]
      %v1218 = vld [vmem:[%s1207 + $0x28] sm:$0xf]
      %v1219 = vld [vmem:[%s1207 + $0x2c] sm:$0xf]
      %v1220 = vld [vmem:[%s1207 + $0x30] sm:$0xf]
      %v1221 = vld [vmem:[%s1207 + $0x34] sm:$0xf]
      %v1222 = vld [vmem:[%s1207 + $0x38] sm:$0xf]
      %v1223 = vld [vmem:[%s1207 + $0x3c] sm:$0xf]
      %v1240 = vunpack.c.l.b16 %v1208
      %v1241 = vunpack.c.l.b16 %v1209
      %v1242 = vunpack.c.l.b16 %v1210
      %v1243 = vunpack.c.l.b16 %v1211
      %v1244 = vunpack.c.l.b16 %v1212
      %v1245 = vunpack.c.l.b16 %v1213
      %v1246 = vunpack.c.l.b16 %v1214
      %v1247 = vunpack.c.l.b16 %v1215
      %v1248 = vunpack.c.l.b16 %v1216
      %v1249 = vunpack.c.l.b16 %v1217
      %v1250 = vunpack.c.l.b16 %v1218
      %v1251 = vunpack.c.l.b16 %v1219
      %v1252 = vunpack.c.l.b16 %v1220
      %v1253 = vunpack.c.l.b16 %v1221
      %v1254 = vunpack.c.l.b16 %v1222
      %v1255 = vunpack.c.l.b16 %v1223
      %v1256 = vpack.c.b16 %v1241, %v1240
      %v1257 = vpack.c.b16 %v1243, %v1242
      %v1258 = vpack.c.b16 %v1245, %v1244
      %v1259 = vpack.c.b16 %v1247, %v1246
      %v1260 = vpack.c.b16 %v1249, %v1248
      %v1261 = vpack.c.b16 %v1251, %v1250
      %v1262 = vpack.c.b16 %v1253, %v1252
      %v1263 = vpack.c.b16 %v1255, %v1254
      %1272 = vmatprep.subr.bf16.mxu0 0
      %1273 = vmatpush1.bf16.msra.mxu0 %v1263
      %1274 = vmatprep.subr.bf16.mxu0 0
      %1275 = vmatpush1.bf16.msra.mxu0 %v1262
      %1276 = vmatprep.subr.bf16.mxu0 0
      %1277 = vmatpush1.bf16.msra.mxu0 %v1261
      %1278 = vmatprep.subr.bf16.mxu0 0
      %1279 = vmatpush1.bf16.msra.mxu0 %v1260
      %1280 = vmatprep.subr.bf16.mxu0 0
      %1281 = vmatpush1.bf16.msra.mxu0 %v1259
      %1282 = vmatprep.subr.bf16.mxu0 0
      %1283 = vmatpush1.bf16.msra.mxu0 %v1258
      %1284 = vmatprep.subr.bf16.mxu0 0
      %1285 = vmatpush1.bf16.msra.mxu0 %v1257
      %1286 = vmatprep.subr.bf16.mxu0 0
      %1287 = vmatpush1.bf16.msra.mxu0 %v1256
      %1288 = vmatprep.subr.bf16.mxu0 0
      %1289 = vmatpush2.bf16.msra.mxu0 0
      %1290 = vmatprep.subr.bf16.mxu0 0
      %1291 = vmatpush2.bf16.msra.mxu0 0
      %1292 = vmatprep.subr.bf16.mxu0 0
      %1293 = vmatpush2.bf16.msra.mxu0 0
      %1294 = vmatprep.subr.bf16.mxu0 0
      %1295 = vmatpush2.bf16.msra.mxu0 0
      %1296 = vmatprep.subr.bf16.mxu0 0
      %1297 = vmatpush2.bf16.msra.mxu0 0
      %1298 = vmatprep.subr.bf16.mxu0 0
      %1299 = vmatpush2.bf16.msra.mxu0 0
      %1300 = vmatprep.subr.bf16.mxu0 0
      %1301 = vmatpush2.bf16.msra.mxu0 0
      %1302 = vmatprep.subr.bf16.mxu0 0
      %1303 = vmatpush2.bf16.msra.mxu0 0
      %1304 = vmatprep.mubr.bf16.mxu0 0
      %1305 = vmatmul.mubr.bf16.gmra.mxu0 %v544
      %v1306 = vpop.f32.mrf.mxu0
      %v1307 = vadd.f32 0.0, %v1306
      %v1308 = vpop.f32.mrf.mxu0
      %v1309 = vpop.f32.mrf.mxu0
      %v1310 = vadd.f32 0.0, %v1309
      %v1311 = vpop.f32.mrf.mxu0
      %1312 = vmatprep.mubr.bf16.mxu0 0
      %1313 = vmatmul.mubr.bf16.gmra.mxu0 %v545
      %v1314 = vpop.f32.mrf.mxu0
      %v1315 = vadd.f32 0.0, %v1314
      %v1316 = vpop.f32.mrf.mxu0
      %v1317 = vpop.f32.mrf.mxu0
      %v1318 = vadd.f32 0.0, %v1317
      %v1319 = vpop.f32.mrf.mxu0
      %1320 = vmatprep.mubr.bf16.mxu0 0
      %1321 = vmatmul.mubr.bf16.gmra.mxu0 %v546
      %v1322 = vpop.f32.mrf.mxu0
      %v1323 = vadd.f32 0.0, %v1322
      %v1324 = vpop.f32.mrf.mxu0
      %v1325 = vpop.f32.mrf.mxu0
      %v1326 = vadd.f32 0.0, %v1325
      %v1327 = vpop.f32.mrf.mxu0
      %1328 = vmatprep.mubr.bf16.mxu0 0
      %1329 = vmatmul.mubr.bf16.gmra.mxu0 %v547
      %v1330 = vpop.f32.mrf.mxu0
      %v1331 = vadd.f32 0.0, %v1330
      %v1332 = vpop.f32.mrf.mxu0
      %v1333 = vpop.f32.mrf.mxu0
      %v1334 = vadd.f32 0.0, %v1333
      %v1335 = vpop.f32.mrf.mxu0
      %1336 = vmatprep.mubr.bf16.mxu0 0
      %1337 = vmatmul.mubr.bf16.gmra.mxu0 %v548
      %v1338 = vpop.f32.mrf.mxu0
      %v1339 = vadd.f32 0.0, %v1338
      %v1340 = vpop.f32.mrf.mxu0
      %v1341 = vpop.f32.mrf.mxu0
      %v1342 = vadd.f32 0.0, %v1341
      %v1343 = vpop.f32.mrf.mxu0
      %1344 = vmatprep.mubr.bf16.mxu0 0
      %1345 = vmatmul.mubr.bf16.gmra.mxu0 %v549
      %v1346 = vpop.f32.mrf.mxu0
      %v1347 = vadd.f32 0.0, %v1346
      %v1348 = vpop.f32.mrf.mxu0
      %v1349 = vpop.f32.mrf.mxu0
      %v1350 = vadd.f32 0.0, %v1349
      %v1351 = vpop.f32.mrf.mxu0
      %1352 = vmatprep.mubr.bf16.mxu0 0
      %1353 = vmatmul.mubr.bf16.gmra.mxu0 %v550
      %v1354 = vpop.f32.mrf.mxu0
      %v1355 = vadd.f32 0.0, %v1354
      %v1356 = vpop.f32.mrf.mxu0
      %v1357 = vpop.f32.mrf.mxu0
      %v1358 = vadd.f32 0.0, %v1357
      %v1359 = vpop.f32.mrf.mxu0
      %1360 = vmatprep.mubr.bf16.mxu0 0
      %1361 = vmatmul.mubr.bf16.gmra.mxu0 %v1206
      %v1362 = vpop.f32.mrf.mxu0
      %v1363 = vadd.f32 0.0, %v1362
      %v1364 = vpop.f32.mrf.mxu0
      %v1365 = vpop.f32.mrf.mxu0
      %v1366 = vadd.f32 0.0, %v1365
      %v1367 = vpop.f32.mrf.mxu0
      %1368 = vdwg.mxu0
      %v1369 = vadd.f32 %v1190, %v1307
      %v1370 = vadd.f32 %v1191, %v1310
      %v1371 = vadd.f32 %v1192, %v1315
      %v1372 = vadd.f32 %v1193, %v1318
      %v1373 = vadd.f32 %v1194, %v1323
      %v1374 = vadd.f32 %v1195, %v1326
      %v1375 = vadd.f32 %v1196, %v1331
      %v1376 = vadd.f32 %v1197, %v1334
      %v1377 = vadd.f32 %v1198, %v1339
      %v1378 = vadd.f32 %v1199, %v1342
      %v1379 = vadd.f32 %v1200, %v1347
      %v1380 = vadd.f32 %v1201, %v1350
      %v1381 = vadd.f32 %v1202, %v1355
      %v1382 = vadd.f32 %v1203, %v1358
      %v1383 = vadd.f32 %v1204, %v1363
      %v1384 = vadd.f32 %v1205, %v1366
      %v1388 = vrot.slane %v540, 1
      %v1389 = vrot.slane %v541, 1
      %v1390 = vsel %vm591, %v1388, %v1389
      %v1391 = vrot.slane %v542, 1
      %v1392 = vsel %vm591, %v1389, %v1391
      %v1395 = vpack.c.bf16 %v1392, %v1390
      %s1396 = scalar_lea.vmem %s3, 256
      %v1397 = vld [vmem:[%s1396] sm:$0xf]
      %v1398 = vld [vmem:[%s1396 + $0x4] sm:$0xf]
      %v1399 = vld [vmem:[%s1396 + $0x8] sm:$0xf]
      %v1400 = vld [vmem:[%s1396 + $0xc] sm:$0xf]
      %v1401 = vld [vmem:[%s1396 + $0x10] sm:$0xf]
      %v1402 = vld [vmem:[%s1396 + $0x14] sm:$0xf]
      %v1403 = vld [vmem:[%s1396 + $0x18] sm:$0xf]
      %v1404 = vld [vmem:[%s1396 + $0x1c] sm:$0xf]
      %v1405 = vld [vmem:[%s1396 + $0x20] sm:$0xf]
      %v1406 = vld [vmem:[%s1396 + $0x24] sm:$0xf]
      %v1407 = vld [vmem:[%s1396 + $0x28] sm:$0xf]
      %v1408 = vld [vmem:[%s1396 + $0x2c] sm:$0xf]
      %v1409 = vld [vmem:[%s1396 + $0x30] sm:$0xf]
      %v1410 = vld [vmem:[%s1396 + $0x34] sm:$0xf]
      %v1411 = vld [vmem:[%s1396 + $0x38] sm:$0xf]
      %v1412 = vld [vmem:[%s1396 + $0x3c] sm:$0xf]
      %v1429 = vunpack.c.l.b16 %v1397
      %v1430 = vunpack.c.l.b16 %v1398
      %v1431 = vunpack.c.l.b16 %v1399
      %v1432 = vunpack.c.l.b16 %v1400
      %v1433 = vunpack.c.l.b16 %v1401
      %v1434 = vunpack.c.l.b16 %v1402
      %v1435 = vunpack.c.l.b16 %v1403
      %v1436 = vunpack.c.l.b16 %v1404
      %v1437 = vunpack.c.l.b16 %v1405
      %v1438 = vunpack.c.l.b16 %v1406
      %v1439 = vunpack.c.l.b16 %v1407
      %v1440 = vunpack.c.l.b16 %v1408
      %v1441 = vunpack.c.l.b16 %v1409
      %v1442 = vunpack.c.l.b16 %v1410
      %v1443 = vunpack.c.l.b16 %v1411
      %v1444 = vunpack.c.l.b16 %v1412
      %v1445 = vpack.c.b16 %v1430, %v1429
      %v1446 = vpack.c.b16 %v1432, %v1431
      %v1447 = vpack.c.b16 %v1434, %v1433
      %v1448 = vpack.c.b16 %v1436, %v1435
      %v1449 = vpack.c.b16 %v1438, %v1437
      %v1450 = vpack.c.b16 %v1440, %v1439
      %v1451 = vpack.c.b16 %v1442, %v1441
      %v1452 = vpack.c.b16 %v1444, %v1443
      %1461 = vmatprep.subr.bf16.mxu0 0
      %1462 = vmatpush1.bf16.msra.mxu0 %v1452
      %1463 = vmatprep.subr.bf16.mxu0 0
      %1464 = vmatpush1.bf16.msra.mxu0 %v1451
      %1465 = vmatprep.subr.bf16.mxu0 0
      %1466 = vmatpush1.bf16.msra.mxu0 %v1450
      %1467 = vmatprep.subr.bf16.mxu0 0
      %1468 = vmatpush1.bf16.msra.mxu0 %v1449
      %1469 = vmatprep.subr.bf16.mxu0 0
      %1470 = vmatpush1.bf16.msra.mxu0 %v1448
      %1471 = vmatprep.subr.bf16.mxu0 0
      %1472 = vmatpush1.bf16.msra.mxu0 %v1447
      %1473 = vmatprep.subr.bf16.mxu0 0
      %1474 = vmatpush1.bf16.msra.mxu0 %v1446
      %1475 = vmatprep.subr.bf16.mxu0 0
      %1476 = vmatpush1.bf16.msra.mxu0 %v1445
      %1477 = vmatprep.subr.bf16.mxu0 0
      %1478 = vmatpush2.bf16.msra.mxu0 0
      %1479 = vmatprep.subr.bf16.mxu0 0
      %1480 = vmatpush2.bf16.msra.mxu0 0
      %1481 = vmatprep.subr.bf16.mxu0 0
      %1482 = vmatpush2.bf16.msra.mxu0 0
      %1483 = vmatprep.subr.bf16.mxu0 0
      %1484 = vmatpush2.bf16.msra.mxu0 0
      %1485 = vmatprep.subr.bf16.mxu0 0
      %1486 = vmatpush2.bf16.msra.mxu0 0
      %1487 = vmatprep.subr.bf16.mxu0 0
      %1488 = vmatpush2.bf16.msra.mxu0 0
      %1489 = vmatprep.subr.bf16.mxu0 0
      %1490 = vmatpush2.bf16.msra.mxu0 0
      %1491 = vmatprep.subr.bf16.mxu0 0
      %1492 = vmatpush2.bf16.msra.mxu0 0
      %1493 = vmatprep.mubr.bf16.mxu0 0
      %1494 = vmatmul.mubr.bf16.gmra.mxu0 %v649
      %v1495 = vpop.f32.mrf.mxu0
      %v1496 = vadd.f32 0.0, %v1495
      %v1497 = vpop.f32.mrf.mxu0
      %v1498 = vpop.f32.mrf.mxu0
      %v1499 = vadd.f32 0.0, %v1498
      %v1500 = vpop.f32.mrf.mxu0
      %1501 = vmatprep.mubr.bf16.mxu0 0
      %1502 = vmatmul.mubr.bf16.gmra.mxu0 %v650
      %v1503 = vpop.f32.mrf.mxu0
      %v1504 = vadd.f32 0.0, %v1503
      %v1505 = vpop.f32.mrf.mxu0
      %v1506 = vpop.f32.mrf.mxu0
      %v1507 = vadd.f32 0.0, %v1506
      %v1508 = vpop.f32.mrf.mxu0
      %1509 = vmatprep.mubr.bf16.mxu0 0
      %1510 = vmatmul.mubr.bf16.gmra.mxu0 %v651
      %v1511 = vpop.f32.mrf.mxu0
      %v1512 = vadd.f32 0.0, %v1511
      %v1513 = vpop.f32.mrf.mxu0
      %v1514 = vpop.f32.mrf.mxu0
      %v1515 = vadd.f32 0.0, %v1514
      %v1516 = vpop.f32.mrf.mxu0
      %1517 = vmatprep.mubr.bf16.mxu0 0
      %1518 = vmatmul.mubr.bf16.gmra.mxu0 %v652
      %v1519 = vpop.f32.mrf.mxu0
      %v1520 = vadd.f32 0.0, %v1519
      %v1521 = vpop.f32.mrf.mxu0
      %v1522 = vpop.f32.mrf.mxu0
      %v1523 = vadd.f32 0.0, %v1522
      %v1524 = vpop.f32.mrf.mxu0
      %1525 = vmatprep.mubr.bf16.mxu0 0
      %1526 = vmatmul.mubr.bf16.gmra.mxu0 %v653
      %v1527 = vpop.f32.mrf.mxu0
      %v1528 = vadd.f32 0.0, %v1527
      %v1529 = vpop.f32.mrf.mxu0
      %v1530 = vpop.f32.mrf.mxu0
      %v1531 = vadd.f32 0.0, %v1530
      %v1532 = vpop.f32.mrf.mxu0
      %1533 = vmatprep.mubr.bf16.mxu0 0
      %1534 = vmatmul.mubr.bf16.gmra.mxu0 %v654
      %v1535 = vpop.f32.mrf.mxu0
      %v1536 = vadd.f32 0.0, %v1535
      %v1537 = vpop.f32.mrf.mxu0
      %v1538 = vpop.f32.mrf.mxu0
      %v1539 = vadd.f32 0.0, %v1538
      %v1540 = vpop.f32.mrf.mxu0
      %1541 = vmatprep.mubr.bf16.mxu0 0
      %1542 = vmatmul.mubr.bf16.gmra.mxu0 %v655
      %v1543 = vpop.f32.mrf.mxu0
      %v1544 = vadd.f32 0.0, %v1543
      %v1545 = vpop.f32.mrf.mxu0
      %v1546 = vpop.f32.mrf.mxu0
      %v1547 = vadd.f32 0.0, %v1546
      %v1548 = vpop.f32.mrf.mxu0
      %1549 = vmatprep.mubr.bf16.mxu0 0
      %1550 = vmatmul.mubr.bf16.gmra.mxu0 %v1395
      %v1551 = vpop.f32.mrf.mxu0
      %v1552 = vadd.f32 0.0, %v1551
      %v1553 = vpop.f32.mrf.mxu0
      %v1554 = vpop.f32.mrf.mxu0
      %v1555 = vadd.f32 0.0, %v1554
      %v1556 = vpop.f32.mrf.mxu0
      %1557 = vdwg.mxu0
      %v1558 = vadd.f32 %v1369, %v1496
      %v1559 = vadd.f32 %v1370, %v1499
      %v1560 = vadd.f32 %v1371, %v1504
      %v1561 = vadd.f32 %v1372, %v1507
      %v1562 = vadd.f32 %v1373, %v1512
      %v1563 = vadd.f32 %v1374, %v1515
      %v1564 = vadd.f32 %v1375, %v1520
      %v1565 = vadd.f32 %v1376, %v1523
      %v1566 = vadd.f32 %v1377, %v1528
      %v1567 = vadd.f32 %v1378, %v1531
      %v1568 = vadd.f32 %v1379, %v1536
      %v1569 = vadd.f32 %v1380, %v1539
      %v1570 = vadd.f32 %v1381, %v1544
      %v1571 = vadd.f32 %v1382, %v1547
      %v1572 = vadd.f32 %v1383, %v1552
      %v1573 = vadd.f32 %v1384, %v1555
      %v1574 = vrot.slane %v540, 2
      %v1575 = vrot.slane %v541, 2
      %v1576 = vsel %vm963, %v1574, %v1575
      %v1577 = vrot.slane %v542, 2
      %v1578 = vsel %vm963, %v1575, %v1577
      %v1581 = vpack.c.bf16 %v1578, %v1576
      %s1582 = scalar_lea.vmem %s3, 320
      %v1583 = vld [vmem:[%s1582] sm:$0xf]
      %v1584 = vld [vmem:[%s1582 + $0x4] sm:$0xf]
      %v1585 = vld [vmem:[%s1582 + $0x8] sm:$0xf]
      %v1586 = vld [vmem:[%s1582 + $0xc] sm:$0xf]
      %v1587 = vld [vmem:[%s1582 + $0x10] sm:$0xf]
      %v1588 = vld [vmem:[%s1582 + $0x14] sm:$0xf]
      %v1589 = vld [vmem:[%s1582 + $0x18] sm:$0xf]
      %v1590 = vld [vmem:[%s1582 + $0x1c] sm:$0xf]
      %v1591 = vld [vmem:[%s1582 + $0x20] sm:$0xf]
      %v1592 = vld [vmem:[%s1582 + $0x24] sm:$0xf]
      %v1593 = vld [vmem:[%s1582 + $0x28] sm:$0xf]
      %v1594 = vld [vmem:[%s1582 + $0x2c] sm:$0xf]
      %v1595 = vld [vmem:[%s1582 + $0x30] sm:$0xf]
      %v1596 = vld [vmem:[%s1582 + $0x34] sm:$0xf]
      %v1597 = vld [vmem:[%s1582 + $0x38] sm:$0xf]
      %v1598 = vld [vmem:[%s1582 + $0x3c] sm:$0xf]
      %v1615 = vunpack.c.l.b16 %v1583
      %v1616 = vunpack.c.l.b16 %v1584
      %v1617 = vunpack.c.l.b16 %v1585
      %v1618 = vunpack.c.l.b16 %v1586
      %v1619 = vunpack.c.l.b16 %v1587
      %v1620 = vunpack.c.l.b16 %v1588
      %v1621 = vunpack.c.l.b16 %v1589
      %v1622 = vunpack.c.l.b16 %v1590
      %v1623 = vunpack.c.l.b16 %v1591
      %v1624 = vunpack.c.l.b16 %v1592
      %v1625 = vunpack.c.l.b16 %v1593
      %v1626 = vunpack.c.l.b16 %v1594
      %v1627 = vunpack.c.l.b16 %v1595
      %v1628 = vunpack.c.l.b16 %v1596
      %v1629 = vunpack.c.l.b16 %v1597
      %v1630 = vunpack.c.l.b16 %v1598
      %v1631 = vpack.c.b16 %v1616, %v1615
      %v1632 = vpack.c.b16 %v1618, %v1617
      %v1633 = vpack.c.b16 %v1620, %v1619
      %v1634 = vpack.c.b16 %v1622, %v1621
      %v1635 = vpack.c.b16 %v1624, %v1623
      %v1636 = vpack.c.b16 %v1626, %v1625
      %v1637 = vpack.c.b16 %v1628, %v1627
      %v1638 = vpack.c.b16 %v1630, %v1629
      %1647 = vmatprep.subr.bf16.mxu0 0
      %1648 = vmatpush1.bf16.msra.mxu0 %v1638
      %1649 = vmatprep.subr.bf16.mxu0 0
      %1650 = vmatpush1.bf16.msra.mxu0 %v1637
      %1651 = vmatprep.subr.bf16.mxu0 0
      %1652 = vmatpush1.bf16.msra.mxu0 %v1636
      %1653 = vmatprep.subr.bf16.mxu0 0
      %1654 = vmatpush1.bf16.msra.mxu0 %v1635
      %1655 = vmatprep.subr.bf16.mxu0 0
      %1656 = vmatpush1.bf16.msra.mxu0 %v1634
      %1657 = vmatprep.subr.bf16.mxu0 0
      %1658 = vmatpush1.bf16.msra.mxu0 %v1633
      %1659 = vmatprep.subr.bf16.mxu0 0
      %1660 = vmatpush1.bf16.msra.mxu0 %v1632
      %1661 = vmatprep.subr.bf16.mxu0 0
      %1662 = vmatpush1.bf16.msra.mxu0 %v1631
      %1663 = vmatprep.subr.bf16.mxu0 0
      %1664 = vmatpush2.bf16.msra.mxu0 0
      %1665 = vmatprep.subr.bf16.mxu0 0
      %1666 = vmatpush2.bf16.msra.mxu0 0
      %1667 = vmatprep.subr.bf16.mxu0 0
      %1668 = vmatpush2.bf16.msra.mxu0 0
      %1669 = vmatprep.subr.bf16.mxu0 0
      %1670 = vmatpush2.bf16.msra.mxu0 0
      %1671 = vmatprep.subr.bf16.mxu0 0
      %1672 = vmatpush2.bf16.msra.mxu0 0
      %1673 = vmatprep.subr.bf16.mxu0 0
      %1674 = vmatpush2.bf16.msra.mxu0 0
      %1675 = vmatprep.subr.bf16.mxu0 0
      %1676 = vmatpush2.bf16.msra.mxu0 0
      %1677 = vmatprep.subr.bf16.mxu0 0
      %1678 = vmatpush2.bf16.msra.mxu0 0
      %1679 = vmatprep.mubr.bf16.mxu0 0
      %1680 = vmatmul.mubr.bf16.gmra.mxu0 %v1021
      %v1681 = vpop.f32.mrf.mxu0
      %v1682 = vadd.f32 0.0, %v1681
      %v1683 = vpop.f32.mrf.mxu0
      %v1684 = vpop.f32.mrf.mxu0
      %v1685 = vadd.f32 0.0, %v1684
      %v1686 = vpop.f32.mrf.mxu0
      %1687 = vmatprep.mubr.bf16.mxu0 0
      %1688 = vmatmul.mubr.bf16.gmra.mxu0 %v1022
      %v1689 = vpop.f32.mrf.mxu0
      %v1690 = vadd.f32 0.0, %v1689
      %v1691 = vpop.f32.mrf.mxu0
      %v1692 = vpop.f32.mrf.mxu0
      %v1693 = vadd.f32 0.0, %v1692
      %v1694 = vpop.f32.mrf.mxu0
      %1695 = vmatprep.mubr.bf16.mxu0 0
      %1696 = vmatmul.mubr.bf16.gmra.mxu0 %v1023
      %v1697 = vpop.f32.mrf.mxu0
      %v1698 = vadd.f32 0.0, %v1697
      %v1699 = vpop.f32.mrf.mxu0
      %v1700 = vpop.f32.mrf.mxu0
      %v1701 = vadd.f32 0.0, %v1700
      %v1702 = vpop.f32.mrf.mxu0
      %1703 = vmatprep.mubr.bf16.mxu0 0
      %1704 = vmatmul.mubr.bf16.gmra.mxu0 %v1024
      %v1705 = vpop.f32.mrf.mxu0
      %v1706 = vadd.f32 0.0, %v1705
      %v1707 = vpop.f32.mrf.mxu0
      %v1708 = vpop.f32.mrf.mxu0
      %v1709 = vadd.f32 0.0, %v1708
      %v1710 = vpop.f32.mrf.mxu0
      %1711 = vmatprep.mubr.bf16.mxu0 0
      %1712 = vmatmul.mubr.bf16.gmra.mxu0 %v1025
      %v1713 = vpop.f32.mrf.mxu0
      %v1714 = vadd.f32 0.0, %v1713
      %v1715 = vpop.f32.mrf.mxu0
      %v1716 = vpop.f32.mrf.mxu0
      %v1717 = vadd.f32 0.0, %v1716
      %v1718 = vpop.f32.mrf.mxu0
      %1719 = vmatprep.mubr.bf16.mxu0 0
      %1720 = vmatmul.mubr.bf16.gmra.mxu0 %v1026
      %v1721 = vpop.f32.mrf.mxu0
      %v1722 = vadd.f32 0.0, %v1721
      %v1723 = vpop.f32.mrf.mxu0
      %v1724 = vpop.f32.mrf.mxu0
      %v1725 = vadd.f32 0.0, %v1724
      %v1726 = vpop.f32.mrf.mxu0
      %1727 = vmatprep.mubr.bf16.mxu0 0
      %1728 = vmatmul.mubr.bf16.gmra.mxu0 %v1027
      %v1729 = vpop.f32.mrf.mxu0
      %v1730 = vadd.f32 0.0, %v1729
      %v1731 = vpop.f32.mrf.mxu0
      %v1732 = vpop.f32.mrf.mxu0
      %v1733 = vadd.f32 0.0, %v1732
      %v1734 = vpop.f32.mrf.mxu0
      %1735 = vmatprep.mubr.bf16.mxu0 0
      %1736 = vmatmul.mubr.bf16.gmra.mxu0 %v1581
      %v1737 = vpop.f32.mrf.mxu0
      %v1738 = vadd.f32 0.0, %v1737
      %v1739 = vpop.f32.mrf.mxu0
      %v1740 = vpop.f32.mrf.mxu0
      %v1741 = vadd.f32 0.0, %v1740
      %v1742 = vpop.f32.mrf.mxu0
      %1743 = vdwg.mxu0
      %v1744 = vadd.f32 %v1558, %v1682
      %v1745 = vadd.f32 %v1559, %v1685
      %v1746 = vadd.f32 %v1560, %v1690
      %v1747 = vadd.f32 %v1561, %v1693
      %v1748 = vadd.f32 %v1562, %v1698
      %v1749 = vadd.f32 %v1563, %v1701
      %v1750 = vadd.f32 %v1564, %v1706
      %v1751 = vadd.f32 %v1565, %v1709
      %v1752 = vadd.f32 %v1566, %v1714
      %v1753 = vadd.f32 %v1567, %v1717
      %v1754 = vadd.f32 %v1568, %v1722
      %v1755 = vadd.f32 %v1569, %v1725
      %v1756 = vadd.f32 %v1570, %v1730
      %v1757 = vadd.f32 %v1571, %v1733
      %v1758 = vadd.f32 %v1572, %v1738
      %v1759 = vadd.f32 %v1573, %v1741
      %v1760 = vpack.c.bf16 %v493, %v492
      %s1761 = scalar_lea.vmem %s3, 384
      %v1762 = vld [vmem:[%s1761] sm:$0xf]
      %v1763 = vld [vmem:[%s1761 + $0x4] sm:$0xf]
      %v1764 = vld [vmem:[%s1761 + $0x8] sm:$0xf]
      %v1765 = vld [vmem:[%s1761 + $0xc] sm:$0xf]
      %v1766 = vld [vmem:[%s1761 + $0x10] sm:$0xf]
      %v1767 = vld [vmem:[%s1761 + $0x14] sm:$0xf]
      %v1768 = vld [vmem:[%s1761 + $0x18] sm:$0xf]
      %v1769 = vld [vmem:[%s1761 + $0x1c] sm:$0xf]
      %v1770 = vld [vmem:[%s1761 + $0x20] sm:$0xf]
      %v1771 = vld [vmem:[%s1761 + $0x24] sm:$0xf]
      %v1772 = vld [vmem:[%s1761 + $0x28] sm:$0xf]
      %v1773 = vld [vmem:[%s1761 + $0x2c] sm:$0xf]
      %v1774 = vld [vmem:[%s1761 + $0x30] sm:$0xf]
      %v1775 = vld [vmem:[%s1761 + $0x34] sm:$0xf]
      %v1776 = vld [vmem:[%s1761 + $0x38] sm:$0xf]
      %v1777 = vld [vmem:[%s1761 + $0x3c] sm:$0xf]
      %v1794 = vunpack.c.l.b16 %v1762
      %v1795 = vunpack.c.l.b16 %v1763
      %v1796 = vunpack.c.l.b16 %v1764
      %v1797 = vunpack.c.l.b16 %v1765
      %v1798 = vunpack.c.l.b16 %v1766
      %v1799 = vunpack.c.l.b16 %v1767
      %v1800 = vunpack.c.l.b16 %v1768
      %v1801 = vunpack.c.l.b16 %v1769
      %v1802 = vunpack.c.l.b16 %v1770
      %v1803 = vunpack.c.l.b16 %v1771
      %v1804 = vunpack.c.l.b16 %v1772
      %v1805 = vunpack.c.l.b16 %v1773
      %v1806 = vunpack.c.l.b16 %v1774
      %v1807 = vunpack.c.l.b16 %v1775
      %v1808 = vunpack.c.l.b16 %v1776
      %v1809 = vunpack.c.l.b16 %v1777
      %v1810 = vpack.c.b16 %v1795, %v1794
      %v1811 = vpack.c.b16 %v1797, %v1796
      %v1812 = vpack.c.b16 %v1799, %v1798
      %v1813 = vpack.c.b16 %v1801, %v1800
      %v1814 = vpack.c.b16 %v1803, %v1802
      %v1815 = vpack.c.b16 %v1805, %v1804
      %v1816 = vpack.c.b16 %v1807, %v1806
      %v1817 = vpack.c.b16 %v1809, %v1808
      %1826 = vmatprep.subr.bf16.mxu0 0
      %1827 = vmatpush1.bf16.msra.mxu0 %v1817
      %1828 = vmatprep.subr.bf16.mxu0 0
      %1829 = vmatpush1.bf16.msra.mxu0 %v1816
      %1830 = vmatprep.subr.bf16.mxu0 0
      %1831 = vmatpush1.bf16.msra.mxu0 %v1815
      %1832 = vmatprep.subr.bf16.mxu0 0
      %1833 = vmatpush1.bf16.msra.mxu0 %v1814
      %1834 = vmatprep.subr.bf16.mxu0 0
      %1835 = vmatpush1.bf16.msra.mxu0 %v1813
      %1836 = vmatprep.subr.bf16.mxu0 0
      %1837 = vmatpush1.bf16.msra.mxu0 %v1812
      %1838 = vmatprep.subr.bf16.mxu0 0
      %1839 = vmatpush1.bf16.msra.mxu0 %v1811
      %1840 = vmatprep.subr.bf16.mxu0 0
      %1841 = vmatpush1.bf16.msra.mxu0 %v1810
      %1842 = vmatprep.subr.bf16.mxu0 0
      %1843 = vmatpush2.bf16.msra.mxu0 0
      %1844 = vmatprep.subr.bf16.mxu0 0
      %1845 = vmatpush2.bf16.msra.mxu0 0
      %1846 = vmatprep.subr.bf16.mxu0 0
      %1847 = vmatpush2.bf16.msra.mxu0 0
      %1848 = vmatprep.subr.bf16.mxu0 0
      %1849 = vmatpush2.bf16.msra.mxu0 0
      %1850 = vmatprep.subr.bf16.mxu0 0
      %1851 = vmatpush2.bf16.msra.mxu0 0
      %1852 = vmatprep.subr.bf16.mxu0 0
      %1853 = vmatpush2.bf16.msra.mxu0 0
      %1854 = vmatprep.subr.bf16.mxu0 0
      %1855 = vmatpush2.bf16.msra.mxu0 0
      %1856 = vmatprep.subr.bf16.mxu0 0
      %1857 = vmatpush2.bf16.msra.mxu0 0
      %1858 = vmatprep.mubr.bf16.mxu0 0
      %1859 = vmatmul.mubr.bf16.gmra.mxu0 %v545
      %v1860 = vpop.f32.mrf.mxu0
      %v1861 = vadd.f32 0.0, %v1860
      %v1862 = vpop.f32.mrf.mxu0
      %v1863 = vpop.f32.mrf.mxu0
      %v1864 = vadd.f32 0.0, %v1863
      %v1865 = vpop.f32.mrf.mxu0
      %1866 = vmatprep.mubr.bf16.mxu0 0
      %1867 = vmatmul.mubr.bf16.gmra.mxu0 %v546
      %v1868 = vpop.f32.mrf.mxu0
      %v1869 = vadd.f32 0.0, %v1868
      %v1870 = vpop.f32.mrf.mxu0
      %v1871 = vpop.f32.mrf.mxu0
      %v1872 = vadd.f32 0.0, %v1871
      %v1873 = vpop.f32.mrf.mxu0
      %1874 = vmatprep.mubr.bf16.mxu0 0
      %1875 = vmatmul.mubr.bf16.gmra.mxu0 %v547
      %v1876 = vpop.f32.mrf.mxu0
      %v1877 = vadd.f32 0.0, %v1876
      %v1878 = vpop.f32.mrf.mxu0
      %v1879 = vpop.f32.mrf.mxu0
      %v1880 = vadd.f32 0.0, %v1879
      %v1881 = vpop.f32.mrf.mxu0
      %1882 = vmatprep.mubr.bf16.mxu0 0
      %1883 = vmatmul.mubr.bf16.gmra.mxu0 %v548
      %v1884 = vpop.f32.mrf.mxu0
      %v1885 = vadd.f32 0.0, %v1884
      %v1886 = vpop.f32.mrf.mxu0
      %v1887 = vpop.f32.mrf.mxu0
      %v1888 = vadd.f32 0.0, %v1887
      %v1889 = vpop.f32.mrf.mxu0
      %1890 = vmatprep.mubr.bf16.mxu0 0
      %1891 = vmatmul.mubr.bf16.gmra.mxu0 %v549
      %v1892 = vpop.f32.mrf.mxu0
      %v1893 = vadd.f32 0.0, %v1892
      %v1894 = vpop.f32.mrf.mxu0
      %v1895 = vpop.f32.mrf.mxu0
      %v1896 = vadd.f32 0.0, %v1895
      %v1897 = vpop.f32.mrf.mxu0
      %1898 = vmatprep.mubr.bf16.mxu0 0
      %1899 = vmatmul.mubr.bf16.gmra.mxu0 %v550
      %v1900 = vpop.f32.mrf.mxu0
      %v1901 = vadd.f32 0.0, %v1900
      %v1902 = vpop.f32.mrf.mxu0
      %v1903 = vpop.f32.mrf.mxu0
      %v1904 = vadd.f32 0.0, %v1903
      %v1905 = vpop.f32.mrf.mxu0
      %1906 = vmatprep.mubr.bf16.mxu0 0
      %1907 = vmatmul.mubr.bf16.gmra.mxu0 %v1206
      %v1908 = vpop.f32.mrf.mxu0
      %v1909 = vadd.f32 0.0, %v1908
      %v1910 = vpop.f32.mrf.mxu0
      %v1911 = vpop.f32.mrf.mxu0
      %v1912 = vadd.f32 0.0, %v1911
      %v1913 = vpop.f32.mrf.mxu0
      %1914 = vmatprep.mubr.bf16.mxu0 0
      %1915 = vmatmul.mubr.bf16.gmra.mxu0 %v1760
      %v1916 = vpop.f32.mrf.mxu0
      %v1917 = vadd.f32 0.0, %v1916
      %v1918 = vpop.f32.mrf.mxu0
      %v1919 = vpop.f32.mrf.mxu0
      %v1920 = vadd.f32 0.0, %v1919
      %v1921 = vpop.f32.mrf.mxu0
      %1922 = vdwg.mxu0
      %v1923 = vadd.f32 %v1744, %v1861
      %v1924 = vadd.f32 %v1745, %v1864
      %v1925 = vadd.f32 %v1746, %v1869
      %v1926 = vadd.f32 %v1747, %v1872
      %v1927 = vadd.f32 %v1748, %v1877
      %v1928 = vadd.f32 %v1749, %v1880
      %v1929 = vadd.f32 %v1750, %v1885
      %v1930 = vadd.f32 %v1751, %v1888
      %v1931 = vadd.f32 %v1752, %v1893
      %v1932 = vadd.f32 %v1753, %v1896
      %v1933 = vadd.f32 %v1754, %v1901
      %v1934 = vadd.f32 %v1755, %v1904
      %v1935 = vadd.f32 %v1756, %v1909
      %v1936 = vadd.f32 %v1757, %v1912
      %v1937 = vadd.f32 %v1758, %v1917
      %v1938 = vadd.f32 %v1759, %v1920
      %v1942 = vrot.slane %v492, 1
      %v1943 = vrot.slane %v493, 1
      %v1944 = vsel %vm591, %v1942, %v1943
      %v1945 = vrot.slane %v494, 1
      %v1946 = vsel %vm591, %v1943, %v1945
      %v1949 = vpack.c.bf16 %v1946, %v1944
      %s1950 = scalar_lea.vmem %s3, 448
      %v1951 = vld [vmem:[%s1950] sm:$0xf]
      %v1952 = vld [vmem:[%s1950 + $0x4] sm:$0xf]
      %v1953 = vld [vmem:[%s1950 + $0x8] sm:$0xf]
      %v1954 = vld [vmem:[%s1950 + $0xc] sm:$0xf]
      %v1955 = vld [vmem:[%s1950 + $0x10] sm:$0xf]
      %v1956 = vld [vmem:[%s1950 + $0x14] sm:$0xf]
      %v1957 = vld [vmem:[%s1950 + $0x18] sm:$0xf]
      %v1958 = vld [vmem:[%s1950 + $0x1c] sm:$0xf]
      %v1959 = vld [vmem:[%s1950 + $0x20] sm:$0xf]
      %v1960 = vld [vmem:[%s1950 + $0x24] sm:$0xf]
      %v1961 = vld [vmem:[%s1950 + $0x28] sm:$0xf]
      %v1962 = vld [vmem:[%s1950 + $0x2c] sm:$0xf]
      %v1963 = vld [vmem:[%s1950 + $0x30] sm:$0xf]
      %v1964 = vld [vmem:[%s1950 + $0x34] sm:$0xf]
      %v1965 = vld [vmem:[%s1950 + $0x38] sm:$0xf]
      %v1966 = vld [vmem:[%s1950 + $0x3c] sm:$0xf]
      %v1983 = vunpack.c.l.b16 %v1951
      %v1984 = vunpack.c.l.b16 %v1952
      %v1985 = vunpack.c.l.b16 %v1953
      %v1986 = vunpack.c.l.b16 %v1954
      %v1987 = vunpack.c.l.b16 %v1955
      %v1988 = vunpack.c.l.b16 %v1956
      %v1989 = vunpack.c.l.b16 %v1957
      %v1990 = vunpack.c.l.b16 %v1958
      %v1991 = vunpack.c.l.b16 %v1959
      %v1992 = vunpack.c.l.b16 %v1960
      %v1993 = vunpack.c.l.b16 %v1961
      %v1994 = vunpack.c.l.b16 %v1962
      %v1995 = vunpack.c.l.b16 %v1963
      %v1996 = vunpack.c.l.b16 %v1964
      %v1997 = vunpack.c.l.b16 %v1965
      %v1998 = vunpack.c.l.b16 %v1966
      %v1999 = vpack.c.b16 %v1984, %v1983
      %v2000 = vpack.c.b16 %v1986, %v1985
      %v2001 = vpack.c.b16 %v1988, %v1987
      %v2002 = vpack.c.b16 %v1990, %v1989
      %v2003 = vpack.c.b16 %v1992, %v1991
      %v2004 = vpack.c.b16 %v1994, %v1993
      %v2005 = vpack.c.b16 %v1996, %v1995
      %v2006 = vpack.c.b16 %v1998, %v1997
      %2015 = vmatprep.subr.bf16.mxu0 0
      %2016 = vmatpush1.bf16.msra.mxu0 %v2006
      %2017 = vmatprep.subr.bf16.mxu0 0
      %2018 = vmatpush1.bf16.msra.mxu0 %v2005
      %2019 = vmatprep.subr.bf16.mxu0 0
      %2020 = vmatpush1.bf16.msra.mxu0 %v2004
      %2021 = vmatprep.subr.bf16.mxu0 0
      %2022 = vmatpush1.bf16.msra.mxu0 %v2003
      %2023 = vmatprep.subr.bf16.mxu0 0
      %2024 = vmatpush1.bf16.msra.mxu0 %v2002
      %2025 = vmatprep.subr.bf16.mxu0 0
      %2026 = vmatpush1.bf16.msra.mxu0 %v2001
      %2027 = vmatprep.subr.bf16.mxu0 0
      %2028 = vmatpush1.bf16.msra.mxu0 %v2000
      %2029 = vmatprep.subr.bf16.mxu0 0
      %2030 = vmatpush1.bf16.msra.mxu0 %v1999
      %2031 = vmatprep.subr.bf16.mxu0 0
      %2032 = vmatpush2.bf16.msra.mxu0 0
      %2033 = vmatprep.subr.bf16.mxu0 0
      %2034 = vmatpush2.bf16.msra.mxu0 0
      %2035 = vmatprep.subr.bf16.mxu0 0
      %2036 = vmatpush2.bf16.msra.mxu0 0
      %2037 = vmatprep.subr.bf16.mxu0 0
      %2038 = vmatpush2.bf16.msra.mxu0 0
      %2039 = vmatprep.subr.bf16.mxu0 0
      %2040 = vmatpush2.bf16.msra.mxu0 0
      %2041 = vmatprep.subr.bf16.mxu0 0
      %2042 = vmatpush2.bf16.msra.mxu0 0
      %2043 = vmatprep.subr.bf16.mxu0 0
      %2044 = vmatpush2.bf16.msra.mxu0 0
      %2045 = vmatprep.subr.bf16.mxu0 0
      %2046 = vmatpush2.bf16.msra.mxu0 0
      %2047 = vmatprep.mubr.bf16.mxu0 0
      %2048 = vmatmul.mubr.bf16.gmra.mxu0 %v650
      %v2049 = vpop.f32.mrf.mxu0
      %v2050 = vadd.f32 0.0, %v2049
      %v2051 = vpop.f32.mrf.mxu0
      %v2052 = vpop.f32.mrf.mxu0
      %v2053 = vadd.f32 0.0, %v2052
      %v2054 = vpop.f32.mrf.mxu0
      %2055 = vmatprep.mubr.bf16.mxu0 0
      %2056 = vmatmul.mubr.bf16.gmra.mxu0 %v651
      %v2057 = vpop.f32.mrf.mxu0
      %v2058 = vadd.f32 0.0, %v2057
      %v2059 = vpop.f32.mrf.mxu0
      %v2060 = vpop.f32.mrf.mxu0
      %v2061 = vadd.f32 0.0, %v2060
      %v2062 = vpop.f32.mrf.mxu0
      %2063 = vmatprep.mubr.bf16.mxu0 0
      %2064 = vmatmul.mubr.bf16.gmra.mxu0 %v652
      %v2065 = vpop.f32.mrf.mxu0
      %v2066 = vadd.f32 0.0, %v2065
      %v2067 = vpop.f32.mrf.mxu0
      %v2068 = vpop.f32.mrf.mxu0
      %v2069 = vadd.f32 0.0, %v2068
      %v2070 = vpop.f32.mrf.mxu0
      %2071 = vmatprep.mubr.bf16.mxu0 0
      %2072 = vmatmul.mubr.bf16.gmra.mxu0 %v653
      %v2073 = vpop.f32.mrf.mxu0
      %v2074 = vadd.f32 0.0, %v2073
      %v2075 = vpop.f32.mrf.mxu0
      %v2076 = vpop.f32.mrf.mxu0
      %v2077 = vadd.f32 0.0, %v2076
      %v2078 = vpop.f32.mrf.mxu0
      %2079 = vmatprep.mubr.bf16.mxu0 0
      %2080 = vmatmul.mubr.bf16.gmra.mxu0 %v654
      %v2081 = vpop.f32.mrf.mxu0
      %v2082 = vadd.f32 0.0, %v2081
      %v2083 = vpop.f32.mrf.mxu0
      %v2084 = vpop.f32.mrf.mxu0
      %v2085 = vadd.f32 0.0, %v2084
      %v2086 = vpop.f32.mrf.mxu0
      %2087 = vmatprep.mubr.bf16.mxu0 0
      %2088 = vmatmul.mubr.bf16.gmra.mxu0 %v655
      %v2089 = vpop.f32.mrf.mxu0
      %v2090 = vadd.f32 0.0, %v2089
      %v2091 = vpop.f32.mrf.mxu0
      %v2092 = vpop.f32.mrf.mxu0
      %v2093 = vadd.f32 0.0, %v2092
      %v2094 = vpop.f32.mrf.mxu0
      %2095 = vmatprep.mubr.bf16.mxu0 0
      %2096 = vmatmul.mubr.bf16.gmra.mxu0 %v1395
      %v2097 = vpop.f32.mrf.mxu0
      %v2098 = vadd.f32 0.0, %v2097
      %v2099 = vpop.f32.mrf.mxu0
      %v2100 = vpop.f32.mrf.mxu0
      %v2101 = vadd.f32 0.0, %v2100
      %v2102 = vpop.f32.mrf.mxu0
      %2103 = vmatprep.mubr.bf16.mxu0 0
      %2104 = vmatmul.mubr.bf16.gmra.mxu0 %v1949
      %v2105 = vpop.f32.mrf.mxu0
      %v2106 = vadd.f32 0.0, %v2105
      %v2107 = vpop.f32.mrf.mxu0
      %v2108 = vpop.f32.mrf.mxu0
      %v2109 = vadd.f32 0.0, %v2108
      %v2110 = vpop.f32.mrf.mxu0
      %2111 = vdwg.mxu0
      %v2112 = vadd.f32 %v1923, %v2050
      %v2113 = vadd.f32 %v1924, %v2053
      %v2114 = vadd.f32 %v1925, %v2058
      %v2115 = vadd.f32 %v1926, %v2061
      %v2116 = vadd.f32 %v1927, %v2066
      %v2117 = vadd.f32 %v1928, %v2069
      %v2118 = vadd.f32 %v1929, %v2074
      %v2119 = vadd.f32 %v1930, %v2077
      %v2120 = vadd.f32 %v1931, %v2082
      %v2121 = vadd.f32 %v1932, %v2085
      %v2122 = vadd.f32 %v1933, %v2090
      %v2123 = vadd.f32 %v1934, %v2093
      %v2124 = vadd.f32 %v1935, %v2098
      %v2125 = vadd.f32 %v1936, %v2101
      %v2126 = vadd.f32 %v1937, %v2106
      %v2127 = vadd.f32 %v1938, %v2109
      %v2128 = vrot.slane %v492, 2
      %v2129 = vrot.slane %v493, 2
      %v2130 = vsel %vm963, %v2128, %v2129
      %v2131 = vrot.slane %v494, 2
      %v2132 = vsel %vm963, %v2129, %v2131
      %v2135 = vpack.c.bf16 %v2132, %v2130
      %s2136 = scalar_lea.vmem %s3, 512
      %v2137 = vld [vmem:[%s2136] sm:$0xf]
      %v2138 = vld [vmem:[%s2136 + $0x4] sm:$0xf]
      %v2139 = vld [vmem:[%s2136 + $0x8] sm:$0xf]
      %v2140 = vld [vmem:[%s2136 + $0xc] sm:$0xf]
      %v2141 = vld [vmem:[%s2136 + $0x10] sm:$0xf]
      %v2142 = vld [vmem:[%s2136 + $0x14] sm:$0xf]
      %v2143 = vld [vmem:[%s2136 + $0x18] sm:$0xf]
      %v2144 = vld [vmem:[%s2136 + $0x1c] sm:$0xf]
      %v2145 = vld [vmem:[%s2136 + $0x20] sm:$0xf]
      %v2146 = vld [vmem:[%s2136 + $0x24] sm:$0xf]
      %v2147 = vld [vmem:[%s2136 + $0x28] sm:$0xf]
      %v2148 = vld [vmem:[%s2136 + $0x2c] sm:$0xf]
      %v2149 = vld [vmem:[%s2136 + $0x30] sm:$0xf]
      %v2150 = vld [vmem:[%s2136 + $0x34] sm:$0xf]
      %v2151 = vld [vmem:[%s2136 + $0x38] sm:$0xf]
      %v2152 = vld [vmem:[%s2136 + $0x3c] sm:$0xf]
      %v2169 = vunpack.c.l.b16 %v2137
      %v2170 = vunpack.c.l.b16 %v2138
      %v2171 = vunpack.c.l.b16 %v2139
      %v2172 = vunpack.c.l.b16 %v2140
      %v2173 = vunpack.c.l.b16 %v2141
      %v2174 = vunpack.c.l.b16 %v2142
      %v2175 = vunpack.c.l.b16 %v2143
      %v2176 = vunpack.c.l.b16 %v2144
      %v2177 = vunpack.c.l.b16 %v2145
      %v2178 = vunpack.c.l.b16 %v2146
      %v2179 = vunpack.c.l.b16 %v2147
      %v2180 = vunpack.c.l.b16 %v2148
      %v2181 = vunpack.c.l.b16 %v2149
      %v2182 = vunpack.c.l.b16 %v2150
      %v2183 = vunpack.c.l.b16 %v2151
      %v2184 = vunpack.c.l.b16 %v2152
      %v2185 = vpack.c.b16 %v2170, %v2169
      %v2186 = vpack.c.b16 %v2172, %v2171
      %v2187 = vpack.c.b16 %v2174, %v2173
      %v2188 = vpack.c.b16 %v2176, %v2175
      %v2189 = vpack.c.b16 %v2178, %v2177
      %v2190 = vpack.c.b16 %v2180, %v2179
      %v2191 = vpack.c.b16 %v2182, %v2181
      %v2192 = vpack.c.b16 %v2184, %v2183
      %2201 = vmatprep.subr.bf16.mxu0 0
      %2202 = vmatpush1.bf16.msra.mxu0 %v2192
      %2203 = vmatprep.subr.bf16.mxu0 0
      %2204 = vmatpush1.bf16.msra.mxu0 %v2191
      %2205 = vmatprep.subr.bf16.mxu0 0
      %2206 = vmatpush1.bf16.msra.mxu0 %v2190
      %2207 = vmatprep.subr.bf16.mxu0 0
      %2208 = vmatpush1.bf16.msra.mxu0 %v2189
      %2209 = vmatprep.subr.bf16.mxu0 0
      %2210 = vmatpush1.bf16.msra.mxu0 %v2188
      %2211 = vmatprep.subr.bf16.mxu0 0
      %2212 = vmatpush1.bf16.msra.mxu0 %v2187
      %2213 = vmatprep.subr.bf16.mxu0 0
      %2214 = vmatpush1.bf16.msra.mxu0 %v2186
      %2215 = vmatprep.subr.bf16.mxu0 0
      %2216 = vmatpush1.bf16.msra.mxu0 %v2185
      %2217 = vmatprep.subr.bf16.mxu0 0
      %2218 = vmatpush2.bf16.msra.mxu0 0
      %2219 = vmatprep.subr.bf16.mxu0 0
      %2220 = vmatpush2.bf16.msra.mxu0 0
      %2221 = vmatprep.subr.bf16.mxu0 0
      %2222 = vmatpush2.bf16.msra.mxu0 0
      %2223 = vmatprep.subr.bf16.mxu0 0
      %2224 = vmatpush2.bf16.msra.mxu0 0
      %2225 = vmatprep.subr.bf16.mxu0 0
      %2226 = vmatpush2.bf16.msra.mxu0 0
      %2227 = vmatprep.subr.bf16.mxu0 0
      %2228 = vmatpush2.bf16.msra.mxu0 0
      %2229 = vmatprep.subr.bf16.mxu0 0
      %2230 = vmatpush2.bf16.msra.mxu0 0
      %2231 = vmatprep.subr.bf16.mxu0 0
      %2232 = vmatpush2.bf16.msra.mxu0 0
      %2233 = vmatprep.mubr.bf16.mxu0 0
      %2234 = vmatmul.mubr.bf16.gmra.mxu0 %v1022
      %v2235 = vpop.f32.mrf.mxu0
      %v2236 = vadd.f32 0.0, %v2235
      %v2237 = vpop.f32.mrf.mxu0
      %v2238 = vpop.f32.mrf.mxu0
      %v2239 = vadd.f32 0.0, %v2238
      %v2240 = vpop.f32.mrf.mxu0
      %2241 = vmatprep.mubr.bf16.mxu0 0
      %2242 = vmatmul.mubr.bf16.gmra.mxu0 %v1023
      %v2243 = vpop.f32.mrf.mxu0
      %v2244 = vadd.f32 0.0, %v2243
      %v2245 = vpop.f32.mrf.mxu0
      %v2246 = vpop.f32.mrf.mxu0
      %v2247 = vadd.f32 0.0, %v2246
      %v2248 = vpop.f32.mrf.mxu0
      %2249 = vmatprep.mubr.bf16.mxu0 0
      %2250 = vmatmul.mubr.bf16.gmra.mxu0 %v1024
      %v2251 = vpop.f32.mrf.mxu0
      %v2252 = vadd.f32 0.0, %v2251
      %v2253 = vpop.f32.mrf.mxu0
      %v2254 = vpop.f32.mrf.mxu0
      %v2255 = vadd.f32 0.0, %v2254
      %v2256 = vpop.f32.mrf.mxu0
      %2257 = vmatprep.mubr.bf16.mxu0 0
      %2258 = vmatmul.mubr.bf16.gmra.mxu0 %v1025
      %v2259 = vpop.f32.mrf.mxu0
      %v2260 = vadd.f32 0.0, %v2259
      %v2261 = vpop.f32.mrf.mxu0
      %v2262 = vpop.f32.mrf.mxu0
      %v2263 = vadd.f32 0.0, %v2262
      %v2264 = vpop.f32.mrf.mxu0
      %2265 = vmatprep.mubr.bf16.mxu0 0
      %2266 = vmatmul.mubr.bf16.gmra.mxu0 %v1026
      %v2267 = vpop.f32.mrf.mxu0
      %v2268 = vadd.f32 0.0, %v2267
      %v2269 = vpop.f32.mrf.mxu0
      %v2270 = vpop.f32.mrf.mxu0
      %v2271 = vadd.f32 0.0, %v2270
      %v2272 = vpop.f32.mrf.mxu0
      %2273 = vmatprep.mubr.bf16.mxu0 0
      %2274 = vmatmul.mubr.bf16.gmra.mxu0 %v1027
      %v2275 = vpop.f32.mrf.mxu0
      %v2276 = vadd.f32 0.0, %v2275
      %v2277 = vpop.f32.mrf.mxu0
      %v2278 = vpop.f32.mrf.mxu0
      %v2279 = vadd.f32 0.0, %v2278
      %v2280 = vpop.f32.mrf.mxu0
      %2281 = vmatprep.mubr.bf16.mxu0 0
      %2282 = vmatmul.mubr.bf16.gmra.mxu0 %v1581
      %v2283 = vpop.f32.mrf.mxu0
      %v2284 = vadd.f32 0.0, %v2283
      %v2285 = vpop.f32.mrf.mxu0
      %v2286 = vpop.f32.mrf.mxu0
      %v2287 = vadd.f32 0.0, %v2286
      %v2288 = vpop.f32.mrf.mxu0
      %2289 = vmatprep.mubr.bf16.mxu0 0
      %2290 = vmatmul.mubr.bf16.gmra.mxu0 %v2135
      %v2291 = vpop.f32.mrf.mxu0
      %v2292 = vadd.f32 0.0, %v2291
      %v2293 = vpop.f32.mrf.mxu0
      %v2294 = vpop.f32.mrf.mxu0
      %v2295 = vadd.f32 0.0, %v2294
      %v2296 = vpop.f32.mrf.mxu0
      %2297 = vdwg.mxu0
      %v2298 = vadd.f32 %v2112, %v2236
      %v2299 = vadd.f32 %v2113, %v2239
      %v2300 = vadd.f32 %v2114, %v2244
      %v2301 = vadd.f32 %v2115, %v2247
      %v2302 = vadd.f32 %v2116, %v2252
      %v2303 = vadd.f32 %v2117, %v2255
      %v2304 = vadd.f32 %v2118, %v2260
      %v2305 = vadd.f32 %v2119, %v2263
      %v2306 = vadd.f32 %v2120, %v2268
      %v2307 = vadd.f32 %v2121, %v2271
      %v2308 = vadd.f32 %v2122, %v2276
      %v2309 = vadd.f32 %v2123, %v2279
      %v2310 = vadd.f32 %v2124, %v2284
      %v2311 = vadd.f32 %v2125, %v2287
      %v2312 = vadd.f32 %v2126, %v2292
      %v2313 = vadd.f32 %v2127, %v2295
      %v2314 = vld [vmem:[%s5] sm:$0x1]
      %v2316 = vlaneseq
      %v2317 = vshrl.u32 %v2316, 7
      %v2318 = vsub.s32 0, %v2317
      %v2319 = vrot.slane %v2314, %v2318
      %v2321 = vadd.f32 %v2298, %v2319
      %v2322 = vadd.f32 %v2299, %v2319
      %v2323 = vadd.f32 %v2300, %v2319
      %v2324 = vadd.f32 %v2301, %v2319
      %v2325 = vadd.f32 %v2302, %v2319
      %v2326 = vadd.f32 %v2303, %v2319
      %v2327 = vadd.f32 %v2304, %v2319
      %v2328 = vadd.f32 %v2305, %v2319
      %v2329 = vadd.f32 %v2306, %v2319
      %v2330 = vadd.f32 %v2307, %v2319
      %v2331 = vadd.f32 %v2308, %v2319
      %v2332 = vadd.f32 %v2309, %v2319
      %v2333 = vadd.f32 %v2310, %v2319
      %v2334 = vadd.f32 %v2311, %v2319
      %v2335 = vadd.f32 %v2312, %v2319
      %v2336 = vadd.f32 %v2313, %v2319
      %v2337 = vpack.c.bf16 %v2322, %v2321
      %v2338 = vpack.c.bf16 %v2324, %v2323
      %v2339 = vpack.c.bf16 %v2326, %v2325
      %v2340 = vpack.c.bf16 %v2328, %v2327
      %v2341 = vpack.c.bf16 %v2330, %v2329
      %v2342 = vpack.c.bf16 %v2332, %v2331
      %v2343 = vpack.c.bf16 %v2334, %v2333
      %v2344 = vpack.c.bf16 %v2336, %v2335
      %v2353 = vunpack.c.l.b16 %v2337
      %v2354 = vunpack.c.h.b16 %v2337
      %v2355 = vunpack.c.l.b16 %v2338
      %v2356 = vunpack.c.h.b16 %v2338
      %v2357 = vunpack.c.l.b16 %v2339
      %v2358 = vunpack.c.h.b16 %v2339
      %v2359 = vunpack.c.l.b16 %v2340
      %v2360 = vunpack.c.h.b16 %v2340
      %v2361 = vunpack.c.l.b16 %v2341
      %v2362 = vunpack.c.h.b16 %v2341
      %v2363 = vunpack.c.l.b16 %v2342
      %v2364 = vunpack.c.h.b16 %v2342
      %v2365 = vunpack.c.l.b16 %v2343
      %v2366 = vunpack.c.h.b16 %v2343
      %v2367 = vunpack.c.l.b16 %v2344
      %v2368 = vunpack.c.h.b16 %v2344
      %v2369 = vpack.c.b16 %v2353, %v2353
      %v2370 = vpack.c.b16 %v2354, %v2354
      %v2371 = vpack.c.b16 %v2355, %v2355
      %v2372 = vpack.c.b16 %v2356, %v2356
      %v2373 = vpack.c.b16 %v2357, %v2357
      %v2374 = vpack.c.b16 %v2358, %v2358
      %v2375 = vpack.c.b16 %v2359, %v2359
      %v2376 = vpack.c.b16 %v2360, %v2360
      %v2377 = vpack.c.b16 %v2361, %v2361
      %v2378 = vpack.c.b16 %v2362, %v2362
      %v2379 = vpack.c.b16 %v2363, %v2363
      %v2380 = vpack.c.b16 %v2364, %v2364
      %v2381 = vpack.c.b16 %v2365, %v2365
      %v2382 = vpack.c.b16 %v2366, %v2366
      %v2383 = vpack.c.b16 %v2367, %v2367
      %v2384 = vpack.c.b16 %v2368, %v2368
      %2401 = vst [vmem:[%s458] sm:$0xf] %v2369
      %2402 = vst [vmem:[%s458 + $0x4] sm:$0xf] %v2370
      %2403 = vst [vmem:[%s458 + $0x8] sm:$0xf] %v2371
      %2404 = vst [vmem:[%s458 + $0xc] sm:$0xf] %v2372
      %2405 = vst [vmem:[%s458 + $0x10] sm:$0xf] %v2373
      %2406 = vst [vmem:[%s458 + $0x14] sm:$0xf] %v2374
      %2407 = vst [vmem:[%s458 + $0x18] sm:$0xf] %v2375
      %2408 = vst [vmem:[%s458 + $0x1c] sm:$0xf] %v2376
      %2409 = vst [vmem:[%s458 + $0x20] sm:$0xf] %v2377
      %2410 = vst [vmem:[%s458 + $0x24] sm:$0xf] %v2378
      %2411 = vst [vmem:[%s458 + $0x28] sm:$0xf] %v2379
      %2412 = vst [vmem:[%s458 + $0x2c] sm:$0xf] %v2380
      %2413 = vst [vmem:[%s458 + $0x30] sm:$0xf] %v2381
      %2414 = vst [vmem:[%s458 + $0x34] sm:$0xf] %v2382
      %2415 = vst [vmem:[%s458 + $0x38] sm:$0xf] %v2383
      %2416 = vst [vmem:[%s458 + $0x3c] sm:$0xf] %v2384
      %v2417 = vld [vmem:[%s4] sm:$0xf]
      %v2418 = vld [vmem:[%s4 + $0x4] sm:$0xf]
      %v2419 = vld [vmem:[%s4 + $0x8] sm:$0xf]
      %v2420 = vld [vmem:[%s4 + $0xc] sm:$0xf]
      %v2421 = vld [vmem:[%s4 + $0x10] sm:$0xf]
      %v2422 = vld [vmem:[%s4 + $0x14] sm:$0xf]
      %v2423 = vld [vmem:[%s4 + $0x18] sm:$0xf]
      %v2424 = vld [vmem:[%s4 + $0x1c] sm:$0xf]
      %v2425 = vld [vmem:[%s4 + $0x20] sm:$0xf]
      %v2426 = vld [vmem:[%s4 + $0x24] sm:$0xf]
      %v2427 = vld [vmem:[%s4 + $0x28] sm:$0xf]
      %v2428 = vld [vmem:[%s4 + $0x2c] sm:$0xf]
      %v2429 = vld [vmem:[%s4 + $0x30] sm:$0xf]
      %v2430 = vld [vmem:[%s4 + $0x34] sm:$0xf]
      %v2431 = vld [vmem:[%s4 + $0x38] sm:$0xf]
      %v2432 = vld [vmem:[%s4 + $0x3c] sm:$0xf]
      %v2449 = vunpack.c.l.b16 %v2417
      %v2450 = vunpack.c.l.b16 %v2418
      %v2451 = vunpack.c.l.b16 %v2419
      %v2452 = vunpack.c.l.b16 %v2420
      %v2453 = vunpack.c.l.b16 %v2421
      %v2454 = vunpack.c.l.b16 %v2422
      %v2455 = vunpack.c.l.b16 %v2423
      %v2456 = vunpack.c.l.b16 %v2424
      %v2457 = vunpack.c.l.b16 %v2425
      %v2458 = vunpack.c.l.b16 %v2426
      %v2459 = vunpack.c.l.b16 %v2427
      %v2460 = vunpack.c.l.b16 %v2428
      %v2461 = vunpack.c.l.b16 %v2429
      %v2462 = vunpack.c.l.b16 %v2430
      %v2463 = vunpack.c.l.b16 %v2431
      %v2464 = vunpack.c.l.b16 %v2432
      %v2465 = vpack.c.b16 %v2450, %v2449
      %v2466 = vpack.c.b16 %v2452, %v2451
      %v2467 = vpack.c.b16 %v2454, %v2453
      %v2468 = vpack.c.b16 %v2456, %v2455
      %v2469 = vpack.c.b16 %v2458, %v2457
      %v2470 = vpack.c.b16 %v2460, %v2459
      %v2471 = vpack.c.b16 %v2462, %v2461
      %v2472 = vpack.c.b16 %v2464, %v2463
      %2481 = vmatprep.subr.bf16.mxu0 0
      %2482 = vmatpush1.bf16.msra.mxu0 %v2472
      %2483 = vmatprep.subr.bf16.mxu0 0
      %2484 = vmatpush1.bf16.msra.mxu0 %v2471
      %2485 = vmatprep.subr.bf16.mxu0 0
      %2486 = vmatpush1.bf16.msra.mxu0 %v2470
      %2487 = vmatprep.subr.bf16.mxu0 0
      %2488 = vmatpush1.bf16.msra.mxu0 %v2469
      %2489 = vmatprep.subr.bf16.mxu0 0
      %2490 = vmatpush1.bf16.msra.mxu0 %v2468
      %2491 = vmatprep.subr.bf16.mxu0 0
      %2492 = vmatpush1.bf16.msra.mxu0 %v2467
      %2493 = vmatprep.subr.bf16.mxu0 0
      %2494 = vmatpush1.bf16.msra.mxu0 %v2466
      %2495 = vmatprep.subr.bf16.mxu0 0
      %2496 = vmatpush1.bf16.msra.mxu0 %v2465
      %2497 = vmatprep.subr.bf16.mxu0 0
      %2498 = vmatpush2.bf16.msra.mxu0 0
      %2499 = vmatprep.subr.bf16.mxu0 0
      %2500 = vmatpush2.bf16.msra.mxu0 0
      %2501 = vmatprep.subr.bf16.mxu0 0
      %2502 = vmatpush2.bf16.msra.mxu0 0
      %2503 = vmatprep.subr.bf16.mxu0 0
      %2504 = vmatpush2.bf16.msra.mxu0 0
      %2505 = vmatprep.subr.bf16.mxu0 0
      %2506 = vmatpush2.bf16.msra.mxu0 0
      %2507 = vmatprep.subr.bf16.mxu0 0
      %2508 = vmatpush2.bf16.msra.mxu0 0
      %2509 = vmatprep.subr.bf16.mxu0 0
      %2510 = vmatpush2.bf16.msra.mxu0 0
      %2511 = vmatprep.subr.bf16.mxu0 0
      %2512 = vmatpush2.bf16.msra.mxu0 0
      %2513 = vmatprep.mubr.bf16.mxu0 0
      %2514 = vmatmul.mubr.bf16.gmra.mxu0 %v649
      %v2515 = vpop.f32.mrf.mxu0
      %v2516 = vadd.f32 0.0, %v2515
      %v2517 = vpop.f32.mrf.mxu0
      %v2518 = vpop.f32.mrf.mxu0
      %v2519 = vadd.f32 0.0, %v2518
      %v2520 = vpop.f32.mrf.mxu0
      %2521 = vmatprep.mubr.bf16.mxu0 0
      %2522 = vmatmul.mubr.bf16.gmra.mxu0 %v650
      %v2523 = vpop.f32.mrf.mxu0
      %v2524 = vadd.f32 0.0, %v2523
      %v2525 = vpop.f32.mrf.mxu0
      %v2526 = vpop.f32.mrf.mxu0
      %v2527 = vadd.f32 0.0, %v2526
      %v2528 = vpop.f32.mrf.mxu0
      %2529 = vmatprep.mubr.bf16.mxu0 0
      %2530 = vmatmul.mubr.bf16.gmra.mxu0 %v651
      %v2531 = vpop.f32.mrf.mxu0
      %v2532 = vadd.f32 0.0, %v2531
      %v2533 = vpop.f32.mrf.mxu0
      %v2534 = vpop.f32.mrf.mxu0
      %v2535 = vadd.f32 0.0, %v2534
      %v2536 = vpop.f32.mrf.mxu0
      %2537 = vmatprep.mubr.bf16.mxu0 0
      %2538 = vmatmul.mubr.bf16.gmra.mxu0 %v652
      %v2539 = vpop.f32.mrf.mxu0
      %v2540 = vadd.f32 0.0, %v2539
      %v2541 = vpop.f32.mrf.mxu0
      %v2542 = vpop.f32.mrf.mxu0
      %v2543 = vadd.f32 0.0, %v2542
      %v2544 = vpop.f32.mrf.mxu0
      %2545 = vmatprep.mubr.bf16.mxu0 0
      %2546 = vmatmul.mubr.bf16.gmra.mxu0 %v653
      %v2547 = vpop.f32.mrf.mxu0
      %v2548 = vadd.f32 0.0, %v2547
      %v2549 = vpop.f32.mrf.mxu0
      %v2550 = vpop.f32.mrf.mxu0
      %v2551 = vadd.f32 0.0, %v2550
      %v2552 = vpop.f32.mrf.mxu0
      %2553 = vmatprep.mubr.bf16.mxu0 0
      %2554 = vmatmul.mubr.bf16.gmra.mxu0 %v654
      %v2555 = vpop.f32.mrf.mxu0
      %v2556 = vadd.f32 0.0, %v2555
      %v2557 = vpop.f32.mrf.mxu0
      %v2558 = vpop.f32.mrf.mxu0
      %v2559 = vadd.f32 0.0, %v2558
      %v2560 = vpop.f32.mrf.mxu0
      %2561 = vmatprep.mubr.bf16.mxu0 0
      %2562 = vmatmul.mubr.bf16.gmra.mxu0 %v655
      %v2563 = vpop.f32.mrf.mxu0
      %v2564 = vadd.f32 0.0, %v2563
      %v2565 = vpop.f32.mrf.mxu0
      %v2566 = vpop.f32.mrf.mxu0
      %v2567 = vadd.f32 0.0, %v2566
      %v2568 = vpop.f32.mrf.mxu0
      %2569 = vmatprep.mubr.bf16.mxu0 0
      %2570 = vmatmul.mubr.bf16.gmra.mxu0 %v1395
      %v2571 = vpop.f32.mrf.mxu0
      %v2572 = vadd.f32 0.0, %v2571
      %v2573 = vpop.f32.mrf.mxu0
      %v2574 = vpop.f32.mrf.mxu0
      %v2575 = vadd.f32 0.0, %v2574
      %v2576 = vpop.f32.mrf.mxu0
      %2577 = vdwg.mxu0
      %v2578 = vadd.f32 %v2321, %v2322
      %v2579 = vadd.f32 %v2578, %v2323
      %v2580 = vadd.f32 %v2579, %v2324
      %v2581 = vadd.f32 %v2580, %v2325
      %v2582 = vadd.f32 %v2581, %v2326
      %v2583 = vadd.f32 %v2582, %v2327
      %v2584 = vadd.f32 %v2583, %v2328
      %v2585 = vadd.f32 %v2584, %v2329
      %v2586 = vadd.f32 %v2585, %v2330
      %v2587 = vadd.f32 %v2586, %v2331
      %v2588 = vadd.f32 %v2587, %v2332
      %v2589 = vadd.f32 %v2588, %v2333
      %v2590 = vadd.f32 %v2589, %v2334
      %v2591 = vadd.f32 %v2590, %v2335
      %v2592 = vadd.f32 %v2591, %v2336
      %v2593 = vrot.slane %v2592, 4
      %v2594 = vadd.f32 %v2592, %v2593
      %v2595 = vrot.slane %v2594, 2
      %v2596 = vadd.f32 %v2594, %v2595
      %v2597 = vrot.slane %v2596, 1
      %v2598 = vadd.f32 %v2596, %v2597
      %v2599 = vmul.f32 %v2321, %v2321
      %v2600 = vmul.f32 %v2322, %v2322
      %v2601 = vmul.f32 %v2323, %v2323
      %v2602 = vmul.f32 %v2324, %v2324
      %v2603 = vmul.f32 %v2325, %v2325
      %v2604 = vmul.f32 %v2326, %v2326
      %v2605 = vmul.f32 %v2327, %v2327
      %v2606 = vmul.f32 %v2328, %v2328
      %v2607 = vmul.f32 %v2329, %v2329
      %v2608 = vmul.f32 %v2330, %v2330
      %v2609 = vmul.f32 %v2331, %v2331
      %v2610 = vmul.f32 %v2332, %v2332
      %v2611 = vmul.f32 %v2333, %v2333
      %v2612 = vmul.f32 %v2334, %v2334
      %v2613 = vmul.f32 %v2335, %v2335
      %v2614 = vmul.f32 %v2336, %v2336
      %v2615 = vadd.f32 %v2599, %v2600
      %v2616 = vadd.f32 %v2615, %v2601
      %v2617 = vadd.f32 %v2616, %v2602
      %v2618 = vadd.f32 %v2617, %v2603
      %v2619 = vadd.f32 %v2618, %v2604
      %v2620 = vadd.f32 %v2619, %v2605
      %v2621 = vadd.f32 %v2620, %v2606
      %v2622 = vadd.f32 %v2621, %v2607
      %v2623 = vadd.f32 %v2622, %v2608
      %v2624 = vadd.f32 %v2623, %v2609
      %v2625 = vadd.f32 %v2624, %v2610
      %v2626 = vadd.f32 %v2625, %v2611
      %v2627 = vadd.f32 %v2626, %v2612
      %v2628 = vadd.f32 %v2627, %v2613
      %v2629 = vadd.f32 %v2628, %v2614
      %v2630 = vrot.slane %v2629, 4
      %v2631 = vadd.f32 %v2629, %v2630
      %v2632 = vrot.slane %v2631, 2
      %v2633 = vadd.f32 %v2631, %v2632
      %v2634 = vrot.slane %v2633, 1
      %v2635 = vadd.f32 %v2633, %v2634
      %v2636 = vadd.f32 %v2516, %v2519
      %v2637 = vadd.f32 %v2636, %v2524
      %v2638 = vadd.f32 %v2637, %v2527
      %v2639 = vadd.f32 %v2638, %v2532
      %v2640 = vadd.f32 %v2639, %v2535
      %v2641 = vadd.f32 %v2640, %v2540
      %v2642 = vadd.f32 %v2641, %v2543
      %v2643 = vadd.f32 %v2642, %v2548
      %v2644 = vadd.f32 %v2643, %v2551
      %v2645 = vadd.f32 %v2644, %v2556
      %v2646 = vadd.f32 %v2645, %v2559
      %v2647 = vadd.f32 %v2646, %v2564
      %v2648 = vadd.f32 %v2647, %v2567
      %v2649 = vadd.f32 %v2648, %v2572
      %v2650 = vadd.f32 %v2649, %v2575
      %v2651 = vrot.slane %v2650, 4
      %v2652 = vadd.f32 %v2650, %v2651
      %v2653 = vrot.slane %v2652, 2
      %v2654 = vadd.f32 %v2652, %v2653
      %v2655 = vrot.slane %v2654, 1
      %v2656 = vadd.f32 %v2654, %v2655
      %v2657 = vmul.f32 %v2516, %v2516
      %v2658 = vmul.f32 %v2519, %v2519
      %v2659 = vmul.f32 %v2524, %v2524
      %v2660 = vmul.f32 %v2527, %v2527
      %v2661 = vmul.f32 %v2532, %v2532
      %v2662 = vmul.f32 %v2535, %v2535
      %v2663 = vmul.f32 %v2540, %v2540
      %v2664 = vmul.f32 %v2543, %v2543
      %v2665 = vmul.f32 %v2548, %v2548
      %v2666 = vmul.f32 %v2551, %v2551
      %v2667 = vmul.f32 %v2556, %v2556
      %v2668 = vmul.f32 %v2559, %v2559
      %v2669 = vmul.f32 %v2564, %v2564
      %v2670 = vmul.f32 %v2567, %v2567
      %v2671 = vmul.f32 %v2572, %v2572
      %v2672 = vmul.f32 %v2575, %v2575
      %v2673 = vadd.f32 %v2657, %v2658
      %v2674 = vadd.f32 %v2673, %v2659
      %v2675 = vadd.f32 %v2674, %v2660
      %v2676 = vadd.f32 %v2675, %v2661
      %v2677 = vadd.f32 %v2676, %v2662
      %v2678 = vadd.f32 %v2677, %v2663
      %v2679 = vadd.f32 %v2678, %v2664
      %v2680 = vadd.f32 %v2679, %v2665
      %v2681 = vadd.f32 %v2680, %v2666
      %v2682 = vadd.f32 %v2681, %v2667
      %v2683 = vadd.f32 %v2682, %v2668
      %v2684 = vadd.f32 %v2683, %v2669
      %v2685 = vadd.f32 %v2684, %v2670
      %v2686 = vadd.f32 %v2685, %v2671
      %v2687 = vadd.f32 %v2686, %v2672
      %v2688 = vrot.slane %v2687, 4
      %v2689 = vadd.f32 %v2687, %v2688
      %v2690 = vrot.slane %v2689, 2
      %v2691 = vadd.f32 %v2689, %v2690
      %v2692 = vrot.slane %v2691, 1
      %v2693 = vadd.f32 %v2691, %v2692
      %vm2694 = vcmask 1040384
      %v2695 = vsel %vm2694, %v2598, %v2635
      %vm2696 = vcmask 1041408
      %v2697 = vsel %vm2696, %v2695, %v2656
      %vm2698 = vcmask 1042432
      %v2699 = vsel %vm2698, %v2697, %v2693
      %2700 = vst [vmem:[%s467] sm:$0xf] %v2699
      %s2701 = smul.u32 8, %s24
      %p2702 = scmp.lt.s32.totalorder %s23, 1
      %s2703 = scalar_select %p2702, %s23, 1
      %p2704 = scmp.lt.s32.totalorder %s2701, 15
      %s2705 = scalar_select %p2704, %s2701, 15
      %s2706 = smul.addr %s2705, 2
      %s2707 = smul.addr %s2703, 32
      %s2708 = sadd.s32 %s2706, %s2707
      %s2709 = smul.addr %s2708, 4
      %s2710 = scalar_lea.vmem %s6, %s2709
      %p2711 = scmp.lt.s32.totalorder %s23, 1
      %s2712 = scalar_select %p2711, %s23, 1
      %p2713 = scmp.lt.s32.totalorder %s24, 1
      %s2714 = scalar_select %p2713, %s24, 1
      %s2715 = smul.addr %s2712, 2
      %s2716 = sadd.s32 %s2714, %s2715
      %s2717 = smul.addr %s2716, 4
      %s2718 = scalar_lea.vmem %s7, %s2717
      // Predicated region
      $region45: #{resblock_forward.2} parent=43 // pred_check
        %p2719 = pneg %p214
      $region46: #{resblock_forward.2} parent=43 // pred_check_branch
        %2721 = sbr.rel (%p2719) target = $region48
      $region47: #{resblock_forward.2} parent=43 // pred_region
        %s2722 = smul.u32 8, %s24
      $region48: #{resblock_forward.2} parent=43 // pred_fallthru
        _
      // Predicated region
      $region49: #{resblock_forward.2} parent=43 // pred_check
        %p2723 = pneg %p242
      $region50: #{resblock_forward.2} parent=43 // pred_check_branch
        %2725 = sbr.rel (%p2723) target = $region52
      $region51: #{resblock_forward.2} parent=43 // pred_region
        _
      $region52: #{resblock_forward.2} parent=43 // pred_fallthru
        _
    $region44: #{resblock_forward.2} parent=5 // pred_fallthru
      _
    %p2726 = scmp.le.s32.totalorder 2, %s14
    // Predicated region
    $region53: #{resblock_forward.2} parent=5 // pred_check
      %p2727 = pneg %p2726
    $region54: #{resblock_forward.2} parent=5 // pred_check_branch
      %2729 = sbr.rel (%p2727) target = $region56
    $region55: #{resblock_forward.2} parent=5 // pred_region
      %s2730 = ssub.s32 %s14, 2
      // Predicated region
      $region57: #{resblock_forward.2} parent=55 // pred_check
        %p2731 = pneg %p220
      $region58: #{resblock_forward.2} parent=55 // pred_check_branch
        %2733 = sbr.rel (%p2731) target = $region60
      $region59: #{resblock_forward.2} parent=55 // pred_region
        %s2734 = smul.u32 8, %s26
        %p2735 = scmp.lt.s32.totalorder %s25, 1
        %s2736 = scalar_select %p2735, %s25, 1
        %p2737 = scmp.lt.s32.totalorder %s2734, 15
        %s2738 = scalar_select %p2737, %s2734, 15
        %s2739 = smul.addr %s2738, 2
        %s2740 = smul.addr %s2736, 32
        %s2741 = sadd.s32 %s2739, %s2740
        %s2742 = smul.addr %s2741, 4
        %s2743 = scalar_lea.vmem %s6, %s2742
      $region60: #{resblock_forward.2} parent=55 // pred_fallthru
        _
      // Predicated region
      $region61: #{resblock_forward.2} parent=55 // pred_check
        %p2744 = pneg %p248
      $region62: #{resblock_forward.2} parent=55 // pred_check_branch
        %2746 = sbr.rel (%p2744) target = $region64
      $region63: #{resblock_forward.2} parent=55 // pred_region
        %p2747 = scmp.lt.s32.totalorder %s25, 1
        %s2748 = scalar_select %p2747, %s25, 1
        %p2749 = scmp.lt.s32.totalorder %s26, 1
        %s2750 = scalar_select %p2749, %s26, 1
        %s2751 = smul.addr %s2748, 2
        %s2752 = sadd.s32 %s2750, %s2751
        %s2753 = smul.addr %s2752, 4
        %s2754 = scalar_lea.vmem %s7, %s2753
      $region64: #{resblock_forward.2} parent=55 // pred_fallthru
        _
    $region56: #{resblock_forward.2} parent=5 // pred_fallthru
      _
  $region6: #{resblock_forward.2} parent=0 // loop_footer
    %s18 = sadd.s32 1, %s14
  $region7: #{resblock_forward.2} parent=0 // loop_footer_branch
    %13 = sbr.rel target = $region3
  $region8: #{resblock_forward.2} parent=0 // loop_exit
    _

// kernel: resblock_forward.3
$region0: #{resblock_forward.3}
  #allocation0 [shape = 'u32[]', space=smem, size = 0x4, offset = 0x4, fixed_abs, tag = 'smem constant byte address 0x4 - core index']
  #allocation1 [shape = 'u32[144,128]{1,0:T(1,128)}', space=vmem, size = 0x12000, scoped, tag = 'internal scratch']
  %s0 = inlined_call_operand.vmem [shape: bf16[2,16,16,128], index: 0, kind: input, shape index: {}, may-alias: {0,1,2}]
  %s1 = inlined_call_operand.vmem [shape: bf16[2,16,16,128], index: 1, kind: input, shape index: {}, may-alias: {0,1,2}]
  %s2 = inlined_call_operand.vmem [shape: bf16[2,16,16,128], index: 2, kind: input, shape index: {}, may-alias: {0,1,2}]
  %s3 = inlined_call_operand.vmem [shape: bf16[2,16,32,128], index: 3, kind: input, shape index: {}]
  %s4 = inlined_call_operand.vmem [shape: bf16[9,128,128], index: 4, kind: input, shape index: {}]
  %s5 = inlined_call_operand.vmem [shape: bf16[128,128], index: 5, kind: input, shape index: {}]
  %s6 = inlined_call_operand.vmem [shape: f32[1,128], index: 6, kind: input, shape index: {}]
  %s7 = inlined_call_operand.vmem [shape: f32[1,128], index: 7, kind: input, shape index: {}]
  %s8 = inlined_call_operand.vmem [shape: f32[1,128], index: 8, kind: input, shape index: {}]
  %s9 = inlined_call_operand.vmem [shape: f32[1,128], index: 9, kind: input, shape index: {}]
  %s10 = inlined_call_operand.vmem [shape: f32[1,128], index: 10, kind: input, shape index: {}]
  %s11 = inlined_call_operand.vmem [shape: f32[2,16,16,128], index: 11, kind: output, shape index: {0}]
  %s12 = inlined_call_operand.vmem [shape: f32[2,8,8,128], index: 12, kind: output, shape index: {1}]
  %13 = xla_tuple %s11, %s12
  %s14 = sld [smem:[#allocation0]]
  $region85: #{resblock_forward.3} parent=0
    _
  %s16 = ssub.s32 1, %s14
  %s17 = scalar_select 0, %s16, %s14
  loop: start=0, step=1, limit=6
  $region2: #{resblock_forward.3} parent=0 // loop_pre_header
    _
  $region3: #{resblock_forward.3} parent=0 // loop_header
    %s19 = sphi 0, %s23
    %p20 = scmp.ge.s32.totalorder %s19, 6
    %s26 = sphi 0, %s38
    %s27 = sphi 0, %s34
    %s28 = sphi 0, %s26
    %s29 = sphi 0, %s27
    %s30 = sphi 0, %s28
    %s31 = sphi 0, %s29
    %s51 = sphi 0, %s53
    %s54 = sphi 0, %s51
    %s55 = sphi 0, %s54
    %s71 = sphi 0, %s55
    %s79 = sphi 0, %s81
    %s82 = sphi 0, %s79
    %s83 = sphi 0, %s82
    %s99 = sphi 0, %s83
    %s115 = sphi 0, %s117
    %s118 = sphi 0, %s115
    %s119 = sphi 0, %s118
    %s135 = sphi 0, %s119
    %s143 = sphi 0, %s145
    %s146 = sphi 0, %s143
    %s147 = sphi 0, %s146
    %s163 = sphi 0, %s147
    %s167 = sphi 0, %s167
    %s169 = sphi 0, %s167
    %s170 = sphi 0, %s169
    %s184 = sphi 0, %s170
    %s188 = sphi 0, %s188
    %s190 = sphi 0, %s188
    %s191 = sphi 0, %s190
    %s205 = sphi 0, %s191
    %s209 = sphi 0, %s209
    %s211 = sphi 0, %s209
    %s212 = sphi 0, %s211
    %s226 = sphi 0, %s212
    %s230 = sphi 0, %s230
    %s232 = sphi 0, %s230
    %s233 = sphi 0, %s232
    %s247 = sphi 0, %s233
    %s251 = sphi 0, %s251
    %s253 = sphi 0, %s251
    %s254 = sphi 0, %s253
    %s268 = sphi 0, %s254
    %s272 = sphi 0, %s272
    %s274 = sphi 0, %s272
    %s275 = sphi 0, %s274
    %s289 = sphi 0, %s275
    %s293 = sphi 0, %s293
    %s295 = sphi 0, %s293
    %s296 = sphi 0, %s295
    %s310 = sphi 0, %s296
    %s318 = sphi 0, %s320
    %s321 = sphi 0, %s318
    %s322 = sphi 0, %s321
    %s338 = sphi 0, %s322
    %s346 = sphi 0, %s348
    %s349 = sphi 0, %s346
    %s350 = sphi 0, %s349
    %s366 = sphi 0, %s350
  $region4: #{resblock_forward.3} parent=0 // loop_header_branch
    %22 = sbr.rel (%p20) target = $region8
  $region5: #{resblock_forward.3} parent=0 // loop_body
    %s24 = ssub.s32 %s19, 1
    %s25 = ssub.s32 %s19, 2
    %s32 = sadd.s32 1, %s27
    %p33 = scmp.ge.s32.totalorder %s32, 2
    %s34 = scalar_select %p33, 0, %s32
    %s35 = sadd.s32 1, %s26
    %s36 = scalar_select %p33, %s35, %s26
    %p37 = scmp.ge.s32.totalorder %s36, 2
    %s38 = scalar_select %p37, 0, %s36
    %s39 = smul.u32 %s27, 8
    %s40 = ssub.s32 %s39, 1
    %p41 = scmp.gt.s32.totalorder %s40, 0
    %s42 = scalar_select %p41, %s40, 0
    %s43 = smul.u32 %s34, 8
    %s44 = ssub.s32 %s43, 1
    %p45 = scmp.gt.s32.totalorder %s44, 0
    %s46 = scalar_select %p45, %s44, 0
    %s47 = ssub.s32 %s26, %s38
    %s48 = ssub.s32 %s42, %s46
    %s49 = sor.u32 %s47, %s48
    %p50 = scmp.eq.s32.totalorder %s49, 0
    %s52 = sadd.s32 %s51, 1
    %s53 = scalar_select %p50, %s51, %s52
    %p56 = pneg %p50
    %p57 = scmp.eq.s32.totalorder %s19, 3
    %p58 = por %p56, %p57
    %p59 = scmp.ne.s32.totalorder %s51, %s54
    %p60 = scmp.eq.s32.totalorder %s19, 0
    %p61 = por %p59, %p60
    %p62 = scmp.ne.s32.totalorder %s51, %s54
    %p63 = scmp.eq.s32.totalorder %s24, 3
    %p64 = por %p62, %p63
    %p65 = scmp.ne.s32.totalorder %s54, %s55
    %p66 = scmp.eq.s32.totalorder %s24, 0
    %p67 = por %p65, %p66
    %p68 = scmp.ne.s32.totalorder %s54, %s55
    %p69 = scmp.eq.s32.totalorder %s25, 3
    %p70 = por %p68, %p69
    %p72 = scmp.ne.s32.totalorder %s55, %s71
    %p73 = scmp.eq.s32.totalorder %s25, 0
    %p74 = por %p72, %p73
    %s75 = ssub.s32 %s26, %s38
    %s76 = ssub.s32 %s27, %s34
    %s77 = sor.u32 %s75, %s76
    %p78 = scmp.eq.s32.totalorder %s77, 0
    %s80 = sadd.s32 %s79, 1
    %s81 = scalar_select %p78, %s79, %s80
    %p84 = pneg %p78
    %p85 = scmp.eq.s32.totalorder %s19, 3
    %p86 = por %p84, %p85
    %p87 = scmp.ne.s32.totalorder %s79, %s82
    %p88 = scmp.eq.s32.totalorder %s19, 0
    %p89 = por %p87, %p88
    %p90 = scmp.ne.s32.totalorder %s79, %s82
    %p91 = scmp.eq.s32.totalorder %s24, 3
    %p92 = por %p90, %p91
    %p93 = scmp.ne.s32.totalorder %s82, %s83
    %p94 = scmp.eq.s32.totalorder %s24, 0
    %p95 = por %p93, %p94
    %p96 = scmp.ne.s32.totalorder %s82, %s83
    %p97 = scmp.eq.s32.totalorder %s25, 3
    %p98 = por %p96, %p97
    %p100 = scmp.ne.s32.totalorder %s83, %s99
    %p101 = scmp.eq.s32.totalorder %s25, 0
    %p102 = por %p100, %p101
    %s103 = smul.u32 %s27, 8
    %s104 = sadd.s32 %s103, 8
    %p105 = scmp.lt.s32.totalorder %s104, 15
    %s106 = scalar_select %p105, %s104, 15
    %s107 = smul.u32 %s34, 8
    %s108 = sadd.s32 %s107, 8
    %p109 = scmp.lt.s32.totalorder %s108, 15
    %s110 = scalar_select %p109, %s108, 15
    %s111 = ssub.s32 %s26, %s38
    %s112 = ssub.s32 %s106, %s110
    %s113 = sor.u32 %s111, %s112
    %p114 = scmp.eq.s32.totalorder %s113, 0
    %s116 = sadd.s32 %s115, 1
    %s117 = scalar_select %p114, %s115, %s116
    %p120 = pneg %p114
    %p121 = scmp.eq.s32.totalorder %s19, 3
    %p122 = por %p120, %p121
    %p123 = scmp.ne.s32.totalorder %s115, %s118
    %p124 = scmp.eq.s32.totalorder %s19, 0
    %p125 = por %p123, %p124
    %p126 = scmp.ne.s32.totalorder %s115, %s118
    %p127 = scmp.eq.s32.totalorder %s24, 3
    %p128 = por %p126, %p127
    %p129 = scmp.ne.s32.totalorder %s118, %s119
    %p130 = scmp.eq.s32.totalorder %s24, 0
    %p131 = por %p129, %p130
    %p132 = scmp.ne.s32.totalorder %s118, %s119
    %p133 = scmp.eq.s32.totalorder %s25, 3
    %p134 = por %p132, %p133
    %p136 = scmp.ne.s32.totalorder %s119, %s135
    %p137 = scmp.eq.s32.totalorder %s25, 0
    %p138 = por %p136, %p137
    %s139 = ssub.s32 %s26, %s38
    %s140 = ssub.s32 %s27, %s34
    %s141 = sor.u32 %s139, %s140
    %p142 = scmp.eq.s32.totalorder %s141, 0
    %s144 = sadd.s32 %s143, 1
    %s145 = scalar_select %p142, %s143, %s144
    %p148 = pneg %p142
    %p149 = scmp.eq.s32.totalorder %s19, 3
    %p150 = por %p148, %p149
    %p151 = scmp.ne.s32.totalorder %s143, %s146
    %p152 = scmp.eq.s32.totalorder %s19, 0
    %p153 = por %p151, %p152
    %p154 = scmp.ne.s32.totalorder %s143, %s146
    %p155 = scmp.eq.s32.totalorder %s24, 3
    %p156 = por %p154, %p155
    %p157 = scmp.ne.s32.totalorder %s146, %s147
    %p158 = scmp.eq.s32.totalorder %s24, 0
    %p159 = por %p157, %p158
    %p160 = scmp.ne.s32.totalorder %s146, %s147
    %p161 = scmp.eq.s32.totalorder %s25, 3
    %p162 = por %p160, %p161
    %p164 = scmp.ne.s32.totalorder %s147, %s163
    %p165 = scmp.eq.s32.totalorder %s25, 0
    %p166 = por %p164, %p165
    %s168 = sadd.s32 %s167, 1
    %p171 = scmp.eq.s32.totalorder %s19, 3
    %p172 = scmp.ne.s32.totalorder %s167, %s169
    %p173 = scmp.eq.s32.totalorder %s19, 0
    %p174 = por %p172, %p173
    %p175 = scmp.ne.s32.totalorder %s167, %s169
    %p176 = scmp.eq.s32.totalorder %s24, 3
    %p177 = por %p175, %p176
    %p178 = scmp.ne.s32.totalorder %s169, %s170
    %p179 = scmp.eq.s32.totalorder %s24, 0
    %p180 = por %p178, %p179
    %p181 = scmp.ne.s32.totalorder %s169, %s170
    %p182 = scmp.eq.s32.totalorder %s25, 3
    %p183 = por %p181, %p182
    %p185 = scmp.ne.s32.totalorder %s170, %s184
    %p186 = scmp.eq.s32.totalorder %s25, 0
    %p187 = por %p185, %p186
    %s189 = sadd.s32 %s188, 1
    %p192 = scmp.eq.s32.totalorder %s19, 3
    %p193 = scmp.ne.s32.totalorder %s188, %s190
    %p194 = scmp.eq.s32.totalorder %s19, 0
    %p195 = por %p193, %p194
    %p196 = scmp.ne.s32.totalorder %s188, %s190
    %p197 = scmp.eq.s32.totalorder %s24, 3
    %p198 = por %p196, %p197
    %p199 = scmp.ne.s32.totalorder %s190, %s191
    %p200 = scmp.eq.s32.totalorder %s24, 0
    %p201 = por %p199, %p200
    %p202 = scmp.ne.s32.totalorder %s190, %s191
    %p203 = scmp.eq.s32.totalorder %s25, 3
    %p204 = por %p202, %p203
    %p206 = scmp.ne.s32.totalorder %s191, %s205
    %p207 = scmp.eq.s32.totalorder %s25, 0
    %p208 = por %p206, %p207
    %s210 = sadd.s32 %s209, 1
    %p213 = scmp.eq.s32.totalorder %s19, 3
    %p214 = scmp.ne.s32.totalorder %s209, %s211
    %p215 = scmp.eq.s32.totalorder %s19, 0
    %p216 = por %p214, %p215
    %p217 = scmp.ne.s32.totalorder %s209, %s211
    %p218 = scmp.eq.s32.totalorder %s24, 3
    %p219 = por %p217, %p218
    %p220 = scmp.ne.s32.totalorder %s211, %s212
    %p221 = scmp.eq.s32.totalorder %s24, 0
    %p222 = por %p220, %p221
    %p223 = scmp.ne.s32.totalorder %s211, %s212
    %p224 = scmp.eq.s32.totalorder %s25, 3
    %p225 = por %p223, %p224
    %p227 = scmp.ne.s32.totalorder %s212, %s226
    %p228 = scmp.eq.s32.totalorder %s25, 0
    %p229 = por %p227, %p228
    %s231 = sadd.s32 %s230, 1
    %p234 = scmp.eq.s32.totalorder %s19, 3
    %p235 = scmp.ne.s32.totalorder %s230, %s232
    %p236 = scmp.eq.s32.totalorder %s19, 0
    %p237 = por %p235, %p236
    %p238 = scmp.ne.s32.totalorder %s230, %s232
    %p239 = scmp.eq.s32.totalorder %s24, 3
    %p240 = por %p238, %p239
    %p241 = scmp.ne.s32.totalorder %s232, %s233
    %p242 = scmp.eq.s32.totalorder %s24, 0
    %p243 = por %p241, %p242
    %p244 = scmp.ne.s32.totalorder %s232, %s233
    %p245 = scmp.eq.s32.totalorder %s25, 3
    %p246 = por %p244, %p245
    %p248 = scmp.ne.s32.totalorder %s233, %s247
    %p249 = scmp.eq.s32.totalorder %s25, 0
    %p250 = por %p248, %p249
    %s252 = sadd.s32 %s251, 1
    %p255 = scmp.eq.s32.totalorder %s19, 3
    %p256 = scmp.ne.s32.totalorder %s251, %s253
    %p257 = scmp.eq.s32.totalorder %s19, 0
    %p258 = por %p256, %p257
    %p259 = scmp.ne.s32.totalorder %s251, %s253
    %p260 = scmp.eq.s32.totalorder %s24, 3
    %p261 = por %p259, %p260
    %p262 = scmp.ne.s32.totalorder %s253, %s254
    %p263 = scmp.eq.s32.totalorder %s24, 0
    %p264 = por %p262, %p263
    %p265 = scmp.ne.s32.totalorder %s253, %s254
    %p266 = scmp.eq.s32.totalorder %s25, 3
    %p267 = por %p265, %p266
    %p269 = scmp.ne.s32.totalorder %s254, %s268
    %p270 = scmp.eq.s32.totalorder %s25, 0
    %p271 = por %p269, %p270
    %s273 = sadd.s32 %s272, 1
    %p276 = scmp.eq.s32.totalorder %s19, 3
    %p277 = scmp.ne.s32.totalorder %s272, %s274
    %p278 = scmp.eq.s32.totalorder %s19, 0
    %p279 = por %p277, %p278
    %p280 = scmp.ne.s32.totalorder %s272, %s274
    %p281 = scmp.eq.s32.totalorder %s24, 3
    %p282 = por %p280, %p281
    %p283 = scmp.ne.s32.totalorder %s274, %s275
    %p284 = scmp.eq.s32.totalorder %s24, 0
    %p285 = por %p283, %p284
    %p286 = scmp.ne.s32.totalorder %s274, %s275
    %p287 = scmp.eq.s32.totalorder %s25, 3
    %p288 = por %p286, %p287
    %p290 = scmp.ne.s32.totalorder %s275, %s289
    %p291 = scmp.eq.s32.totalorder %s25, 0
    %p292 = por %p290, %p291
    %s294 = sadd.s32 %s293, 1
    %p297 = scmp.eq.s32.totalorder %s19, 3
    %p298 = scmp.ne.s32.totalorder %s293, %s295
    %p299 = scmp.eq.s32.totalorder %s19, 0
    %p300 = por %p298, %p299
    %p301 = scmp.ne.s32.totalorder %s293, %s295
    %p302 = scmp.eq.s32.totalorder %s24, 3
    %p303 = por %p301, %p302
    %p304 = scmp.ne.s32.totalorder %s295, %s296
    %p305 = scmp.eq.s32.totalorder %s24, 0
    %p306 = por %p304, %p305
    %p307 = scmp.ne.s32.totalorder %s295, %s296
    %p308 = scmp.eq.s32.totalorder %s25, 3
    %p309 = por %p307, %p308
    %p311 = scmp.ne.s32.totalorder %s296, %s310
    %p312 = scmp.eq.s32.totalorder %s25, 0
    %p313 = por %p311, %p312
    %s314 = ssub.s32 %s26, %s38
    %s315 = ssub.s32 %s27, %s34
    %s316 = sor.u32 %s314, %s315
    %p317 = scmp.eq.s32.totalorder %s316, 0
    %s319 = sadd.s32 %s318, 1
    %s320 = scalar_select %p317, %s318, %s319
    %p323 = pneg %p317
    %p324 = scmp.eq.s32.totalorder %s19, 3
    %p325 = por %p323, %p324
    %p326 = scmp.ne.s32.totalorder %s318, %s321
    %p327 = scmp.eq.s32.totalorder %s19, 0
    %p328 = por %p326, %p327
    %p329 = scmp.ne.s32.totalorder %s318, %s321
    %p330 = scmp.eq.s32.totalorder %s24, 3
    %p331 = por %p329, %p330
    %p332 = scmp.ne.s32.totalorder %s321, %s322
    %p333 = scmp.eq.s32.totalorder %s24, 0
    %p334 = por %p332, %p333
    %p335 = scmp.ne.s32.totalorder %s321, %s322
    %p336 = scmp.eq.s32.totalorder %s25, 3
    %p337 = por %p335, %p336
    %p339 = scmp.ne.s32.totalorder %s322, %s338
    %p340 = scmp.eq.s32.totalorder %s25, 0
    %p341 = por %p339, %p340
    %s342 = ssub.s32 %s26, %s38
    %s343 = ssub.s32 %s27, %s34
    %s344 = sor.u32 %s342, %s343
    %p345 = scmp.eq.s32.totalorder %s344, 0
    %s347 = sadd.s32 %s346, 1
    %s348 = scalar_select %p345, %s346, %s347
    %p351 = pneg %p345
    %p352 = scmp.eq.s32.totalorder %s19, 3
    %p353 = por %p351, %p352
    %p354 = scmp.ne.s32.totalorder %s346, %s349
    %p355 = scmp.eq.s32.totalorder %s19, 0
    %p356 = por %p354, %p355
    %p357 = scmp.ne.s32.totalorder %s346, %s349
    %p358 = scmp.eq.s32.totalorder %s24, 3
    %p359 = por %p357, %p358
    %p360 = scmp.ne.s32.totalorder %s349, %s350
    %p361 = scmp.eq.s32.totalorder %s24, 0
    %p362 = por %p360, %p361
    %p363 = scmp.ne.s32.totalorder %s349, %s350
    %p364 = scmp.eq.s32.totalorder %s25, 3
    %p365 = por %p363, %p364
    %p367 = scmp.ne.s32.totalorder %s350, %s366
    %p368 = scmp.eq.s32.totalorder %s25, 0
    %p369 = por %p367, %p368
    %p370 = scmp.le.s32.totalorder 1, %s19
    %p371 = scmp.lt.s32.totalorder %s19, 5
    %p372 = pnand %p370, %p371
    %p373 = pneg %p372
    // Predicated region
    $region9: #{resblock_forward.3} parent=5 // pred_check
      _
    $region10: #{resblock_forward.3} parent=5 // pred_check_branch
      %375 = sbr.rel (%p372) target = $region12
    $region11: #{resblock_forward.3} parent=5 // pred_region
      %s376 = ssub.s32 %s19, 1
      // Predicated region
      $region13: #{resblock_forward.3} parent=11 // pred_check
        %p377 = pneg %p180
      $region14: #{resblock_forward.3} parent=11 // pred_check_branch
        %379 = sbr.rel (%p377) target = $region16
      $region15: #{resblock_forward.3} parent=11 // pred_region
        _
      $region16: #{resblock_forward.3} parent=11 // pred_fallthru
        _
      // Predicated region
      $region17: #{resblock_forward.3} parent=11 // pred_check
        %p380 = pneg %p201
      $region18: #{resblock_forward.3} parent=11 // pred_check_branch
        %382 = sbr.rel (%p380) target = $region20
      $region19: #{resblock_forward.3} parent=11 // pred_region
        _
      $region20: #{resblock_forward.3} parent=11 // pred_fallthru
        _
      // Predicated region
      $region21: #{resblock_forward.3} parent=11 // pred_check
        %p383 = pneg %p222
      $region22: #{resblock_forward.3} parent=11 // pred_check_branch
        %385 = sbr.rel (%p383) target = $region24
      $region23: #{resblock_forward.3} parent=11 // pred_region
        _
      $region24: #{resblock_forward.3} parent=11 // pred_fallthru
        _
      // Predicated region
      $region25: #{resblock_forward.3} parent=11 // pred_check
        %p386 = pneg %p243
      $region26: #{resblock_forward.3} parent=11 // pred_check_branch
        %388 = sbr.rel (%p386) target = $region28
      $region27: #{resblock_forward.3} parent=11 // pred_region
        _
      $region28: #{resblock_forward.3} parent=11 // pred_fallthru
        _
      // Predicated region
      $region29: #{resblock_forward.3} parent=11 // pred_check
        %p389 = pneg %p264
      $region30: #{resblock_forward.3} parent=11 // pred_check_branch
        %391 = sbr.rel (%p389) target = $region32
      $region31: #{resblock_forward.3} parent=11 // pred_region
        _
      $region32: #{resblock_forward.3} parent=11 // pred_fallthru
        _
      // Predicated region
      $region33: #{resblock_forward.3} parent=11 // pred_check
        %p392 = pneg %p285
      $region34: #{resblock_forward.3} parent=11 // pred_check_branch
        %394 = sbr.rel (%p392) target = $region36
      $region35: #{resblock_forward.3} parent=11 // pred_region
        _
      $region36: #{resblock_forward.3} parent=11 // pred_fallthru
        _
      // Predicated region
      $region37: #{resblock_forward.3} parent=11 // pred_check
        %p395 = pneg %p306
      $region38: #{resblock_forward.3} parent=11 // pred_check_branch
        %397 = sbr.rel (%p395) target = $region40
      $region39: #{resblock_forward.3} parent=11 // pred_region
        _
      $region40: #{resblock_forward.3} parent=11 // pred_fallthru
        _
    $region12: #{resblock_forward.3} parent=5 // pred_fallthru
      _
    %p398 = scmp.lt.s32.totalorder %s19, 4
    // Predicated region
    $region41: #{resblock_forward.3} parent=5 // pred_check
      %p399 = pneg %p398
    $region42: #{resblock_forward.3} parent=5 // pred_check_branch
      %401 = sbr.rel (%p399) target = $region44
    $region43: #{resblock_forward.3} parent=5 // pred_region
      // Predicated region
      $region45: #{resblock_forward.3} parent=43 // pred_check
        %p402 = pneg %p61
      $region46: #{resblock_forward.3} parent=43 // pred_check_branch
        %404 = sbr.rel (%p402) target = $region48
      $region47: #{resblock_forward.3} parent=43 // pred_region
        %s405 = smul.u32 %s27, 8
        %s406 = ssub.s32 %s405, 1
        %p407 = scmp.gt.s32.totalorder %s406, 0
        %s408 = scalar_select %p407, %s406, 0
        %p409 = scmp.lt.s32.totalorder %s26, 1
        %s410 = scalar_select %p409, %s26, 1
        %p411 = scmp.lt.s32.totalorder %s408, 15
        %s412 = scalar_select %p411, %s408, 15
        %s413 = smul.addr %s412, 2
        %s414 = smul.addr %s410, 32
        %s415 = sadd.s32 %s413, %s414
        %s416 = smul.addr %s415, 4
        %s417 = scalar_lea.vmem %s0, %s416
        %s418 = smul.u32 %s27, 8
        %s419 = ssub.s32 %s418, 1
        %p420 = scmp.gt.s32.totalorder %s419, 0
        %s421 = scalar_select %p420, %s419, 0
      $region48: #{resblock_forward.3} parent=43 // pred_fallthru
        _
      // Predicated region
      $region49: #{resblock_forward.3} parent=43 // pred_check
        %p422 = pneg %p89
      $region50: #{resblock_forward.3} parent=43 // pred_check_branch
        %424 = sbr.rel (%p422) target = $region52
      $region51: #{resblock_forward.3} parent=43 // pred_region
        %s425 = smul.u32 8, %s27
        %p426 = scmp.lt.s32.totalorder %s26, 1
        %s427 = scalar_select %p426, %s26, 1
        %p428 = scmp.lt.s32.totalorder %s425, 15
        %s429 = scalar_select %p428, %s425, 15
        %s430 = smul.addr %s429, 2
        %s431 = smul.addr %s427, 32
        %s432 = sadd.s32 %s430, %s431
        %s433 = smul.addr %s432, 4
        %s434 = scalar_lea.vmem %s1, %s433
        %s435 = smul.u32 8, %s27
      $region52: #{resblock_forward.3} parent=43 // pred_fallthru
        _
      // Predicated region
      $region53: #{resblock_forward.3} parent=43 // pred_check
        %p436 = pneg %p125
      $region54: #{resblock_forward.3} parent=43 // pred_check_branch
        %438 = sbr.rel (%p436) target = $region56
      $region55: #{resblock_forward.3} parent=43 // pred_region
        %s439 = smul.u32 %s27, 8
        %s440 = sadd.s32 %s439, 8
        %p441 = scmp.lt.s32.totalorder %s440, 15
        %s442 = scalar_select %p441, %s440, 15
        %p443 = scmp.lt.s32.totalorder %s26, 1
        %s444 = scalar_select %p443, %s26, 1
        %p445 = scmp.lt.s32.totalorder %s442, 15
        %s446 = scalar_select %p445, %s442, 15
        %s447 = smul.addr %s446, 2
        %s448 = smul.addr %s444, 32
        %s449 = sadd.s32 %s447, %s448
        %s450 = smul.addr %s449, 4
        %s451 = scalar_lea.vmem %s2, %s450
        %s452 = smul.u32 %s27, 8
        %s453 = sadd.s32 %s452, 8
        %p454 = scmp.lt.s32.totalorder %s453, 15
        %s455 = scalar_select %p454, %s453, 15
      $region56: #{resblock_forward.3} parent=43 // pred_fallthru
        _
      // Predicated region
      $region57: #{resblock_forward.3} parent=43 // pred_check
        %p456 = pneg %p153
      $region58: #{resblock_forward.3} parent=43 // pred_check_branch
        %458 = sbr.rel (%p456) target = $region60
      $region59: #{resblock_forward.3} parent=43 // pred_region
        %s459 = smul.u32 8, %s27
        %p460 = scmp.lt.s32.totalorder %s26, 1
        %s461 = scalar_select %p460, %s26, 1
        %p462 = scmp.lt.s32.totalorder %s459, 15
        %s463 = scalar_select %p462, %s459, 15
        %s464 = smul.addr %s463, 4
        %s465 = smul.addr %s461, 64
        %s466 = sadd.s32 %s464, %s465
        %s467 = smul.addr %s466, 4
        %s468 = scalar_lea.vmem %s3, %s467
        %s469 = smul.u32 8, %s27
      $region60: #{resblock_forward.3} parent=43 // pred_fallthru
        _
    $region44: #{resblock_forward.3} parent=5 // pred_fallthru
      _
    %p470 = scmp.le.s32.totalorder 1, %s19
    %p471 = scmp.lt.s32.totalorder %s19, 5
    %p472 = pnand %p470, %p471
    %p473 = pneg %p472
    // Predicated region
    $region61: #{resblock_forward.3} parent=5 // pred_check
      _
    $region62: #{resblock_forward.3} parent=5 // pred_check_branch
      %475 = sbr.rel (%p472) target = $region64
    $region63: #{resblock_forward.3} parent=5 // pred_region
      %s476 = ssub.s32 %s19, 1
      %s477 = smul.u32 %s29, 8
      %s478 = ssub.s32 %s477, 1
      %p479 = scmp.gt.s32.totalorder %s478, 0
      %s480 = scalar_select %p479, %s478, 0
      %p481 = scmp.lt.s32.totalorder %s28, 1
      %s482 = scalar_select %p481, %s28, 1
      %p483 = scmp.lt.s32.totalorder %s480, 15
      %s484 = scalar_select %p483, %s480, 15
      %s485 = smul.addr %s484, 2
      %s486 = smul.addr %s482, 32
      %s487 = sadd.s32 %s485, %s486
      %s488 = smul.addr %s487, 4
      %s489 = scalar_lea.vmem %s0, %s488
      %p490 = pneg %p67
      %p491 = pneg %p64
      %s492 = smul.u32 8, %s29
      %p493 = scmp.lt.s32.totalorder %s28, 1
      %s494 = scalar_select %p493, %s28, 1
      %p495 = scmp.lt.s32.totalorder %s492, 15
      %s496 = scalar_select %p495, %s492, 15
      %s497 = smul.addr %s496, 2
      %s498 = smul.addr %s494, 32
      %s499 = sadd.s32 %s497, %s498
      %s500 = smul.addr %s499, 4
      %s501 = scalar_lea.vmem %s1, %s500
      %p502 = pneg %p95
      %p503 = pneg %p92
      %s504 = smul.u32 %s29, 8
      %s505 = sadd.s32 %s504, 8
      %p506 = scmp.lt.s32.totalorder %s505, 15
      %s507 = scalar_select %p506, %s505, 15
      %p508 = scmp.lt.s32.totalorder %s28, 1
      %s509 = scalar_select %p508, %s28, 1
      %p510 = scmp.lt.s32.totalorder %s507, 15
      %s511 = scalar_select %p510, %s507, 15
      %s512 = smul.addr %s511, 2
      %s513 = smul.addr %s509, 32
      %s514 = sadd.s32 %s512, %s513
      %s515 = smul.addr %s514, 4
      %s516 = scalar_lea.vmem %s2, %s515
      %p517 = pneg %p131
      %p518 = pneg %p128
      %s519 = smul.u32 8, %s29
      %p520 = scmp.lt.s32.totalorder %s28, 1
      %s521 = scalar_select %p520, %s28, 1
      %p522 = scmp.lt.s32.totalorder %s519, 15
      %s523 = scalar_select %p522, %s519, 15
      %s524 = smul.addr %s523, 4
      %s525 = smul.addr %s521, 64
      %s526 = sadd.s32 %s524, %s525
      %s527 = smul.addr %s526, 4
      %s528 = scalar_lea.vmem %s3, %s527
      %p529 = pneg %p159
      %p530 = pneg %p156
      %p531 = pneg %p180
      %p532 = pneg %p177
      %p533 = pneg %p201
      %p534 = pneg %p198
      %p535 = pneg %p222
      %p536 = pneg %p219
      %p537 = pneg %p243
      %p538 = pneg %p240
      %p539 = pneg %p264
      %p540 = pneg %p261
      %p541 = pneg %p285
      %p542 = pneg %p282
      %p543 = pneg %p306
      %p544 = pneg %p303
      %p545 = pneg %p334
      %p546 = pneg %p331
      %s547 = smul.u32 8, %s29
      %p548 = scmp.lt.s32.totalorder %s28, 1
      %s549 = scalar_select %p548, %s28, 1
      %p550 = scmp.lt.s32.totalorder %s547, 15
      %s551 = scalar_select %p550, %s547, 15
      %s552 = smul.addr %s551, 2
      %s553 = smul.addr %s549, 32
      %s554 = sadd.s32 %s552, %s553
      %s555 = smul.addr %s554, 8
      %s556 = scalar_lea.vmem %s11, %s555
      %p557 = pneg %p362
      %p558 = pneg %p359
      %s559 = smul.u32 4, %s29
      %p560 = scmp.lt.s32.totalorder %s28, 1
      %s561 = scalar_select %p560, %s28, 1
      %p562 = scmp.lt.s32.totalorder %s559, 7
      %s563 = scalar_select %p562, %s559, 7
      %s564 = smul.addr %s561, 8
      %s565 = sadd.s32 %s563, %s564
      %s566 = smul.addr %s565, 8
      %s567 = scalar_lea.vmem %s12, %s566
      %s568 = smul.u32 %s29, 8
      %s569 = ssub.s32 %s568, 1
      %p570 = scmp.gt.s32.totalorder %s569, 0
      %s571 = scalar_select %p570, %s569, 0
      %p572 = scmp.lt.s32.totalorder %s28, 1
      %s573 = scalar_select %p572, %s28, 1
      %p574 = scmp.lt.s32.totalorder %s571, 15
      %s575 = scalar_select %p574, %s571, 15
      %s576 = smul.addr %s575, 2
      %s577 = smul.addr %s573, 32
      %s578 = sadd.s32 %s576, %s577
      %s579 = smul.addr %s578, 4
      %s580 = scalar_lea.vmem %s0, %s579
      %s581 = smul.u32 %s29, 8
      %s582 = ssub.s32 %s581, 1
      %p583 = scmp.gt.s32.totalorder %s582, 0
      %s584 = scalar_select %p583, %s582, 0
      %s585 = smul.u32 8, %s29
      %p586 = scmp.lt.s32.totalorder %s28, 1
      %s587 = scalar_select %p586, %s28, 1
      %p588 = scmp.lt.s32.totalorder %s585, 15
      %s589 = scalar_select %p588, %s585, 15
      %s590 = smul.addr %s589, 2
      %s591 = smul.addr %s587, 32
      %s592 = sadd.s32 %s590, %s591
      %s593 = smul.addr %s592, 4
      %s594 = scalar_lea.vmem %s1, %s593
      %s595 = smul.u32 8, %s29
      %s596 = smul.u32 %s29, 8
      %s597 = sadd.s32 %s596, 8
      %p598 = scmp.lt.s32.totalorder %s597, 15
      %s599 = scalar_select %p598, %s597, 15
      %p600 = scmp.lt.s32.totalorder %s28, 1
      %s601 = scalar_select %p600, %s28, 1
      %p602 = scmp.lt.s32.totalorder %s599, 15
      %s603 = scalar_select %p602, %s599, 15
      %s604 = smul.addr %s603, 2
      %s605 = smul.addr %s601, 32
      %s606 = sadd.s32 %s604, %s605
      %s607 = smul.addr %s606, 4
      %s608 = scalar_lea.vmem %s2, %s607
      %s609 = smul.u32 %s29, 8
      %s610 = sadd.s32 %s609, 8
      %p611 = scmp.lt.s32.totalorder %s610, 15
      %s612 = scalar_select %p611, %s610, 15
      %s613 = smul.u32 8, %s29
      %p614 = scmp.lt.s32.totalorder %s28, 1
      %s615 = scalar_select %p614, %s28, 1
      %p616 = scmp.lt.s32.totalorder %s613, 15
      %s617 = scalar_select %p616, %s613, 15
      %s618 = smul.addr %s617, 4
      %s619 = smul.addr %s615, 64
      %s620 = sadd.s32 %s618, %s619
      %s621 = smul.addr %s620, 4
      %s622 = scalar_lea.vmem %s3, %s621
      %s623 = smul.u32 8, %s29
      %s624 = smul.u32 8, %s29
      %p625 = scmp.lt.s32.totalorder %s28, 1
      %s626 = scalar_select %p625, %s28, 1
      %p627 = scmp.lt.s32.totalorder %s624, 15
      %s628 = scalar_select %p627, %s624, 15
      %s629 = smul.addr %s628, 2
      %s630 = smul.addr %s626, 32
      %s631 = sadd.s32 %s629, %s630
      %s632 = smul.addr %s631, 8
      %s633 = scalar_lea.vmem %s11, %s632
      %s634 = smul.u32 8, %s29
      %s635 = smul.u32 4, %s29
      %p636 = scmp.lt.s32.totalorder %s28, 1
      %s637 = scalar_select %p636, %s28, 1
      %p638 = scmp.lt.s32.totalorder %s635, 7
      %s639 = scalar_select %p638, %s635, 7
      %s640 = smul.addr %s637, 8
      %s641 = sadd.s32 %s639, %s640
      %s642 = smul.addr %s641, 8
      %s643 = scalar_lea.vmem %s12, %s642
      %s644 = smul.u32 4, %s29
      %v646 = vld [vmem:[%s6] sm:$0x1]
      %v647 = vld [vmem:[%s7] sm:$0x1]
      %p648 = scmp.gt.s32.totalorder %s29, 0
      %s649 = scalar_select %p648, 1, 0
      %s650 = scvt.s32.f32 %s649
      %p651 = scmp.lt.s32.totalorder %s29, 1
      %s652 = scalar_select %p651, 1, 0
      %s653 = scvt.s32.f32 %s652
      %v654 = vld [vmem:[%s580] sm:$0xf]
      %v655 = vld [vmem:[%s580 + $0x4] sm:$0xf]
      %v656 = vunpack.c.l.bf16 %v654
      %v657 = vunpack.c.l.bf16 %v655
      %v659 = vlaneseq
      %v660 = vshrl.u32 %v659, 7
      %v661 = vsub.s32 0, %v660
      %v662 = vrot.slane %v646, %v661
      %v664 = vmul.f32 %v656, %v662
      %v665 = vmul.f32 %v657, %v662
      %v667 = vlaneseq
      %v668 = vshrl.u32 %v667, 7
      %v669 = vsub.s32 0, %v668
      %v670 = vrot.slane %v647, %v669
      %v672 = vadd.f32 %v664, %v670
      %v673 = vadd.f32 %v665, %v670
      %v674 = vmax.f32 %v672, 0.0
      %v675 = vmax.f32 %v673, 0.0
      %v676 = vstv %s650
      %v677 = vmul.f32 %v674, %v676
      %v678 = vmul.f32 %v675, %v676
      %v679 = vld [vmem:[%s608] sm:$0xf]
      %v680 = vld [vmem:[%s608 + $0x4] sm:$0xf]
      %v681 = vunpack.c.l.bf16 %v679
      %v682 = vunpack.c.l.bf16 %v680
      %v683 = vmul.f32 %v681, %v662
      %v684 = vmul.f32 %v682, %v662
      %v685 = vadd.f32 %v683, %v670
      %v686 = vadd.f32 %v684, %v670
      %v687 = vmax.f32 %v685, 0.0
      %v688 = vmax.f32 %v686, 0.0
      %v689 = vstv %s653
      %v690 = vmul.f32 %v687, %v689
      %v691 = vmul.f32 %v688, %v689
      %v692 = vld [vmem:[%s594] sm:$0xf]
      %v693 = vld [vmem:[%s594 + $0x4] sm:$0xf]
      %v694 = vld [vmem:[%s594 + $0x8] sm:$0xf]
      %v695 = vld [vmem:[%s594 + $0xc] sm:$0xf]
      %v696 = vld [vmem:[%s594 + $0x10] sm:$0xf]
      %v697 = vld [vmem:[%s594 + $0x14] sm:$0xf]
      %v698 = vld [vmem:[%s594 + $0x18] sm:$0xf]
      %v699 = vld [vmem:[%s594 + $0x1c] sm:$0xf]
      %v700 = vld [vmem:[%s594 + $0x20] sm:$0xf]
      %v701 = vld [vmem:[%s594 + $0x24] sm:$0xf]
      %v702 = vld [vmem:[%s594 + $0x28] sm:$0xf]
      %v703 = vld [vmem:[%s594 + $0x2c] sm:$0xf]
      %v704 = vld [vmem:[%s594 + $0x30] sm:$0xf]
      %v705 = vld [vmem:[%s594 + $0x34] sm:$0xf]
      %v706 = vld [vmem:[%s594 + $0x38] sm:$0xf]
      %v707 = vld [vmem:[%s594 + $0x3c] sm:$0xf]
      %v708 = vunpack.c.l.bf16 %v692
      %v709 = vunpack.c.l.bf16 %v693
      %v710 = vunpack.c.l.bf16 %v694
      %v711 = vunpack.c.l.bf16 %v695
      %v712 = vunpack.c.l.bf16 %v696
      %v713 = vunpack.c.l.bf16 %v697
      %v714 = vunpack.c.l.bf16 %v698
      %v715 = vunpack.c.l.bf16 %v699
      %v716 = vunpack.c.l.bf16 %v700
      %v717 = vunpack.c.l.bf16 %v701
      %v718 = vunpack.c.l.bf16 %v702
      %v719 = vunpack.c.l.bf16 %v703
      %v720 = vunpack.c.l.bf16 %v704
      %v721 = vunpack.c.l.bf16 %v705
      %v722 = vunpack.c.l.bf16 %v706
      %v723 = vunpack.c.l.bf16 %v707
      %v724 = vmul.f32 %v708, %v662
      %v725 = vmul.f32 %v709, %v662
      %v726 = vmul.f32 %v710, %v662
      %v727 = vmul.f32 %v711, %v662
      %v728 = vmul.f32 %v712, %v662
      %v729 = vmul.f32 %v713, %v662
      %v730 = vmul.f32 %v714, %v662
      %v731 = vmul.f32 %v715, %v662
      %v732 = vmul.f32 %v716, %v662
      %v733 = vmul.f32 %v717, %v662
      %v734 = vmul.f32 %v718, %v662
      %v735 = vmul.f32 %v719, %v662
      %v736 = vmul.f32 %v720, %v662
      %v737 = vmul.f32 %v721, %v662
      %v738 = vmul.f32 %v722, %v662
      %v739 = vmul.f32 %v723, %v662
      %v740 = vadd.f32 %v724, %v670
      %v741 = vadd.f32 %v725, %v670
      %v742 = vadd.f32 %v726, %v670
      %v743 = vadd.f32 %v727, %v670
      %v744 = vadd.f32 %v728, %v670
      %v745 = vadd.f32 %v729, %v670
      %v746 = vadd.f32 %v730, %v670
      %v747 = vadd.f32 %v731, %v670
      %v748 = vadd.f32 %v732, %v670
      %v749 = vadd.f32 %v733, %v670
      %v750 = vadd.f32 %v734, %v670
      %v751 = vadd.f32 %v735, %v670
      %v752 = vadd.f32 %v736, %v670
      %v753 = vadd.f32 %v737, %v670
      %v754 = vadd.f32 %v738, %v670
      %v755 = vadd.f32 %v739, %v670
      %v756 = vmax.f32 %v740, 0.0
      %v757 = vmax.f32 %v741, 0.0
      %v758 = vmax.f32 %v742, 0.0
      %v759 = vmax.f32 %v743, 0.0
      %v760 = vmax.f32 %v744, 0.0
      %v761 = vmax.f32 %v745, 0.0
      %v762 = vmax.f32 %v746, 0.0
      %v763 = vmax.f32 %v747, 0.0
      %v764 = vmax.f32 %v748, 0.0
      %v765 = vmax.f32 %v749, 0.0
      %v766 = vmax.f32 %v750, 0.0
      %v767 = vmax.f32 %v751, 0.0
      %v768 = vmax.f32 %v752, 0.0
      %v769 = vmax.f32 %v753, 0.0
      %v770 = vmax.f32 %v754, 0.0
      %v771 = vmax.f32 %v755, 0.0
      %vm792 = vcmask 1040384
      %v793 = vrot.slane %v677, 7
      %v794 = vrot.slane %v678, 7
      %v795 = vsel %vm792, %v793, %v794
      %v796 = vrot.slane %v756, 7
      %v797 = vrot.slane %v757, 7
      %v798 = vsel %vm792, %v796, %v797
      %v799 = vrot.slane %v758, 7
      %v800 = vrot.slane %v759, 7
      %v801 = vsel %vm792, %v799, %v800
      %v802 = vrot.slane %v760, 7
      %v803 = vrot.slane %v761, 7
      %v804 = vsel %vm792, %v802, %v803
      %v805 = vrot.slane %v762, 7
      %v806 = vrot.slane %v763, 7
      %v807 = vsel %vm792, %v805, %v806
      %v808 = vrot.slane %v764, 7
      %v809 = vrot.slane %v765, 7
      %v810 = vsel %vm792, %v808, %v809
      %v811 = vrot.slane %v766, 7
      %v812 = vrot.slane %v767, 7
      %v813 = vsel %vm792, %v811, %v812
      %v814 = vrot.slane %v768, 7
      %v815 = vrot.slane %v769, 7
      %v816 = vsel %vm792, %v814, %v815
      %v817 = vrot.slane %v770, 7
      %v818 = vrot.slane %v771, 7
      %v819 = vsel %vm792, %v817, %v818
      %v820 = vrot.slane %v690, 7
      %v821 = vrot.slane %v691, 7
      %v822 = vsel %vm792, %v820, %v821
      %v853 = vsel %vm792, 0.0, %v793
      %v854 = vsel %vm792, 0.0, %v796
      %v855 = vsel %vm792, 0.0, %v799
      %v856 = vsel %vm792, 0.0, %v802
      %v857 = vsel %vm792, 0.0, %v805
      %v858 = vsel %vm792, 0.0, %v808
      %v859 = vsel %vm792, 0.0, %v811
      %v860 = vsel %vm792, 0.0, %v814
      %v861 = vsel %vm792, 0.0, %v817
      %v862 = vsel %vm792, 0.0, %v820
      %v863 = vsel %vm792, %v794, 0.0
      %v864 = vsel %vm792, %v797, 0.0
      %v865 = vsel %vm792, %v800, 0.0
      %v866 = vsel %vm792, %v803, 0.0
      %v867 = vsel %vm792, %v806, 0.0
      %v868 = vsel %vm792, %v809, 0.0
      %v869 = vsel %vm792, %v812, 0.0
      %v870 = vsel %vm792, %v815, 0.0
      %v871 = vsel %vm792, %v818, 0.0
      %v872 = vsel %vm792, %v821, 0.0
      %v873 = vpack.c.bf16 %v795, %v853
      %v874 = vpack.c.bf16 %v798, %v854
      %v875 = vpack.c.bf16 %v801, %v855
      %v876 = vpack.c.bf16 %v804, %v856
      %v877 = vpack.c.bf16 %v807, %v857
      %v878 = vpack.c.bf16 %v810, %v858
      %v879 = vpack.c.bf16 %v813, %v859
      %v880 = vpack.c.bf16 %v816, %v860
      %v881 = vld [vmem:[%s4] sm:$0xf]
      %v882 = vld [vmem:[%s4 + $0x4] sm:$0xf]
      %v883 = vld [vmem:[%s4 + $0x8] sm:$0xf]
      %v884 = vld [vmem:[%s4 + $0xc] sm:$0xf]
      %v885 = vld [vmem:[%s4 + $0x10] sm:$0xf]
      %v886 = vld [vmem:[%s4 + $0x14] sm:$0xf]
      %v887 = vld [vmem:[%s4 + $0x18] sm:$0xf]
      %v888 = vld [vmem:[%s4 + $0x1c] sm:$0xf]
      %v889 = vld [vmem:[%s4 + $0x20] sm:$0xf]
      %v890 = vld [vmem:[%s4 + $0x24] sm:$0xf]
      %v891 = vld [vmem:[%s4 + $0x28] sm:$0xf]
      %v892 = vld [vmem:[%s4 + $0x2c] sm:$0xf]
      %v893 = vld [vmem:[%s4 + $0x30] sm:$0xf]
      %v894 = vld [vmem:[%s4 + $0x34] sm:$0xf]
      %v895 = vld [vmem:[%s4 + $0x38] sm:$0xf]
      %v896 = vld [vmem:[%s4 + $0x3c] sm:$0xf]
      %vm913 = vcmask 1046528
      %v914 = vrot.slane %v853, 1
      %v915 = vrot.slane %v795, 1
      %v916 = vsel %vm913, %v914, %v915
      %v917 = vrot.slane %v863, 1
      %v918 = vsel %vm913, %v915, %v917
      %v919 = vrot.slane %v854, 1
      %v920 = vrot.slane %v798, 1
      %v921 = vsel %vm913, %v919, %v920
      %v922 = vrot.slane %v864, 1
      %v923 = vsel %vm913, %v920, %v922
      %v924 = vrot.slane %v855, 1
      %v925 = vrot.slane %v801, 1
      %v926 = vsel %vm913, %v924, %v925
      %v927 = vrot.slane %v865, 1
      %v928 = vsel %vm913, %v925, %v927
      %v929 = vrot.slane %v856, 1
      %v930 = vrot.slane %v804, 1
      %v931 = vsel %vm913, %v929, %v930
      %v932 = vrot.slane %v866, 1
      %v933 = vsel %vm913, %v930, %v932
      %v934 = vrot.slane %v857, 1
      %v935 = vrot.slane %v807, 1
      %v936 = vsel %vm913, %v934, %v935
      %v937 = vrot.slane %v867, 1
      %v938 = vsel %vm913, %v935, %v937
      %v939 = vrot.slane %v858, 1
      %v940 = vrot.slane %v810, 1
      %v941 = vsel %vm913, %v939, %v940
      %v942 = vrot.slane %v868, 1
      %v943 = vsel %vm913, %v940, %v942
      %v944 = vrot.slane %v859, 1
      %v945 = vrot.slane %v813, 1
      %v946 = vsel %vm913, %v944, %v945
      %v947 = vrot.slane %v869, 1
      %v948 = vsel %vm913, %v945, %v947
      %v949 = vrot.slane %v860, 1
      %v950 = vrot.slane %v816, 1
      %v951 = vsel %vm913, %v949, %v950
      %v952 = vrot.slane %v870, 1
      %v953 = vsel %vm913, %v950, %v952
      %v970 = vpack.c.bf16 %v918, %v916
      %v971 = vpack.c.bf16 %v923, %v921
      %v972 = vpack.c.bf16 %v928, %v926
      %v973 = vpack.c.bf16 %v933, %v931
      %v974 = vpack.c.bf16 %v938, %v936
      %v975 = vpack.c.bf16 %v943, %v941
      %v976 = vpack.c.bf16 %v948, %v946
      %v977 = vpack.c.bf16 %v953, %v951
      %s978 = scalar_lea.vmem %s4, 64
      %v979 = vld [vmem:[%s978] sm:$0xf]
      %v980 = vld [vmem:[%s978 + $0x4] sm:$0xf]
      %v981 = vld [vmem:[%s978 + $0x8] sm:$0xf]
      %v982 = vld [vmem:[%s978 + $0xc] sm:$0xf]
      %v983 = vld [vmem:[%s978 + $0x10] sm:$0xf]
      %v984 = vld [vmem:[%s978 + $0x14] sm:$0xf]
      %v985 = vld [vmem:[%s978 + $0x18] sm:$0xf]
      %v986 = vld [vmem:[%s978 + $0x1c] sm:$0xf]
      %v987 = vld [vmem:[%s978 + $0x20] sm:$0xf]
      %v988 = vld [vmem:[%s978 + $0x24] sm:$0xf]
      %v989 = vld [vmem:[%s978 + $0x28] sm:$0xf]
      %v990 = vld [vmem:[%s978 + $0x2c] sm:$0xf]
      %v991 = vld [vmem:[%s978 + $0x30] sm:$0xf]
      %v992 = vld [vmem:[%s978 + $0x34] sm:$0xf]
      %v993 = vld [vmem:[%s978 + $0x38] sm:$0xf]
      %v994 = vld [vmem:[%s978 + $0x3c] sm:$0xf]
      %v1011 = vunpack.c.l.b16 %v979
      %v1012 = vunpack.c.l.b16 %v980
      %v1013 = vunpack.c.l.b16 %v981
      %v1014 = vunpack.c.l.b16 %v982
      %v1015 = vunpack.c.l.b16 %v983
      %v1016 = vunpack.c.l.b16 %v984
      %v1017 = vunpack.c.l.b16 %v985
      %v1018 = vunpack.c.l.b16 %v986
      %v1019 = vunpack.c.l.b16 %v987
      %v1020 = vunpack.c.l.b16 %v988
      %v1021 = vunpack.c.l.b16 %v989
      %v1022 = vunpack.c.l.b16 %v990
      %v1023 = vunpack.c.l.b16 %v991
      %v1024 = vunpack.c.l.b16 %v992
      %v1025 = vunpack.c.l.b16 %v993
      %v1026 = vunpack.c.l.b16 %v994
      %v1027 = vpack.c.b16 %v1012, %v1011
      %v1028 = vpack.c.b16 %v1014, %v1013
      %v1029 = vpack.c.b16 %v1016, %v1015
      %v1030 = vpack.c.b16 %v1018, %v1017
      %v1031 = vpack.c.b16 %v1020, %v1019
      %v1032 = vpack.c.b16 %v1022, %v1021
      %v1033 = vpack.c.b16 %v1024, %v1023
      %v1034 = vpack.c.b16 %v1026, %v1025
      %1043 = vmatprep.subr.bf16.mxu0 0
      %1044 = vmatpush1.bf16.msra.mxu0 %v1034
      %1045 = vmatprep.subr.bf16.mxu0 0
      %1046 = vmatpush1.bf16.msra.mxu0 %v1033
      %1047 = vmatprep.subr.bf16.mxu0 0
      %1048 = vmatpush1.bf16.msra.mxu0 %v1032
      %1049 = vmatprep.subr.bf16.mxu0 0
      %1050 = vmatpush1.bf16.msra.mxu0 %v1031
      %1051 = vmatprep.subr.bf16.mxu0 0
      %1052 = vmatpush1.bf16.msra.mxu0 %v1030
      %1053 = vmatprep.subr.bf16.mxu0 0
      %1054 = vmatpush1.bf16.msra.mxu0 %v1029
      %1055 = vmatprep.subr.bf16.mxu0 0
      %1056 = vmatpush1.bf16.msra.mxu0 %v1028
      %1057 = vmatprep.subr.bf16.mxu0 0
      %1058 = vmatpush1.bf16.msra.mxu0 %v1027
      %1059 = vmatprep.subr.bf16.mxu0 0
      %1060 = vmatpush2.bf16.msra.mxu0 0
      %1061 = vmatprep.subr.bf16.mxu0 0
      %1062 = vmatpush2.bf16.msra.mxu0 0
      %1063 = vmatprep.subr.bf16.mxu0 0
      %1064 = vmatpush2.bf16.msra.mxu0 0
      %1065 = vmatprep.subr.bf16.mxu0 0
      %1066 = vmatpush2.bf16.msra.mxu0 0
      %1067 = vmatprep.subr.bf16.mxu0 0
      %1068 = vmatpush2.bf16.msra.mxu0 0
      %1069 = vmatprep.subr.bf16.mxu0 0
      %1070 = vmatpush2.bf16.msra.mxu0 0
      %1071 = vmatprep.subr.bf16.mxu0 0
      %1072 = vmatpush2.bf16.msra.mxu0 0
      %1073 = vmatprep.subr.bf16.mxu0 0
      %1074 = vmatpush2.bf16.msra.mxu0 0
      %1075 = vmatprep.mubr.bf16.mxu0 0
      %1076 = vmatmul.mubr.bf16.gmra.mxu0 %v970
      %v1077 = vpop.f32.mrf.mxu0
      %v1078 = vadd.f32 0.0, %v1077
      %v1079 = vpop.f32.mrf.mxu0
      %v1080 = vpop.f32.mrf.mxu0
      %v1081 = vadd.f32 0.0, %v1080
      %v1082 = vpop.f32.mrf.mxu0
      %1083 = vmatprep.mubr.bf16.mxu0 0
      %1084 = vmatmul.mubr.bf16.gmra.mxu0 %v971
      %v1085 = vpop.f32.mrf.mxu0
      %v1086 = vadd.f32 0.0, %v1085
      %v1087 = vpop.f32.mrf.mxu0
      %v1088 = vpop.f32.mrf.mxu0
      %v1089 = vadd.f32 0.0, %v1088
      %v1090 = vpop.f32.mrf.mxu0
      %1091 = vmatprep.mubr.bf16.mxu0 0
      %1092 = vmatmul.mubr.bf16.gmra.mxu0 %v972
      %v1093 = vpop.f32.mrf.mxu0
      %v1094 = vadd.f32 0.0, %v1093
      %v1095 = vpop.f32.mrf.mxu0
      %v1096 = vpop.f32.mrf.mxu0
      %v1097 = vadd.f32 0.0, %v1096
      %v1098 = vpop.f32.mrf.mxu0
      %1099 = vmatprep.mubr.bf16.mxu0 0
      %1100 = vmatmul.mubr.bf16.gmra.mxu0 %v973
      %v1101 = vpop.f32.mrf.mxu0
      %v1102 = vadd.f32 0.0, %v1101
      %v1103 = vpop.f32.mrf.mxu0
      %v1104 = vpop.f32.mrf.mxu0
      %v1105 = vadd.f32 0.0, %v1104
      %v1106 = vpop.f32.mrf.mxu0
      %1107 = vmatprep.mubr.bf16.mxu0 0
      %1108 = vmatmul.mubr.bf16.gmra.mxu0 %v974
      %v1109 = vpop.f32.mrf.mxu0
      %v1110 = vadd.f32 0.0, %v1109
      %v1111 = vpop.f32.mrf.mxu0
      %v1112 = vpop.f32.mrf.mxu0
      %v1113 = vadd.f32 0.0, %v1112
      %v1114 = vpop.f32.mrf.mxu0
      %1115 = vmatprep.mubr.bf16.mxu0 0
      %1116 = vmatmul.mubr.bf16.gmra.mxu0 %v975
      %v1117 = vpop.f32.mrf.mxu0
      %v1118 = vadd.f32 0.0, %v1117
      %v1119 = vpop.f32.mrf.mxu0
      %v1120 = vpop.f32.mrf.mxu0
      %v1121 = vadd.f32 0.0, %v1120
      %v1122 = vpop.f32.mrf.mxu0
      %1123 = vmatprep.mubr.bf16.mxu0 0
      %1124 = vmatmul.mubr.bf16.gmra.mxu0 %v976
      %v1125 = vpop.f32.mrf.mxu0
      %v1126 = vadd.f32 0.0, %v1125
      %v1127 = vpop.f32.mrf.mxu0
      %v1128 = vpop.f32.mrf.mxu0
      %v1129 = vadd.f32 0.0, %v1128
      %v1130 = vpop.f32.mrf.mxu0
      %1131 = vmatprep.mubr.bf16.mxu0 0
      %1132 = vmatmul.mubr.bf16.gmra.mxu0 %v977
      %v1133 = vpop.f32.mrf.mxu0
      %v1134 = vadd.f32 0.0, %v1133
      %v1135 = vpop.f32.mrf.mxu0
      %v1136 = vpop.f32.mrf.mxu0
      %v1137 = vadd.f32 0.0, %v1136
      %v1138 = vpop.f32.mrf.mxu0
      %1139 = vdwg.mxu0
      %v1156 = vunpack.c.l.b16 %v881
      %v1157 = vunpack.c.l.b16 %v882
      %v1158 = vunpack.c.l.b16 %v883
      %v1159 = vunpack.c.l.b16 %v884
      %v1160 = vunpack.c.l.b16 %v885
      %v1161 = vunpack.c.l.b16 %v886
      %v1162 = vunpack.c.l.b16 %v887
      %v1163 = vunpack.c.l.b16 %v888
      %v1164 = vunpack.c.l.b16 %v889
      %v1165 = vunpack.c.l.b16 %v890
      %v1166 = vunpack.c.l.b16 %v891
      %v1167 = vunpack.c.l.b16 %v892
      %v1168 = vunpack.c.l.b16 %v893
      %v1169 = vunpack.c.l.b16 %v894
      %v1170 = vunpack.c.l.b16 %v895
      %v1171 = vunpack.c.l.b16 %v896
      %v1172 = vpack.c.b16 %v1157, %v1156
      %v1173 = vpack.c.b16 %v1159, %v1158
      %v1174 = vpack.c.b16 %v1161, %v1160
      %v1175 = vpack.c.b16 %v1163, %v1162
      %v1176 = vpack.c.b16 %v1165, %v1164
      %v1177 = vpack.c.b16 %v1167, %v1166
      %v1178 = vpack.c.b16 %v1169, %v1168
      %v1179 = vpack.c.b16 %v1171, %v1170
      %1188 = vmatprep.subr.bf16.mxu0 0
      %1189 = vmatpush1.bf16.msra.mxu0 %v1179
      %1190 = vmatprep.subr.bf16.mxu0 0
      %1191 = vmatpush1.bf16.msra.mxu0 %v1178
      %1192 = vmatprep.subr.bf16.mxu0 0
      %1193 = vmatpush1.bf16.msra.mxu0 %v1177
      %1194 = vmatprep.subr.bf16.mxu0 0
      %1195 = vmatpush1.bf16.msra.mxu0 %v1176
      %1196 = vmatprep.subr.bf16.mxu0 0
      %1197 = vmatpush1.bf16.msra.mxu0 %v1175
      %1198 = vmatprep.subr.bf16.mxu0 0
      %1199 = vmatpush1.bf16.msra.mxu0 %v1174
      %1200 = vmatprep.subr.bf16.mxu0 0
      %1201 = vmatpush1.bf16.msra.mxu0 %v1173
      %1202 = vmatprep.subr.bf16.mxu0 0
      %1203 = vmatpush1.bf16.msra.mxu0 %v1172
      %1204 = vmatprep.subr.bf16.mxu0 0
      %1205 = vmatpush2.bf16.msra.mxu0 0
      %1206 = vmatprep.subr.bf16.mxu0 0
      %1207 = vmatpush2.bf16.msra.mxu0 0
      %1208 = vmatprep.subr.bf16.mxu0 0
      %1209 = vmatpush2.bf16.msra.mxu0 0
      %1210 = vmatprep.subr.bf16.mxu0 0
      %1211 = vmatpush2.bf16.msra.mxu0 0
      %1212 = vmatprep.subr.bf16.mxu0 0
      %1213 = vmatpush2.bf16.msra.mxu0 0
      %1214 = vmatprep.subr.bf16.mxu0 0
      %1215 = vmatpush2.bf16.msra.mxu0 0
      %1216 = vmatprep.subr.bf16.mxu0 0
      %1217 = vmatpush2.bf16.msra.mxu0 0
      %1218 = vmatprep.subr.bf16.mxu0 0
      %1219 = vmatpush2.bf16.msra.mxu0 0
      %1220 = vmatprep.mubr.bf16.mxu0 0
      %1221 = vmatmul.mubr.bf16.gmra.mxu0 %v873
      %v1222 = vpop.f32.mrf.mxu0
      %v1223 = vadd.f32 %v1078, %v1222
      %v1224 = vpop.f32.mrf.mxu0
      %v1225 = vpop.f32.mrf.mxu0
      %v1226 = vadd.f32 %v1081, %v1225
      %v1227 = vpop.f32.mrf.mxu0
      %1228 = vmatprep.mubr.bf16.mxu0 0
      %1229 = vmatmul.mubr.bf16.gmra.mxu0 %v874
      %v1230 = vpop.f32.mrf.mxu0
      %v1231 = vadd.f32 %v1086, %v1230
      %v1232 = vpop.f32.mrf.mxu0
      %v1233 = vpop.f32.mrf.mxu0
      %v1234 = vadd.f32 %v1089, %v1233
      %v1235 = vpop.f32.mrf.mxu0
      %1236 = vmatprep.mubr.bf16.mxu0 0
      %1237 = vmatmul.mubr.bf16.gmra.mxu0 %v875
      %v1238 = vpop.f32.mrf.mxu0
      %v1239 = vadd.f32 %v1094, %v1238
      %v1240 = vpop.f32.mrf.mxu0
      %v1241 = vpop.f32.mrf.mxu0
      %v1242 = vadd.f32 %v1097, %v1241
      %v1243 = vpop.f32.mrf.mxu0
      %1244 = vmatprep.mubr.bf16.mxu0 0
      %1245 = vmatmul.mubr.bf16.gmra.mxu0 %v876
      %v1246 = vpop.f32.mrf.mxu0
      %v1247 = vadd.f32 %v1102, %v1246
      %v1248 = vpop.f32.mrf.mxu0
      %v1249 = vpop.f32.mrf.mxu0
      %v1250 = vadd.f32 %v1105, %v1249
      %v1251 = vpop.f32.mrf.mxu0
      %1252 = vmatprep.mubr.bf16.mxu0 0
      %1253 = vmatmul.mubr.bf16.gmra.mxu0 %v877
      %v1254 = vpop.f32.mrf.mxu0
      %v1255 = vadd.f32 %v1110, %v1254
      %v1256 = vpop.f32.mrf.mxu0
      %v1257 = vpop.f32.mrf.mxu0
      %v1258 = vadd.f32 %v1113, %v1257
      %v1259 = vpop.f32.mrf.mxu0
      %1260 = vmatprep.mubr.bf16.mxu0 0
      %1261 = vmatmul.mubr.bf16.gmra.mxu0 %v878
      %v1262 = vpop.f32.mrf.mxu0
      %v1263 = vadd.f32 %v1118, %v1262
      %v1264 = vpop.f32.mrf.mxu0
      %v1265 = vpop.f32.mrf.mxu0
      %v1266 = vadd.f32 %v1121, %v1265
      %v1267 = vpop.f32.mrf.mxu0
      %1268 = vmatprep.mubr.bf16.mxu0 0
      %1269 = vmatmul.mubr.bf16.gmra.mxu0 %v879
      %v1270 = vpop.f32.mrf.mxu0
      %v1271 = vadd.f32 %v1126, %v1270
      %v1272 = vpop.f32.mrf.mxu0
      %v1273 = vpop.f32.mrf.mxu0
      %v1274 = vadd.f32 %v1129, %v1273
      %v1275 = vpop.f32.mrf.mxu0
      %1276 = vmatprep.mubr.bf16.mxu0 0
      %1277 = vmatmul.mubr.bf16.gmra.mxu0 %v880
      %v1278 = vpop.f32.mrf.mxu0
      %v1279 = vadd.f32 %v1134, %v1278
      %v1280 = vpop.f32.mrf.mxu0
      %v1281 = vpop.f32.mrf.mxu0
      %v1282 = vadd.f32 %v1137, %v1281
      %v1283 = vpop.f32.mrf.mxu0
      %1284 = vdwg.mxu0
      %vm1285 = vcmask 1045504
      %v1286 = vrot.slane %v853, 2
      %v1287 = vrot.slane %v795, 2
      %v1288 = vsel %vm1285, %v1286, %v1287
      %v1289 = vrot.slane %v863, 2
      %v1290 = vsel %vm1285, %v1287, %v1289
      %v1291 = vrot.slane %v854, 2
      %v1292 = vrot.slane %v798, 2
      %v1293 = vsel %vm1285, %v1291, %v1292
      %v1294 = vrot.slane %v864, 2
      %v1295 = vsel %vm1285, %v1292, %v1294
      %v1296 = vrot.slane %v855, 2
      %v1297 = vrot.slane %v801, 2
      %v1298 = vsel %vm1285, %v1296, %v1297
      %v1299 = vrot.slane %v865, 2
      %v1300 = vsel %vm1285, %v1297, %v1299
      %v1301 = vrot.slane %v856, 2
      %v1302 = vrot.slane %v804, 2
      %v1303 = vsel %vm1285, %v1301, %v1302
      %v1304 = vrot.slane %v866, 2
      %v1305 = vsel %vm1285, %v1302, %v1304
      %v1306 = vrot.slane %v857, 2
      %v1307 = vrot.slane %v807, 2
      %v1308 = vsel %vm1285, %v1306, %v1307
      %v1309 = vrot.slane %v867, 2
      %v1310 = vsel %vm1285, %v1307, %v1309
      %v1311 = vrot.slane %v858, 2
      %v1312 = vrot.slane %v810, 2
      %v1313 = vsel %vm1285, %v1311, %v1312
      %v1314 = vrot.slane %v868, 2
      %v1315 = vsel %vm1285, %v1312, %v1314
      %v1316 = vrot.slane %v859, 2
      %v1317 = vrot.slane %v813, 2
      %v1318 = vsel %vm1285, %v1316, %v1317
      %v1319 = vrot.slane %v869, 2
      %v1320 = vsel %vm1285, %v1317, %v1319
      %v1321 = vrot.slane %v860, 2
      %v1322 = vrot.slane %v816, 2
      %v1323 = vsel %vm1285, %v1321, %v1322
      %v1324 = vrot.slane %v870, 2
      %v1325 = vsel %vm1285, %v1322, %v1324
      %v1342 = vpack.c.bf16 %v1290, %v1288
      %v1343 = vpack.c.bf16 %v1295, %v1293
      %v1344 = vpack.c.bf16 %v1300, %v1298
      %v1345 = vpack.c.bf16 %v1305, %v1303
      %v1346 = vpack.c.bf16 %v1310, %v1308
      %v1347 = vpack.c.bf16 %v1315, %v1313
      %v1348 = vpack.c.bf16 %v1320, %v1318
      %v1349 = vpack.c.bf16 %v1325, %v1323
      %s1350 = scalar_lea.vmem %s4, 128
      %v1351 = vld [vmem:[%s1350] sm:$0xf]
      %v1352 = vld [vmem:[%s1350 + $0x4] sm:$0xf]
      %v1353 = vld [vmem:[%s1350 + $0x8] sm:$0xf]
      %v1354 = vld [vmem:[%s1350 + $0xc] sm:$0xf]
      %v1355 = vld [vmem:[%s1350 + $0x10] sm:$0xf]
      %v1356 = vld [vmem:[%s1350 + $0x14] sm:$0xf]
      %v1357 = vld [vmem:[%s1350 + $0x18] sm:$0xf]
      %v1358 = vld [vmem:[%s1350 + $0x1c] sm:$0xf]
      %v1359 = vld [vmem:[%s1350 + $0x20] sm:$0xf]
      %v1360 = vld [vmem:[%s1350 + $0x24] sm:$0xf]
      %v1361 = vld [vmem:[%s1350 + $0x28] sm:$0xf]
      %v1362 = vld [vmem:[%s1350 + $0x2c] sm:$0xf]
      %v1363 = vld [vmem:[%s1350 + $0x30] sm:$0xf]
      %v1364 = vld [vmem:[%s1350 + $0x34] sm:$0xf]
      %v1365 = vld [vmem:[%s1350 + $0x38] sm:$0xf]
      %v1366 = vld [vmem:[%s1350 + $0x3c] sm:$0xf]
      %v1383 = vunpack.c.l.b16 %v1351
      %v1384 = vunpack.c.l.b16 %v1352
      %v1385 = vunpack.c.l.b16 %v1353
      %v1386 = vunpack.c.l.b16 %v1354
      %v1387 = vunpack.c.l.b16 %v1355
      %v1388 = vunpack.c.l.b16 %v1356
      %v1389 = vunpack.c.l.b16 %v1357
      %v1390 = vunpack.c.l.b16 %v1358
      %v1391 = vunpack.c.l.b16 %v1359
      %v1392 = vunpack.c.l.b16 %v1360
      %v1393 = vunpack.c.l.b16 %v1361
      %v1394 = vunpack.c.l.b16 %v1362
      %v1395 = vunpack.c.l.b16 %v1363
      %v1396 = vunpack.c.l.b16 %v1364
      %v1397 = vunpack.c.l.b16 %v1365
      %v1398 = vunpack.c.l.b16 %v1366
      %v1399 = vpack.c.b16 %v1384, %v1383
      %v1400 = vpack.c.b16 %v1386, %v1385
      %v1401 = vpack.c.b16 %v1388, %v1387
      %v1402 = vpack.c.b16 %v1390, %v1389
      %v1403 = vpack.c.b16 %v1392, %v1391
      %v1404 = vpack.c.b16 %v1394, %v1393
      %v1405 = vpack.c.b16 %v1396, %v1395
      %v1406 = vpack.c.b16 %v1398, %v1397
      %1415 = vmatprep.subr.bf16.mxu0 0
      %1416 = vmatpush1.bf16.msra.mxu0 %v1406
      %1417 = vmatprep.subr.bf16.mxu0 0
      %1418 = vmatpush1.bf16.msra.mxu0 %v1405
      %1419 = vmatprep.subr.bf16.mxu0 0
      %1420 = vmatpush1.bf16.msra.mxu0 %v1404
      %1421 = vmatprep.subr.bf16.mxu0 0
      %1422 = vmatpush1.bf16.msra.mxu0 %v1403
      %1423 = vmatprep.subr.bf16.mxu0 0
      %1424 = vmatpush1.bf16.msra.mxu0 %v1402
      %1425 = vmatprep.subr.bf16.mxu0 0
      %1426 = vmatpush1.bf16.msra.mxu0 %v1401
      %1427 = vmatprep.subr.bf16.mxu0 0
      %1428 = vmatpush1.bf16.msra.mxu0 %v1400
      %1429 = vmatprep.subr.bf16.mxu0 0
      %1430 = vmatpush1.bf16.msra.mxu0 %v1399
      %1431 = vmatprep.subr.bf16.mxu0 0
      %1432 = vmatpush2.bf16.msra.mxu0 0
      %1433 = vmatprep.subr.bf16.mxu0 0
      %1434 = vmatpush2.bf16.msra.mxu0 0
      %1435 = vmatprep.subr.bf16.mxu0 0
      %1436 = vmatpush2.bf16.msra.mxu0 0
      %1437 = vmatprep.subr.bf16.mxu0 0
      %1438 = vmatpush2.bf16.msra.mxu0 0
      %1439 = vmatprep.subr.bf16.mxu0 0
      %1440 = vmatpush2.bf16.msra.mxu0 0
      %1441 = vmatprep.subr.bf16.mxu0 0
      %1442 = vmatpush2.bf16.msra.mxu0 0
      %1443 = vmatprep.subr.bf16.mxu0 0
      %1444 = vmatpush2.bf16.msra.mxu0 0
      %1445 = vmatprep.subr.bf16.mxu0 0
      %1446 = vmatpush2.bf16.msra.mxu0 0
      %1447 = vmatprep.mubr.bf16.mxu0 0
      %1448 = vmatmul.mubr.bf16.gmra.mxu0 %v1342
      %v1449 = vpop.f32.mrf.mxu0
      %v1450 = vadd.f32 0.0, %v1449
      %v1451 = vpop.f32.mrf.mxu0
      %v1452 = vpop.f32.mrf.mxu0
      %v1453 = vadd.f32 0.0, %v1452
      %v1454 = vpop.f32.mrf.mxu0
      %1455 = vmatprep.mubr.bf16.mxu0 0
      %1456 = vmatmul.mubr.bf16.gmra.mxu0 %v1343
      %v1457 = vpop.f32.mrf.mxu0
      %v1458 = vadd.f32 0.0, %v1457
      %v1459 = vpop.f32.mrf.mxu0
      %v1460 = vpop.f32.mrf.mxu0
      %v1461 = vadd.f32 0.0, %v1460
      %v1462 = vpop.f32.mrf.mxu0
      %1463 = vmatprep.mubr.bf16.mxu0 0
      %1464 = vmatmul.mubr.bf16.gmra.mxu0 %v1344
      %v1465 = vpop.f32.mrf.mxu0
      %v1466 = vadd.f32 0.0, %v1465
      %v1467 = vpop.f32.mrf.mxu0
      %v1468 = vpop.f32.mrf.mxu0
      %v1469 = vadd.f32 0.0, %v1468
      %v1470 = vpop.f32.mrf.mxu0
      %1471 = vmatprep.mubr.bf16.mxu0 0
      %1472 = vmatmul.mubr.bf16.gmra.mxu0 %v1345
      %v1473 = vpop.f32.mrf.mxu0
      %v1474 = vadd.f32 0.0, %v1473
      %v1475 = vpop.f32.mrf.mxu0
      %v1476 = vpop.f32.mrf.mxu0
      %v1477 = vadd.f32 0.0, %v1476
      %v1478 = vpop.f32.mrf.mxu0
      %1479 = vmatprep.mubr.bf16.mxu0 0
      %1480 = vmatmul.mubr.bf16.gmra.mxu0 %v1346
      %v1481 = vpop.f32.mrf.mxu0
      %v1482 = vadd.f32 0.0, %v1481
      %v1483 = vpop.f32.mrf.mxu0
      %v1484 = vpop.f32.mrf.mxu0
      %v1485 = vadd.f32 0.0, %v1484
      %v1486 = vpop.f32.mrf.mxu0
      %1487 = vmatprep.mubr.bf16.mxu0 0
      %1488 = vmatmul.mubr.bf16.gmra.mxu0 %v1347
      %v1489 = vpop.f32.mrf.mxu0
      %v1490 = vadd.f32 0.0, %v1489
      %v1491 = vpop.f32.mrf.mxu0
      %v1492 = vpop.f32.mrf.mxu0
      %v1493 = vadd.f32 0.0, %v1492
      %v1494 = vpop.f32.mrf.mxu0
      %1495 = vmatprep.mubr.bf16.mxu0 0
      %1496 = vmatmul.mubr.bf16.gmra.mxu0 %v1348
      %v1497 = vpop.f32.mrf.mxu0
      %v1498 = vadd.f32 0.0, %v1497
      %v1499 = vpop.f32.mrf.mxu0
      %v1500 = vpop.f32.mrf.mxu0
      %v1501 = vadd.f32 0.0, %v1500
      %v1502 = vpop.f32.mrf.mxu0
      %1503 = vmatprep.mubr.bf16.mxu0 0
      %1504 = vmatmul.mubr.bf16.gmra.mxu0 %v1349
      %v1505 = vpop.f32.mrf.mxu0
      %v1506 = vadd.f32 0.0, %v1505
      %v1507 = vpop.f32.mrf.mxu0
      %v1508 = vpop.f32.mrf.mxu0
      %v1509 = vadd.f32 0.0, %v1508
      %v1510 = vpop.f32.mrf.mxu0
      %1511 = vdwg.mxu0
      %v1512 = vadd.f32 %v1223, %v1450
      %v1513 = vadd.f32 %v1226, %v1453
      %v1514 = vadd.f32 %v1231, %v1458
      %v1515 = vadd.f32 %v1234, %v1461
      %v1516 = vadd.f32 %v1239, %v1466
      %v1517 = vadd.f32 %v1242, %v1469
      %v1518 = vadd.f32 %v1247, %v1474
      %v1519 = vadd.f32 %v1250, %v1477
      %v1520 = vadd.f32 %v1255, %v1482
      %v1521 = vadd.f32 %v1258, %v1485
      %v1522 = vadd.f32 %v1263, %v1490
      %v1523 = vadd.f32 %v1266, %v1493
      %v1524 = vadd.f32 %v1271, %v1498
      %v1525 = vadd.f32 %v1274, %v1501
      %v1526 = vadd.f32 %v1279, %v1506
      %v1527 = vadd.f32 %v1282, %v1509
      %v1528 = vpack.c.bf16 %v819, %v861
      %s1529 = scalar_lea.vmem %s4, 192
      %v1530 = vld [vmem:[%s1529] sm:$0xf]
      %v1531 = vld [vmem:[%s1529 + $0x4] sm:$0xf]
      %v1532 = vld [vmem:[%s1529 + $0x8] sm:$0xf]
      %v1533 = vld [vmem:[%s1529 + $0xc] sm:$0xf]
      %v1534 = vld [vmem:[%s1529 + $0x10] sm:$0xf]
      %v1535 = vld [vmem:[%s1529 + $0x14] sm:$0xf]
      %v1536 = vld [vmem:[%s1529 + $0x18] sm:$0xf]
      %v1537 = vld [vmem:[%s1529 + $0x1c] sm:$0xf]
      %v1538 = vld [vmem:[%s1529 + $0x20] sm:$0xf]
      %v1539 = vld [vmem:[%s1529 + $0x24] sm:$0xf]
      %v1540 = vld [vmem:[%s1529 + $0x28] sm:$0xf]
      %v1541 = vld [vmem:[%s1529 + $0x2c] sm:$0xf]
      %v1542 = vld [vmem:[%s1529 + $0x30] sm:$0xf]
      %v1543 = vld [vmem:[%s1529 + $0x34] sm:$0xf]
      %v1544 = vld [vmem:[%s1529 + $0x38] sm:$0xf]
      %v1545 = vld [vmem:[%s1529 + $0x3c] sm:$0xf]
      %v1562 = vunpack.c.l.b16 %v1530
      %v1563 = vunpack.c.l.b16 %v1531
      %v1564 = vunpack.c.l.b16 %v1532
      %v1565 = vunpack.c.l.b16 %v1533
      %v1566 = vunpack.c.l.b16 %v1534
      %v1567 = vunpack.c.l.b16 %v1535
      %v1568 = vunpack.c.l.b16 %v1536
      %v1569 = vunpack.c.l.b16 %v1537
      %v1570 = vunpack.c.l.b16 %v1538
      %v1571 = vunpack.c.l.b16 %v1539
      %v1572 = vunpack.c.l.b16 %v1540
      %v1573 = vunpack.c.l.b16 %v1541
      %v1574 = vunpack.c.l.b16 %v1542
      %v1575 = vunpack.c.l.b16 %v1543
      %v1576 = vunpack.c.l.b16 %v1544
      %v1577 = vunpack.c.l.b16 %v1545
      %v1578 = vpack.c.b16 %v1563, %v1562
      %v1579 = vpack.c.b16 %v1565, %v1564
      %v1580 = vpack.c.b16 %v1567, %v1566
      %v1581 = vpack.c.b16 %v1569, %v1568
      %v1582 = vpack.c.b16 %v1571, %v1570
      %v1583 = vpack.c.b16 %v1573, %v1572
      %v1584 = vpack.c.b16 %v1575, %v1574
      %v1585 = vpack.c.b16 %v1577, %v1576
      %1594 = vmatprep.subr.bf16.mxu0 0
      %1595 = vmatpush1.bf16.msra.mxu0 %v1585
      %1596 = vmatprep.subr.bf16.mxu0 0
      %1597 = vmatpush1.bf16.msra.mxu0 %v1584
      %1598 = vmatprep.subr.bf16.mxu0 0
      %1599 = vmatpush1.bf16.msra.mxu0 %v1583
      %1600 = vmatprep.subr.bf16.mxu0 0
      %1601 = vmatpush1.bf16.msra.mxu0 %v1582
      %1602 = vmatprep.subr.bf16.mxu0 0
      %1603 = vmatpush1.bf16.msra.mxu0 %v1581
      %1604 = vmatprep.subr.bf16.mxu0 0
      %1605 = vmatpush1.bf16.msra.mxu0 %v1580
      %1606 = vmatprep.subr.bf16.mxu0 0
      %1607 = vmatpush1.bf16.msra.mxu0 %v1579
      %1608 = vmatprep.subr.bf16.mxu0 0
      %1609 = vmatpush1.bf16.msra.mxu0 %v1578
      %1610 = vmatprep.subr.bf16.mxu0 0
      %1611 = vmatpush2.bf16.msra.mxu0 0
      %1612 = vmatprep.subr.bf16.mxu0 0
      %1613 = vmatpush2.bf16.msra.mxu0 0
      %1614 = vmatprep.subr.bf16.mxu0 0
      %1615 = vmatpush2.bf16.msra.mxu0 0
      %1616 = vmatprep.subr.bf16.mxu0 0
      %1617 = vmatpush2.bf16.msra.mxu0 0
      %1618 = vmatprep.subr.bf16.mxu0 0
      %1619 = vmatpush2.bf16.msra.mxu0 0
      %1620 = vmatprep.subr.bf16.mxu0 0
      %1621 = vmatpush2.bf16.msra.mxu0 0
      %1622 = vmatprep.subr.bf16.mxu0 0
      %1623 = vmatpush2.bf16.msra.mxu0 0
      %1624 = vmatprep.subr.bf16.mxu0 0
      %1625 = vmatpush2.bf16.msra.mxu0 0
      %1626 = vmatprep.mubr.bf16.mxu0 0
      %1627 = vmatmul.mubr.bf16.gmra.mxu0 %v874
      %v1628 = vpop.f32.mrf.mxu0
      %v1629 = vadd.f32 0.0, %v1628
      %v1630 = vpop.f32.mrf.mxu0
      %v1631 = vpop.f32.mrf.mxu0
      %v1632 = vadd.f32 0.0, %v1631
      %v1633 = vpop.f32.mrf.mxu0
      %1634 = vmatprep.mubr.bf16.mxu0 0
      %1635 = vmatmul.mubr.bf16.gmra.mxu0 %v875
      %v1636 = vpop.f32.mrf.mxu0
      %v1637 = vadd.f32 0.0, %v1636
      %v1638 = vpop.f32.mrf.mxu0
      %v1639 = vpop.f32.mrf.mxu0
      %v1640 = vadd.f32 0.0, %v1639
      %v1641 = vpop.f32.mrf.mxu0
      %1642 = vmatprep.mubr.bf16.mxu0 0
      %1643 = vmatmul.mubr.bf16.gmra.mxu0 %v876
      %v1644 = vpop.f32.mrf.mxu0
      %v1645 = vadd.f32 0.0, %v1644
      %v1646 = vpop.f32.mrf.mxu0
      %v1647 = vpop.f32.mrf.mxu0
      %v1648 = vadd.f32 0.0, %v1647
      %v1649 = vpop.f32.mrf.mxu0
      %1650 = vmatprep.mubr.bf16.mxu0 0
      %1651 = vmatmul.mubr.bf16.gmra.mxu0 %v877
      %v1652 = vpop.f32.mrf.mxu0
      %v1653 = vadd.f32 0.0, %v1652
      %v1654 = vpop.f32.mrf.mxu0
      %v1655 = vpop.f32.mrf.mxu0
      %v1656 = vadd.f32 0.0, %v1655
      %v1657 = vpop.f32.mrf.mxu0
      %1658 = vmatprep.mubr.bf16.mxu0 0
      %1659 = vmatmul.mubr.bf16.gmra.mxu0 %v878
      %v1660 = vpop.f32.mrf.mxu0
      %v1661 = vadd.f32 0.0, %v1660
      %v1662 = vpop.f32.mrf.mxu0
      %v1663 = vpop.f32.mrf.mxu0
      %v1664 = vadd.f32 0.0, %v1663
      %v1665 = vpop.f32.mrf.mxu0
      %1666 = vmatprep.mubr.bf16.mxu0 0
      %1667 = vmatmul.mubr.bf16.gmra.mxu0 %v879
      %v1668 = vpop.f32.mrf.mxu0
      %v1669 = vadd.f32 0.0, %v1668
      %v1670 = vpop.f32.mrf.mxu0
      %v1671 = vpop.f32.mrf.mxu0
      %v1672 = vadd.f32 0.0, %v1671
      %v1673 = vpop.f32.mrf.mxu0
      %1674 = vmatprep.mubr.bf16.mxu0 0
      %1675 = vmatmul.mubr.bf16.gmra.mxu0 %v880
      %v1676 = vpop.f32.mrf.mxu0
      %v1677 = vadd.f32 0.0, %v1676
      %v1678 = vpop.f32.mrf.mxu0
      %v1679 = vpop.f32.mrf.mxu0
      %v1680 = vadd.f32 0.0, %v1679
      %v1681 = vpop.f32.mrf.mxu0
      %1682 = vmatprep.mubr.bf16.mxu0 0
      %1683 = vmatmul.mubr.bf16.gmra.mxu0 %v1528
      %v1684 = vpop.f32.mrf.mxu0
      %v1685 = vadd.f32 0.0, %v1684
      %v1686 = vpop.f32.mrf.mxu0
      %v1687 = vpop.f32.mrf.mxu0
      %v1688 = vadd.f32 0.0, %v1687
      %v1689 = vpop.f32.mrf.mxu0
      %1690 = vdwg.mxu0
      %v1691 = vadd.f32 %v1512, %v1629
      %v1692 = vadd.f32 %v1513, %v1632
      %v1693 = vadd.f32 %v1514, %v1637
      %v1694 = vadd.f32 %v1515, %v1640
      %v1695 = vadd.f32 %v1516, %v1645
      %v1696 = vadd.f32 %v1517, %v1648
      %v1697 = vadd.f32 %v1518, %v1653
      %v1698 = vadd.f32 %v1519, %v1656
      %v1699 = vadd.f32 %v1520, %v1661
      %v1700 = vadd.f32 %v1521, %v1664
      %v1701 = vadd.f32 %v1522, %v1669
      %v1702 = vadd.f32 %v1523, %v1672
      %v1703 = vadd.f32 %v1524, %v1677
      %v1704 = vadd.f32 %v1525, %v1680
      %v1705 = vadd.f32 %v1526, %v1685
      %v1706 = vadd.f32 %v1527, %v1688
      %v1709 = vrot.slane %v861, 1
      %v1710 = vrot.slane %v819, 1
      %v1711 = vsel %vm913, %v1709, %v1710
      %v1712 = vrot.slane %v871, 1
      %v1713 = vsel %vm913, %v1710, %v1712
      %v1716 = vpack.c.bf16 %v1713, %v1711
      %s1717 = scalar_lea.vmem %s4, 256
      %v1718 = vld [vmem:[%s1717] sm:$0xf]
      %v1719 = vld [vmem:[%s1717 + $0x4] sm:$0xf]
      %v1720 = vld [vmem:[%s1717 + $0x8] sm:$0xf]
      %v1721 = vld [vmem:[%s1717 + $0xc] sm:$0xf]
      %v1722 = vld [vmem:[%s1717 + $0x10] sm:$0xf]
      %v1723 = vld [vmem:[%s1717 + $0x14] sm:$0xf]
      %v1724 = vld [vmem:[%s1717 + $0x18] sm:$0xf]
      %v1725 = vld [vmem:[%s1717 + $0x1c] sm:$0xf]
      %v1726 = vld [vmem:[%s1717 + $0x20] sm:$0xf]
      %v1727 = vld [vmem:[%s1717 + $0x24] sm:$0xf]
      %v1728 = vld [vmem:[%s1717 + $0x28] sm:$0xf]
      %v1729 = vld [vmem:[%s1717 + $0x2c] sm:$0xf]
      %v1730 = vld [vmem:[%s1717 + $0x30] sm:$0xf]
      %v1731 = vld [vmem:[%s1717 + $0x34] sm:$0xf]
      %v1732 = vld [vmem:[%s1717 + $0x38] sm:$0xf]
      %v1733 = vld [vmem:[%s1717 + $0x3c] sm:$0xf]
      %v1750 = vunpack.c.l.b16 %v1718
      %v1751 = vunpack.c.l.b16 %v1719
      %v1752 = vunpack.c.l.b16 %v1720
      %v1753 = vunpack.c.l.b16 %v1721
      %v1754 = vunpack.c.l.b16 %v1722
      %v1755 = vunpack.c.l.b16 %v1723
      %v1756 = vunpack.c.l.b16 %v1724
      %v1757 = vunpack.c.l.b16 %v1725
      %v1758 = vunpack.c.l.b16 %v1726
      %v1759 = vunpack.c.l.b16 %v1727
      %v1760 = vunpack.c.l.b16 %v1728
      %v1761 = vunpack.c.l.b16 %v1729
      %v1762 = vunpack.c.l.b16 %v1730
      %v1763 = vunpack.c.l.b16 %v1731
      %v1764 = vunpack.c.l.b16 %v1732
      %v1765 = vunpack.c.l.b16 %v1733
      %v1766 = vpack.c.b16 %v1751, %v1750
      %v1767 = vpack.c.b16 %v1753, %v1752
      %v1768 = vpack.c.b16 %v1755, %v1754
      %v1769 = vpack.c.b16 %v1757, %v1756
      %v1770 = vpack.c.b16 %v1759, %v1758
      %v1771 = vpack.c.b16 %v1761, %v1760
      %v1772 = vpack.c.b16 %v1763, %v1762
      %v1773 = vpack.c.b16 %v1765, %v1764
      %1782 = vmatprep.subr.bf16.mxu0 0
      %1783 = vmatpush1.bf16.msra.mxu0 %v1773
      %1784 = vmatprep.subr.bf16.mxu0 0
      %1785 = vmatpush1.bf16.msra.mxu0 %v1772
      %1786 = vmatprep.subr.bf16.mxu0 0
      %1787 = vmatpush1.bf16.msra.mxu0 %v1771
      %1788 = vmatprep.subr.bf16.mxu0 0
      %1789 = vmatpush1.bf16.msra.mxu0 %v1770
      %1790 = vmatprep.subr.bf16.mxu0 0
      %1791 = vmatpush1.bf16.msra.mxu0 %v1769
      %1792 = vmatprep.subr.bf16.mxu0 0
      %1793 = vmatpush1.bf16.msra.mxu0 %v1768
      %1794 = vmatprep.subr.bf16.mxu0 0
      %1795 = vmatpush1.bf16.msra.mxu0 %v1767
      %1796 = vmatprep.subr.bf16.mxu0 0
      %1797 = vmatpush1.bf16.msra.mxu0 %v1766
      %1798 = vmatprep.subr.bf16.mxu0 0
      %1799 = vmatpush2.bf16.msra.mxu0 0
      %1800 = vmatprep.subr.bf16.mxu0 0
      %1801 = vmatpush2.bf16.msra.mxu0 0
      %1802 = vmatprep.subr.bf16.mxu0 0
      %1803 = vmatpush2.bf16.msra.mxu0 0
      %1804 = vmatprep.subr.bf16.mxu0 0
      %1805 = vmatpush2.bf16.msra.mxu0 0
      %1806 = vmatprep.subr.bf16.mxu0 0
      %1807 = vmatpush2.bf16.msra.mxu0 0
      %1808 = vmatprep.subr.bf16.mxu0 0
      %1809 = vmatpush2.bf16.msra.mxu0 0
      %1810 = vmatprep.subr.bf16.mxu0 0
      %1811 = vmatpush2.bf16.msra.mxu0 0
      %1812 = vmatprep.subr.bf16.mxu0 0
      %1813 = vmatpush2.bf16.msra.mxu0 0
      %1814 = vmatprep.mubr.bf16.mxu0 0
      %1815 = vmatmul.mubr.bf16.gmra.mxu0 %v971
      %v1816 = vpop.f32.mrf.mxu0
      %v1817 = vadd.f32 0.0, %v1816
      %v1818 = vpop.f32.mrf.mxu0
      %v1819 = vpop.f32.mrf.mxu0
      %v1820 = vadd.f32 0.0, %v1819
      %v1821 = vpop.f32.mrf.mxu0
      %1822 = vmatprep.mubr.bf16.mxu0 0
      %1823 = vmatmul.mubr.bf16.gmra.mxu0 %v972
      %v1824 = vpop.f32.mrf.mxu0
      %v1825 = vadd.f32 0.0, %v1824
      %v1826 = vpop.f32.mrf.mxu0
      %v1827 = vpop.f32.mrf.mxu0
      %v1828 = vadd.f32 0.0, %v1827
      %v1829 = vpop.f32.mrf.mxu0
      %1830 = vmatprep.mubr.bf16.mxu0 0
      %1831 = vmatmul.mubr.bf16.gmra.mxu0 %v973
      %v1832 = vpop.f32.mrf.mxu0
      %v1833 = vadd.f32 0.0, %v1832
      %v1834 = vpop.f32.mrf.mxu0
      %v1835 = vpop.f32.mrf.mxu0
      %v1836 = vadd.f32 0.0, %v1835
      %v1837 = vpop.f32.mrf.mxu0
      %1838 = vmatprep.mubr.bf16.mxu0 0
      %1839 = vmatmul.mubr.bf16.gmra.mxu0 %v974
      %v1840 = vpop.f32.mrf.mxu0
      %v1841 = vadd.f32 0.0, %v1840
      %v1842 = vpop.f32.mrf.mxu0
      %v1843 = vpop.f32.mrf.mxu0
      %v1844 = vadd.f32 0.0, %v1843
      %v1845 = vpop.f32.mrf.mxu0
      %1846 = vmatprep.mubr.bf16.mxu0 0
      %1847 = vmatmul.mubr.bf16.gmra.mxu0 %v975
      %v1848 = vpop.f32.mrf.mxu0
      %v1849 = vadd.f32 0.0, %v1848
      %v1850 = vpop.f32.mrf.mxu0
      %v1851 = vpop.f32.mrf.mxu0
      %v1852 = vadd.f32 0.0, %v1851
      %v1853 = vpop.f32.mrf.mxu0
      %1854 = vmatprep.mubr.bf16.mxu0 0
      %1855 = vmatmul.mubr.bf16.gmra.mxu0 %v976
      %v1856 = vpop.f32.mrf.mxu0
      %v1857 = vadd.f32 0.0, %v1856
      %v1858 = vpop.f32.mrf.mxu0
      %v1859 = vpop.f32.mrf.mxu0
      %v1860 = vadd.f32 0.0, %v1859
      %v1861 = vpop.f32.mrf.mxu0
      %1862 = vmatprep.mubr.bf16.mxu0 0
      %1863 = vmatmul.mubr.bf16.gmra.mxu0 %v977
      %v1864 = vpop.f32.mrf.mxu0
      %v1865 = vadd.f32 0.0, %v1864
      %v1866 = vpop.f32.mrf.mxu0
      %v1867 = vpop.f32.mrf.mxu0
      %v1868 = vadd.f32 0.0, %v1867
      %v1869 = vpop.f32.mrf.mxu0
      %1870 = vmatprep.mubr.bf16.mxu0 0
      %1871 = vmatmul.mubr.bf16.gmra.mxu0 %v1716
      %v1872 = vpop.f32.mrf.mxu0
      %v1873 = vadd.f32 0.0, %v1872
      %v1874 = vpop.f32.mrf.mxu0
      %v1875 = vpop.f32.mrf.mxu0
      %v1876 = vadd.f32 0.0, %v1875
      %v1877 = vpop.f32.mrf.mxu0
      %1878 = vdwg.mxu0
      %v1879 = vadd.f32 %v1691, %v1817
      %v1880 = vadd.f32 %v1692, %v1820
      %v1881 = vadd.f32 %v1693, %v1825
      %v1882 = vadd.f32 %v1694, %v1828
      %v1883 = vadd.f32 %v1695, %v1833
      %v1884 = vadd.f32 %v1696, %v1836
      %v1885 = vadd.f32 %v1697, %v1841
      %v1886 = vadd.f32 %v1698, %v1844
      %v1887 = vadd.f32 %v1699, %v1849
      %v1888 = vadd.f32 %v1700, %v1852
      %v1889 = vadd.f32 %v1701, %v1857
      %v1890 = vadd.f32 %v1702, %v1860
      %v1891 = vadd.f32 %v1703, %v1865
      %v1892 = vadd.f32 %v1704, %v1868
      %v1893 = vadd.f32 %v1705, %v1873
      %v1894 = vadd.f32 %v1706, %v1876
      %v1895 = vrot.slane %v861, 2
      %v1896 = vrot.slane %v819, 2
      %v1897 = vsel %vm1285, %v1895, %v1896
      %v1898 = vrot.slane %v871, 2
      %v1899 = vsel %vm1285, %v1896, %v1898
      %v1902 = vpack.c.bf16 %v1899, %v1897
      %s1903 = scalar_lea.vmem %s4, 320
      %v1904 = vld [vmem:[%s1903] sm:$0xf]
      %v1905 = vld [vmem:[%s1903 + $0x4] sm:$0xf]
      %v1906 = vld [vmem:[%s1903 + $0x8] sm:$0xf]
      %v1907 = vld [vmem:[%s1903 + $0xc] sm:$0xf]
      %v1908 = vld [vmem:[%s1903 + $0x10] sm:$0xf]
      %v1909 = vld [vmem:[%s1903 + $0x14] sm:$0xf]
      %v1910 = vld [vmem:[%s1903 + $0x18] sm:$0xf]
      %v1911 = vld [vmem:[%s1903 + $0x1c] sm:$0xf]
      %v1912 = vld [vmem:[%s1903 + $0x20] sm:$0xf]
      %v1913 = vld [vmem:[%s1903 + $0x24] sm:$0xf]
      %v1914 = vld [vmem:[%s1903 + $0x28] sm:$0xf]
      %v1915 = vld [vmem:[%s1903 + $0x2c] sm:$0xf]
      %v1916 = vld [vmem:[%s1903 + $0x30] sm:$0xf]
      %v1917 = vld [vmem:[%s1903 + $0x34] sm:$0xf]
      %v1918 = vld [vmem:[%s1903 + $0x38] sm:$0xf]
      %v1919 = vld [vmem:[%s1903 + $0x3c] sm:$0xf]
      %v1936 = vunpack.c.l.b16 %v1904
      %v1937 = vunpack.c.l.b16 %v1905
      %v1938 = vunpack.c.l.b16 %v1906
      %v1939 = vunpack.c.l.b16 %v1907
      %v1940 = vunpack.c.l.b16 %v1908
      %v1941 = vunpack.c.l.b16 %v1909
      %v1942 = vunpack.c.l.b16 %v1910
      %v1943 = vunpack.c.l.b16 %v1911
      %v1944 = vunpack.c.l.b16 %v1912
      %v1945 = vunpack.c.l.b16 %v1913
      %v1946 = vunpack.c.l.b16 %v1914
      %v1947 = vunpack.c.l.b16 %v1915
      %v1948 = vunpack.c.l.b16 %v1916
      %v1949 = vunpack.c.l.b16 %v1917
      %v1950 = vunpack.c.l.b16 %v1918
      %v1951 = vunpack.c.l.b16 %v1919
      %v1952 = vpack.c.b16 %v1937, %v1936
      %v1953 = vpack.c.b16 %v1939, %v1938
      %v1954 = vpack.c.b16 %v1941, %v1940
      %v1955 = vpack.c.b16 %v1943, %v1942
      %v1956 = vpack.c.b16 %v1945, %v1944
      %v1957 = vpack.c.b16 %v1947, %v1946
      %v1958 = vpack.c.b16 %v1949, %v1948
      %v1959 = vpack.c.b16 %v1951, %v1950
      %1968 = vmatprep.subr.bf16.mxu0 0
      %1969 = vmatpush1.bf16.msra.mxu0 %v1959
      %1970 = vmatprep.subr.bf16.mxu0 0
      %1971 = vmatpush1.bf16.msra.mxu0 %v1958
      %1972 = vmatprep.subr.bf16.mxu0 0
      %1973 = vmatpush1.bf16.msra.mxu0 %v1957
      %1974 = vmatprep.subr.bf16.mxu0 0
      %1975 = vmatpush1.bf16.msra.mxu0 %v1956
      %1976 = vmatprep.subr.bf16.mxu0 0
      %1977 = vmatpush1.bf16.msra.mxu0 %v1955
      %1978 = vmatprep.subr.bf16.mxu0 0
      %1979 = vmatpush1.bf16.msra.mxu0 %v1954
      %1980 = vmatprep.subr.bf16.mxu0 0
      %1981 = vmatpush1.bf16.msra.mxu0 %v1953
      %1982 = vmatprep.subr.bf16.mxu0 0
      %1983 = vmatpush1.bf16.msra.mxu0 %v1952
      %1984 = vmatprep.subr.bf16.mxu0 0
      %1985 = vmatpush2.bf16.msra.mxu0 0
      %1986 = vmatprep.subr.bf16.mxu0 0
      %1987 = vmatpush2.bf16.msra.mxu0 0
      %1988 = vmatprep.subr.bf16.mxu0 0
      %1989 = vmatpush2.bf16.msra.mxu0 0
      %1990 = vmatprep.subr.bf16.mxu0 0
      %1991 = vmatpush2.bf16.msra.mxu0 0
      %1992 = vmatprep.subr.bf16.mxu0 0
      %1993 = vmatpush2.bf16.msra.mxu0 0
      %1994 = vmatprep.subr.bf16.mxu0 0
      %1995 = vmatpush2.bf16.msra.mxu0 0
      %1996 = vmatprep.subr.bf16.mxu0 0
      %1997 = vmatpush2.bf16.msra.mxu0 0
      %1998 = vmatprep.subr.bf16.mxu0 0
      %1999 = vmatpush2.bf16.msra.mxu0 0
      %2000 = vmatprep.mubr.bf16.mxu0 0
      %2001 = vmatmul.mubr.bf16.gmra.mxu0 %v1343
      %v2002 = vpop.f32.mrf.mxu0
      %v2003 = vadd.f32 0.0, %v2002
      %v2004 = vpop.f32.mrf.mxu0
      %v2005 = vpop.f32.mrf.mxu0
      %v2006 = vadd.f32 0.0, %v2005
      %v2007 = vpop.f32.mrf.mxu0
      %2008 = vmatprep.mubr.bf16.mxu0 0
      %2009 = vmatmul.mubr.bf16.gmra.mxu0 %v1344
      %v2010 = vpop.f32.mrf.mxu0
      %v2011 = vadd.f32 0.0, %v2010
      %v2012 = vpop.f32.mrf.mxu0
      %v2013 = vpop.f32.mrf.mxu0
      %v2014 = vadd.f32 0.0, %v2013
      %v2015 = vpop.f32.mrf.mxu0
      %2016 = vmatprep.mubr.bf16.mxu0 0
      %2017 = vmatmul.mubr.bf16.gmra.mxu0 %v1345
      %v2018 = vpop.f32.mrf.mxu0
      %v2019 = vadd.f32 0.0, %v2018
      %v2020 = vpop.f32.mrf.mxu0
      %v2021 = vpop.f32.mrf.mxu0
      %v2022 = vadd.f32 0.0, %v2021
      %v2023 = vpop.f32.mrf.mxu0
      %2024 = vmatprep.mubr.bf16.mxu0 0
      %2025 = vmatmul.mubr.bf16.gmra.mxu0 %v1346
      %v2026 = vpop.f32.mrf.mxu0
      %v2027 = vadd.f32 0.0, %v2026
      %v2028 = vpop.f32.mrf.mxu0
      %v2029 = vpop.f32.mrf.mxu0
      %v2030 = vadd.f32 0.0, %v2029
      %v2031 = vpop.f32.mrf.mxu0
      %2032 = vmatprep.mubr.bf16.mxu0 0
      %2033 = vmatmul.mubr.bf16.gmra.mxu0 %v1347
      %v2034 = vpop.f32.mrf.mxu0
      %v2035 = vadd.f32 0.0, %v2034
      %v2036 = vpop.f32.mrf.mxu0
      %v2037 = vpop.f32.mrf.mxu0
      %v2038 = vadd.f32 0.0, %v2037
      %v2039 = vpop.f32.mrf.mxu0
      %2040 = vmatprep.mubr.bf16.mxu0 0
      %2041 = vmatmul.mubr.bf16.gmra.mxu0 %v1348
      %v2042 = vpop.f32.mrf.mxu0
      %v2043 = vadd.f32 0.0, %v2042
      %v2044 = vpop.f32.mrf.mxu0
      %v2045 = vpop.f32.mrf.mxu0
      %v2046 = vadd.f32 0.0, %v2045
      %v2047 = vpop.f32.mrf.mxu0
      %2048 = vmatprep.mubr.bf16.mxu0 0
      %2049 = vmatmul.mubr.bf16.gmra.mxu0 %v1349
      %v2050 = vpop.f32.mrf.mxu0
      %v2051 = vadd.f32 0.0, %v2050
      %v2052 = vpop.f32.mrf.mxu0
      %v2053 = vpop.f32.mrf.mxu0
      %v2054 = vadd.f32 0.0, %v2053
      %v2055 = vpop.f32.mrf.mxu0
      %2056 = vmatprep.mubr.bf16.mxu0 0
      %2057 = vmatmul.mubr.bf16.gmra.mxu0 %v1902
      %v2058 = vpop.f32.mrf.mxu0
      %v2059 = vadd.f32 0.0, %v2058
      %v2060 = vpop.f32.mrf.mxu0
      %v2061 = vpop.f32.mrf.mxu0
      %v2062 = vadd.f32 0.0, %v2061
      %v2063 = vpop.f32.mrf.mxu0
      %2064 = vdwg.mxu0
      %v2065 = vadd.f32 %v1879, %v2003
      %v2066 = vadd.f32 %v1880, %v2006
      %v2067 = vadd.f32 %v1881, %v2011
      %v2068 = vadd.f32 %v1882, %v2014
      %v2069 = vadd.f32 %v1883, %v2019
      %v2070 = vadd.f32 %v1884, %v2022
      %v2071 = vadd.f32 %v1885, %v2027
      %v2072 = vadd.f32 %v1886, %v2030
      %v2073 = vadd.f32 %v1887, %v2035
      %v2074 = vadd.f32 %v1888, %v2038
      %v2075 = vadd.f32 %v1889, %v2043
      %v2076 = vadd.f32 %v1890, %v2046
      %v2077 = vadd.f32 %v1891, %v2051
      %v2078 = vadd.f32 %v1892, %v2054
      %v2079 = vadd.f32 %v1893, %v2059
      %v2080 = vadd.f32 %v1894, %v2062
      %v2081 = vpack.c.bf16 %v822, %v862
      %s2082 = scalar_lea.vmem %s4, 384
      %v2083 = vld [vmem:[%s2082] sm:$0xf]
      %v2084 = vld [vmem:[%s2082 + $0x4] sm:$0xf]
      %v2085 = vld [vmem:[%s2082 + $0x8] sm:$0xf]
      %v2086 = vld [vmem:[%s2082 + $0xc] sm:$0xf]
      %v2087 = vld [vmem:[%s2082 + $0x10] sm:$0xf]
      %v2088 = vld [vmem:[%s2082 + $0x14] sm:$0xf]
      %v2089 = vld [vmem:[%s2082 + $0x18] sm:$0xf]
      %v2090 = vld [vmem:[%s2082 + $0x1c] sm:$0xf]
      %v2091 = vld [vmem:[%s2082 + $0x20] sm:$0xf]
      %v2092 = vld [vmem:[%s2082 + $0x24] sm:$0xf]
      %v2093 = vld [vmem:[%s2082 + $0x28] sm:$0xf]
      %v2094 = vld [vmem:[%s2082 + $0x2c] sm:$0xf]
      %v2095 = vld [vmem:[%s2082 + $0x30] sm:$0xf]
      %v2096 = vld [vmem:[%s2082 + $0x34] sm:$0xf]
      %v2097 = vld [vmem:[%s2082 + $0x38] sm:$0xf]
      %v2098 = vld [vmem:[%s2082 + $0x3c] sm:$0xf]
      %v2115 = vunpack.c.l.b16 %v2083
      %v2116 = vunpack.c.l.b16 %v2084
      %v2117 = vunpack.c.l.b16 %v2085
      %v2118 = vunpack.c.l.b16 %v2086
      %v2119 = vunpack.c.l.b16 %v2087
      %v2120 = vunpack.c.l.b16 %v2088
      %v2121 = vunpack.c.l.b16 %v2089
      %v2122 = vunpack.c.l.b16 %v2090
      %v2123 = vunpack.c.l.b16 %v2091
      %v2124 = vunpack.c.l.b16 %v2092
      %v2125 = vunpack.c.l.b16 %v2093
      %v2126 = vunpack.c.l.b16 %v2094
      %v2127 = vunpack.c.l.b16 %v2095
      %v2128 = vunpack.c.l.b16 %v2096
      %v2129 = vunpack.c.l.b16 %v2097
      %v2130 = vunpack.c.l.b16 %v2098
      %v2131 = vpack.c.b16 %v2116, %v2115
      %v2132 = vpack.c.b16 %v2118, %v2117
      %v2133 = vpack.c.b16 %v2120, %v2119
      %v2134 = vpack.c.b16 %v2122, %v2121
      %v2135 = vpack.c.b16 %v2124, %v2123
      %v2136 = vpack.c.b16 %v2126, %v2125
      %v2137 = vpack.c.b16 %v2128, %v2127
      %v2138 = vpack.c.b16 %v2130, %v2129
      %2147 = vmatprep.subr.bf16.mxu0 0
      %2148 = vmatpush1.bf16.msra.mxu0 %v2138
      %2149 = vmatprep.subr.bf16.mxu0 0
      %2150 = vmatpush1.bf16.msra.mxu0 %v2137
      %2151 = vmatprep.subr.bf16.mxu0 0
      %2152 = vmatpush1.bf16.msra.mxu0 %v2136
      %2153 = vmatprep.subr.bf16.mxu0 0
      %2154 = vmatpush1.bf16.msra.mxu0 %v2135
      %2155 = vmatprep.subr.bf16.mxu0 0
      %2156 = vmatpush1.bf16.msra.mxu0 %v2134
      %2157 = vmatprep.subr.bf16.mxu0 0
      %2158 = vmatpush1.bf16.msra.mxu0 %v2133
      %2159 = vmatprep.subr.bf16.mxu0 0
      %2160 = vmatpush1.bf16.msra.mxu0 %v2132
      %2161 = vmatprep.subr.bf16.mxu0 0
      %2162 = vmatpush1.bf16.msra.mxu0 %v2131
      %2163 = vmatprep.subr.bf16.mxu0 0
      %2164 = vmatpush2.bf16.msra.mxu0 0
      %2165 = vmatprep.subr.bf16.mxu0 0
      %2166 = vmatpush2.bf16.msra.mxu0 0
      %2167 = vmatprep.subr.bf16.mxu0 0
      %2168 = vmatpush2.bf16.msra.mxu0 0
      %2169 = vmatprep.subr.bf16.mxu0 0
      %2170 = vmatpush2.bf16.msra.mxu0 0
      %2171 = vmatprep.subr.bf16.mxu0 0
      %2172 = vmatpush2.bf16.msra.mxu0 0
      %2173 = vmatprep.subr.bf16.mxu0 0
      %2174 = vmatpush2.bf16.msra.mxu0 0
      %2175 = vmatprep.subr.bf16.mxu0 0
      %2176 = vmatpush2.bf16.msra.mxu0 0
      %2177 = vmatprep.subr.bf16.mxu0 0
      %2178 = vmatpush2.bf16.msra.mxu0 0
      %2179 = vmatprep.mubr.bf16.mxu0 0
      %2180 = vmatmul.mubr.bf16.gmra.mxu0 %v875
      %v2181 = vpop.f32.mrf.mxu0
      %v2182 = vadd.f32 0.0, %v2181
      %v2183 = vpop.f32.mrf.mxu0
      %v2184 = vpop.f32.mrf.mxu0
      %v2185 = vadd.f32 0.0, %v2184
      %v2186 = vpop.f32.mrf.mxu0
      %2187 = vmatprep.mubr.bf16.mxu0 0
      %2188 = vmatmul.mubr.bf16.gmra.mxu0 %v876
      %v2189 = vpop.f32.mrf.mxu0
      %v2190 = vadd.f32 0.0, %v2189
      %v2191 = vpop.f32.mrf.mxu0
      %v2192 = vpop.f32.mrf.mxu0
      %v2193 = vadd.f32 0.0, %v2192
      %v2194 = vpop.f32.mrf.mxu0
      %2195 = vmatprep.mubr.bf16.mxu0 0
      %2196 = vmatmul.mubr.bf16.gmra.mxu0 %v877
      %v2197 = vpop.f32.mrf.mxu0
      %v2198 = vadd.f32 0.0, %v2197
      %v2199 = vpop.f32.mrf.mxu0
      %v2200 = vpop.f32.mrf.mxu0
      %v2201 = vadd.f32 0.0, %v2200
      %v2202 = vpop.f32.mrf.mxu0
      %2203 = vmatprep.mubr.bf16.mxu0 0
      %2204 = vmatmul.mubr.bf16.gmra.mxu0 %v878
      %v2205 = vpop.f32.mrf.mxu0
      %v2206 = vadd.f32 0.0, %v2205
      %v2207 = vpop.f32.mrf.mxu0
      %v2208 = vpop.f32.mrf.mxu0
      %v2209 = vadd.f32 0.0, %v2208
      %v2210 = vpop.f32.mrf.mxu0
      %2211 = vmatprep.mubr.bf16.mxu0 0
      %2212 = vmatmul.mubr.bf16.gmra.mxu0 %v879
      %v2213 = vpop.f32.mrf.mxu0
      %v2214 = vadd.f32 0.0, %v2213
      %v2215 = vpop.f32.mrf.mxu0
      %v2216 = vpop.f32.mrf.mxu0
      %v2217 = vadd.f32 0.0, %v2216
      %v2218 = vpop.f32.mrf.mxu0
      %2219 = vmatprep.mubr.bf16.mxu0 0
      %2220 = vmatmul.mubr.bf16.gmra.mxu0 %v880
      %v2221 = vpop.f32.mrf.mxu0
      %v2222 = vadd.f32 0.0, %v2221
      %v2223 = vpop.f32.mrf.mxu0
      %v2224 = vpop.f32.mrf.mxu0
      %v2225 = vadd.f32 0.0, %v2224
      %v2226 = vpop.f32.mrf.mxu0
      %2227 = vmatprep.mubr.bf16.mxu0 0
      %2228 = vmatmul.mubr.bf16.gmra.mxu0 %v1528
      %v2229 = vpop.f32.mrf.mxu0
      %v2230 = vadd.f32 0.0, %v2229
      %v2231 = vpop.f32.mrf.mxu0
      %v2232 = vpop.f32.mrf.mxu0
      %v2233 = vadd.f32 0.0, %v2232
      %v2234 = vpop.f32.mrf.mxu0
      %2235 = vmatprep.mubr.bf16.mxu0 0
      %2236 = vmatmul.mubr.bf16.gmra.mxu0 %v2081
      %v2237 = vpop.f32.mrf.mxu0
      %v2238 = vadd.f32 0.0, %v2237
      %v2239 = vpop.f32.mrf.mxu0
      %v2240 = vpop.f32.mrf.mxu0
      %v2241 = vadd.f32 0.0, %v2240
      %v2242 = vpop.f32.mrf.mxu0
      %2243 = vdwg.mxu0
      %v2244 = vadd.f32 %v2065, %v2182
      %v2245 = vadd.f32 %v2066, %v2185
      %v2246 = vadd.f32 %v2067, %v2190
      %v2247 = vadd.f32 %v2068, %v2193
      %v2248 = vadd.f32 %v2069, %v2198
      %v2249 = vadd.f32 %v2070, %v2201
      %v2250 = vadd.f32 %v2071, %v2206
      %v2251 = vadd.f32 %v2072, %v2209
      %v2252 = vadd.f32 %v2073, %v2214
      %v2253 = vadd.f32 %v2074, %v2217
      %v2254 = vadd.f32 %v2075, %v2222
      %v2255 = vadd.f32 %v2076, %v2225
      %v2256 = vadd.f32 %v2077, %v2230
      %v2257 = vadd.f32 %v2078, %v2233
      %v2258 = vadd.f32 %v2079, %v2238
      %v2259 = vadd.f32 %v2080, %v2241
      %v2262 = vrot.slane %v862, 1
      %v2263 = vrot.slane %v822, 1
      %v2264 = vsel %vm913, %v2262, %v2263
      %v2265 = vrot.slane %v872, 1
      %v2266 = vsel %vm913, %v2263, %v2265
      %v2269 = vpack.c.bf16 %v2266, %v2264
      %s2270 = scalar_lea.vmem %s4, 448
      %v2271 = vld [vmem:[%s2270] sm:$0xf]
      %v2272 = vld [vmem:[%s2270 + $0x4] sm:$0xf]
      %v2273 = vld [vmem:[%s2270 + $0x8] sm:$0xf]
      %v2274 = vld [vmem:[%s2270 + $0xc] sm:$0xf]
      %v2275 = vld [vmem:[%s2270 + $0x10] sm:$0xf]
      %v2276 = vld [vmem:[%s2270 + $0x14] sm:$0xf]
      %v2277 = vld [vmem:[%s2270 + $0x18] sm:$0xf]
      %v2278 = vld [vmem:[%s2270 + $0x1c] sm:$0xf]
      %v2279 = vld [vmem:[%s2270 + $0x20] sm:$0xf]
      %v2280 = vld [vmem:[%s2270 + $0x24] sm:$0xf]
      %v2281 = vld [vmem:[%s2270 + $0x28] sm:$0xf]
      %v2282 = vld [vmem:[%s2270 + $0x2c] sm:$0xf]
      %v2283 = vld [vmem:[%s2270 + $0x30] sm:$0xf]
      %v2284 = vld [vmem:[%s2270 + $0x34] sm:$0xf]
      %v2285 = vld [vmem:[%s2270 + $0x38] sm:$0xf]
      %v2286 = vld [vmem:[%s2270 + $0x3c] sm:$0xf]
      %v2303 = vunpack.c.l.b16 %v2271
      %v2304 = vunpack.c.l.b16 %v2272
      %v2305 = vunpack.c.l.b16 %v2273
      %v2306 = vunpack.c.l.b16 %v2274
      %v2307 = vunpack.c.l.b16 %v2275
      %v2308 = vunpack.c.l.b16 %v2276
      %v2309 = vunpack.c.l.b16 %v2277
      %v2310 = vunpack.c.l.b16 %v2278
      %v2311 = vunpack.c.l.b16 %v2279
      %v2312 = vunpack.c.l.b16 %v2280
      %v2313 = vunpack.c.l.b16 %v2281
      %v2314 = vunpack.c.l.b16 %v2282
      %v2315 = vunpack.c.l.b16 %v2283
      %v2316 = vunpack.c.l.b16 %v2284
      %v2317 = vunpack.c.l.b16 %v2285
      %v2318 = vunpack.c.l.b16 %v2286
      %v2319 = vpack.c.b16 %v2304, %v2303
      %v2320 = vpack.c.b16 %v2306, %v2305
      %v2321 = vpack.c.b16 %v2308, %v2307
      %v2322 = vpack.c.b16 %v2310, %v2309
      %v2323 = vpack.c.b16 %v2312, %v2311
      %v2324 = vpack.c.b16 %v2314, %v2313
      %v2325 = vpack.c.b16 %v2316, %v2315
      %v2326 = vpack.c.b16 %v2318, %v2317
      %2335 = vmatprep.subr.bf16.mxu0 0
      %2336 = vmatpush1.bf16.msra.mxu0 %v2326
      %2337 = vmatprep.subr.bf16.mxu0 0
      %2338 = vmatpush1.bf16.msra.mxu0 %v2325
      %2339 = vmatprep.subr.bf16.mxu0 0
      %2340 = vmatpush1.bf16.msra.mxu0 %v2324
      %2341 = vmatprep.subr.bf16.mxu0 0
      %2342 = vmatpush1.bf16.msra.mxu0 %v2323
      %2343 = vmatprep.subr.bf16.mxu0 0
      %2344 = vmatpush1.bf16.msra.mxu0 %v2322
      %2345 = vmatprep.subr.bf16.mxu0 0
      %2346 = vmatpush1.bf16.msra.mxu0 %v2321
      %2347 = vmatprep.subr.bf16.mxu0 0
      %2348 = vmatpush1.bf16.msra.mxu0 %v2320
      %2349 = vmatprep.subr.bf16.mxu0 0
      %2350 = vmatpush1.bf16.msra.mxu0 %v2319
      %2351 = vmatprep.subr.bf16.mxu0 0
      %2352 = vmatpush2.bf16.msra.mxu0 0
      %2353 = vmatprep.subr.bf16.mxu0 0
      %2354 = vmatpush2.bf16.msra.mxu0 0
      %2355 = vmatprep.subr.bf16.mxu0 0
      %2356 = vmatpush2.bf16.msra.mxu0 0
      %2357 = vmatprep.subr.bf16.mxu0 0
      %2358 = vmatpush2.bf16.msra.mxu0 0
      %2359 = vmatprep.subr.bf16.mxu0 0
      %2360 = vmatpush2.bf16.msra.mxu0 0
      %2361 = vmatprep.subr.bf16.mxu0 0
      %2362 = vmatpush2.bf16.msra.mxu0 0
      %2363 = vmatprep.subr.bf16.mxu0 0
      %2364 = vmatpush2.bf16.msra.mxu0 0
      %2365 = vmatprep.subr.bf16.mxu0 0
      %2366 = vmatpush2.bf16.msra.mxu0 0
      %2367 = vmatprep.mubr.bf16.mxu0 0
      %2368 = vmatmul.mubr.bf16.gmra.mxu0 %v972
      %v2369 = vpop.f32.mrf.mxu0
      %v2370 = vadd.f32 0.0, %v2369
      %v2371 = vpop.f32.mrf.mxu0
      %v2372 = vpop.f32.mrf.mxu0
      %v2373 = vadd.f32 0.0, %v2372
      %v2374 = vpop.f32.mrf.mxu0
      %2375 = vmatprep.mubr.bf16.mxu0 0
      %2376 = vmatmul.mubr.bf16.gmra.mxu0 %v973
      %v2377 = vpop.f32.mrf.mxu0
      %v2378 = vadd.f32 0.0, %v2377
      %v2379 = vpop.f32.mrf.mxu0
      %v2380 = vpop.f32.mrf.mxu0
      %v2381 = vadd.f32 0.0, %v2380
      %v2382 = vpop.f32.mrf.mxu0
      %2383 = vmatprep.mubr.bf16.mxu0 0
      %2384 = vmatmul.mubr.bf16.gmra.mxu0 %v974
      %v2385 = vpop.f32.mrf.mxu0
      %v2386 = vadd.f32 0.0, %v2385
      %v2387 = vpop.f32.mrf.mxu0
      %v2388 = vpop.f32.mrf.mxu0
      %v2389 = vadd.f32 0.0, %v2388
      %v2390 = vpop.f32.mrf.mxu0
      %2391 = vmatprep.mubr.bf16.mxu0 0
      %2392 = vmatmul.mubr.bf16.gmra.mxu0 %v975
      %v2393 = vpop.f32.mrf.mxu0
      %v2394 = vadd.f32 0.0, %v2393
      %v2395 = vpop.f32.mrf.mxu0
      %v2396 = vpop.f32.mrf.mxu0
      %v2397 = vadd.f32 0.0, %v2396
      %v2398 = vpop.f32.mrf.mxu0
      %2399 = vmatprep.mubr.bf16.mxu0 0
      %2400 = vmatmul.mubr.bf16.gmra.mxu0 %v976
      %v2401 = vpop.f32.mrf.mxu0
      %v2402 = vadd.f32 0.0, %v2401
      %v2403 = vpop.f32.mrf.mxu0
      %v2404 = vpop.f32.mrf.mxu0
      %v2405 = vadd.f32 0.0, %v2404
      %v2406 = vpop.f32.mrf.mxu0
      %2407 = vmatprep.mubr.bf16.mxu0 0
      %2408 = vmatmul.mubr.bf16.gmra.mxu0 %v977
      %v2409 = vpop.f32.mrf.mxu0
      %v2410 = vadd.f32 0.0, %v2409
      %v2411 = vpop.f32.mrf.mxu0
      %v2412 = vpop.f32.mrf.mxu0
      %v2413 = vadd.f32 0.0, %v2412
      %v2414 = vpop.f32.mrf.mxu0
      %2415 = vmatprep.mubr.bf16.mxu0 0
      %2416 = vmatmul.mubr.bf16.gmra.mxu0 %v1716
      %v2417 = vpop.f32.mrf.mxu0
      %v2418 = vadd.f32 0.0, %v2417
      %v2419 = vpop.f32.mrf.mxu0
      %v2420 = vpop.f32.mrf.mxu0
      %v2421 = vadd.f32 0.0, %v2420
      %v2422 = vpop.f32.mrf.mxu0
      %2423 = vmatprep.mubr.bf16.mxu0 0
      %2424 = vmatmul.mubr.bf16.gmra.mxu0 %v2269
      %v2425 = vpop.f32.mrf.mxu0
      %v2426 = vadd.f32 0.0, %v2425
      %v2427 = vpop.f32.mrf.mxu0
      %v2428 = vpop.f32.mrf.mxu0
      %v2429 = vadd.f32 0.0, %v2428
      %v2430 = vpop.f32.mrf.mxu0
      %2431 = vdwg.mxu0
      %v2432 = vadd.f32 %v2244, %v2370
      %v2433 = vadd.f32 %v2245, %v2373
      %v2434 = vadd.f32 %v2246, %v2378
      %v2435 = vadd.f32 %v2247, %v2381
      %v2436 = vadd.f32 %v2248, %v2386
      %v2437 = vadd.f32 %v2249, %v2389
      %v2438 = vadd.f32 %v2250, %v2394
      %v2439 = vadd.f32 %v2251, %v2397
      %v2440 = vadd.f32 %v2252, %v2402
      %v2441 = vadd.f32 %v2253, %v2405
      %v2442 = vadd.f32 %v2254, %v2410
      %v2443 = vadd.f32 %v2255, %v2413
      %v2444 = vadd.f32 %v2256, %v2418
      %v2445 = vadd.f32 %v2257, %v2421
      %v2446 = vadd.f32 %v2258, %v2426
      %v2447 = vadd.f32 %v2259, %v2429
      %v2448 = vrot.slane %v862, 2
      %v2449 = vrot.slane %v822, 2
      %v2450 = vsel %vm1285, %v2448, %v2449
      %v2451 = vrot.slane %v872, 2
      %v2452 = vsel %vm1285, %v2449, %v2451
      %v2455 = vpack.c.bf16 %v2452, %v2450
      %s2456 = scalar_lea.vmem %s4, 512
      %v2457 = vld [vmem:[%s2456] sm:$0xf]
      %v2458 = vld [vmem:[%s2456 + $0x4] sm:$0xf]
      %v2459 = vld [vmem:[%s2456 + $0x8] sm:$0xf]
      %v2460 = vld [vmem:[%s2456 + $0xc] sm:$0xf]
      %v2461 = vld [vmem:[%s2456 + $0x10] sm:$0xf]
      %v2462 = vld [vmem:[%s2456 + $0x14] sm:$0xf]
      %v2463 = vld [vmem:[%s2456 + $0x18] sm:$0xf]
      %v2464 = vld [vmem:[%s2456 + $0x1c] sm:$0xf]
      %v2465 = vld [vmem:[%s2456 + $0x20] sm:$0xf]
      %v2466 = vld [vmem:[%s2456 + $0x24] sm:$0xf]
      %v2467 = vld [vmem:[%s2456 + $0x28] sm:$0xf]
      %v2468 = vld [vmem:[%s2456 + $0x2c] sm:$0xf]
      %v2469 = vld [vmem:[%s2456 + $0x30] sm:$0xf]
      %v2470 = vld [vmem:[%s2456 + $0x34] sm:$0xf]
      %v2471 = vld [vmem:[%s2456 + $0x38] sm:$0xf]
      %v2472 = vld [vmem:[%s2456 + $0x3c] sm:$0xf]
      %v2489 = vunpack.c.l.b16 %v2457
      %v2490 = vunpack.c.l.b16 %v2458
      %v2491 = vunpack.c.l.b16 %v2459
      %v2492 = vunpack.c.l.b16 %v2460
      %v2493 = vunpack.c.l.b16 %v2461
      %v2494 = vunpack.c.l.b16 %v2462
      %v2495 = vunpack.c.l.b16 %v2463
      %v2496 = vunpack.c.l.b16 %v2464
      %v2497 = vunpack.c.l.b16 %v2465
      %v2498 = vunpack.c.l.b16 %v2466
      %v2499 = vunpack.c.l.b16 %v2467
      %v2500 = vunpack.c.l.b16 %v2468
      %v2501 = vunpack.c.l.b16 %v2469
      %v2502 = vunpack.c.l.b16 %v2470
      %v2503 = vunpack.c.l.b16 %v2471
      %v2504 = vunpack.c.l.b16 %v2472
      %v2505 = vpack.c.b16 %v2490, %v2489
      %v2506 = vpack.c.b16 %v2492, %v2491
      %v2507 = vpack.c.b16 %v2494, %v2493
      %v2508 = vpack.c.b16 %v2496, %v2495
      %v2509 = vpack.c.b16 %v2498, %v2497
      %v2510 = vpack.c.b16 %v2500, %v2499
      %v2511 = vpack.c.b16 %v2502, %v2501
      %v2512 = vpack.c.b16 %v2504, %v2503
      %2521 = vmatprep.subr.bf16.mxu0 0
      %2522 = vmatpush1.bf16.msra.mxu0 %v2512
      %2523 = vmatprep.subr.bf16.mxu0 0
      %2524 = vmatpush1.bf16.msra.mxu0 %v2511
      %2525 = vmatprep.subr.bf16.mxu0 0
      %2526 = vmatpush1.bf16.msra.mxu0 %v2510
      %2527 = vmatprep.subr.bf16.mxu0 0
      %2528 = vmatpush1.bf16.msra.mxu0 %v2509
      %2529 = vmatprep.subr.bf16.mxu0 0
      %2530 = vmatpush1.bf16.msra.mxu0 %v2508
      %2531 = vmatprep.subr.bf16.mxu0 0
      %2532 = vmatpush1.bf16.msra.mxu0 %v2507
      %2533 = vmatprep.subr.bf16.mxu0 0
      %2534 = vmatpush1.bf16.msra.mxu0 %v2506
      %2535 = vmatprep.subr.bf16.mxu0 0
      %2536 = vmatpush1.bf16.msra.mxu0 %v2505
      %2537 = vmatprep.subr.bf16.mxu0 0
      %2538 = vmatpush2.bf16.msra.mxu0 0
      %2539 = vmatprep.subr.bf16.mxu0 0
      %2540 = vmatpush2.bf16.msra.mxu0 0
      %2541 = vmatprep.subr.bf16.mxu0 0
      %2542 = vmatpush2.bf16.msra.mxu0 0
      %2543 = vmatprep.subr.bf16.mxu0 0
      %2544 = vmatpush2.bf16.msra.mxu0 0
      %2545 = vmatprep.subr.bf16.mxu0 0
      %2546 = vmatpush2.bf16.msra.mxu0 0
      %2547 = vmatprep.subr.bf16.mxu0 0
      %2548 = vmatpush2.bf16.msra.mxu0 0
      %2549 = vmatprep.subr.bf16.mxu0 0
      %2550 = vmatpush2.bf16.msra.mxu0 0
      %2551 = vmatprep.subr.bf16.mxu0 0
      %2552 = vmatpush2.bf16.msra.mxu0 0
      %2553 = vmatprep.mubr.bf16.mxu0 0
      %2554 = vmatmul.mubr.bf16.gmra.mxu0 %v1344
      %v2555 = vpop.f32.mrf.mxu0
      %v2556 = vadd.f32 0.0, %v2555
      %v2557 = vpop.f32.mrf.mxu0
      %v2558 = vpop.f32.mrf.mxu0
      %v2559 = vadd.f32 0.0, %v2558
      %v2560 = vpop.f32.mrf.mxu0
      %2561 = vmatprep.mubr.bf16.mxu0 0
      %2562 = vmatmul.mubr.bf16.gmra.mxu0 %v1345
      %v2563 = vpop.f32.mrf.mxu0
      %v2564 = vadd.f32 0.0, %v2563
      %v2565 = vpop.f32.mrf.mxu0
      %v2566 = vpop.f32.mrf.mxu0
      %v2567 = vadd.f32 0.0, %v2566
      %v2568 = vpop.f32.mrf.mxu0
      %2569 = vmatprep.mubr.bf16.mxu0 0
      %2570 = vmatmul.mubr.bf16.gmra.mxu0 %v1346
      %v2571 = vpop.f32.mrf.mxu0
      %v2572 = vadd.f32 0.0, %v2571
      %v2573 = vpop.f32.mrf.mxu0
      %v2574 = vpop.f32.mrf.mxu0
      %v2575 = vadd.f32 0.0, %v2574
      %v2576 = vpop.f32.mrf.mxu0
      %2577 = vmatprep.mubr.bf16.mxu0 0
      %2578 = vmatmul.mubr.bf16.gmra.mxu0 %v1347
      %v2579 = vpop.f32.mrf.mxu0
      %v2580 = vadd.f32 0.0, %v2579
      %v2581 = vpop.f32.mrf.mxu0
      %v2582 = vpop.f32.mrf.mxu0
      %v2583 = vadd.f32 0.0, %v2582
      %v2584 = vpop.f32.mrf.mxu0
      %2585 = vmatprep.mubr.bf16.mxu0 0
      %2586 = vmatmul.mubr.bf16.gmra.mxu0 %v1348
      %v2587 = vpop.f32.mrf.mxu0
      %v2588 = vadd.f32 0.0, %v2587
      %v2589 = vpop.f32.mrf.mxu0
      %v2590 = vpop.f32.mrf.mxu0
      %v2591 = vadd.f32 0.0, %v2590
      %v2592 = vpop.f32.mrf.mxu0
      %2593 = vmatprep.mubr.bf16.mxu0 0
      %2594 = vmatmul.mubr.bf16.gmra.mxu0 %v1349
      %v2595 = vpop.f32.mrf.mxu0
      %v2596 = vadd.f32 0.0, %v2595
      %v2597 = vpop.f32.mrf.mxu0
      %v2598 = vpop.f32.mrf.mxu0
      %v2599 = vadd.f32 0.0, %v2598
      %v2600 = vpop.f32.mrf.mxu0
      %2601 = vmatprep.mubr.bf16.mxu0 0
      %2602 = vmatmul.mubr.bf16.gmra.mxu0 %v1902
      %v2603 = vpop.f32.mrf.mxu0
      %v2604 = vadd.f32 0.0, %v2603
      %v2605 = vpop.f32.mrf.mxu0
      %v2606 = vpop.f32.mrf.mxu0
      %v2607 = vadd.f32 0.0, %v2606
      %v2608 = vpop.f32.mrf.mxu0
      %2609 = vmatprep.mubr.bf16.mxu0 0
      %2610 = vmatmul.mubr.bf16.gmra.mxu0 %v2455
      %v2611 = vpop.f32.mrf.mxu0
      %v2612 = vadd.f32 0.0, %v2611
      %v2613 = vpop.f32.mrf.mxu0
      %v2614 = vpop.f32.mrf.mxu0
      %v2615 = vadd.f32 0.0, %v2614
      %v2616 = vpop.f32.mrf.mxu0
      %2617 = vdwg.mxu0
      %v2618 = vadd.f32 %v2432, %v2556
      %v2619 = vadd.f32 %v2433, %v2559
      %v2620 = vadd.f32 %v2434, %v2564
      %v2621 = vadd.f32 %v2435, %v2567
      %v2622 = vadd.f32 %v2436, %v2572
      %v2623 = vadd.f32 %v2437, %v2575
      %v2624 = vadd.f32 %v2438, %v2580
      %v2625 = vadd.f32 %v2439, %v2583
      %v2626 = vadd.f32 %v2440, %v2588
      %v2627 = vadd.f32 %v2441, %v2591
      %v2628 = vadd.f32 %v2442, %v2596
      %v2629 = vadd.f32 %v2443, %v2599
      %v2630 = vadd.f32 %v2444, %v2604
      %v2631 = vadd.f32 %v2445, %v2607
      %v2632 = vadd.f32 %v2446, %v2612
      %v2633 = vadd.f32 %v2447, %v2615
      %v2634 = vld [vmem:[%s8] sm:$0x1]
      %v2636 = vlaneseq
      %v2637 = vshrl.u32 %v2636, 7
      %v2638 = vsub.s32 0, %v2637
      %v2639 = vrot.slane %v2634, %v2638
      %v2641 = vadd.f32 %v2618, %v2639
      %v2642 = vadd.f32 %v2619, %v2639
      %v2643 = vadd.f32 %v2620, %v2639
      %v2644 = vadd.f32 %v2621, %v2639
      %v2645 = vadd.f32 %v2622, %v2639
      %v2646 = vadd.f32 %v2623, %v2639
      %v2647 = vadd.f32 %v2624, %v2639
      %v2648 = vadd.f32 %v2625, %v2639
      %v2649 = vadd.f32 %v2626, %v2639
      %v2650 = vadd.f32 %v2627, %v2639
      %v2651 = vadd.f32 %v2628, %v2639
      %v2652 = vadd.f32 %v2629, %v2639
      %v2653 = vadd.f32 %v2630, %v2639
      %v2654 = vadd.f32 %v2631, %v2639
      %v2655 = vadd.f32 %v2632, %v2639
      %v2656 = vadd.f32 %v2633, %v2639
      %v2657 = vmax.f32 %v2641, 0.0
      %v2658 = vmax.f32 %v2642, 0.0
      %v2659 = vmax.f32 %v2643, 0.0
      %v2660 = vmax.f32 %v2644, 0.0
      %v2661 = vmax.f32 %v2645, 0.0
      %v2662 = vmax.f32 %v2646, 0.0
      %v2663 = vmax.f32 %v2647, 0.0
      %v2664 = vmax.f32 %v2648, 0.0
      %v2665 = vmax.f32 %v2649, 0.0
      %v2666 = vmax.f32 %v2650, 0.0
      %v2667 = vmax.f32 %v2651, 0.0
      %v2668 = vmax.f32 %v2652, 0.0
      %v2669 = vmax.f32 %v2653, 0.0
      %v2670 = vmax.f32 %v2654, 0.0
      %v2671 = vmax.f32 %v2655, 0.0
      %v2672 = vmax.f32 %v2656, 0.0
      %v2673 = vld [vmem:[%s622] sm:$0xf]
      %v2674 = vld [vmem:[%s622 + $0x4] sm:$0xf]
      %v2675 = vld [vmem:[%s622 + $0x8] sm:$0x1]
      %v2676 = vld [vmem:[%s622 + $0x10] sm:$0xf]
      %v2677 = vld [vmem:[%s622 + $0x14] sm:$0xf]
      %v2678 = vld [vmem:[%s622 + $0x18] sm:$0x1]
      %v2679 = vld [vmem:[%s622 + $0x20] sm:$0xf]
      %v2680 = vld [vmem:[%s622 + $0x24] sm:$0xf]
      %v2681 = vld [vmem:[%s622 + $0x28] sm:$0x1]
      %v2682 = vld [vmem:[%s622 + $0x30] sm:$0xf]
      %v2683 = vld [vmem:[%s622 + $0x34] sm:$0xf]
      %v2684 = vld [vmem:[%s622 + $0x38] sm:$0x1]
      %v2685 = vld [vmem:[%s622 + $0x40] sm:$0xf]
      %v2686 = vld [vmem:[%s622 + $0x44] sm:$0xf]
      %v2687 = vld [vmem:[%s622 + $0x48] sm:$0x1]
      %v2688 = vld [vmem:[%s622 + $0x50] sm:$0xf]
      %v2689 = vld [vmem:[%s622 + $0x54] sm:$0xf]
      %v2690 = vld [vmem:[%s622 + $0x58] sm:$0x1]
      %v2691 = vld [vmem:[%s622 + $0x60] sm:$0xf]
      %v2692 = vld [vmem:[%s622 + $0x64] sm:$0xf]
      %v2693 = vld [vmem:[%s622 + $0x68] sm:$0x1]
      %v2694 = vld [vmem:[%s622 + $0x70] sm:$0xf]
      %v2695 = vld [vmem:[%s622 + $0x74] sm:$0xf]
      %v2696 = vld [vmem:[%s622 + $0x78] sm:$0x1]
      %vm2697 = vsmask.f32 3328
      %vm2698 = vsmask.f32 7440
      %vm2699 = vmor %vm2697, %vm2698
      %v2701 = vshrl.u32 %v2673, 16
      %v2703 = vrot.slane %v2701, 4
      %v2704 = vshll.u32 %v2673, 16
      %v2706 = vrot.slane %v2704, 5
      %v2707 = vor.u32 %v2703, %v2706
      %v2708 = vrot.slane %v2707, 4
      %v2710 = vshll.u32 %v2674, 16
      %v2712 = vrot.slane %v2710, 5
      %v2713 = vsel %vm2699, %v2708, %v2712
      %v2714 = vshrl.u32 %v2674, 16
      %v2716 = vrot.slane %v2714, 4
      %v2717 = vor.u32 %v2716, %v2712
      %v2718 = vrot.slane %v2717, 4
      %v2720 = vshll.u32 %v2675, 16
      %v2722 = vrot.slane %v2720, 5
      %v2723 = vsel %vm2699, %v2718, %v2722
      %v2725 = vshrl.u32 %v2676, 16
      %v2727 = vrot.slane %v2725, 4
      %v2728 = vshll.u32 %v2676, 16
      %v2730 = vrot.slane %v2728, 5
      %v2731 = vor.u32 %v2727, %v2730
      %v2732 = vrot.slane %v2731, 4
      %v2734 = vshll.u32 %v2677, 16
      %v2736 = vrot.slane %v2734, 5
      %v2737 = vsel %vm2699, %v2732, %v2736
      %v2738 = vshrl.u32 %v2677, 16
      %v2740 = vrot.slane %v2738, 4
      %v2741 = vor.u32 %v2740, %v2736
      %v2742 = vrot.slane %v2741, 4
      %v2744 = vshll.u32 %v2678, 16
      %v2746 = vrot.slane %v2744, 5
      %v2747 = vsel %vm2699, %v2742, %v2746
      %v2749 = vshrl.u32 %v2679, 16
      %v2751 = vrot.slane %v2749, 4
      %v2752 = vshll.u32 %v2679, 16
      %v2754 = vrot.slane %v2752, 5
      %v2755 = vor.u32 %v2751, %v2754
      %v2756 = vrot.slane %v2755, 4
      %v2758 = vshll.u32 %v2680, 16
      %v2760 = vrot.slane %v2758, 5
      %v2761 = vsel %vm2699, %v2756, %v2760
      %v2762 = vshrl.u32 %v2680, 16
      %v2764 = vrot.slane %v2762, 4
      %v2765 = vor.u32 %v2764, %v2760
      %v2766 = vrot.slane %v2765, 4
      %v2768 = vshll.u32 %v2681, 16
      %v2770 = vrot.slane %v2768, 5
      %v2771 = vsel %vm2699, %v2766, %v2770
      %v2773 = vshrl.u32 %v2682, 16
      %v2775 = vrot.slane %v2773, 4
      %v2776 = vshll.u32 %v2682, 16
      %v2778 = vrot.slane %v2776, 5
      %v2779 = vor.u32 %v2775, %v2778
      %v2780 = vrot.slane %v2779, 4
      %v2782 = vshll.u32 %v2683, 16
      %v2784 = vrot.slane %v2782, 5
      %v2785 = vsel %vm2699, %v2780, %v2784
      %v2786 = vshrl.u32 %v2683, 16
      %v2788 = vrot.slane %v2786, 4
      %v2789 = vor.u32 %v2788, %v2784
      %v2790 = vrot.slane %v2789, 4
      %v2792 = vshll.u32 %v2684, 16
      %v2794 = vrot.slane %v2792, 5
      %v2795 = vsel %vm2699, %v2790, %v2794
      %v2797 = vshrl.u32 %v2685, 16
      %v2799 = vrot.slane %v2797, 4
      %v2800 = vshll.u32 %v2685, 16
      %v2802 = vrot.slane %v2800, 5
      %v2803 = vor.u32 %v2799, %v2802
      %v2804 = vrot.slane %v2803, 4
      %v2806 = vshll.u32 %v2686, 16
      %v2808 = vrot.slane %v2806, 5
      %v2809 = vsel %vm2699, %v2804, %v2808
      %v2810 = vshrl.u32 %v2686, 16
      %v2812 = vrot.slane %v2810, 4
      %v2813 = vor.u32 %v2812, %v2808
      %v2814 = vrot.slane %v2813, 4
      %v2816 = vshll.u32 %v2687, 16
      %v2818 = vrot.slane %v2816, 5
      %v2819 = vsel %vm2699, %v2814, %v2818
      %v2821 = vshrl.u32 %v2688, 16
      %v2823 = vrot.slane %v2821, 4
      %v2824 = vshll.u32 %v2688, 16
      %v2826 = vrot.slane %v2824, 5
      %v2827 = vor.u32 %v2823, %v2826
      %v2828 = vrot.slane %v2827, 4
      %v2830 = vshll.u32 %v2689, 16
      %v2832 = vrot.slane %v2830, 5
      %v2833 = vsel %vm2699, %v2828, %v2832
      %v2834 = vshrl.u32 %v2689, 16
      %v2836 = vrot.slane %v2834, 4
      %v2837 = vor.u32 %v2836, %v2832
      %v2838 = vrot.slane %v2837, 4
      %v2840 = vshll.u32 %v2690, 16
      %v2842 = vrot.slane %v2840, 5
      %v2843 = vsel %vm2699, %v2838, %v2842
      %v2845 = vshrl.u32 %v2691, 16
      %v2847 = vrot.slane %v2845, 4
      %v2848 = vshll.u32 %v2691, 16
      %v2850 = vrot.slane %v2848, 5
      %v2851 = vor.u32 %v2847, %v2850
      %v2852 = vrot.slane %v2851, 4
      %v2854 = vshll.u32 %v2692, 16
      %v2856 = vrot.slane %v2854, 5
      %v2857 = vsel %vm2699, %v2852, %v2856
      %v2858 = vshrl.u32 %v2692, 16
      %v2860 = vrot.slane %v2858, 4
      %v2861 = vor.u32 %v2860, %v2856
      %v2862 = vrot.slane %v2861, 4
      %v2864 = vshll.u32 %v2693, 16
      %v2866 = vrot.slane %v2864, 5
      %v2867 = vsel %vm2699, %v2862, %v2866
      %v2869 = vshrl.u32 %v2694, 16
      %v2871 = vrot.slane %v2869, 4
      %v2872 = vshll.u32 %v2694, 16
      %v2874 = vrot.slane %v2872, 5
      %v2875 = vor.u32 %v2871, %v2874
      %v2876 = vrot.slane %v2875, 4
      %v2878 = vshll.u32 %v2695, 16
      %v2880 = vrot.slane %v2878, 5
      %v2881 = vsel %vm2699, %v2876, %v2880
      %v2882 = vshrl.u32 %v2695, 16
      %v2884 = vrot.slane %v2882, 4
      %v2885 = vor.u32 %v2884, %v2880
      %v2886 = vrot.slane %v2885, 4
      %v2888 = vshll.u32 %v2696, 16
      %v2890 = vrot.slane %v2888, 5
      %v2891 = vsel %vm2699, %v2886, %v2890
      %v2892 = vld [vmem:[%s5] sm:$0xf]
      %v2893 = vld [vmem:[%s5 + $0x4] sm:$0xf]
      %v2894 = vld [vmem:[%s5 + $0x8] sm:$0xf]
      %v2895 = vld [vmem:[%s5 + $0xc] sm:$0xf]
      %v2896 = vld [vmem:[%s5 + $0x10] sm:$0xf]
      %v2897 = vld [vmem:[%s5 + $0x14] sm:$0xf]
      %v2898 = vld [vmem:[%s5 + $0x18] sm:$0xf]
      %v2899 = vld [vmem:[%s5 + $0x1c] sm:$0xf]
      %v2900 = vld [vmem:[%s5 + $0x20] sm:$0xf]
      %v2901 = vld [vmem:[%s5 + $0x24] sm:$0xf]
      %v2902 = vld [vmem:[%s5 + $0x28] sm:$0xf]
      %v2903 = vld [vmem:[%s5 + $0x2c] sm:$0xf]
      %v2904 = vld [vmem:[%s5 + $0x30] sm:$0xf]
      %v2905 = vld [vmem:[%s5 + $0x34] sm:$0xf]
      %v2906 = vld [vmem:[%s5 + $0x38] sm:$0xf]
      %v2907 = vld [vmem:[%s5 + $0x3c] sm:$0xf]
      %v2908 = vunpack.c.l.b16 %v2713
      %v2909 = vunpack.c.l.b16 %v2723
      %v2910 = vunpack.c.l.b16 %v2737
      %v2911 = vunpack.c.l.b16 %v2747
      %v2912 = vunpack.c.l.b16 %v2761
      %v2913 = vunpack.c.l.b16 %v2771
      %v2914 = vunpack.c.l.b16 %v2785
      %v2915 = vunpack.c.l.b16 %v2795
      %v2916 = vunpack.c.l.b16 %v2809
      %v2917 = vunpack.c.l.b16 %v2819
      %v2918 = vunpack.c.l.b16 %v2833
      %v2919 = vunpack.c.l.b16 %v2843
      %v2920 = vunpack.c.l.b16 %v2857
      %v2921 = vunpack.c.l.b16 %v2867
      %v2922 = vunpack.c.l.b16 %v2881
      %v2923 = vunpack.c.l.b16 %v2891
      %v2924 = vpack.c.b16 %v2909, %v2908
      %v2925 = vpack.c.b16 %v2911, %v2910
      %v2926 = vpack.c.b16 %v2913, %v2912
      %v2927 = vpack.c.b16 %v2915, %v2914
      %v2928 = vpack.c.b16 %v2917, %v2916
      %v2929 = vpack.c.b16 %v2919, %v2918
      %v2930 = vpack.c.b16 %v2921, %v2920
      %v2931 = vpack.c.b16 %v2923, %v2922
      %v2956 = vunpack.c.l.b16 %v2892
      %v2957 = vunpack.c.l.b16 %v2893
      %v2958 = vunpack.c.l.b16 %v2894
      %v2959 = vunpack.c.l.b16 %v2895
      %v2960 = vunpack.c.l.b16 %v2896
      %v2961 = vunpack.c.l.b16 %v2897
      %v2962 = vunpack.c.l.b16 %v2898
      %v2963 = vunpack.c.l.b16 %v2899
      %v2964 = vunpack.c.l.b16 %v2900
      %v2965 = vunpack.c.l.b16 %v2901
      %v2966 = vunpack.c.l.b16 %v2902
      %v2967 = vunpack.c.l.b16 %v2903
      %v2968 = vunpack.c.l.b16 %v2904
      %v2969 = vunpack.c.l.b16 %v2905
      %v2970 = vunpack.c.l.b16 %v2906
      %v2971 = vunpack.c.l.b16 %v2907
      %v2972 = vpack.c.b16 %v2957, %v2956
      %v2973 = vpack.c.b16 %v2959, %v2958
      %v2974 = vpack.c.b16 %v2961, %v2960
      %v2975 = vpack.c.b16 %v2963, %v2962
      %v2976 = vpack.c.b16 %v2965, %v2964
      %v2977 = vpack.c.b16 %v2967, %v2966
      %v2978 = vpack.c.b16 %v2969, %v2968
      %v2979 = vpack.c.b16 %v2971, %v2970
      %2988 = vmatprep.subr.bf16.mxu0 0
      %2989 = vmatpush1.bf16.msra.mxu0 %v2979
      %2990 = vmatprep.subr.bf16.mxu0 0
      %2991 = vmatpush1.bf16.msra.mxu0 %v2978
      %2992 = vmatprep.subr.bf16.mxu0 0
      %2993 = vmatpush1.bf16.msra.mxu0 %v2977
      %2994 = vmatprep.subr.bf16.mxu0 0
      %2995 = vmatpush1.bf16.msra.mxu0 %v2976
      %2996 = vmatprep.subr.bf16.mxu0 0
      %2997 = vmatpush1.bf16.msra.mxu0 %v2975
      %2998 = vmatprep.subr.bf16.mxu0 0
      %2999 = vmatpush1.bf16.msra.mxu0 %v2974
      %3000 = vmatprep.subr.bf16.mxu0 0
      %3001 = vmatpush1.bf16.msra.mxu0 %v2973
      %3002 = vmatprep.subr.bf16.mxu0 0
      %3003 = vmatpush1.bf16.msra.mxu0 %v2972
      %3004 = vmatprep.subr.bf16.mxu0 0
      %3005 = vmatpush2.bf16.msra.mxu0 0
      %3006 = vmatprep.subr.bf16.mxu0 0
      %3007 = vmatpush2.bf16.msra.mxu0 0
      %3008 = vmatprep.subr.bf16.mxu0 0
      %3009 = vmatpush2.bf16.msra.mxu0 0
      %3010 = vmatprep.subr.bf16.mxu0 0
      %3011 = vmatpush2.bf16.msra.mxu0 0
      %3012 = vmatprep.subr.bf16.mxu0 0
      %3013 = vmatpush2.bf16.msra.mxu0 0
      %3014 = vmatprep.subr.bf16.mxu0 0
      %3015 = vmatpush2.bf16.msra.mxu0 0
      %3016 = vmatprep.subr.bf16.mxu0 0
      %3017 = vmatpush2.bf16.msra.mxu0 0
      %3018 = vmatprep.subr.bf16.mxu0 0
      %3019 = vmatpush2.bf16.msra.mxu0 0
      %3020 = vmatprep.mubr.bf16.mxu0 0
      %3021 = vmatmul.mubr.bf16.gmra.mxu0 %v2924
      %v3022 = vpop.f32.mrf.mxu0
      %v3023 = vadd.f32 0.0, %v3022
      %v3024 = vpop.f32.mrf.mxu0
      %v3025 = vpop.f32.mrf.mxu0
      %v3026 = vadd.f32 0.0, %v3025
      %v3027 = vpop.f32.mrf.mxu0
      %3028 = vmatprep.mubr.bf16.mxu0 0
      %3029 = vmatmul.mubr.bf16.gmra.mxu0 %v2925
      %v3030 = vpop.f32.mrf.mxu0
      %v3031 = vadd.f32 0.0, %v3030
      %v3032 = vpop.f32.mrf.mxu0
      %v3033 = vpop.f32.mrf.mxu0
      %v3034 = vadd.f32 0.0, %v3033
      %v3035 = vpop.f32.mrf.mxu0
      %3036 = vmatprep.mubr.bf16.mxu0 0
      %3037 = vmatmul.mubr.bf16.gmra.mxu0 %v2926
      %v3038 = vpop.f32.mrf.mxu0
      %v3039 = vadd.f32 0.0, %v3038
      %v3040 = vpop.f32.mrf.mxu0
      %v3041 = vpop.f32.mrf.mxu0
      %v3042 = vadd.f32 0.0, %v3041
      %v3043 = vpop.f32.mrf.mxu0
      %3044 = vmatprep.mubr.bf16.mxu0 0
      %3045 = vmatmul.mubr.bf16.gmra.mxu0 %v2927
      %v3046 = vpop.f32.mrf.mxu0
      %v3047 = vadd.f32 0.0, %v3046
      %v3048 = vpop.f32.mrf.mxu0
      %v3049 = vpop.f32.mrf.mxu0
      %v3050 = vadd.f32 0.0, %v3049
      %v3051 = vpop.f32.mrf.mxu0
      %3052 = vmatprep.mubr.bf16.mxu0 0
      %3053 = vmatmul.mubr.bf16.gmra.mxu0 %v2928
      %v3054 = vpop.f32.mrf.mxu0
      %v3055 = vadd.f32 0.0, %v3054
      %v3056 = vpop.f32.mrf.mxu0
      %v3057 = vpop.f32.mrf.mxu0
      %v3058 = vadd.f32 0.0, %v3057
      %v3059 = vpop.f32.mrf.mxu0
      %3060 = vmatprep.mubr.bf16.mxu0 0
      %3061 = vmatmul.mubr.bf16.gmra.mxu0 %v2929
      %v3062 = vpop.f32.mrf.mxu0
      %v3063 = vadd.f32 0.0, %v3062
      %v3064 = vpop.f32.mrf.mxu0
      %v3065 = vpop.f32.mrf.mxu0
      %v3066 = vadd.f32 0.0, %v3065
      %v3067 = vpop.f32.mrf.mxu0
      %3068 = vmatprep.mubr.bf16.mxu0 0
      %3069 = vmatmul.mubr.bf16.gmra.mxu0 %v2930
      %v3070 = vpop.f32.mrf.mxu0
      %v3071 = vadd.f32 0.0, %v3070
      %v3072 = vpop.f32.mrf.mxu0
      %v3073 = vpop.f32.mrf.mxu0
      %v3074 = vadd.f32 0.0, %v3073
      %v3075 = vpop.f32.mrf.mxu0
      %3076 = vmatprep.mubr.bf16.mxu0 0
      %3077 = vmatmul.mubr.bf16.gmra.mxu0 %v2931
      %v3078 = vpop.f32.mrf.mxu0
      %v3079 = vadd.f32 0.0, %v3078
      %v3080 = vpop.f32.mrf.mxu0
      %v3081 = vpop.f32.mrf.mxu0
      %v3082 = vadd.f32 0.0, %v3081
      %v3083 = vpop.f32.mrf.mxu0
      %3084 = vdwg.mxu0
      %v3085 = vld [vmem:[%s9] sm:$0x1]
      %v3087 = vlaneseq
      %v3088 = vshrl.u32 %v3087, 7
      %v3089 = vsub.s32 0, %v3088
      %v3090 = vrot.slane %v3085, %v3089
      %v3092 = vmul.f32 %v3023, %v3090
      %v3093 = vmul.f32 %v3026, %v3090
      %v3094 = vmul.f32 %v3031, %v3090
      %v3095 = vmul.f32 %v3034, %v3090
      %v3096 = vmul.f32 %v3039, %v3090
      %v3097 = vmul.f32 %v3042, %v3090
      %v3098 = vmul.f32 %v3047, %v3090
      %v3099 = vmul.f32 %v3050, %v3090
      %v3100 = vmul.f32 %v3055, %v3090
      %v3101 = vmul.f32 %v3058, %v3090
      %v3102 = vmul.f32 %v3063, %v3090
      %v3103 = vmul.f32 %v3066, %v3090
      %v3104 = vmul.f32 %v3071, %v3090
      %v3105 = vmul.f32 %v3074, %v3090
      %v3106 = vmul.f32 %v3079, %v3090
      %v3107 = vmul.f32 %v3082, %v3090
      %v3108 = vld [vmem:[%s10] sm:$0x1]
      %v3110 = vlaneseq
      %v3111 = vshrl.u32 %v3110, 7
      %v3112 = vsub.s32 0, %v3111
      %v3113 = vrot.slane %v3108, %v3112
      %v3115 = vadd.f32 %v3092, %v3113
      %v3116 = vadd.f32 %v3093, %v3113
      %v3117 = vadd.f32 %v3094, %v3113
      %v3118 = vadd.f32 %v3095, %v3113
      %v3119 = vadd.f32 %v3096, %v3113
      %v3120 = vadd.f32 %v3097, %v3113
      %v3121 = vadd.f32 %v3098, %v3113
      %v3122 = vadd.f32 %v3099, %v3113
      %v3123 = vadd.f32 %v3100, %v3113
      %v3124 = vadd.f32 %v3101, %v3113
      %v3125 = vadd.f32 %v3102, %v3113
      %v3126 = vadd.f32 %v3103, %v3113
      %v3127 = vadd.f32 %v3104, %v3113
      %v3128 = vadd.f32 %v3105, %v3113
      %v3129 = vadd.f32 %v3106, %v3113
      %v3130 = vadd.f32 %v3107, %v3113
      %v3131 = vadd.f32 %v2657, %v3115
      %v3132 = vadd.f32 %v2658, %v3116
      %v3133 = vadd.f32 %v2659, %v3117
      %v3134 = vadd.f32 %v2660, %v3118
      %v3135 = vadd.f32 %v2661, %v3119
      %v3136 = vadd.f32 %v2662, %v3120
      %v3137 = vadd.f32 %v2663, %v3121
      %v3138 = vadd.f32 %v2664, %v3122
      %v3139 = vadd.f32 %v2665, %v3123
      %v3140 = vadd.f32 %v2666, %v3124
      %v3141 = vadd.f32 %v2667, %v3125
      %v3142 = vadd.f32 %v2668, %v3126
      %v3143 = vadd.f32 %v2669, %v3127
      %v3144 = vadd.f32 %v2670, %v3128
      %v3145 = vadd.f32 %v2671, %v3129
      %v3146 = vadd.f32 %v2672, %v3130
      %v3147 = vmax.f32 %v3131, 0.0
      %v3148 = vmax.f32 %v3132, 0.0
      %v3149 = vmax.f32 %v3133, 0.0
      %v3150 = vmax.f32 %v3134, 0.0
      %v3151 = vmax.f32 %v3135, 0.0
      %v3152 = vmax.f32 %v3136, 0.0
      %v3153 = vmax.f32 %v3137, 0.0
      %v3154 = vmax.f32 %v3138, 0.0
      %v3155 = vmax.f32 %v3139, 0.0
      %v3156 = vmax.f32 %v3140, 0.0
      %v3157 = vmax.f32 %v3141, 0.0
      %v3158 = vmax.f32 %v3142, 0.0
      %v3159 = vmax.f32 %v3143, 0.0
      %v3160 = vmax.f32 %v3144, 0.0
      %v3161 = vmax.f32 %v3145, 0.0
      %v3162 = vmax.f32 %v3146, 0.0
      %3163 = vst [vmem:[%s633] sm:$0xff] %v3147
      %3164 = vst [vmem:[%s633 + $0x8] sm:$0xff] %v3148
      %3165 = vst [vmem:[%s633 + $0x10] sm:$0xff] %v3149
      %3166 = vst [vmem:[%s633 + $0x18] sm:$0xff] %v3150
      %3167 = vst [vmem:[%s633 + $0x20] sm:$0xff] %v3151
      %3168 = vst [vmem:[%s633 + $0x28] sm:$0xff] %v3152
      %3169 = vst [vmem:[%s633 + $0x30] sm:$0xff] %v3153
      %3170 = vst [vmem:[%s633 + $0x38] sm:$0xff] %v3154
      %3171 = vst [vmem:[%s633 + $0x40] sm:$0xff] %v3155
      %3172 = vst [vmem:[%s633 + $0x48] sm:$0xff] %v3156
      %3173 = vst [vmem:[%s633 + $0x50] sm:$0xff] %v3157
      %3174 = vst [vmem:[%s633 + $0x58] sm:$0xff] %v3158
      %3175 = vst [vmem:[%s633 + $0x60] sm:$0xff] %v3159
      %3176 = vst [vmem:[%s633 + $0x68] sm:$0xff] %v3160
      %3177 = vst [vmem:[%s633 + $0x70] sm:$0xff] %v3161
      %3178 = vst [vmem:[%s633 + $0x78] sm:$0xff] %v3162
      %v3195 = vcombine.high %v3147, %v3147
      %v3197 = vunpack.c.l.s4 1983009808
      %v3198 = vunpack.c.0.s8 %v3197
      %v3199 = vlaneseq
      %v3200 = vshrl.u32 %v3199, 7
      %v3201 = vsub.s32 %v3198, %v3200
      %v3202 = vrot.slane %v3147, %v3201
      %v3204 = vunpack.c.l.s4 1983009808
      %v3205 = vunpack.c.0.s8 %v3204
      %v3206 = vlaneseq
      %v3207 = vshrl.u32 %v3206, 7
      %v3208 = vsub.s32 %v3205, %v3207
      %v3209 = vrot.slane %v3195, %v3208
      %v3210 = vcombine.high %v3202, %v3202
      %v3211 = vcombine.high %v3209, %v3209
      %v3212 = vcombine.high %v3148, %v3148
      %v3214 = vunpack.c.l.s4 1983009808
      %v3215 = vunpack.c.0.s8 %v3214
      %v3216 = vlaneseq
      %v3217 = vshrl.u32 %v3216, 7
      %v3218 = vsub.s32 %v3215, %v3217
      %v3219 = vrot.slane %v3148, %v3218
      %v3221 = vunpack.c.l.s4 1983009808
      %v3222 = vunpack.c.0.s8 %v3221
      %v3223 = vlaneseq
      %v3224 = vshrl.u32 %v3223, 7
      %v3225 = vsub.s32 %v3222, %v3224
      %v3226 = vrot.slane %v3212, %v3225
      %v3227 = vcombine.high %v3219, %v3219
      %v3228 = vcombine.high %v3226, %v3226
      %v3229 = vcombine.high %v3149, %v3149
      %v3231 = vunpack.c.l.s4 1983009808
      %v3232 = vunpack.c.0.s8 %v3231
      %v3233 = vlaneseq
      %v3234 = vshrl.u32 %v3233, 7
      %v3235 = vsub.s32 %v3232, %v3234
      %v3236 = vrot.slane %v3149, %v3235
      %v3238 = vunpack.c.l.s4 1983009808
      %v3239 = vunpack.c.0.s8 %v3238
      %v3240 = vlaneseq
      %v3241 = vshrl.u32 %v3240, 7
      %v3242 = vsub.s32 %v3239, %v3241
      %v3243 = vrot.slane %v3229, %v3242
      %v3244 = vcombine.high %v3236, %v3236
      %v3245 = vcombine.high %v3243, %v3243
      %v3246 = vcombine.high %v3150, %v3150
      %v3248 = vunpack.c.l.s4 1983009808
      %v3249 = vunpack.c.0.s8 %v3248
      %v3250 = vlaneseq
      %v3251 = vshrl.u32 %v3250, 7
      %v3252 = vsub.s32 %v3249, %v3251
      %v3253 = vrot.slane %v3150, %v3252
      %v3255 = vunpack.c.l.s4 1983009808
      %v3256 = vunpack.c.0.s8 %v3255
      %v3257 = vlaneseq
      %v3258 = vshrl.u32 %v3257, 7
      %v3259 = vsub.s32 %v3256, %v3258
      %v3260 = vrot.slane %v3246, %v3259
      %v3261 = vcombine.high %v3253, %v3253
      %v3262 = vcombine.high %v3260, %v3260
      %v3263 = vcombine.high %v3151, %v3151
      %v3265 = vunpack.c.l.s4 1983009808
      %v3266 = vunpack.c.0.s8 %v3265
      %v3267 = vlaneseq
      %v3268 = vshrl.u32 %v3267, 7
      %v3269 = vsub.s32 %v3266, %v3268
      %v3270 = vrot.slane %v3151, %v3269
      %v3272 = vunpack.c.l.s4 1983009808
      %v3273 = vunpack.c.0.s8 %v3272
      %v3274 = vlaneseq
      %v3275 = vshrl.u32 %v3274, 7
      %v3276 = vsub.s32 %v3273, %v3275
      %v3277 = vrot.slane %v3263, %v3276
      %v3278 = vcombine.high %v3270, %v3270
      %v3279 = vcombine.high %v3277, %v3277
      %v3280 = vcombine.high %v3152, %v3152
      %v3282 = vunpack.c.l.s4 1983009808
      %v3283 = vunpack.c.0.s8 %v3282
      %v3284 = vlaneseq
      %v3285 = vshrl.u32 %v3284, 7
      %v3286 = vsub.s32 %v3283, %v3285
      %v3287 = vrot.slane %v3152, %v3286
      %v3289 = vunpack.c.l.s4 1983009808
      %v3290 = vunpack.c.0.s8 %v3289
      %v3291 = vlaneseq
      %v3292 = vshrl.u32 %v3291, 7
      %v3293 = vsub.s32 %v3290, %v3292
      %v3294 = vrot.slane %v3280, %v3293
      %v3295 = vcombine.high %v3287, %v3287
      %v3296 = vcombine.high %v3294, %v3294
      %v3297 = vcombine.high %v3153, %v3153
      %v3299 = vunpack.c.l.s4 1983009808
      %v3300 = vunpack.c.0.s8 %v3299
      %v3301 = vlaneseq
      %v3302 = vshrl.u32 %v3301, 7
      %v3303 = vsub.s32 %v3300, %v3302
      %v3304 = vrot.slane %v3153, %v3303
      %v3306 = vunpack.c.l.s4 1983009808
      %v3307 = vunpack.c.0.s8 %v3306
      %v3308 = vlaneseq
      %v3309 = vshrl.u32 %v3308, 7
      %v3310 = vsub.s32 %v3307, %v3309
      %v3311 = vrot.slane %v3297, %v3310
      %v3312 = vcombine.high %v3304, %v3304
      %v3313 = vcombine.high %v3311, %v3311
      %v3314 = vcombine.high %v3154, %v3154
      %v3316 = vunpack.c.l.s4 1983009808
      %v3317 = vunpack.c.0.s8 %v3316
      %v3318 = vlaneseq
      %v3319 = vshrl.u32 %v3318, 7
      %v3320 = vsub.s32 %v3317, %v3319
      %v3321 = vrot.slane %v3154, %v3320
      %v3323 = vunpack.c.l.s4 1983009808
      %v3324 = vunpack.c.0.s8 %v3323
      %v3325 = vlaneseq
      %v3326 = vshrl.u32 %v3325, 7
      %v3327 = vsub.s32 %v3324, %v3326
      %v3328 = vrot.slane %v3314, %v3327
      %v3329 = vcombine.high %v3321, %v3321
      %v3330 = vcombine.high %v3328, %v3328
      %v3331 = vcombine.high %v3155, %v3155
      %v3333 = vunpack.c.l.s4 1983009808
      %v3334 = vunpack.c.0.s8 %v3333
      %v3335 = vlaneseq
      %v3336 = vshrl.u32 %v3335, 7
      %v3337 = vsub.s32 %v3334, %v3336
      %v3338 = vrot.slane %v3155, %v3337
      %v3340 = vunpack.c.l.s4 1983009808
      %v3341 = vunpack.c.0.s8 %v3340
      %v3342 = vlaneseq
      %v3343 = vshrl.u32 %v3342, 7
      %v3344 = vsub.s32 %v3341, %v3343
      %v3345 = vrot.slane %v3331, %v3344
      %v3346 = vcombine.high %v3338, %v3338
      %v3347 = vcombine.high %v3345, %v3345
      %v3348 = vcombine.high %v3156, %v3156
      %v3350 = vunpack.c.l.s4 1983009808
      %v3351 = vunpack.c.0.s8 %v3350
      %v3352 = vlaneseq
      %v3353 = vshrl.u32 %v3352, 7
      %v3354 = vsub.s32 %v3351, %v3353
      %v3355 = vrot.slane %v3156, %v3354
      %v3357 = vunpack.c.l.s4 1983009808
      %v3358 = vunpack.c.0.s8 %v3357
      %v3359 = vlaneseq
      %v3360 = vshrl.u32 %v3359, 7
      %v3361 = vsub.s32 %v3358, %v3360
      %v3362 = vrot.slane %v3348, %v3361
      %v3363 = vcombine.high %v3355, %v3355
      %v3364 = vcombine.high %v3362, %v3362
      %v3365 = vcombine.high %v3157, %v3157
      %v3367 = vunpack.c.l.s4 1983009808
      %v3368 = vunpack.c.0.s8 %v3367
      %v3369 = vlaneseq
      %v3370 = vshrl.u32 %v3369, 7
      %v3371 = vsub.s32 %v3368, %v3370
      %v3372 = vrot.slane %v3157, %v3371
      %v3374 = vunpack.c.l.s4 1983009808
      %v3375 = vunpack.c.0.s8 %v3374
      %v3376 = vlaneseq
      %v3377 = vshrl.u32 %v3376, 7
      %v3378 = vsub.s32 %v3375, %v3377
      %v3379 = vrot.slane %v3365, %v3378
      %v3380 = vcombine.high %v3372, %v3372
      %v3381 = vcombine.high %v3379, %v3379
      %v3382 = vcombine.high %v3158, %v3158
      %v3384 = vunpack.c.l.s4 1983009808
      %v3385 = vunpack.c.0.s8 %v3384
      %v3386 = vlaneseq
      %v3387 = vshrl.u32 %v3386, 7
      %v3388 = vsub.s32 %v3385, %v3387
      %v3389 = vrot.slane %v3158, %v3388
      %v3391 = vunpack.c.l.s4 1983009808
      %v3392 = vunpack.c.0.s8 %v3391
      %v3393 = vlaneseq
      %v3394 = vshrl.u32 %v3393, 7
      %v3395 = vsub.s32 %v3392, %v3394
      %v3396 = vrot.slane %v3382, %v3395
      %v3397 = vcombine.high %v3389, %v3389
      %v3398 = vcombine.high %v3396, %v3396
      %v3399 = vcombine.high %v3159, %v3159
      %v3401 = vunpack.c.l.s4 1983009808
      %v3402 = vunpack.c.0.s8 %v3401
      %v3403 = vlaneseq
      %v3404 = vshrl.u32 %v3403, 7
      %v3405 = vsub.s32 %v3402, %v3404
      %v3406 = vrot.slane %v3159, %v3405
      %v3408 = vunpack.c.l.s4 1983009808
      %v3409 = vunpack.c.0.s8 %v3408
      %v3410 = vlaneseq
      %v3411 = vshrl.u32 %v3410, 7
      %v3412 = vsub.s32 %v3409, %v3411
      %v3413 = vrot.slane %v3399, %v3412
      %v3414 = vcombine.high %v3406, %v3406
      %v3415 = vcombine.high %v3413, %v3413
      %v3416 = vcombine.high %v3160, %v3160
      %v3418 = vunpack.c.l.s4 1983009808
      %v3419 = vunpack.c.0.s8 %v3418
      %v3420 = vlaneseq
      %v3421 = vshrl.u32 %v3420, 7
      %v3422 = vsub.s32 %v3419, %v3421
      %v3423 = vrot.slane %v3160, %v3422
      %v3425 = vunpack.c.l.s4 1983009808
      %v3426 = vunpack.c.0.s8 %v3425
      %v3427 = vlaneseq
      %v3428 = vshrl.u32 %v3427, 7
      %v3429 = vsub.s32 %v3426, %v3428
      %v3430 = vrot.slane %v3416, %v3429
      %v3431 = vcombine.high %v3423, %v3423
      %v3432 = vcombine.high %v3430, %v3430
      %v3433 = vcombine.high %v3161, %v3161
      %v3435 = vunpack.c.l.s4 1983009808
      %v3436 = vunpack.c.0.s8 %v3435
      %v3437 = vlaneseq
      %v3438 = vshrl.u32 %v3437, 7
      %v3439 = vsub.s32 %v3436, %v3438
      %v3440 = vrot.slane %v3161, %v3439
      %v3442 = vunpack.c.l.s4 1983009808
      %v3443 = vunpack.c.0.s8 %v3442
      %v3444 = vlaneseq
      %v3445 = vshrl.u32 %v3444, 7
      %v3446 = vsub.s32 %v3443, %v3445
      %v3447 = vrot.slane %v3433, %v3446
      %v3448 = vcombine.high %v3440, %v3440
      %v3449 = vcombine.high %v3447, %v3447
      %v3450 = vcombine.high %v3162, %v3162
      %v3452 = vunpack.c.l.s4 1983009808
      %v3453 = vunpack.c.0.s8 %v3452
      %v3454 = vlaneseq
      %v3455 = vshrl.u32 %v3454, 7
      %v3456 = vsub.s32 %v3453, %v3455
      %v3457 = vrot.slane %v3162, %v3456
      %v3459 = vunpack.c.l.s4 1983009808
      %v3460 = vunpack.c.0.s8 %v3459
      %v3461 = vlaneseq
      %v3462 = vshrl.u32 %v3461, 7
      %v3463 = vsub.s32 %v3460, %v3462
      %v3464 = vrot.slane %v3450, %v3463
      %v3465 = vcombine.high %v3457, %v3457
      %v3466 = vcombine.high %v3464, %v3464
      %vm3531 = vcmask 1041408
      %v3532 = vsel %vm3531, %v3202, -inf
      %v3533 = vrot.slane %v3532, 4
      %v3534 = vmax.f32 %v3532, %v3533
      %v3535 = vrot.slane %v3534, 2
      %v3536 = vmax.f32 %v3534, %v3535
      %v3537 = vrot.slane %v3536, 1
      %v3538 = vmax.f32 %v3536, %v3537
      %v3539 = vsel %vm3531, %v3210, -inf
      %v3540 = vrot.slane %v3539, 4
      %v3541 = vmax.f32 %v3539, %v3540
      %v3542 = vrot.slane %v3541, 2
      %v3543 = vmax.f32 %v3541, %v3542
      %v3544 = vrot.slane %v3543, 1
      %v3545 = vmax.f32 %v3543, %v3544
      %v3546 = vsel %vm3531, %v3209, -inf
      %v3547 = vrot.slane %v3546, 4
      %v3548 = vmax.f32 %v3546, %v3547
      %v3549 = vrot.slane %v3548, 2
      %v3550 = vmax.f32 %v3548, %v3549
      %v3551 = vrot.slane %v3550, 1
      %v3552 = vmax.f32 %v3550, %v3551
      %v3553 = vsel %vm3531, %v3211, -inf
      %v3554 = vrot.slane %v3553, 4
      %v3555 = vmax.f32 %v3553, %v3554
      %v3556 = vrot.slane %v3555, 2
      %v3557 = vmax.f32 %v3555, %v3556
      %v3558 = vrot.slane %v3557, 1
      %v3559 = vmax.f32 %v3557, %v3558
      %v3560 = vsel %vm3531, %v3219, -inf
      %v3561 = vrot.slane %v3560, 4
      %v3562 = vmax.f32 %v3560, %v3561
      %v3563 = vrot.slane %v3562, 2
      %v3564 = vmax.f32 %v3562, %v3563
      %v3565 = vrot.slane %v3564, 1
      %v3566 = vmax.f32 %v3564, %v3565
      %v3567 = vsel %vm3531, %v3227, -inf
      %v3568 = vrot.slane %v3567, 4
      %v3569 = vmax.f32 %v3567, %v3568
      %v3570 = vrot.slane %v3569, 2
      %v3571 = vmax.f32 %v3569, %v3570
      %v3572 = vrot.slane %v3571, 1
      %v3573 = vmax.f32 %v3571, %v3572
      %v3574 = vsel %vm3531, %v3226, -inf
      %v3575 = vrot.slane %v3574, 4
      %v3576 = vmax.f32 %v3574, %v3575
      %v3577 = vrot.slane %v3576, 2
      %v3578 = vmax.f32 %v3576, %v3577
      %v3579 = vrot.slane %v3578, 1
      %v3580 = vmax.f32 %v3578, %v3579
      %v3581 = vsel %vm3531, %v3228, -inf
      %v3582 = vrot.slane %v3581, 4
      %v3583 = vmax.f32 %v3581, %v3582
      %v3584 = vrot.slane %v3583, 2
      %v3585 = vmax.f32 %v3583, %v3584
      %v3586 = vrot.slane %v3585, 1
      %v3587 = vmax.f32 %v3585, %v3586
      %v3588 = vsel %vm3531, %v3236, -inf
      %v3589 = vrot.slane %v3588, 4
      %v3590 = vmax.f32 %v3588, %v3589
      %v3591 = vrot.slane %v3590, 2
      %v3592 = vmax.f32 %v3590, %v3591
      %v3593 = vrot.slane %v3592, 1
      %v3594 = vmax.f32 %v3592, %v3593
      %v3595 = vsel %vm3531, %v3244, -inf
      %v3596 = vrot.slane %v3595, 4
      %v3597 = vmax.f32 %v3595, %v3596
      %v3598 = vrot.slane %v3597, 2
      %v3599 = vmax.f32 %v3597, %v3598
      %v3600 = vrot.slane %v3599, 1
      %v3601 = vmax.f32 %v3599, %v3600
      %v3602 = vsel %vm3531, %v3243, -inf
      %v3603 = vrot.slane %v3602, 4
      %v3604 = vmax.f32 %v3602, %v3603
      %v3605 = vrot.slane %v3604, 2
      %v3606 = vmax.f32 %v3604, %v3605
      %v3607 = vrot.slane %v3606, 1
      %v3608 = vmax.f32 %v3606, %v3607
      %v3609 = vsel %vm3531, %v3245, -inf
      %v3610 = vrot.slane %v3609, 4
      %v3611 = vmax.f32 %v3609, %v3610
      %v3612 = vrot.slane %v3611, 2
      %v3613 = vmax.f32 %v3611, %v3612
      %v3614 = vrot.slane %v3613, 1
      %v3615 = vmax.f32 %v3613, %v3614
      %v3616 = vsel %vm3531, %v3253, -inf
      %v3617 = vrot.slane %v3616, 4
      %v3618 = vmax.f32 %v3616, %v3617
      %v3619 = vrot.slane %v3618, 2
      %v3620 = vmax.f32 %v3618, %v3619
      %v3621 = vrot.slane %v3620, 1
      %v3622 = vmax.f32 %v3620, %v3621
      %v3623 = vsel %vm3531, %v3261, -inf
      %v3624 = vrot.slane %v3623, 4
      %v3625 = vmax.f32 %v3623, %v3624
      %v3626 = vrot.slane %v3625, 2
      %v3627 = vmax.f32 %v3625, %v3626
      %v3628 = vrot.slane %v3627, 1
      %v3629 = vmax.f32 %v3627, %v3628
      %v3630 = vsel %vm3531, %v3260, -inf
      %v3631 = vrot.slane %v3630, 4
      %v3632 = vmax.f32 %v3630, %v3631
      %v3633 = vrot.slane %v3632, 2
      %v3634 = vmax.f32 %v3632, %v3633
      %v3635 = vrot.slane %v3634, 1
      %v3636 = vmax.f32 %v3634, %v3635
      %v3637 = vsel %vm3531, %v3262, -inf
      %v3638 = vrot.slane %v3637, 4
      %v3639 = vmax.f32 %v3637, %v3638
      %v3640 = vrot.slane %v3639, 2
      %v3641 = vmax.f32 %v3639, %v3640
      %v3642 = vrot.slane %v3641, 1
      %v3643 = vmax.f32 %v3641, %v3642
      %v3644 = vsel %vm3531, %v3270, -inf
      %v3645 = vrot.slane %v3644, 4
      %v3646 = vmax.f32 %v3644, %v3645
      %v3647 = vrot.slane %v3646, 2
      %v3648 = vmax.f32 %v3646, %v3647
      %v3649 = vrot.slane %v3648, 1
      %v3650 = vmax.f32 %v3648, %v3649
      %v3651 = vsel %vm3531, %v3278, -inf
      %v3652 = vrot.slane %v3651, 4
      %v3653 = vmax.f32 %v3651, %v3652
      %v3654 = vrot.slane %v3653, 2
      %v3655 = vmax.f32 %v3653, %v3654
      %v3656 = vrot.slane %v3655, 1
      %v3657 = vmax.f32 %v3655, %v3656
      %v3658 = vsel %vm3531, %v3277, -inf
      %v3659 = vrot.slane %v3658, 4
      %v3660 = vmax.f32 %v3658, %v3659
      %v3661 = vrot.slane %v3660, 2
      %v3662 = vmax.f32 %v3660, %v3661
      %v3663 = vrot.slane %v3662, 1
      %v3664 = vmax.f32 %v3662, %v3663
      %v3665 = vsel %vm3531, %v3279, -inf
      %v3666 = vrot.slane %v3665, 4
      %v3667 = vmax.f32 %v3665, %v3666
      %v3668 = vrot.slane %v3667, 2
      %v3669 = vmax.f32 %v3667, %v3668
      %v3670 = vrot.slane %v3669, 1
      %v3671 = vmax.f32 %v3669, %v3670
      %v3672 = vsel %vm3531, %v3287, -inf
      %v3673 = vrot.slane %v3672, 4
      %v3674 = vmax.f32 %v3672, %v3673
      %v3675 = vrot.slane %v3674, 2
      %v3676 = vmax.f32 %v3674, %v3675
      %v3677 = vrot.slane %v3676, 1
      %v3678 = vmax.f32 %v3676, %v3677
      %v3679 = vsel %vm3531, %v3295, -inf
      %v3680 = vrot.slane %v3679, 4
      %v3681 = vmax.f32 %v3679, %v3680
      %v3682 = vrot.slane %v3681, 2
      %v3683 = vmax.f32 %v3681, %v3682
      %v3684 = vrot.slane %v3683, 1
      %v3685 = vmax.f32 %v3683, %v3684
      %v3686 = vsel %vm3531, %v3294, -inf
      %v3687 = vrot.slane %v3686, 4
      %v3688 = vmax.f32 %v3686, %v3687
      %v3689 = vrot.slane %v3688, 2
      %v3690 = vmax.f32 %v3688, %v3689
      %v3691 = vrot.slane %v3690, 1
      %v3692 = vmax.f32 %v3690, %v3691
      %v3693 = vsel %vm3531, %v3296, -inf
      %v3694 = vrot.slane %v3693, 4
      %v3695 = vmax.f32 %v3693, %v3694
      %v3696 = vrot.slane %v3695, 2
      %v3697 = vmax.f32 %v3695, %v3696
      %v3698 = vrot.slane %v3697, 1
      %v3699 = vmax.f32 %v3697, %v3698
      %v3700 = vsel %vm3531, %v3304, -inf
      %v3701 = vrot.slane %v3700, 4
      %v3702 = vmax.f32 %v3700, %v3701
      %v3703 = vrot.slane %v3702, 2
      %v3704 = vmax.f32 %v3702, %v3703
      %v3705 = vrot.slane %v3704, 1
      %v3706 = vmax.f32 %v3704, %v3705
      %v3707 = vsel %vm3531, %v3312, -inf
      %v3708 = vrot.slane %v3707, 4
      %v3709 = vmax.f32 %v3707, %v3708
      %v3710 = vrot.slane %v3709, 2
      %v3711 = vmax.f32 %v3709, %v3710
      %v3712 = vrot.slane %v3711, 1
      %v3713 = vmax.f32 %v3711, %v3712
      %v3714 = vsel %vm3531, %v3311, -inf
      %v3715 = vrot.slane %v3714, 4
      %v3716 = vmax.f32 %v3714, %v3715
      %v3717 = vrot.slane %v3716, 2
      %v3718 = vmax.f32 %v3716, %v3717
      %v3719 = vrot.slane %v3718, 1
      %v3720 = vmax.f32 %v3718, %v3719
      %v3721 = vsel %vm3531, %v3313, -inf
      %v3722 = vrot.slane %v3721, 4
      %v3723 = vmax.f32 %v3721, %v3722
      %v3724 = vrot.slane %v3723, 2
      %v3725 = vmax.f32 %v3723, %v3724
      %v3726 = vrot.slane %v3725, 1
      %v3727 = vmax.f32 %v3725, %v3726
      %v3728 = vsel %vm3531, %v3321, -inf
      %v3729 = vrot.slane %v3728, 4
      %v3730 = vmax.f32 %v3728, %v3729
      %v3731 = vrot.slane %v3730, 2
      %v3732 = vmax.f32 %v3730, %v3731
      %v3733 = vrot.slane %v3732, 1
      %v3734 = vmax.f32 %v3732, %v3733
      %v3735 = vsel %vm3531, %v3329, -inf
      %v3736 = vrot.slane %v3735, 4
      %v3737 = vmax.f32 %v3735, %v3736
      %v3738 = vrot.slane %v3737, 2
      %v3739 = vmax.f32 %v3737, %v3738
      %v3740 = vrot.slane %v3739, 1
      %v3741 = vmax.f32 %v3739, %v3740
      %v3742 = vsel %vm3531, %v3328, -inf
      %v3743 = vrot.slane %v3742, 4
      %v3744 = vmax.f32 %v3742, %v3743
      %v3745 = vrot.slane %v3744, 2
      %v3746 = vmax.f32 %v3744, %v3745
      %v3747 = vrot.slane %v3746, 1
      %v3748 = vmax.f32 %v3746, %v3747
      %v3749 = vsel %vm3531, %v3330, -inf
      %v3750 = vrot.slane %v3749, 4
      %v3751 = vmax.f32 %v3749, %v3750
      %v3752 = vrot.slane %v3751, 2
      %v3753 = vmax.f32 %v3751, %v3752
      %v3754 = vrot.slane %v3753, 1
      %v3755 = vmax.f32 %v3753, %v3754
      %v3756 = vsel %vm3531, %v3338, -inf
      %v3757 = vrot.slane %v3756, 4
      %v3758 = vmax.f32 %v3756, %v3757
      %v3759 = vrot.slane %v3758, 2
      %v3760 = vmax.f32 %v3758, %v3759
      %v3761 = vrot.slane %v3760, 1
      %v3762 = vmax.f32 %v3760, %v3761
      %v3763 = vsel %vm3531, %v3346, -inf
      %v3764 = vrot.slane %v3763, 4
      %v3765 = vmax.f32 %v3763, %v3764
      %v3766 = vrot.slane %v3765, 2
      %v3767 = vmax.f32 %v3765, %v3766
      %v3768 = vrot.slane %v3767, 1
      %v3769 = vmax.f32 %v3767, %v3768
      %v3770 = vsel %vm3531, %v3345, -inf
      %v3771 = vrot.slane %v3770, 4
      %v3772 = vmax.f32 %v3770, %v3771
      %v3773 = vrot.slane %v3772, 2
      %v3774 = vmax.f32 %v3772, %v3773
      %v3775 = vrot.slane %v3774, 1
      %v3776 = vmax.f32 %v3774, %v3775
      %v3777 = vsel %vm3531, %v3347, -inf
      %v3778 = vrot.slane %v3777, 4
      %v3779 = vmax.f32 %v3777, %v3778
      %v3780 = vrot.slane %v3779, 2
      %v3781 = vmax.f32 %v3779, %v3780
      %v3782 = vrot.slane %v3781, 1
      %v3783 = vmax.f32 %v3781, %v3782
      %v3784 = vsel %vm3531, %v3355, -inf
      %v3785 = vrot.slane %v3784, 4
      %v3786 = vmax.f32 %v3784, %v3785
      %v3787 = vrot.slane %v3786, 2
      %v3788 = vmax.f32 %v3786, %v3787
      %v3789 = vrot.slane %v3788, 1
      %v3790 = vmax.f32 %v3788, %v3789
      %v3791 = vsel %vm3531, %v3363, -inf
      %v3792 = vrot.slane %v3791, 4
      %v3793 = vmax.f32 %v3791, %v3792
      %v3794 = vrot.slane %v3793, 2
      %v3795 = vmax.f32 %v3793, %v3794
      %v3796 = vrot.slane %v3795, 1
      %v3797 = vmax.f32 %v3795, %v3796
      %v3798 = vsel %vm3531, %v3362, -inf
      %v3799 = vrot.slane %v3798, 4
      %v3800 = vmax.f32 %v3798, %v3799
      %v3801 = vrot.slane %v3800, 2
      %v3802 = vmax.f32 %v3800, %v3801
      %v3803 = vrot.slane %v3802, 1
      %v3804 = vmax.f32 %v3802, %v3803
      %v3805 = vsel %vm3531, %v3364, -inf
      %v3806 = vrot.slane %v3805, 4
      %v3807 = vmax.f32 %v3805, %v3806
      %v3808 = vrot.slane %v3807, 2
      %v3809 = vmax.f32 %v3807, %v3808
      %v3810 = vrot.slane %v3809, 1
      %v3811 = vmax.f32 %v3809, %v3810
      %v3812 = vsel %vm3531, %v3372, -inf
      %v3813 = vrot.slane %v3812, 4
      %v3814 = vmax.f32 %v3812, %v3813
      %v3815 = vrot.slane %v3814, 2
      %v3816 = vmax.f32 %v3814, %v3815
      %v3817 = vrot.slane %v3816, 1
      %v3818 = vmax.f32 %v3816, %v3817
      %v3819 = vsel %vm3531, %v3380, -inf
      %v3820 = vrot.slane %v3819, 4
      %v3821 = vmax.f32 %v3819, %v3820
      %v3822 = vrot.slane %v3821, 2
      %v3823 = vmax.f32 %v3821, %v3822
      %v3824 = vrot.slane %v3823, 1
      %v3825 = vmax.f32 %v3823, %v3824
      %v3826 = vsel %vm3531, %v3379, -inf
      %v3827 = vrot.slane %v3826, 4
      %v3828 = vmax.f32 %v3826, %v3827
      %v3829 = vrot.slane %v3828, 2
      %v3830 = vmax.f32 %v3828, %v3829
      %v3831 = vrot.slane %v3830, 1
      %v3832 = vmax.f32 %v3830, %v3831
      %v3833 = vsel %vm3531, %v3381, -inf
      %v3834 = vrot.slane %v3833, 4
      %v3835 = vmax.f32 %v3833, %v3834
      %v3836 = vrot.slane %v3835, 2
      %v3837 = vmax.f32 %v3835, %v3836
      %v3838 = vrot.slane %v3837, 1
      %v3839 = vmax.f32 %v3837, %v3838
      %v3840 = vsel %vm3531, %v3389, -inf
      %v3841 = vrot.slane %v3840, 4
      %v3842 = vmax.f32 %v3840, %v3841
      %v3843 = vrot.slane %v3842, 2
      %v3844 = vmax.f32 %v3842, %v3843
      %v3845 = vrot.slane %v3844, 1
      %v3846 = vmax.f32 %v3844, %v3845
      %v3847 = vsel %vm3531, %v3397, -inf
      %v3848 = vrot.slane %v3847, 4
      %v3849 = vmax.f32 %v3847, %v3848
      %v3850 = vrot.slane %v3849, 2
      %v3851 = vmax.f32 %v3849, %v3850
      %v3852 = vrot.slane %v3851, 1
      %v3853 = vmax.f32 %v3851, %v3852
      %v3854 = vsel %vm3531, %v3396, -inf
      %v3855 = vrot.slane %v3854, 4
      %v3856 = vmax.f32 %v3854, %v3855
      %v3857 = vrot.slane %v3856, 2
      %v3858 = vmax.f32 %v3856, %v3857
      %v3859 = vrot.slane %v3858, 1
      %v3860 = vmax.f32 %v3858, %v3859
      %v3861 = vsel %vm3531, %v3398, -inf
      %v3862 = vrot.slane %v3861, 4
      %v3863 = vmax.f32 %v3861, %v3862
      %v3864 = vrot.slane %v3863, 2
      %v3865 = vmax.f32 %v3863, %v3864
      %v3866 = vrot.slane %v3865, 1
      %v3867 = vmax.f32 %v3865, %v3866
      %v3868 = vsel %vm3531, %v3406, -inf
      %v3869 = vrot.slane %v3868, 4
      %v3870 = vmax.f32 %v3868, %v3869
      %v3871 = vrot.slane %v3870, 2
      %v3872 = vmax.f32 %v3870, %v3871
      %v3873 = vrot.slane %v3872, 1
      %v3874 = vmax.f32 %v3872, %v3873
      %v3875 = vsel %vm3531, %v3414, -inf
      %v3876 = vrot.slane %v3875, 4
      %v3877 = vmax.f32 %v3875, %v3876
      %v3878 = vrot.slane %v3877, 2
      %v3879 = vmax.f32 %v3877, %v3878
      %v3880 = vrot.slane %v3879, 1
      %v3881 = vmax.f32 %v3879, %v3880
      %v3882 = vsel %vm3531, %v3413, -inf
      %v3883 = vrot.slane %v3882, 4
      %v3884 = vmax.f32 %v3882, %v3883
      %v3885 = vrot.slane %v3884, 2
      %v3886 = vmax.f32 %v3884, %v3885
      %v3887 = vrot.slane %v3886, 1
      %v3888 = vmax.f32 %v3886, %v3887
      %v3889 = vsel %vm3531, %v3415, -inf
      %v3890 = vrot.slane %v3889, 4
      %v3891 = vmax.f32 %v3889, %v3890
      %v3892 = vrot.slane %v3891, 2
      %v3893 = vmax.f32 %v3891, %v3892
      %v3894 = vrot.slane %v3893, 1
      %v3895 = vmax.f32 %v3893, %v3894
      %v3896 = vsel %vm3531, %v3423, -inf
      %v3897 = vrot.slane %v3896, 4
      %v3898 = vmax.f32 %v3896, %v3897
      %v3899 = vrot.slane %v3898, 2
      %v3900 = vmax.f32 %v3898, %v3899
      %v3901 = vrot.slane %v3900, 1
      %v3902 = vmax.f32 %v3900, %v3901
      %v3903 = vsel %vm3531, %v3431, -inf
      %v3904 = vrot.slane %v3903, 4
      %v3905 = vmax.f32 %v3903, %v3904
      %v3906 = vrot.slane %v3905, 2
      %v3907 = vmax.f32 %v3905, %v3906
      %v3908 = vrot.slane %v3907, 1
      %v3909 = vmax.f32 %v3907, %v3908
      %v3910 = vsel %vm3531, %v3430, -inf
      %v3911 = vrot.slane %v3910, 4
      %v3912 = vmax.f32 %v3910, %v3911
      %v3913 = vrot.slane %v3912, 2
      %v3914 = vmax.f32 %v3912, %v3913
      %v3915 = vrot.slane %v3914, 1
      %v3916 = vmax.f32 %v3914, %v3915
      %v3917 = vsel %vm3531, %v3432, -inf
      %v3918 = vrot.slane %v3917, 4
      %v3919 = vmax.f32 %v3917, %v3918
      %v3920 = vrot.slane %v3919, 2
      %v3921 = vmax.f32 %v3919, %v3920
      %v3922 = vrot.slane %v3921, 1
      %v3923 = vmax.f32 %v3921, %v3922
      %v3924 = vsel %vm3531, %v3440, -inf
      %v3925 = vrot.slane %v3924, 4
      %v3926 = vmax.f32 %v3924, %v3925
      %v3927 = vrot.slane %v3926, 2
      %v3928 = vmax.f32 %v3926, %v3927
      %v3929 = vrot.slane %v3928, 1
      %v3930 = vmax.f32 %v3928, %v3929
      %v3931 = vsel %vm3531, %v3448, -inf
      %v3932 = vrot.slane %v3931, 4
      %v3933 = vmax.f32 %v3931, %v3932
      %v3934 = vrot.slane %v3933, 2
      %v3935 = vmax.f32 %v3933, %v3934
      %v3936 = vrot.slane %v3935, 1
      %v3937 = vmax.f32 %v3935, %v3936
      %v3938 = vsel %vm3531, %v3447, -inf
      %v3939 = vrot.slane %v3938, 4
      %v3940 = vmax.f32 %v3938, %v3939
      %v3941 = vrot.slane %v3940, 2
      %v3942 = vmax.f32 %v3940, %v3941
      %v3943 = vrot.slane %v3942, 1
      %v3944 = vmax.f32 %v3942, %v3943
      %v3945 = vsel %vm3531, %v3449, -inf
      %v3946 = vrot.slane %v3945, 4
      %v3947 = vmax.f32 %v3945, %v3946
      %v3948 = vrot.slane %v3947, 2
      %v3949 = vmax.f32 %v3947, %v3948
      %v3950 = vrot.slane %v3949, 1
      %v3951 = vmax.f32 %v3949, %v3950
      %v3952 = vsel %vm3531, %v3457, -inf
      %v3953 = vrot.slane %v3952, 4
      %v3954 = vmax.f32 %v3952, %v3953
      %v3955 = vrot.slane %v3954, 2
      %v3956 = vmax.f32 %v3954, %v3955
      %v3957 = vrot.slane %v3956, 1
      %v3958 = vmax.f32 %v3956, %v3957
      %v3959 = vsel %vm3531, %v3465, -inf
      %v3960 = vrot.slane %v3959, 4
      %v3961 = vmax.f32 %v3959, %v3960
      %v3962 = vrot.slane %v3961, 2
      %v3963 = vmax.f32 %v3961, %v3962
      %v3964 = vrot.slane %v3963, 1
      %v3965 = vmax.f32 %v3963, %v3964
      %v3966 = vsel %vm3531, %v3464, -inf
      %v3967 = vrot.slane %v3966, 4
      %v3968 = vmax.f32 %v3966, %v3967
      %v3969 = vrot.slane %v3968, 2
      %v3970 = vmax.f32 %v3968, %v3969
      %v3971 = vrot.slane %v3970, 1
      %v3972 = vmax.f32 %v3970, %v3971
      %v3973 = vsel %vm3531, %v3466, -inf
      %v3974 = vrot.slane %v3973, 4
      %v3975 = vmax.f32 %v3973, %v3974
      %v3976 = vrot.slane %v3975, 2
      %v3977 = vmax.f32 %v3975, %v3976
      %v3978 = vrot.slane %v3977, 1
      %v3979 = vmax.f32 %v3977, %v3978
      %v3980 = vmax.f32 %v3538, %v3594
      %v3981 = vmax.f32 %v3545, %v3601
      %v3982 = vmax.f32 %v3552, %v3608
      %v3983 = vmax.f32 %v3559, %v3615
      %v3984 = vmax.f32 %v3566, %v3622
      %v3985 = vmax.f32 %v3573, %v3629
      %v3986 = vmax.f32 %v3580, %v3636
      %v3987 = vmax.f32 %v3587, %v3643
      %v3988 = vmax.f32 %v3650, %v3706
      %v3989 = vmax.f32 %v3657, %v3713
      %v3990 = vmax.f32 %v3664, %v3720
      %v3991 = vmax.f32 %v3671, %v3727
      %v3992 = vmax.f32 %v3678, %v3734
      %v3993 = vmax.f32 %v3685, %v3741
      %v3994 = vmax.f32 %v3692, %v3748
      %v3995 = vmax.f32 %v3699, %v3755
      %v3996 = vmax.f32 %v3762, %v3818
      %v3997 = vmax.f32 %v3769, %v3825
      %v3998 = vmax.f32 %v3776, %v3832
      %v3999 = vmax.f32 %v3783, %v3839
      %v4000 = vmax.f32 %v3790, %v3846
      %v4001 = vmax.f32 %v3797, %v3853
      %v4002 = vmax.f32 %v3804, %v3860
      %v4003 = vmax.f32 %v3811, %v3867
      %v4004 = vmax.f32 %v3874, %v3930
      %v4005 = vmax.f32 %v3881, %v3937
      %v4006 = vmax.f32 %v3888, %v3944
      %v4007 = vmax.f32 %v3895, %v3951
      %v4008 = vmax.f32 %v3902, %v3958
      %v4009 = vmax.f32 %v3909, %v3965
      %v4010 = vmax.f32 %v3916, %v3972
      %v4011 = vmax.f32 %v3923, %v3979
      %vm4044 = vcmask 1041409
      %v4045 = vsel %vm4044, %v3981, %v3980
      %vm4046 = vcmask 1042434
      %v4047 = vsel %vm4046, %v3982, %v4045
      %vm4048 = vcmask 1043459
      %v4049 = vsel %vm4048, %v3983, %v4047
      %vm4050 = vcmask 1044484
      %v4051 = vsel %vm4050, %v3984, %v4049
      %vm4052 = vcmask 1045509
      %v4053 = vsel %vm4052, %v3985, %v4051
      %vm4054 = vcmask 1046534
      %v4055 = vsel %vm4054, %v3986, %v4053
      %vm4056 = vcmask 1047559
      %v4057 = vsel %vm4056, %v3987, %v4055
      %v4058 = vsel %vm4044, %v3989, %v3988
      %v4059 = vsel %vm4046, %v3990, %v4058
      %v4060 = vsel %vm4048, %v3991, %v4059
      %v4061 = vsel %vm4050, %v3992, %v4060
      %v4062 = vsel %vm4052, %v3993, %v4061
      %v4063 = vsel %vm4054, %v3994, %v4062
      %v4064 = vsel %vm4056, %v3995, %v4063
      %v4065 = vsel %vm4044, %v3997, %v3996
      %v4066 = vsel %vm4046, %v3998, %v4065
      %v4067 = vsel %vm4048, %v3999, %v4066
      %v4068 = vsel %vm4050, %v4000, %v4067
      %v4069 = vsel %vm4052, %v4001, %v4068
      %v4070 = vsel %vm4054, %v4002, %v4069
      %v4071 = vsel %vm4056, %v4003, %v4070
      %v4072 = vsel %vm4044, %v4005, %v4004
      %v4073 = vsel %vm4046, %v4006, %v4072
      %v4074 = vsel %vm4048, %v4007, %v4073
      %v4075 = vsel %vm4050, %v4008, %v4074
      %v4076 = vsel %vm4052, %v4009, %v4075
      %v4077 = vsel %vm4054, %v4010, %v4076
      %v4078 = vsel %vm4056, %v4011, %v4077
      %4083 = vst [vmem:[%s643] sm:$0xff] %v4057
      %4084 = vst [vmem:[%s643 + $0x8] sm:$0xff] %v4064
      %4085 = vst [vmem:[%s643 + $0x10] sm:$0xff] %v4071
      %4086 = vst [vmem:[%s643 + $0x18] sm:$0xff] %v4078
      %s4087 = smul.u32 8, %s29
      %p4088 = scmp.lt.s32.totalorder %s28, 1
      %s4089 = scalar_select %p4088, %s28, 1
      %p4090 = scmp.lt.s32.totalorder %s4087, 15
      %s4091 = scalar_select %p4090, %s4087, 15
      %s4092 = smul.addr %s4091, 2
      %s4093 = smul.addr %s4089, 32
      %s4094 = sadd.s32 %s4092, %s4093
      %s4095 = smul.addr %s4094, 8
      %s4096 = scalar_lea.vmem %s11, %s4095
      %s4097 = smul.u32 4, %s29
      %p4098 = scmp.lt.s32.totalorder %s28, 1
      %s4099 = scalar_select %p4098, %s28, 1
      %p4100 = scmp.lt.s32.totalorder %s4097, 7
      %s4101 = scalar_select %p4100, %s4097, 7
      %s4102 = smul.addr %s4099, 8
      %s4103 = sadd.s32 %s4101, %s4102
      %s4104 = smul.addr %s4103, 8
      %s4105 = scalar_lea.vmem %s12, %s4104
      // Predicated region
      $region65: #{resblock_forward.3} parent=63 // pred_check
        %p4106 = pneg %p331
      $region66: #{resblock_forward.3} parent=63 // pred_check_branch
        %4108 = sbr.rel (%p4106) target = $region68
      $region67: #{resblock_forward.3} parent=63 // pred_region
        %s4109 = smul.u32 8, %s29
      $region68: #{resblock_forward.3} parent=63 // pred_fallthru
        _
      // Predicated region
      $region69: #{resblock_forward.3} parent=63 // pred_check
        %p4110 = pneg %p359
      $region70: #{resblock_forward.3} parent=63 // pred_check_branch
        %4112 = sbr.rel (%p4110) target = $region72
      $region71: #{resblock_forward.3} parent=63 // pred_region
        %s4113 = smul.u32 4, %s29
      $region72: #{resblock_forward.3} parent=63 // pred_fallthru
        _
    $region64: #{resblock_forward.3} parent=5 // pred_fallthru
      _
    %p4114 = scmp.le.s32.totalorder 2, %s19
    // Predicated region
    $region73: #{resblock_forward.3} parent=5 // pred_check
      %p4115 = pneg %p4114
    $region74: #{resblock_forward.3} parent=5 // pred_check_branch
      %4117 = sbr.rel (%p4115) target = $region76
    $region75: #{resblock_forward.3} parent=5 // pred_region
      %s4118 = ssub.s32 %s19, 2
      // Predicated region
      $region77: #{resblock_forward.3} parent=75 // pred_check
        %p4119 = pneg %p337
      $region78: #{resblock_forward.3} parent=75 // pred_check_branch
        %4121 = sbr.rel (%p4119) target = $region80
      $region79: #{resblock_forward.3} parent=75 // pred_region
        %s4122 = smul.u32 8, %s31
        %p4123 = scmp.lt.s32.totalorder %s30, 1
        %s4124 = scalar_select %p4123, %s30, 1
        %p4125 = scmp.lt.s32.totalorder %s4122, 15
        %s4126 = scalar_select %p4125, %s4122, 15
        %s4127 = smul.addr %s4126, 2
        %s4128 = smul.addr %s4124, 32
        %s4129 = sadd.s32 %s4127, %s4128
        %s4130 = smul.addr %s4129, 8
        %s4131 = scalar_lea.vmem %s11, %s4130
      $region80: #{resblock_forward.3} parent=75 // pred_fallthru
        _
      // Predicated region
      $region81: #{resblock_forward.3} parent=75 // pred_check
        %p4132 = pneg %p365
      $region82: #{resblock_forward.3} parent=75 // pred_check_branch
        %4134 = sbr.rel (%p4132) target = $region84
      $region83: #{resblock_forward.3} parent=75 // pred_region
        %s4135 = smul.u32 4, %s31
        %p4136 = scmp.lt.s32.totalorder %s30, 1
        %s4137 = scalar_select %p4136, %s30, 1
        %p4138 = scmp.lt.s32.totalorder %s4135, 7
        %s4139 = scalar_select %p4138, %s4135, 7
        %s4140 = smul.addr %s4137, 8
        %s4141 = sadd.s32 %s4139, %s4140
        %s4142 = smul.addr %s4141, 8
        %s4143 = scalar_lea.vmem %s12, %s4142
      $region84: #{resblock_forward.3} parent=75 // pred_fallthru
        _
    $region76: #{resblock_forward.3} parent=5 // pred_fallthru
      _
  $region6: #{resblock_forward.3} parent=0 // loop_footer
    %s23 = sadd.s32 1, %s19
  $region7: #{resblock_forward.3} parent=0 // loop_footer_branch
    %18 = sbr.rel target = $region3
  $region8: #{resblock_forward.3} parent=0 // loop_exit
    _

</llo_original>
